<compile_context>
chip_gen: v7x
topology: tpu7x:2x2x1
jax: 0.10.0
libtpu: 0.0.40
codegen_flags: <defaults>
</compile_context>

<pallas_src>
import jax
import jax.numpy as jnp
from jax.experimental import pallas as pl
from jax.experimental.pallas import tpu as pltpu


# ----------------------------------------------------------------------------
# Kernel
# ----------------------------------------------------------------------------
def _dense(h_bf16, w_ref, b_ref, relu):
    # bf16 x bf16 matmul on the MXU, f32 accumulation, f32 bias add / ReLU.
    y = jnp.dot(h_bf16, w_ref[...], preferred_element_type=jnp.float32) + b_ref[...]
    if relu:
        y = jnp.maximum(y, 0.0)
    return y


def ae_fused_kernel(x_ref,
                    w1, b1, w2, b2, w3, b3, w4, b4,      # encoder
                    w5, b5, w6, b6, w7, b7, w8, b8,      # decoder
                    out_ref):
    h = x_ref[...]                                       # bf16 batch tile
    # Encoder: F -> 1024 -> 512 -> 256 -> latent(padded)   (no ReLU on latent)
    h = _dense(h, w1, b1, relu=True).astype(jnp.bfloat16)
    h = _dense(h, w2, b2, relu=True).astype(jnp.bfloat16)
    h = _dense(h, w3, b3, relu=True).astype(jnp.bfloat16)
    z = _dense(h, w4, b4, relu=False).astype(jnp.bfloat16)
    # Decoder: latent(padded) -> 256 -> 512 -> 1024 -> F   (no ReLU on logits)
    h = _dense(z, w5, b5, relu=True).astype(jnp.bfloat16)
    h = _dense(h, w6, b6, relu=True).astype(jnp.bfloat16)
    h = _dense(h, w7, b7, relu=True).astype(jnp.bfloat16)
    out_ref[...] = _dense(h, w8, b8, relu=False).astype(out_ref.dtype)


# ----------------------------------------------------------------------------
# Helpers: padding / tiling / device queries
# ----------------------------------------------------------------------------
def _round_up(n, m):
    return ((n + m - 1) // m) * m


def _vmem_capacity_bytes():
    try:
        return int(pltpu.get_tpu_info().vmem_capacity_bytes)
    except Exception:
        return 64 << 20          # conservative: v7x per-TensorCore VMEM


def _latent_pad(latent_dim):
    unit = 128
    try:
        kind = jax.devices()[0].device_kind.lower()
        if "v6" in kind or "v7" in kind:
            unit = 256           # 256x256 MXU: keep latent K/N MXU-native
    except Exception:
        pass
    return _round_up(latent_dim, unit)


def _batch_tiling(batch, max_batch_tile):
    """Balanced batch tiles; >= 2 grid steps when batch >= 16 (v7x 2-TC)."""
    n_tiles = pl.cdiv(batch, max_batch_tile)
    if batch >= 16:
        n_tiles = max(n_tiles, 2)
    tb = _round_up(pl.cdiv(batch, n_tiles), 8)
    b_pad = _round_up(batch, tb)
    return tb, b_pad, b_pad // tb


def make_params(key, input_length, latent_dim):
    """Deterministic init mirroring torch.nn.Linear defaults.

    Weights are stored pre-transposed as (in_features, out_features) so the
    kernel computes h @ W + b (== torch's x @ W.T + b). Biases are (1, out).
    """
    dims = [
        (input_length, 1024), (1024, 512), (512, 256), (256, latent_dim),   # encoder
        (latent_dim, 256), (256, 512), (512, 1024), (1024, input_length),   # decoder
    ]
    params = []
    for (fan_in, fan_out) in dims:
        key, kw, kb = jax.random.split(key, 3)
        bound = 1.0 / jnp.sqrt(fan_in)
        w = jax.random.uniform(kw, (fan_in, fan_out), jnp.float32, -bound, bound)
        b = jax.random.uniform(kb, (1, fan_out), jnp.float32, -bound, bound)
        params.append((w, b))
    return params


def _prepare_params(params, f_pad, l_pad):
    """Zero-pad input-feature and latent widths to lane multiples (exact);
    cast weights to bf16 (MXU path), keep biases in f32 (added post-accum)."""
    ws = [w for (w, _) in params]
    bs = [b for (_, b) in params]
    f = ws[0].shape[0]
    latent = ws[3].shape[1]

    ws[0] = jnp.pad(ws[0], ((0, f_pad - f), (0, 0)))          # pad input rows
    ws[3] = jnp.pad(ws[3], ((0, 0), (0, l_pad - latent)))      # pad latent cols
    bs[3] = jnp.pad(bs[3], ((0, 0), (0, l_pad - latent)))
    ws[4] = jnp.pad(ws[4], ((0, l_pad - latent), (0, 0)))      # pad latent rows
    ws[7] = jnp.pad(ws[7], ((0, 0), (0, f_pad - f)))           # pad output cols
    bs[7] = jnp.pad(bs[7], ((0, 0), (0, f_pad - f)))

    flat = []
    for w, b in zip(ws, bs):
        flat.append(w.astype(jnp.bfloat16))
        flat.append(b.astype(jnp.float32))
    return flat


def _param_specs(flat_params, single_buffer):
    specs = []
    for p in flat_params:
        if single_buffer:
            # Constant index_map => block never changes across the grid; a
            # single VMEM buffer suffices (no double-buffering of weights).
            specs.append(pl.BlockSpec(p.shape, lambda i: (0, 0),
                                      pipeline_mode=pl.Buffered(1)))
        else:
            specs.append(pl.BlockSpec(p.shape, lambda i: (0, 0)))
    return specs


# ----------------------------------------------------------------------------
# Wrapper
# ----------------------------------------------------------------------------
def autoencoder_selfies_forward(x, params, *, max_batch_tile=256):
    """x: (batch, seq_len, n_tokens) float32 -> logits of the same shape."""
    batch, seq_len, n_tokens = x.shape
    f = seq_len * n_tokens
    f_pad = _round_up(f, 128)
    l_pad = _latent_pad(params[3][0].shape[1])

    flat_params = _prepare_params(params, f_pad, l_pad)

    tb, b_pad, n_tiles = _batch_tiling(batch, max_batch_tile)
    grid = (n_tiles,)

    x_flat = x.reshape(batch, f).astype(jnp.bfloat16)
    x_flat = jnp.pad(x_flat, ((0, b_pad - batch), (0, f_pad - f)))

    x_spec = pl.BlockSpec((tb, f_pad), lambda i: (i, 0))
    out_spec = pl.BlockSpec((tb, f_pad), lambda i: (i, 0))

    # Advisory cost estimate for the XLA scheduler.
    weight_arrays = flat_params[0::2]
    flops = 2 * b_pad * sum(int(w.shape[0]) * int(w.shape[1]) for w in weight_arrays)
    param_bytes = sum(int(p.size) * p.dtype.itemsize for p in flat_params)
    bytes_accessed = param_bytes + int(x_flat.size) * 2 + b_pad * f_pad * 2
    cost = pl.CostEstimate(flops=flops, transcendentals=0,
                           bytes_accessed=bytes_accessed)

    # VMEM budget: single-buffered resident params + double-buffered bf16
    # x/out tiles + f32 intermediate activations, 2x headroom, clamped to
    # ~75% of the device's physical VMEM (64 MiB on v7x, 128 MiB on v5e/v6e).
    tile_bytes = tb * f_pad * 2 * 2 * 2            # x + out tiles, bf16, x2 bufs
    act_bytes = tb * 1024 * 4 * 4                  # widest f32 intermediates
    vmem_cap = _vmem_capacity_bytes()
    vmem_limit = int(min(max(2 * (param_bytes + tile_bytes + act_bytes), 16 << 20),
                         (vmem_cap * 3) // 4))
    # TODO(synk): for very large input_length (F_pad of several thousand) the
    # two F_pad x 1024 weights stop fitting v7x VMEM; in that regime split
    # layer 1 (K-reduction grid) and layer 8 (N grid) into their own
    # pallas_calls and keep only the six middle layers fused.

    def _run(param_specs):
        return pl.pallas_call(
            ae_fused_kernel,
            out_shape=jax.ShapeDtypeStruct((b_pad, f_pad), jnp.bfloat16),
            grid=grid,
            in_specs=[x_spec] + param_specs,
            out_specs=out_spec,
            compiler_params=pltpu.CompilerParams(
                dimension_semantics=("parallel",),
                vmem_limit_bytes=vmem_limit),
            cost_estimate=cost,
        )(x_flat, *flat_params)

    try:
        out_flat = _run(_param_specs(flat_params, single_buffer=True))
    except Exception:
        # Fallback for JAX builds without BlockSpec(pipeline_mode=...).
        out_flat = _run(_param_specs(flat_params, single_buffer=False))

    out = out_flat[:batch, :f].astype(jnp.float32)
    return out.reshape(batch, seq_len, n_tokens)


# ----------------------------------------------------------------------------
# Pure-JAX reference (mirrors the kernel's bf16-weight / f32-accum numerics)
# ----------------------------------------------------------------------------
def reference_forward(x, params):
    batch = x.shape[0]
    h = x.reshape(batch, -1).astype(jnp.bfloat16)
    for i, (w, b) in enumerate(params):
        y = jnp.dot(h, w.astype(jnp.bfloat16),
                    preferred_element_type=jnp.float32) + b
        if i not in (3, 7):               # no ReLU after latent / final logits
            y = jnp.maximum(y, 0.0)
        h = y.astype(jnp.bfloat16)        # kernel stores bf16 everywhere
    return h.astype(jnp.float32).reshape(x.shape)


if __name__ == "__main__":
    # Small shapes consistent with the module: input_length = seq * n_tokens.
    # TODO(synk): tokens_dict is loaded from a JSON file in the original module;
    # here n_tokens is fixed in-script since file I/O is out of scope.
    batch = 2
    max_token_length = 8     # sequence length
    n_tokens = 16            # len(tokens_dict)
    latent_dim = 64
    input_length = max_token_length * n_tokens  # 128

    key = jax.random.PRNGKey(0)
    key_p, key_x = jax.random.split(key)
    params = make_params(key_p, input_length, latent_dim)

    # One-hot input: random token per position.
    tok_ids = jax.random.randint(key_x, (batch, max_token_length), 0, n_tokens)
    x = jax.nn.one_hot(tok_ids, n_tokens, dtype=jnp.float32)  # (B, seq, n_tokens)

    out = autoencoder_selfies_forward(x, params)
    out = jax.block_until_ready(out)

    ref = reference_forward(x, params)
    assert out.shape == x.shape
    assert jnp.allclose(out, ref, atol=2e-3, rtol=2e-3), \
        "mismatch vs pure-JAX reference"

    print("KERNEL_OK")
</pallas_src>

<mosaic_0001>
module attributes {stable_mosaic.version = 11 : i64} {
  func.func @ae_fused_kernel(%arg0: i32, %arg1: memref<8x128xbf16, #tpu.memory_space<vmem>>, %arg2: memref<128x1024xbf16, #tpu.memory_space<vmem>>, %arg3: memref<1x1024xf32, #tpu.memory_space<vmem>>, %arg4: memref<1024x512xbf16, #tpu.memory_space<vmem>>, %arg5: memref<1x512xf32, #tpu.memory_space<vmem>>, %arg6: memref<512x256xbf16, #tpu.memory_space<vmem>>, %arg7: memref<1x256xf32, #tpu.memory_space<vmem>>, %arg8: memref<256x128xbf16, #tpu.memory_space<vmem>>, %arg9: memref<1x128xf32, #tpu.memory_space<vmem>>, %arg10: memref<128x256xbf16, #tpu.memory_space<vmem>>, %arg11: memref<1x256xf32, #tpu.memory_space<vmem>>, %arg12: memref<256x512xbf16, #tpu.memory_space<vmem>>, %arg13: memref<1x512xf32, #tpu.memory_space<vmem>>, %arg14: memref<512x1024xbf16, #tpu.memory_space<vmem>>, %arg15: memref<1x1024xf32, #tpu.memory_space<vmem>>, %arg16: memref<1024x128xbf16, #tpu.memory_space<vmem>>, %arg17: memref<1x128xf32, #tpu.memory_space<vmem>>, %arg18: memref<8x128xbf16, #tpu.memory_space<vmem>>) attributes {dimension_semantics = [#tpu.dimension_semantics<parallel>], iteration_bounds = array<i64: 1>, scalar_prefetch = 0 : i64, scratch_operands = 0 : i64, tpu.core_type = #tpu.core_type<tc>, window_params = [{transform_indices = @transform_0, window_bounds = array<i64: 8, 128>}, {pipeline_mode = #tpu.pipeline_mode<synchronous>, transform_indices = @transform_1, window_bounds = array<i64: 128, 1024>}, {pipeline_mode = #tpu.pipeline_mode<synchronous>, transform_indices = @transform_2, window_bounds = array<i64: 1, 1024>}, {pipeline_mode = #tpu.pipeline_mode<synchronous>, transform_indices = @transform_3, window_bounds = array<i64: 1024, 512>}, {pipeline_mode = #tpu.pipeline_mode<synchronous>, transform_indices = @transform_4, window_bounds = array<i64: 1, 512>}, {pipeline_mode = #tpu.pipeline_mode<synchronous>, transform_indices = @transform_5, window_bounds = array<i64: 512, 256>}, {pipeline_mode = #tpu.pipeline_mode<synchronous>, transform_indices = @transform_6, window_bounds = array<i64: 1, 256>}, {pipeline_mode = #tpu.pipeline_mode<synchronous>, transform_indices = @transform_7, window_bounds = array<i64: 256, 128>}, {pipeline_mode = #tpu.pipeline_mode<synchronous>, transform_indices = @transform_8, window_bounds = array<i64: 1, 128>}, {pipeline_mode = #tpu.pipeline_mode<synchronous>, transform_indices = @transform_9, window_bounds = array<i64: 128, 256>}, {pipeline_mode = #tpu.pipeline_mode<synchronous>, transform_indices = @transform_10, window_bounds = array<i64: 1, 256>}, {pipeline_mode = #tpu.pipeline_mode<synchronous>, transform_indices = @transform_11, window_bounds = array<i64: 256, 512>}, {pipeline_mode = #tpu.pipeline_mode<synchronous>, transform_indices = @transform_12, window_bounds = array<i64: 1, 512>}, {pipeline_mode = #tpu.pipeline_mode<synchronous>, transform_indices = @transform_13, window_bounds = array<i64: 512, 1024>}, {pipeline_mode = #tpu.pipeline_mode<synchronous>, transform_indices = @transform_14, window_bounds = array<i64: 1, 1024>}, {pipeline_mode = #tpu.pipeline_mode<synchronous>, transform_indices = @transform_15, window_bounds = array<i64: 1024, 128>}, {pipeline_mode = #tpu.pipeline_mode<synchronous>, transform_indices = @transform_16, window_bounds = array<i64: 1, 128>}, {transform_indices = @transform_17, window_bounds = array<i64: 8, 128>}]} {
    %c0 = arith.constant 0 : index
    %c0_0 = arith.constant 0 : index
    %0 = vector.load %arg1[%c0, %c0_0] : memref<8x128xbf16, #tpu.memory_space<vmem>>, vector<8x128xbf16>
    %c0_1 = arith.constant 0 : index
    %c0_2 = arith.constant 0 : index
    %1 = vector.load %arg2[%c0_1, %c0_2] : memref<128x1024xbf16, #tpu.memory_space<vmem>>, vector<128x1024xbf16>
    %cst = arith.constant dense<0.000000e+00> : vector<8x1024xf32>
    %2 = tpu.matmul %0, %1, %cst {dimension_numbers = #tpu.dot_dimension_numbers<[1], [0], [0], [1], [0, 0, 1, 1], [], []>} : vector<8x128xbf16>, vector<128x1024xbf16>, vector<8x1024xf32> -> vector<8x1024xf32>
    %c0_3 = arith.constant 0 : index
    %c0_4 = arith.constant 0 : index
    %3 = vector.load %arg3[%c0_3, %c0_4] : memref<1x1024xf32, #tpu.memory_space<vmem>>, vector<1x1024xf32>
    %4 = vector.broadcast %3 : vector<1x1024xf32> to vector<8x1024xf32>
    %5 = arith.addf %2, %4 : vector<8x1024xf32>
    %cst_5 = arith.constant 0.000000e+00 : f32
    %6 = vector.broadcast %cst_5 : f32 to vector<8x1024xf32>
    %7 = arith.maximumf %5, %6 : vector<8x1024xf32>
    %8 = arith.truncf %7 : vector<8x1024xf32> to vector<8x1024xbf16>
    %c0_6 = arith.constant 0 : index
    %c0_7 = arith.constant 0 : index
    %9 = vector.load %arg4[%c0_6, %c0_7] : memref<1024x512xbf16, #tpu.memory_space<vmem>>, vector<1024x512xbf16>
    %cst_8 = arith.constant dense<0.000000e+00> : vector<8x512xf32>
    %10 = tpu.matmul %8, %9, %cst_8 {dimension_numbers = #tpu.dot_dimension_numbers<[1], [0], [0], [1], [0, 0, 1, 1], [], []>} : vector<8x1024xbf16>, vector<1024x512xbf16>, vector<8x512xf32> -> vector<8x512xf32>
    %c0_9 = arith.constant 0 : index
    %c0_10 = arith.constant 0 : index
    %11 = vector.load %arg5[%c0_9, %c0_10] : memref<1x512xf32, #tpu.memory_space<vmem>>, vector<1x512xf32>
    %12 = vector.broadcast %11 : vector<1x512xf32> to vector<8x512xf32>
    %13 = arith.addf %10, %12 : vector<8x512xf32>
    %cst_11 = arith.constant 0.000000e+00 : f32
    %14 = vector.broadcast %cst_11 : f32 to vector<8x512xf32>
    %15 = arith.maximumf %13, %14 : vector<8x512xf32>
    %16 = arith.truncf %15 : vector<8x512xf32> to vector<8x512xbf16>
    %c0_12 = arith.constant 0 : index
    %c0_13 = arith.constant 0 : index
    %17 = vector.load %arg6[%c0_12, %c0_13] : memref<512x256xbf16, #tpu.memory_space<vmem>>, vector<512x256xbf16>
    %cst_14 = arith.constant dense<0.000000e+00> : vector<8x256xf32>
    %18 = tpu.matmul %16, %17, %cst_14 {dimension_numbers = #tpu.dot_dimension_numbers<[1], [0], [0], [1], [0, 0, 1, 1], [], []>} : vector<8x512xbf16>, vector<512x256xbf16>, vector<8x256xf32> -> vector<8x256xf32>
    %c0_15 = arith.constant 0 : index
    %c0_16 = arith.constant 0 : index
    %19 = vector.load %arg7[%c0_15, %c0_16] : memref<1x256xf32, #tpu.memory_space<vmem>>, vector<1x256xf32>
    %20 = vector.broadcast %19 : vector<1x256xf32> to vector<8x256xf32>
    %21 = arith.addf %18, %20 : vector<8x256xf32>
    %cst_17 = arith.constant 0.000000e+00 : f32
    %22 = vector.broadcast %cst_17 : f32 to vector<8x256xf32>
    %23 = arith.maximumf %21, %22 : vector<8x256xf32>
    %24 = arith.truncf %23 : vector<8x256xf32> to vector<8x256xbf16>
    %c0_18 = arith.constant 0 : index
    %c0_19 = arith.constant 0 : index
    %25 = vector.load %arg8[%c0_18, %c0_19] : memref<256x128xbf16, #tpu.memory_space<vmem>>, vector<256x128xbf16>
    %cst_20 = arith.constant dense<0.000000e+00> : vector<8x128xf32>
    %26 = tpu.matmul %24, %25, %cst_20 {dimension_numbers = #tpu.dot_dimension_numbers<[1], [0], [0], [1], [0, 0, 1, 1], [], []>} : vector<8x256xbf16>, vector<256x128xbf16>, vector<8x128xf32> -> vector<8x128xf32>
    %c0_21 = arith.constant 0 : index
    %c0_22 = arith.constant 0 : index
    %27 = vector.load %arg9[%c0_21, %c0_22] : memref<1x128xf32, #tpu.memory_space<vmem>>, vector<1x128xf32>
    %28 = vector.broadcast %27 : vector<1x128xf32> to vector<8x128xf32>
    %29 = arith.addf %26, %28 : vector<8x128xf32>
    %30 = arith.truncf %29 : vector<8x128xf32> to vector<8x128xbf16>
    %c0_23 = arith.constant 0 : index
    %c0_24 = arith.constant 0 : index
    %31 = vector.load %arg10[%c0_23, %c0_24] : memref<128x256xbf16, #tpu.memory_space<vmem>>, vector<128x256xbf16>
    %cst_25 = arith.constant dense<0.000000e+00> : vector<8x256xf32>
    %32 = tpu.matmul %30, %31, %cst_25 {dimension_numbers = #tpu.dot_dimension_numbers<[1], [0], [0], [1], [0, 0, 1, 1], [], []>} : vector<8x128xbf16>, vector<128x256xbf16>, vector<8x256xf32> -> vector<8x256xf32>
    %c0_26 = arith.constant 0 : index
    %c0_27 = arith.constant 0 : index
    %33 = vector.load %arg11[%c0_26, %c0_27] : memref<1x256xf32, #tpu.memory_space<vmem>>, vector<1x256xf32>
    %34 = vector.broadcast %33 : vector<1x256xf32> to vector<8x256xf32>
    %35 = arith.addf %32, %34 : vector<8x256xf32>
    %cst_28 = arith.constant 0.000000e+00 : f32
    %36 = vector.broadcast %cst_28 : f32 to vector<8x256xf32>
    %37 = arith.maximumf %35, %36 : vector<8x256xf32>
    %38 = arith.truncf %37 : vector<8x256xf32> to vector<8x256xbf16>
    %c0_29 = arith.constant 0 : index
    %c0_30 = arith.constant 0 : index
    %39 = vector.load %arg12[%c0_29, %c0_30] : memref<256x512xbf16, #tpu.memory_space<vmem>>, vector<256x512xbf16>
    %cst_31 = arith.constant dense<0.000000e+00> : vector<8x512xf32>
    %40 = tpu.matmul %38, %39, %cst_31 {dimension_numbers = #tpu.dot_dimension_numbers<[1], [0], [0], [1], [0, 0, 1, 1], [], []>} : vector<8x256xbf16>, vector<256x512xbf16>, vector<8x512xf32> -> vector<8x512xf32>
    %c0_32 = arith.constant 0 : index
    %c0_33 = arith.constant 0 : index
    %41 = vector.load %arg13[%c0_32, %c0_33] : memref<1x512xf32, #tpu.memory_space<vmem>>, vector<1x512xf32>
    %42 = vector.broadcast %41 : vector<1x512xf32> to vector<8x512xf32>
    %43 = arith.addf %40, %42 : vector<8x512xf32>
    %cst_34 = arith.constant 0.000000e+00 : f32
    %44 = vector.broadcast %cst_34 : f32 to vector<8x512xf32>
    %45 = arith.maximumf %43, %44 : vector<8x512xf32>
    %46 = arith.truncf %45 : vector<8x512xf32> to vector<8x512xbf16>
    %c0_35 = arith.constant 0 : index
    %c0_36 = arith.constant 0 : index
    %47 = vector.load %arg14[%c0_35, %c0_36] : memref<512x1024xbf16, #tpu.memory_space<vmem>>, vector<512x1024xbf16>
    %cst_37 = arith.constant dense<0.000000e+00> : vector<8x1024xf32>
    %48 = tpu.matmul %46, %47, %cst_37 {dimension_numbers = #tpu.dot_dimension_numbers<[1], [0], [0], [1], [0, 0, 1, 1], [], []>} : vector<8x512xbf16>, vector<512x1024xbf16>, vector<8x1024xf32> -> vector<8x1024xf32>
    %c0_38 = arith.constant 0 : index
    %c0_39 = arith.constant 0 : index
    %49 = vector.load %arg15[%c0_38, %c0_39] : memref<1x1024xf32, #tpu.memory_space<vmem>>, vector<1x1024xf32>
    %50 = vector.broadcast %49 : vector<1x1024xf32> to vector<8x1024xf32>
    %51 = arith.addf %48, %50 : vector<8x1024xf32>
    %cst_40 = arith.constant 0.000000e+00 : f32
    %52 = vector.broadcast %cst_40 : f32 to vector<8x1024xf32>
    %53 = arith.maximumf %51, %52 : vector<8x1024xf32>
    %54 = arith.truncf %53 : vector<8x1024xf32> to vector<8x1024xbf16>
    %c0_41 = arith.constant 0 : index
    %c0_42 = arith.constant 0 : index
    %55 = vector.load %arg16[%c0_41, %c0_42] : memref<1024x128xbf16, #tpu.memory_space<vmem>>, vector<1024x128xbf16>
    %cst_43 = arith.constant dense<0.000000e+00> : vector<8x128xf32>
    %56 = tpu.matmul %54, %55, %cst_43 {dimension_numbers = #tpu.dot_dimension_numbers<[1], [0], [0], [1], [0, 0, 1, 1], [], []>} : vector<8x1024xbf16>, vector<1024x128xbf16>, vector<8x128xf32> -> vector<8x128xf32>
    %c0_44 = arith.constant 0 : index
    %c0_45 = arith.constant 0 : index
    %57 = vector.load %arg17[%c0_44, %c0_45] : memref<1x128xf32, #tpu.memory_space<vmem>>, vector<1x128xf32>
    %58 = vector.broadcast %57 : vector<1x128xf32> to vector<8x128xf32>
    %59 = arith.addf %56, %58 : vector<8x128xf32>
    %60 = arith.truncf %59 : vector<8x128xf32> to vector<8x128xbf16>
    %c0_46 = arith.constant 0 : index
    %c0_47 = arith.constant 0 : index
    %61 = vector.load %arg18[%c0_46, %c0_47] : memref<8x128xbf16, #tpu.memory_space<vmem>>, vector<8x128xbf16>
    tpu.vector_store %arg18[%c0_46, %c0_47], %60 {strides = array<i32>} : memref<8x128xbf16, #tpu.memory_space<vmem>>, vector<8x128xbf16>,
    return
  }
  func.func @transform_0(%arg0: i32) -> (i32, i32) {
    %c0_i32 = arith.constant 0 : i32
    %c0_i32_0 = arith.constant 0 : i32
    return %arg0, %c0_i32 : i32, i32
  }
  func.func @transform_1(%arg0: i32) -> (i32, i32) {
    %c0_i32 = arith.constant 0 : i32
    %c0_i32_0 = arith.constant 0 : i32
    %c0_i32_1 = arith.constant 0 : i32
    return %c0_i32, %c0_i32_0 : i32, i32
  }
  func.func @transform_2(%arg0: i32) -> (i32, i32) {
    %c0_i32 = arith.constant 0 : i32
    %c0_i32_0 = arith.constant 0 : i32
    %c0_i32_1 = arith.constant 0 : i32
    return %c0_i32, %c0_i32_0 : i32, i32
  }
  func.func @transform_3(%arg0: i32) -> (i32, i32) {
    %c0_i32 = arith.constant 0 : i32
    %c0_i32_0 = arith.constant 0 : i32
    %c0_i32_1 = arith.constant 0 : i32
    return %c0_i32, %c0_i32_0 : i32, i32
  }
  func.func @transform_4(%arg0: i32) -> (i32, i32) {
    %c0_i32 = arith.constant 0 : i32
    %c0_i32_0 = arith.constant 0 : i32
    %c0_i32_1 = arith.constant 0 : i32
    return %c0_i32, %c0_i32_0 : i32, i32
  }
  func.func @transform_5(%arg0: i32) -> (i32, i32) {
    %c0_i32 = arith.constant 0 : i32
    %c0_i32_0 = arith.constant 0 : i32
    %c0_i32_1 = arith.constant 0 : i32
    return %c0_i32, %c0_i32_0 : i32, i32
  }
  func.func @transform_6(%arg0: i32) -> (i32, i32) {
    %c0_i32 = arith.constant 0 : i32
    %c0_i32_0 = arith.constant 0 : i32
    %c0_i32_1 = arith.constant 0 : i32
    return %c0_i32, %c0_i32_0 : i32, i32
  }
  func.func @transform_7(%arg0: i32) -> (i32, i32) {
    %c0_i32 = arith.constant 0 : i32
    %c0_i32_0 = arith.constant 0 : i32
    %c0_i32_1 = arith.constant 0 : i32
    return %c0_i32, %c0_i32_0 : i32, i32
  }
  func.func @transform_8(%arg0: i32) -> (i32, i32) {
    %c0_i32 = arith.constant 0 : i32
    %c0_i32_0 = arith.constant 0 : i32
    %c0_i32_1 = arith.constant 0 : i32
    return %c0_i32, %c0_i32_0 : i32, i32
  }
  func.func @transform_9(%arg0: i32) -> (i32, i32) {
    %c0_i32 = arith.constant 0 : i32
    %c0_i32_0 = arith.constant 0 : i32
    %c0_i32_1 = arith.constant 0 : i32
    return %c0_i32, %c0_i32_0 : i32, i32
  }
  func.func @transform_10(%arg0: i32) -> (i32, i32) {
    %c0_i32 = arith.constant 0 : i32
    %c0_i32_0 = arith.constant 0 : i32
    %c0_i32_1 = arith.constant 0 : i32
    return %c0_i32, %c0_i32_0 : i32, i32
  }
  func.func @transform_11(%arg0: i32) -> (i32, i32) {
    %c0_i32 = arith.constant 0 : i32
    %c0_i32_0 = arith.constant 0 : i32
    %c0_i32_1 = arith.constant 0 : i32
    return %c0_i32, %c0_i32_0 : i32, i32
  }
  func.func @transform_12(%arg0: i32) -> (i32, i32) {
    %c0_i32 = arith.constant 0 : i32
    %c0_i32_0 = arith.constant 0 : i32
    %c0_i32_1 = arith.constant 0 : i32
    return %c0_i32, %c0_i32_0 : i32, i32
  }
  func.func @transform_13(%arg0: i32) -> (i32, i32) {
    %c0_i32 = arith.constant 0 : i32
    %c0_i32_0 = arith.constant 0 : i32
    %c0_i32_1 = arith.constant 0 : i32
    return %c0_i32, %c0_i32_0 : i32, i32
  }
  func.func @transform_14(%arg0: i32) -> (i32, i32) {
    %c0_i32 = arith.constant 0 : i32
    %c0_i32_0 = arith.constant 0 : i32
    %c0_i32_1 = arith.constant 0 : i32
    return %c0_i32, %c0_i32_0 : i32, i32
  }
  func.func @transform_15(%arg0: i32) -> (i32, i32) {
    %c0_i32 = arith.constant 0 : i32
    %c0_i32_0 = arith.constant 0 : i32
    %c0_i32_1 = arith.constant 0 : i32
    return %c0_i32, %c0_i32_0 : i32, i32
  }
  func.func @transform_16(%arg0: i32) -> (i32, i32) {
    %c0_i32 = arith.constant 0 : i32
    %c0_i32_0 = arith.constant 0 : i32
    %c0_i32_1 = arith.constant 0 : i32
    return %c0_i32, %c0_i32_0 : i32, i32
  }
  func.func @transform_17(%arg0: i32) -> (i32, i32) {
    %c0_i32 = arith.constant 0 : i32
    %c0_i32_0 = arith.constant 0 : i32
    return %arg0, %c0_i32 : i32, i32
  }
}

module attributes {stable_mosaic.version = 11 : i64} {
  func.func @ae_fused_kernel(%arg0: i32, %arg1: memref<8x128xbf16, #tpu.memory_space<vmem>>, %arg2: memref<128x1024xbf16, #tpu.memory_space<vmem>>, %arg3: memref<1x1024xf32, #tpu.memory_space<vmem>>, %arg4: memref<1024x512xbf16, #tpu.memory_space<vmem>>, %arg5: memref<1x512xf32, #tpu.memory_space<vmem>>, %arg6: memref<512x256xbf16, #tpu.memory_space<vmem>>, %arg7: memref<1x256xf32, #tpu.memory_space<vmem>>, %arg8: memref<256x128xbf16, #tpu.memory_space<vmem>>, %arg9: memref<1x128xf32, #tpu.memory_space<vmem>>, %arg10: memref<128x256xbf16, #tpu.memory_space<vmem>>, %arg11: memref<1x256xf32, #tpu.memory_space<vmem>>, %arg12: memref<256x512xbf16, #tpu.memory_space<vmem>>, %arg13: memref<1x512xf32, #tpu.memory_space<vmem>>, %arg14: memref<512x1024xbf16, #tpu.memory_space<vmem>>, %arg15: memref<1x1024xf32, #tpu.memory_space<vmem>>, %arg16: memref<1024x128xbf16, #tpu.memory_space<vmem>>, %arg17: memref<1x128xf32, #tpu.memory_space<vmem>>, %arg18: memref<8x128xbf16, #tpu.memory_space<vmem>>) attributes {dimension_semantics = [#tpu.dimension_semantics<parallel>], iteration_bounds = array<i64: 1>, scalar_prefetch = 0 : i64, scratch_operands = 0 : i64, tpu.core_type = #tpu.core_type<tc>, window_params = [{transform_indices = @transform_0, window_bounds = array<i64: 8, 128>}, {pipeline_mode = #tpu.pipeline_mode<synchronous>, transform_indices = @transform_1, window_bounds = array<i64: 128, 1024>}, {pipeline_mode = #tpu.pipeline_mode<synchronous>, transform_indices = @transform_2, window_bounds = array<i64: 1, 1024>}, {pipeline_mode = #tpu.pipeline_mode<synchronous>, transform_indices = @transform_3, window_bounds = array<i64: 1024, 512>}, {pipeline_mode = #tpu.pipeline_mode<synchronous>, transform_indices = @transform_4, window_bounds = array<i64: 1, 512>}, {pipeline_mode = #tpu.pipeline_mode<synchronous>, transform_indices = @transform_5, window_bounds = array<i64: 512, 256>}, {pipeline_mode = #tpu.pipeline_mode<synchronous>, transform_indices = @transform_6, window_bounds = array<i64: 1, 256>}, {pipeline_mode = #tpu.pipeline_mode<synchronous>, transform_indices = @transform_7, window_bounds = array<i64: 256, 128>}, {pipeline_mode = #tpu.pipeline_mode<synchronous>, transform_indices = @transform_8, window_bounds = array<i64: 1, 128>}, {pipeline_mode = #tpu.pipeline_mode<synchronous>, transform_indices = @transform_9, window_bounds = array<i64: 128, 256>}, {pipeline_mode = #tpu.pipeline_mode<synchronous>, transform_indices = @transform_10, window_bounds = array<i64: 1, 256>}, {pipeline_mode = #tpu.pipeline_mode<synchronous>, transform_indices = @transform_11, window_bounds = array<i64: 256, 512>}, {pipeline_mode = #tpu.pipeline_mode<synchronous>, transform_indices = @transform_12, window_bounds = array<i64: 1, 512>}, {pipeline_mode = #tpu.pipeline_mode<synchronous>, transform_indices = @transform_13, window_bounds = array<i64: 512, 1024>}, {pipeline_mode = #tpu.pipeline_mode<synchronous>, transform_indices = @transform_14, window_bounds = array<i64: 1, 1024>}, {pipeline_mode = #tpu.pipeline_mode<synchronous>, transform_indices = @transform_15, window_bounds = array<i64: 1024, 128>}, {pipeline_mode = #tpu.pipeline_mode<synchronous>, transform_indices = @transform_16, window_bounds = array<i64: 1, 128>}, {transform_indices = @transform_17, window_bounds = array<i64: 8, 128>}]} {
    %c0 = arith.constant 0 : index
    %c0_0 = arith.constant 0 : index
    %0 = vector.load %arg1[%c0, %c0_0] : memref<8x128xbf16, #tpu.memory_space<vmem>>, vector<8x128xbf16>
    %c0_1 = arith.constant 0 : index
    %c0_2 = arith.constant 0 : index
    %1 = vector.load %arg2[%c0_1, %c0_2] : memref<128x1024xbf16, #tpu.memory_space<vmem>>, vector<128x1024xbf16>
    %cst = arith.constant dense<0.000000e+00> : vector<8x1024xf32>
    %2 = tpu.matmul %0, %1, %cst {dimension_numbers = #tpu.dot_dimension_numbers<[1], [0], [0], [1], [0, 0, 1, 1], [], []>} : vector<8x128xbf16>, vector<128x1024xbf16>, vector<8x1024xf32> -> vector<8x1024xf32>
    %c0_3 = arith.constant 0 : index
    %c0_4 = arith.constant 0 : index
    %3 = vector.load %arg3[%c0_3, %c0_4] : memref<1x1024xf32, #tpu.memory_space<vmem>>, vector<1x1024xf32>
    %4 = vector.broadcast %3 : vector<1x1024xf32> to vector<8x1024xf32>
    %5 = arith.addf %2, %4 : vector<8x1024xf32>
    %cst_5 = arith.constant 0.000000e+00 : f32
    %6 = vector.broadcast %cst_5 : f32 to vector<8x1024xf32>
    %7 = arith.maximumf %5, %6 : vector<8x1024xf32>
    %8 = arith.truncf %7 : vector<8x1024xf32> to vector<8x1024xbf16>
    %c0_6 = arith.constant 0 : index
    %c0_7 = arith.constant 0 : index
    %9 = vector.load %arg4[%c0_6, %c0_7] : memref<1024x512xbf16, #tpu.memory_space<vmem>>, vector<1024x512xbf16>
    %cst_8 = arith.constant dense<0.000000e+00> : vector<8x512xf32>
    %10 = tpu.matmul %8, %9, %cst_8 {dimension_numbers = #tpu.dot_dimension_numbers<[1], [0], [0], [1], [0, 0, 1, 1], [], []>} : vector<8x1024xbf16>, vector<1024x512xbf16>, vector<8x512xf32> -> vector<8x512xf32>
    %c0_9 = arith.constant 0 : index
    %c0_10 = arith.constant 0 : index
    %11 = vector.load %arg5[%c0_9, %c0_10] : memref<1x512xf32, #tpu.memory_space<vmem>>, vector<1x512xf32>
    %12 = vector.broadcast %11 : vector<1x512xf32> to vector<8x512xf32>
    %13 = arith.addf %10, %12 : vector<8x512xf32>
    %cst_11 = arith.constant 0.000000e+00 : f32
    %14 = vector.broadcast %cst_11 : f32 to vector<8x512xf32>
    %15 = arith.maximumf %13, %14 : vector<8x512xf32>
    %16 = arith.truncf %15 : vector<8x512xf32> to vector<8x512xbf16>
    %c0_12 = arith.constant 0 : index
    %c0_13 = arith.constant 0 : index
    %17 = vector.load %arg6[%c0_12, %c0_13] : memref<512x256xbf16, #tpu.memory_space<vmem>>, vector<512x256xbf16>
    %cst_14 = arith.constant dense<0.000000e+00> : vector<8x256xf32>
    %18 = tpu.matmul %16, %17, %cst_14 {dimension_numbers = #tpu.dot_dimension_numbers<[1], [0], [0], [1], [0, 0, 1, 1], [], []>} : vector<8x512xbf16>, vector<512x256xbf16>, vector<8x256xf32> -> vector<8x256xf32>
    %c0_15 = arith.constant 0 : index
    %c0_16 = arith.constant 0 : index
    %19 = vector.load %arg7[%c0_15, %c0_16] : memref<1x256xf32, #tpu.memory_space<vmem>>, vector<1x256xf32>
    %20 = vector.broadcast %19 : vector<1x256xf32> to vector<8x256xf32>
    %21 = arith.addf %18, %20 : vector<8x256xf32>
    %cst_17 = arith.constant 0.000000e+00 : f32
    %22 = vector.broadcast %cst_17 : f32 to vector<8x256xf32>
    %23 = arith.maximumf %21, %22 : vector<8x256xf32>
    %24 = arith.truncf %23 : vector<8x256xf32> to vector<8x256xbf16>
    %c0_18 = arith.constant 0 : index
    %c0_19 = arith.constant 0 : index
    %25 = vector.load %arg8[%c0_18, %c0_19] : memref<256x128xbf16, #tpu.memory_space<vmem>>, vector<256x128xbf16>
    %cst_20 = arith.constant dense<0.000000e+00> : vector<8x128xf32>
    %26 = tpu.matmul %24, %25, %cst_20 {dimension_numbers = #tpu.dot_dimension_numbers<[1], [0], [0], [1], [0, 0, 1, 1], [], []>} : vector<8x256xbf16>, vector<256x128xbf16>, vector<8x128xf32> -> vector<8x128xf32>
    %c0_21 = arith.constant 0 : index
    %c0_22 = arith.constant 0 : index
    %27 = vector.load %arg9[%c0_21, %c0_22] : memref<1x128xf32, #tpu.memory_space<vmem>>, vector<1x128xf32>
    %28 = vector.broadcast %27 : vector<1x128xf32> to vector<8x128xf32>
    %29 = arith.addf %26, %28 : vector<8x128xf32>
    %30 = arith.truncf %29 : vector<8x128xf32> to vector<8x128xbf16>
    %c0_23 = arith.constant 0 : index
    %c0_24 = arith.constant 0 : index
    %31 = vector.load %arg10[%c0_23, %c0_24] : memref<128x256xbf16, #tpu.memory_space<vmem>>, vector<128x256xbf16>
    %cst_25 = arith.constant dense<0.000000e+00> : vector<8x256xf32>
    %32 = tpu.matmul %30, %31, %cst_25 {dimension_numbers = #tpu.dot_dimension_numbers<[1], [0], [0], [1], [0, 0, 1, 1], [], []>} : vector<8x128xbf16>, vector<128x256xbf16>, vector<8x256xf32> -> vector<8x256xf32>
    %c0_26 = arith.constant 0 : index
    %c0_27 = arith.constant 0 : index
    %33 = vector.load %arg11[%c0_26, %c0_27] : memref<1x256xf32, #tpu.memory_space<vmem>>, vector<1x256xf32>
    %34 = vector.broadcast %33 : vector<1x256xf32> to vector<8x256xf32>
    %35 = arith.addf %32, %34 : vector<8x256xf32>
    %cst_28 = arith.constant 0.000000e+00 : f32
    %36 = vector.broadcast %cst_28 : f32 to vector<8x256xf32>
    %37 = arith.maximumf %35, %36 : vector<8x256xf32>
    %38 = arith.truncf %37 : vector<8x256xf32> to vector<8x256xbf16>
    %c0_29 = arith.constant 0 : index
    %c0_30 = arith.constant 0 : index
    %39 = vector.load %arg12[%c0_29, %c0_30] : memref<256x512xbf16, #tpu.memory_space<vmem>>, vector<256x512xbf16>
    %cst_31 = arith.constant dense<0.000000e+00> : vector<8x512xf32>
    %40 = tpu.matmul %38, %39, %cst_31 {dimension_numbers = #tpu.dot_dimension_numbers<[1], [0], [0], [1], [0, 0, 1, 1], [], []>} : vector<8x256xbf16>, vector<256x512xbf16>, vector<8x512xf32> -> vector<8x512xf32>
    %c0_32 = arith.constant 0 : index
    %c0_33 = arith.constant 0 : index
    %41 = vector.load %arg13[%c0_32, %c0_33] : memref<1x512xf32, #tpu.memory_space<vmem>>, vector<1x512xf32>
    %42 = vector.broadcast %41 : vector<1x512xf32> to vector<8x512xf32>
    %43 = arith.addf %40, %42 : vector<8x512xf32>
    %cst_34 = arith.constant 0.000000e+00 : f32
    %44 = vector.broadcast %cst_34 : f32 to vector<8x512xf32>
    %45 = arith.maximumf %43, %44 : vector<8x512xf32>
    %46 = arith.truncf %45 : vector<8x512xf32> to vector<8x512xbf16>
    %c0_35 = arith.constant 0 : index
    %c0_36 = arith.constant 0 : index
    %47 = vector.load %arg14[%c0_35, %c0_36] : memref<512x1024xbf16, #tpu.memory_space<vmem>>, vector<512x1024xbf16>
    %cst_37 = arith.constant dense<0.000000e+00> : vector<8x1024xf32>
    %48 = tpu.matmul %46, %47, %cst_37 {dimension_numbers = #tpu.dot_dimension_numbers<[1], [0], [0], [1], [0, 0, 1, 1], [], []>} : vector<8x512xbf16>, vector<512x1024xbf16>, vector<8x1024xf32> -> vector<8x1024xf32>
    %c0_38 = arith.constant 0 : index
    %c0_39 = arith.constant 0 : index
    %49 = vector.load %arg15[%c0_38, %c0_39] : memref<1x1024xf32, #tpu.memory_space<vmem>>, vector<1x1024xf32>
    %50 = vector.broadcast %49 : vector<1x1024xf32> to vector<8x1024xf32>
    %51 = arith.addf %48, %50 : vector<8x1024xf32>
    %cst_40 = arith.constant 0.000000e+00 : f32
    %52 = vector.broadcast %cst_40 : f32 to vector<8x1024xf32>
    %53 = arith.maximumf %51, %52 : vector<8x1024xf32>
    %54 = arith.truncf %53 : vector<8x1024xf32> to vector<8x1024xbf16>
    %c0_41 = arith.constant 0 : index
    %c0_42 = arith.constant 0 : index
    %55 = vector.load %arg16[%c0_41, %c0_42] : memref<1024x128xbf16, #tpu.memory_space<vmem>>, vector<1024x128xbf16>
    %cst_43 = arith.constant dense<0.000000e+00> : vector<8x128xf32>
    %56 = tpu.matmul %54, %55, %cst_43 {dimension_numbers = #tpu.dot_dimension_numbers<[1], [0], [0], [1], [0, 0, 1, 1], [], []>} : vector<8x1024xbf16>, vector<1024x128xbf16>, vector<8x128xf32> -> vector<8x128xf32>
    %c0_44 = arith.constant 0 : index
    %c0_45 = arith.constant 0 : index
    %57 = vector.load %arg17[%c0_44, %c0_45] : memref<1x128xf32, #tpu.memory_space<vmem>>, vector<1x128xf32>
    %58 = vector.broadcast %57 : vector<1x128xf32> to vector<8x128xf32>
    %59 = arith.addf %56, %58 : vector<8x128xf32>
    %60 = arith.truncf %59 : vector<8x128xf32> to vector<8x128xbf16>
    %c0_46 = arith.constant 0 : index
    %c0_47 = arith.constant 0 : index
    %61 = vector.load %arg18[%c0_46, %c0_47] : memref<8x128xbf16, #tpu.memory_space<vmem>>, vector<8x128xbf16>
    tpu.vector_store %arg18[%c0_46, %c0_47], %60 {strides = array<i32>} : memref<8x128xbf16, #tpu.memory_space<vmem>>, vector<8x128xbf16>,
    return
  }
  func.func @transform_0(%arg0: i32) -> (i32, i32) {
    %c0_i32 = arith.constant 0 : i32
    %c0_i32_0 = arith.constant 0 : i32
    return %arg0, %c0_i32 : i32, i32
  }
  func.func @transform_1(%arg0: i32) -> (i32, i32) {
    %c0_i32 = arith.constant 0 : i32
    %c0_i32_0 = arith.constant 0 : i32
    %c0_i32_1 = arith.constant 0 : i32
    return %c0_i32, %c0_i32_0 : i32, i32
  }
  func.func @transform_2(%arg0: i32) -> (i32, i32) {
    %c0_i32 = arith.constant 0 : i32
    %c0_i32_0 = arith.constant 0 : i32
    %c0_i32_1 = arith.constant 0 : i32
    return %c0_i32, %c0_i32_0 : i32, i32
  }
  func.func @transform_3(%arg0: i32) -> (i32, i32) {
    %c0_i32 = arith.constant 0 : i32
    %c0_i32_0 = arith.constant 0 : i32
    %c0_i32_1 = arith.constant 0 : i32
    return %c0_i32, %c0_i32_0 : i32, i32
  }
  func.func @transform_4(%arg0: i32) -> (i32, i32) {
    %c0_i32 = arith.constant 0 : i32
    %c0_i32_0 = arith.constant 0 : i32
    %c0_i32_1 = arith.constant 0 : i32
    return %c0_i32, %c0_i32_0 : i32, i32
  }
  func.func @transform_5(%arg0: i32) -> (i32, i32) {
    %c0_i32 = arith.constant 0 : i32
    %c0_i32_0 = arith.constant 0 : i32
    %c0_i32_1 = arith.constant 0 : i32
    return %c0_i32, %c0_i32_0 : i32, i32
  }
  func.func @transform_6(%arg0: i32) -> (i32, i32) {
    %c0_i32 = arith.constant 0 : i32
    %c0_i32_0 = arith.constant 0 : i32
    %c0_i32_1 = arith.constant 0 : i32
    return %c0_i32, %c0_i32_0 : i32, i32
  }
  func.func @transform_7(%arg0: i32) -> (i32, i32) {
    %c0_i32 = arith.constant 0 : i32
    %c0_i32_0 = arith.constant 0 : i32
    %c0_i32_1 = arith.constant 0 : i32
    return %c0_i32, %c0_i32_0 : i32, i32
  }
  func.func @transform_8(%arg0: i32) -> (i32, i32) {
    %c0_i32 = arith.constant 0 : i32
    %c0_i32_0 = arith.constant 0 : i32
    %c0_i32_1 = arith.constant 0 : i32
    return %c0_i32, %c0_i32_0 : i32, i32
  }
  func.func @transform_9(%arg0: i32) -> (i32, i32) {
    %c0_i32 = arith.constant 0 : i32
    %c0_i32_0 = arith.constant 0 : i32
    %c0_i32_1 = arith.constant 0 : i32
    return %c0_i32, %c0_i32_0 : i32, i32
  }
  func.func @transform_10(%arg0: i32) -> (i32, i32) {
    %c0_i32 = arith.constant 0 : i32
    %c0_i32_0 = arith.constant 0 : i32
    %c0_i32_1 = arith.constant 0 : i32
    return %c0_i32, %c0_i32_0 : i32, i32
  }
  func.func @transform_11(%arg0: i32) -> (i32, i32) {
    %c0_i32 = arith.constant 0 : i32
    %c0_i32_0 = arith.constant 0 : i32
    %c0_i32_1 = arith.constant 0 : i32
    return %c0_i32, %c0_i32_0 : i32, i32
  }
  func.func @transform_12(%arg0: i32) -> (i32, i32) {
    %c0_i32 = arith.constant 0 : i32
    %c0_i32_0 = arith.constant 0 : i32
    %c0_i32_1 = arith.constant 0 : i32
    return %c0_i32, %c0_i32_0 : i32, i32
  }
  func.func @transform_13(%arg0: i32) -> (i32, i32) {
    %c0_i32 = arith.constant 0 : i32
    %c0_i32_0 = arith.constant 0 : i32
    %c0_i32_1 = arith.constant 0 : i32
    return %c0_i32, %c0_i32_0 : i32, i32
  }
  func.func @transform_14(%arg0: i32) -> (i32, i32) {
    %c0_i32 = arith.constant 0 : i32
    %c0_i32_0 = arith.constant 0 : i32
    %c0_i32_1 = arith.constant 0 : i32
    return %c0_i32, %c0_i32_0 : i32, i32
  }
  func.func @transform_15(%arg0: i32) -> (i32, i32) {
    %c0_i32 = arith.constant 0 : i32
    %c0_i32_0 = arith.constant 0 : i32
    %c0_i32_1 = arith.constant 0 : i32
    return %c0_i32, %c0_i32_0 : i32, i32
  }
  func.func @transform_16(%arg0: i32) -> (i32, i32) {
    %c0_i32 = arith.constant 0 : i32
    %c0_i32_0 = arith.constant 0 : i32
    %c0_i32_1 = arith.constant 0 : i32
    return %c0_i32, %c0_i32_0 : i32, i32
  }
  func.func @transform_17(%arg0: i32) -> (i32, i32) {
    %c0_i32 = arith.constant 0 : i32
    %c0_i32_0 = arith.constant 0 : i32
    return %arg0, %c0_i32 : i32, i32
  }
}

</mosaic_0001>

<llo_original>
// kernel: tpu_custom_call.1
$region0: #{tpu_custom_call.1}
  #allocation0 [shape = 'u32[]', space=smem, size = 0x4, offset = 0x4, fixed_abs, tag = 'smem constant byte address 0x4 - core index']
  #allocation1 [shape = 'u32[144,128]{1,0:T(1,128)}', space=vmem, size = 0x12000, scoped, tag = 'internal scratch']
  %s0 = inlined_call_operand.hbm [shape: bf16[8,128], index: 0, kind: input, shape index: {}]
  %s1 = inlined_call_operand.hbm [shape: bf16[128,1024], index: 1, kind: input, shape index: {}]
  %s2 = inlined_call_operand.hbm [shape: f32[1,1024], index: 2, kind: input, shape index: {}]
  %s3 = inlined_call_operand.hbm [shape: bf16[1024,512], index: 3, kind: input, shape index: {}]
  %s4 = inlined_call_operand.vmem [shape: f32[1,512], index: 4, kind: input, shape index: {}]
  %s5 = inlined_call_operand.hbm [shape: bf16[512,256], index: 5, kind: input, shape index: {}]
  %s6 = inlined_call_operand.vmem [shape: f32[1,256], index: 6, kind: input, shape index: {}]
  %s7 = inlined_call_operand.hbm [shape: bf16[256,128], index: 7, kind: input, shape index: {}]
  %s8 = inlined_call_operand.vmem [shape: f32[1,128], index: 8, kind: input, shape index: {}]
  %s9 = inlined_call_operand.hbm [shape: bf16[128,256], index: 9, kind: input, shape index: {}]
  %s10 = inlined_call_operand.vmem [shape: f32[1,256], index: 10, kind: input, shape index: {}]
  %s11 = inlined_call_operand.hbm [shape: bf16[256,512], index: 11, kind: input, shape index: {}]
  %s12 = inlined_call_operand.vmem [shape: f32[1,512], index: 12, kind: input, shape index: {}]
  %s13 = inlined_call_operand.hbm [shape: bf16[512,1024], index: 13, kind: input, shape index: {}]
  %s14 = inlined_call_operand.vmem [shape: f32[1,1024], index: 14, kind: input, shape index: {}]
  %s15 = inlined_call_operand.hbm [shape: bf16[1024,128], index: 15, kind: input, shape index: {}]
  %s16 = inlined_call_operand.vmem [shape: f32[1,128], index: 16, kind: input, shape index: {}]
  %s17 = inlined_call_operand.hbm [shape: bf16[8,128], index: 17, kind: output, shape index: {}]
  %s18 = sld [smem:[#allocation0]]
  $region118: #{tpu_custom_call.1} parent=0
    _
  %s20 = ssub.s32 1, %s18
  %s21 = scalar_select 0, %s20, %s18
  $region1: #{tpu_custom_call.1} parent=0
    #allocation2 [shape = 'u8[2048]{0}', space=vmem, size = 0x800, scoped, tag = 'input window, operand 0, single buffered']
    #allocation3 [shape = 's32[1]{0}', space=sflag, size = 0x4, scoped, tag = 'scoped memory for tpu_custom_call.1']
    #allocation4 [shape = 's32[1]{0}', space=sflag, size = 0x4, scoped, tag = 'scoped memory for tpu_custom_call.1']
    #allocation5 [shape = 'u8[262144]{0}', space=vmem, size = 0x40000, scoped, tag = 'input window, operand 1, single buffered']
    #allocation6 [shape = 's32[1]{0}', space=sflag, size = 0x4, scoped, tag = 'scoped memory for tpu_custom_call.1']
    #allocation7 [shape = 'u8[4096]{0}', space=vmem, size = 0x1000, scoped, tag = 'input window, operand 2, single buffered']
    #allocation8 [shape = 'u8[1048576]{0}', space=vmem, size = 0x100000, scoped, tag = 'input window, operand 3, single buffered']
    #allocation9 [shape = 's32[1]{0}', space=sflag, size = 0x4, scoped, tag = 'scoped memory for tpu_custom_call.1']
    #allocation10 [shape = 'u8[262144]{0}', space=vmem, size = 0x40000, scoped, tag = 'input window, operand 5, single buffered']
    #allocation11 [shape = 'u8[65536]{0}', space=vmem, size = 0x10000, scoped, tag = 'input window, operand 7, single buffered']
    #allocation12 [shape = 's32[1]{0}', space=sflag, size = 0x4, scoped, tag = 'scoped memory for tpu_custom_call.1']
    #allocation13 [shape = 'u8[65536]{0}', space=vmem, size = 0x10000, scoped, tag = 'input window, operand 9, single buffered']
    #allocation14 [shape = 'u8[262144]{0}', space=vmem, size = 0x40000, scoped, tag = 'input window, operand 11, single buffered']
    #allocation15 [shape = 's32[1]{0}', space=sflag, size = 0x4, scoped, tag = 'scoped memory for tpu_custom_call.1']
    #allocation16 [shape = 'u8[1048576]{0}', space=vmem, size = 0x100000, scoped, tag = 'input window, operand 13, single buffered']
    #allocation17 [shape = 'u8[262144]{0}', space=vmem, size = 0x40000, scoped, tag = 'input window, operand 15, single buffered']
    #allocation18 [shape = 's32[1]{0}', space=sflag, size = 0x4, scoped, tag = 'scoped memory for tpu_custom_call.1']
    #allocation19 [shape = 'u8[2048]{0}', space=vmem, size = 0x800, scoped, tag = 'output window, operand 0, single buffered']
    %22 = vsyncpa [#allocation3], 0
    %23 = vsyncpa [#allocation6], 0
    %24 = vsyncpa [#allocation9], 0
    %25 = vsyncpa [#allocation12], 0
    %26 = vsyncpa [#allocation15], 0
    %27 = vsyncpa [#allocation18], 0
    %28 = vsyncpa [#allocation4], 0
    // Predicated region
    $region2: #{tpu_custom_call.1} parent=1 // pred_check
      _
    $region3: #{tpu_custom_call.1} parent=1 // pred_check_branch
      %30 = sbr.rel (0) target = $region5
    $region4: #{tpu_custom_call.1} parent=1 // pred_region
      %s32 = ssub.s32 64, 64
      %33 = vsyncadd [#allocation3], %s32
      %s35 = sshll.u32 [#allocation2], 4
      %s36 = int_to_ptr.vmem [resolvable:$true] %s35
      %38 = dma.hbm_to_vmem [thread:$0]  %s0, 64, %s36, [#allocation3]
    $region5: #{tpu_custom_call.1} parent=1 // pred_fallthru
      _
    // Predicated region
    $region6: #{tpu_custom_call.1} parent=1 // pred_check
      _
    $region7: #{tpu_custom_call.1} parent=1 // pred_check_branch
      %40 = sbr.rel (0) target = $region9
    $region8: #{tpu_custom_call.1} parent=1 // pred_region
      %s42 = ssub.s32 8192, 8192
      %43 = vsyncadd [#allocation6], %s42
      %s44 = sshll.u32 [#allocation5], 4
      %s45 = int_to_ptr.vmem [resolvable:$true] %s44
      %50 = dma.hbm_to_vmem [thread:$0]  %s1, 8192, %s45, [#allocation6], 512, 512, 32
    $region9: #{tpu_custom_call.1} parent=1 // pred_fallthru
      _
    // Predicated region
    $region10: #{tpu_custom_call.1} parent=1 // pred_check
      _
    $region11: #{tpu_custom_call.1} parent=1 // pred_check_branch
      %52 = sbr.rel (0) target = $region13
    $region12: #{tpu_custom_call.1} parent=1 // pred_region
      %s54 = ssub.s32 128, 128
      %55 = vsyncadd [#allocation6], %s54
      %s57 = sshll.u32 [#allocation7], 4
      %s58 = int_to_ptr.vmem [resolvable:$true] %s57
      %60 = dma.hbm_to_vmem [thread:$0]  %s2, 128, %s58, [#allocation6]
    $region13: #{tpu_custom_call.1} parent=1 // pred_fallthru
      _
    // Predicated region
    $region14: #{tpu_custom_call.1} parent=1 // pred_check
      _
    $region15: #{tpu_custom_call.1} parent=1 // pred_check_branch
      %62 = sbr.rel (0) target = $region17
    $region16: #{tpu_custom_call.1} parent=1 // pred_region
      %s64 = ssub.s32 32768, 32768
      %65 = vsyncadd [#allocation9], %s64
      %s66 = sshll.u32 [#allocation8], 4
      %s67 = int_to_ptr.vmem [resolvable:$true] %s66
      %72 = dma.hbm_to_vmem [thread:$0]  %s3, 32768, %s67, [#allocation9], 256, 256, 16
    $region17: #{tpu_custom_call.1} parent=1 // pred_fallthru
      _
    // Predicated region
    $region18: #{tpu_custom_call.1} parent=1 // pred_check
      _
    $region19: #{tpu_custom_call.1} parent=1 // pred_check_branch
      %74 = sbr.rel (0) target = $region21
    $region20: #{tpu_custom_call.1} parent=1 // pred_region
      _
    $region21: #{tpu_custom_call.1} parent=1 // pred_fallthru
      _
    // Predicated region
    $region22: #{tpu_custom_call.1} parent=1 // pred_check
      _
    $region23: #{tpu_custom_call.1} parent=1 // pred_check_branch
      %76 = sbr.rel (0) target = $region25
    $region24: #{tpu_custom_call.1} parent=1 // pred_region
      %s78 = ssub.s32 8192, 8192
      %79 = vsyncadd [#allocation9], %s78
      %s80 = sshll.u32 [#allocation10], 4
      %s81 = int_to_ptr.vmem [resolvable:$true] %s80
      %86 = dma.hbm_to_vmem [thread:$0]  %s5, 8192, %s81, [#allocation9], 128, 128, 8
    $region25: #{tpu_custom_call.1} parent=1 // pred_fallthru
      _
    // Predicated region
    $region26: #{tpu_custom_call.1} parent=1 // pred_check
      _
    $region27: #{tpu_custom_call.1} parent=1 // pred_check_branch
      %88 = sbr.rel (0) target = $region29
    $region28: #{tpu_custom_call.1} parent=1 // pred_region
      _
    $region29: #{tpu_custom_call.1} parent=1 // pred_fallthru
      _
    // Predicated region
    $region30: #{tpu_custom_call.1} parent=1 // pred_check
      _
    $region31: #{tpu_custom_call.1} parent=1 // pred_check_branch
      %90 = sbr.rel (0) target = $region33
    $region32: #{tpu_custom_call.1} parent=1 // pred_region
      %s92 = ssub.s32 2048, 2048
      %93 = vsyncadd [#allocation12], %s92
      %s94 = sshll.u32 [#allocation11], 4
      %s95 = int_to_ptr.vmem [resolvable:$true] %s94
      %100 = dma.hbm_to_vmem [thread:$0]  %s7, 2048, %s95, [#allocation12], 64, 64, 4
    $region33: #{tpu_custom_call.1} parent=1 // pred_fallthru
      _
    // Predicated region
    $region34: #{tpu_custom_call.1} parent=1 // pred_check
      _
    $region35: #{tpu_custom_call.1} parent=1 // pred_check_branch
      %102 = sbr.rel (0) target = $region37
    $region36: #{tpu_custom_call.1} parent=1 // pred_region
      _
    $region37: #{tpu_custom_call.1} parent=1 // pred_fallthru
      _
    // Predicated region
    $region38: #{tpu_custom_call.1} parent=1 // pred_check
      _
    $region39: #{tpu_custom_call.1} parent=1 // pred_check_branch
      %104 = sbr.rel (0) target = $region41
    $region40: #{tpu_custom_call.1} parent=1 // pred_region
      %s106 = ssub.s32 2048, 2048
      %107 = vsyncadd [#allocation12], %s106
      %s108 = sshll.u32 [#allocation13], 4
      %s109 = int_to_ptr.vmem [resolvable:$true] %s108
      %114 = dma.hbm_to_vmem [thread:$0]  %s9, 2048, %s109, [#allocation12], 128, 128, 8
    $region41: #{tpu_custom_call.1} parent=1 // pred_fallthru
      _
    // Predicated region
    $region42: #{tpu_custom_call.1} parent=1 // pred_check
      _
    $region43: #{tpu_custom_call.1} parent=1 // pred_check_branch
      %116 = sbr.rel (0) target = $region45
    $region44: #{tpu_custom_call.1} parent=1 // pred_region
      _
    $region45: #{tpu_custom_call.1} parent=1 // pred_fallthru
      _
    // Predicated region
    $region46: #{tpu_custom_call.1} parent=1 // pred_check
      _
    $region47: #{tpu_custom_call.1} parent=1 // pred_check_branch
      %118 = sbr.rel (0) target = $region49
    $region48: #{tpu_custom_call.1} parent=1 // pred_region
      %s120 = ssub.s32 8192, 8192
      %121 = vsyncadd [#allocation15], %s120
      %s122 = sshll.u32 [#allocation14], 4
      %s123 = int_to_ptr.vmem [resolvable:$true] %s122
      %128 = dma.hbm_to_vmem [thread:$0]  %s11, 8192, %s123, [#allocation15], 256, 256, 16
    $region49: #{tpu_custom_call.1} parent=1 // pred_fallthru
      _
    // Predicated region
    $region50: #{tpu_custom_call.1} parent=1 // pred_check
      _
    $region51: #{tpu_custom_call.1} parent=1 // pred_check_branch
      %130 = sbr.rel (0) target = $region53
    $region52: #{tpu_custom_call.1} parent=1 // pred_region
      _
    $region53: #{tpu_custom_call.1} parent=1 // pred_fallthru
      _
    // Predicated region
    $region54: #{tpu_custom_call.1} parent=1 // pred_check
      _
    $region55: #{tpu_custom_call.1} parent=1 // pred_check_branch
      %132 = sbr.rel (0) target = $region57
    $region56: #{tpu_custom_call.1} parent=1 // pred_region
      %s134 = ssub.s32 32768, 32768
      %135 = vsyncadd [#allocation15], %s134
      %s136 = sshll.u32 [#allocation16], 4
      %s137 = int_to_ptr.vmem [resolvable:$true] %s136
      %142 = dma.hbm_to_vmem [thread:$0]  %s13, 32768, %s137, [#allocation15], 512, 512, 32
    $region57: #{tpu_custom_call.1} parent=1 // pred_fallthru
      _
    // Predicated region
    $region58: #{tpu_custom_call.1} parent=1 // pred_check
      _
    $region59: #{tpu_custom_call.1} parent=1 // pred_check_branch
      %144 = sbr.rel (0) target = $region61
    $region60: #{tpu_custom_call.1} parent=1 // pred_region
      _
    $region61: #{tpu_custom_call.1} parent=1 // pred_fallthru
      _
    // Predicated region
    $region62: #{tpu_custom_call.1} parent=1 // pred_check
      _
    $region63: #{tpu_custom_call.1} parent=1 // pred_check_branch
      %146 = sbr.rel (0) target = $region65
    $region64: #{tpu_custom_call.1} parent=1 // pred_region
      %s148 = ssub.s32 8192, 8192
      %149 = vsyncadd [#allocation18], %s148
      %s150 = sshll.u32 [#allocation17], 4
      %s151 = int_to_ptr.vmem [resolvable:$true] %s150
      %156 = dma.hbm_to_vmem [thread:$0]  %s15, 8192, %s151, [#allocation18], 64, 64, 4
    $region65: #{tpu_custom_call.1} parent=1 // pred_fallthru
      _
    // Predicated region
    $region66: #{tpu_custom_call.1} parent=1 // pred_check
      _
    $region67: #{tpu_custom_call.1} parent=1 // pred_check_branch
      %158 = sbr.rel (0) target = $region69
    $region68: #{tpu_custom_call.1} parent=1 // pred_region
      _
    $region69: #{tpu_custom_call.1} parent=1 // pred_fallthru
      _
    // Predicated region
    $region70: #{tpu_custom_call.1} parent=1 // pred_check
      _
    $region71: #{tpu_custom_call.1} parent=1 // pred_check_branch
      %160 = sbr.rel (0) target = $region73
    $region72: #{tpu_custom_call.1} parent=1 // pred_region
      %161 = dma.done [#allocation3], 64
    $region73: #{tpu_custom_call.1} parent=1 // pred_fallthru
      _
    // Predicated region
    $region74: #{tpu_custom_call.1} parent=1 // pred_check
      _
    $region75: #{tpu_custom_call.1} parent=1 // pred_check_branch
      %163 = sbr.rel (0) target = $region77
    $region76: #{tpu_custom_call.1} parent=1 // pred_region
      %164 = dma.done [#allocation6], 8192
    $region77: #{tpu_custom_call.1} parent=1 // pred_fallthru
      _
    // Predicated region
    $region78: #{tpu_custom_call.1} parent=1 // pred_check
      _
    $region79: #{tpu_custom_call.1} parent=1 // pred_check_branch
      %166 = sbr.rel (0) target = $region81
    $region80: #{tpu_custom_call.1} parent=1 // pred_region
      %167 = dma.done [#allocation6], 128
    $region81: #{tpu_custom_call.1} parent=1 // pred_fallthru
      _
    // Predicated region
    $region82: #{tpu_custom_call.1} parent=1 // pred_check
      _
    $region83: #{tpu_custom_call.1} parent=1 // pred_check_branch
      %169 = sbr.rel (0) target = $region85
    $region84: #{tpu_custom_call.1} parent=1 // pred_region
      %170 = dma.done [#allocation9], 32768
    $region85: #{tpu_custom_call.1} parent=1 // pred_fallthru
      _
    // Predicated region
    $region86: #{tpu_custom_call.1} parent=1 // pred_check
      _
    $region87: #{tpu_custom_call.1} parent=1 // pred_check_branch
      %172 = sbr.rel (0) target = $region89
    $region88: #{tpu_custom_call.1} parent=1 // pred_region
      %173 = dma.done [#allocation9], 8192
    $region89: #{tpu_custom_call.1} parent=1 // pred_fallthru
      _
    // Predicated region
    $region90: #{tpu_custom_call.1} parent=1 // pred_check
      _
    $region91: #{tpu_custom_call.1} parent=1 // pred_check_branch
      %175 = sbr.rel (0) target = $region93
    $region92: #{tpu_custom_call.1} parent=1 // pred_region
      %176 = dma.done [#allocation12], 2048
    $region93: #{tpu_custom_call.1} parent=1 // pred_fallthru
      _
    // Predicated region
    $region94: #{tpu_custom_call.1} parent=1 // pred_check
      _
    $region95: #{tpu_custom_call.1} parent=1 // pred_check_branch
      %178 = sbr.rel (0) target = $region97
    $region96: #{tpu_custom_call.1} parent=1 // pred_region
      %179 = dma.done [#allocation12], 2048
    $region97: #{tpu_custom_call.1} parent=1 // pred_fallthru
      _
    // Predicated region
    $region98: #{tpu_custom_call.1} parent=1 // pred_check
      _
    $region99: #{tpu_custom_call.1} parent=1 // pred_check_branch
      %181 = sbr.rel (0) target = $region101
    $region100: #{tpu_custom_call.1} parent=1 // pred_region
      %182 = dma.done [#allocation15], 8192
    $region101: #{tpu_custom_call.1} parent=1 // pred_fallthru
      _
    // Predicated region
    $region102: #{tpu_custom_call.1} parent=1 // pred_check
      _
    $region103: #{tpu_custom_call.1} parent=1 // pred_check_branch
      %184 = sbr.rel (0) target = $region105
    $region104: #{tpu_custom_call.1} parent=1 // pred_region
      %185 = dma.done [#allocation15], 32768
    $region105: #{tpu_custom_call.1} parent=1 // pred_fallthru
      _
    // Predicated region
    $region106: #{tpu_custom_call.1} parent=1 // pred_check
      _
    $region107: #{tpu_custom_call.1} parent=1 // pred_check_branch
      %187 = sbr.rel (0) target = $region109
    $region108: #{tpu_custom_call.1} parent=1 // pred_region
      %188 = dma.done [#allocation18], 8192
    $region109: #{tpu_custom_call.1} parent=1 // pred_fallthru
      _
    %v190 = vld [vmem:[#allocation2] sm:$0xf]
    %v191 = vld [vmem:[#allocation5] sm:$0xff]
    %v192 = vld [vmem:[#allocation5 + $0x8] sm:$0xff]
    %v193 = vld [vmem:[#allocation5 + $0x10] sm:$0xff]
    %v194 = vld [vmem:[#allocation5 + $0x18] sm:$0xff]
    %v195 = vld [vmem:[#allocation5 + $0x20] sm:$0xff]
    %v196 = vld [vmem:[#allocation5 + $0x28] sm:$0xff]
    %v197 = vld [vmem:[#allocation5 + $0x30] sm:$0xff]
    %v198 = vld [vmem:[#allocation5 + $0x38] sm:$0xff]
    %v199 = vld [vmem:[#allocation5 + $0x40] sm:$0xff]
    %v200 = vld [vmem:[#allocation5 + $0x48] sm:$0xff]
    %v201 = vld [vmem:[#allocation5 + $0x50] sm:$0xff]
    %v202 = vld [vmem:[#allocation5 + $0x58] sm:$0xff]
    %v203 = vld [vmem:[#allocation5 + $0x60] sm:$0xff]
    %v204 = vld [vmem:[#allocation5 + $0x68] sm:$0xff]
    %v205 = vld [vmem:[#allocation5 + $0x70] sm:$0xff]
    %v206 = vld [vmem:[#allocation5 + $0x78] sm:$0xff]
    %v207 = vld [vmem:[#allocation5 + $0x80] sm:$0xff]
    %v208 = vld [vmem:[#allocation5 + $0x88] sm:$0xff]
    %v209 = vld [vmem:[#allocation5 + $0x90] sm:$0xff]
    %v210 = vld [vmem:[#allocation5 + $0x98] sm:$0xff]
    %v211 = vld [vmem:[#allocation5 + $0xa0] sm:$0xff]
    %v212 = vld [vmem:[#allocation5 + $0xa8] sm:$0xff]
    %v213 = vld [vmem:[#allocation5 + $0xb0] sm:$0xff]
    %v214 = vld [vmem:[#allocation5 + $0xb8] sm:$0xff]
    %v215 = vld [vmem:[#allocation5 + $0xc0] sm:$0xff]
    %v216 = vld [vmem:[#allocation5 + $0xc8] sm:$0xff]
    %v217 = vld [vmem:[#allocation5 + $0xd0] sm:$0xff]
    %v218 = vld [vmem:[#allocation5 + $0xd8] sm:$0xff]
    %v219 = vld [vmem:[#allocation5 + $0xe0] sm:$0xff]
    %v220 = vld [vmem:[#allocation5 + $0xe8] sm:$0xff]
    %v221 = vld [vmem:[#allocation5 + $0xf0] sm:$0xff]
    %v222 = vld [vmem:[#allocation5 + $0xf8] sm:$0xff]
    %v223 = vld [vmem:[#allocation5 + $0x100] sm:$0xff]
    %v224 = vld [vmem:[#allocation5 + $0x108] sm:$0xff]
    %v225 = vld [vmem:[#allocation5 + $0x110] sm:$0xff]
    %v226 = vld [vmem:[#allocation5 + $0x118] sm:$0xff]
    %v227 = vld [vmem:[#allocation5 + $0x120] sm:$0xff]
    %v228 = vld [vmem:[#allocation5 + $0x128] sm:$0xff]
    %v229 = vld [vmem:[#allocation5 + $0x130] sm:$0xff]
    %v230 = vld [vmem:[#allocation5 + $0x138] sm:$0xff]
    %v231 = vld [vmem:[#allocation5 + $0x140] sm:$0xff]
    %v232 = vld [vmem:[#allocation5 + $0x148] sm:$0xff]
    %v233 = vld [vmem:[#allocation5 + $0x150] sm:$0xff]
    %v234 = vld [vmem:[#allocation5 + $0x158] sm:$0xff]
    %v235 = vld [vmem:[#allocation5 + $0x160] sm:$0xff]
    %v236 = vld [vmem:[#allocation5 + $0x168] sm:$0xff]
    %v237 = vld [vmem:[#allocation5 + $0x170] sm:$0xff]
    %v238 = vld [vmem:[#allocation5 + $0x178] sm:$0xff]
    %v239 = vld [vmem:[#allocation5 + $0x180] sm:$0xff]
    %v240 = vld [vmem:[#allocation5 + $0x188] sm:$0xff]
    %v241 = vld [vmem:[#allocation5 + $0x190] sm:$0xff]
    %v242 = vld [vmem:[#allocation5 + $0x198] sm:$0xff]
    %v243 = vld [vmem:[#allocation5 + $0x1a0] sm:$0xff]
    %v244 = vld [vmem:[#allocation5 + $0x1a8] sm:$0xff]
    %v245 = vld [vmem:[#allocation5 + $0x1b0] sm:$0xff]
    %v246 = vld [vmem:[#allocation5 + $0x1b8] sm:$0xff]
    %v247 = vld [vmem:[#allocation5 + $0x1c0] sm:$0xff]
    %v248 = vld [vmem:[#allocation5 + $0x1c8] sm:$0xff]
    %v249 = vld [vmem:[#allocation5 + $0x1d0] sm:$0xff]
    %v250 = vld [vmem:[#allocation5 + $0x1d8] sm:$0xff]
    %v251 = vld [vmem:[#allocation5 + $0x1e0] sm:$0xff]
    %v252 = vld [vmem:[#allocation5 + $0x1e8] sm:$0xff]
    %v253 = vld [vmem:[#allocation5 + $0x1f0] sm:$0xff]
    %v254 = vld [vmem:[#allocation5 + $0x1f8] sm:$0xff]
    %v255 = vld [vmem:[#allocation7] sm:$0xff]
    %v257 = vlaneseq
    %v258 = vshrl.u32 %v257, 7
    %v259 = vsub.s32 0, %v258
    %v260 = vrot.slane %v255, %v259
    %v261 = vlaneseq
    %v262 = vshrl.u32 %v261, 7
    %v263 = vsub.s32 1, %v262
    %v264 = vrot.slane %v255, %v263
    %v265 = vlaneseq
    %v266 = vshrl.u32 %v265, 7
    %v267 = vsub.s32 2, %v266
    %v268 = vrot.slane %v255, %v267
    %v269 = vlaneseq
    %v270 = vshrl.u32 %v269, 7
    %v271 = vsub.s32 3, %v270
    %v272 = vrot.slane %v255, %v271
    %v273 = vlaneseq
    %v274 = vshrl.u32 %v273, 7
    %v275 = vsub.s32 4, %v274
    %v276 = vrot.slane %v255, %v275
    %v277 = vlaneseq
    %v278 = vshrl.u32 %v277, 7
    %v279 = vsub.s32 5, %v278
    %v280 = vrot.slane %v255, %v279
    %v281 = vlaneseq
    %v282 = vshrl.u32 %v281, 7
    %v283 = vsub.s32 6, %v282
    %v284 = vrot.slane %v255, %v283
    %v285 = vlaneseq
    %v286 = vshrl.u32 %v285, 7
    %v287 = vsub.s32 7, %v286
    %v288 = vrot.slane %v255, %v287
    %v361 = vunpack.c.l.b16 %v191
    %v362 = vunpack.c.h.b16 %v191
    %v363 = vunpack.c.l.b16 %v192
    %v364 = vunpack.c.h.b16 %v192
    %v365 = vunpack.c.l.b16 %v193
    %v366 = vunpack.c.h.b16 %v193
    %v367 = vunpack.c.l.b16 %v194
    %v368 = vunpack.c.h.b16 %v194
    %v369 = vunpack.c.l.b16 %v195
    %v370 = vunpack.c.h.b16 %v195
    %v371 = vunpack.c.l.b16 %v196
    %v372 = vunpack.c.h.b16 %v196
    %v373 = vunpack.c.l.b16 %v197
    %v374 = vunpack.c.h.b16 %v197
    %v375 = vunpack.c.l.b16 %v198
    %v376 = vunpack.c.h.b16 %v198
    %v377 = vunpack.c.l.b16 %v199
    %v378 = vunpack.c.h.b16 %v199
    %v379 = vunpack.c.l.b16 %v200
    %v380 = vunpack.c.h.b16 %v200
    %v381 = vunpack.c.l.b16 %v201
    %v382 = vunpack.c.h.b16 %v201
    %v383 = vunpack.c.l.b16 %v202
    %v384 = vunpack.c.h.b16 %v202
    %v385 = vunpack.c.l.b16 %v203
    %v386 = vunpack.c.h.b16 %v203
    %v387 = vunpack.c.l.b16 %v204
    %v388 = vunpack.c.h.b16 %v204
    %v389 = vunpack.c.l.b16 %v205
    %v390 = vunpack.c.h.b16 %v205
    %v391 = vunpack.c.l.b16 %v206
    %v392 = vunpack.c.h.b16 %v206
    %v393 = vunpack.c.l.b16 %v207
    %v394 = vunpack.c.h.b16 %v207
    %v395 = vunpack.c.l.b16 %v208
    %v396 = vunpack.c.h.b16 %v208
    %v397 = vunpack.c.l.b16 %v209
    %v398 = vunpack.c.h.b16 %v209
    %v399 = vunpack.c.l.b16 %v210
    %v400 = vunpack.c.h.b16 %v210
    %v401 = vunpack.c.l.b16 %v211
    %v402 = vunpack.c.h.b16 %v211
    %v403 = vunpack.c.l.b16 %v212
    %v404 = vunpack.c.h.b16 %v212
    %v405 = vunpack.c.l.b16 %v213
    %v406 = vunpack.c.h.b16 %v213
    %v407 = vunpack.c.l.b16 %v214
    %v408 = vunpack.c.h.b16 %v214
    %v409 = vunpack.c.l.b16 %v215
    %v410 = vunpack.c.h.b16 %v215
    %v411 = vunpack.c.l.b16 %v216
    %v412 = vunpack.c.h.b16 %v216
    %v413 = vunpack.c.l.b16 %v217
    %v414 = vunpack.c.h.b16 %v217
    %v415 = vunpack.c.l.b16 %v218
    %v416 = vunpack.c.h.b16 %v218
    %v417 = vunpack.c.l.b16 %v219
    %v418 = vunpack.c.h.b16 %v219
    %v419 = vunpack.c.l.b16 %v220
    %v420 = vunpack.c.h.b16 %v220
    %v421 = vunpack.c.l.b16 %v221
    %v422 = vunpack.c.h.b16 %v221
    %v423 = vunpack.c.l.b16 %v222
    %v424 = vunpack.c.h.b16 %v222
    %v425 = vunpack.c.l.b16 %v223
    %v426 = vunpack.c.h.b16 %v223
    %v427 = vunpack.c.l.b16 %v224
    %v428 = vunpack.c.h.b16 %v224
    %v429 = vunpack.c.l.b16 %v225
    %v430 = vunpack.c.h.b16 %v225
    %v431 = vunpack.c.l.b16 %v226
    %v432 = vunpack.c.h.b16 %v226
    %v433 = vunpack.c.l.b16 %v227
    %v434 = vunpack.c.h.b16 %v227
    %v435 = vunpack.c.l.b16 %v228
    %v436 = vunpack.c.h.b16 %v228
    %v437 = vunpack.c.l.b16 %v229
    %v438 = vunpack.c.h.b16 %v229
    %v439 = vunpack.c.l.b16 %v230
    %v440 = vunpack.c.h.b16 %v230
    %v441 = vunpack.c.l.b16 %v231
    %v442 = vunpack.c.h.b16 %v231
    %v443 = vunpack.c.l.b16 %v232
    %v444 = vunpack.c.h.b16 %v232
    %v445 = vunpack.c.l.b16 %v233
    %v446 = vunpack.c.h.b16 %v233
    %v447 = vunpack.c.l.b16 %v234
    %v448 = vunpack.c.h.b16 %v234
    %v449 = vunpack.c.l.b16 %v235
    %v450 = vunpack.c.h.b16 %v235
    %v451 = vunpack.c.l.b16 %v236
    %v452 = vunpack.c.h.b16 %v236
    %v453 = vunpack.c.l.b16 %v237
    %v454 = vunpack.c.h.b16 %v237
    %v455 = vunpack.c.l.b16 %v238
    %v456 = vunpack.c.h.b16 %v238
    %v457 = vunpack.c.l.b16 %v239
    %v458 = vunpack.c.h.b16 %v239
    %v459 = vunpack.c.l.b16 %v240
    %v460 = vunpack.c.h.b16 %v240
    %v461 = vunpack.c.l.b16 %v241
    %v462 = vunpack.c.h.b16 %v241
    %v463 = vunpack.c.l.b16 %v242
    %v464 = vunpack.c.h.b16 %v242
    %v465 = vunpack.c.l.b16 %v243
    %v466 = vunpack.c.h.b16 %v243
    %v467 = vunpack.c.l.b16 %v244
    %v468 = vunpack.c.h.b16 %v244
    %v469 = vunpack.c.l.b16 %v245
    %v470 = vunpack.c.h.b16 %v245
    %v471 = vunpack.c.l.b16 %v246
    %v472 = vunpack.c.h.b16 %v246
    %v473 = vunpack.c.l.b16 %v247
    %v474 = vunpack.c.h.b16 %v247
    %v475 = vunpack.c.l.b16 %v248
    %v476 = vunpack.c.h.b16 %v248
    %v477 = vunpack.c.l.b16 %v249
    %v478 = vunpack.c.h.b16 %v249
    %v479 = vunpack.c.l.b16 %v250
    %v480 = vunpack.c.h.b16 %v250
    %v481 = vunpack.c.l.b16 %v251
    %v482 = vunpack.c.h.b16 %v251
    %v483 = vunpack.c.l.b16 %v252
    %v484 = vunpack.c.h.b16 %v252
    %v485 = vunpack.c.l.b16 %v253
    %v486 = vunpack.c.h.b16 %v253
    %v487 = vunpack.c.l.b16 %v254
    %v488 = vunpack.c.h.b16 %v254
    %v489 = vpack.c.b16 %v369, %v361
    %v490 = vpack.c.b16 %v370, %v362
    %v491 = vpack.c.b16 %v371, %v363
    %v492 = vpack.c.b16 %v372, %v364
    %v493 = vpack.c.b16 %v373, %v365
    %v494 = vpack.c.b16 %v374, %v366
    %v495 = vpack.c.b16 %v375, %v367
    %v496 = vpack.c.b16 %v376, %v368
    %v497 = vpack.c.b16 %v385, %v377
    %v498 = vpack.c.b16 %v386, %v378
    %v499 = vpack.c.b16 %v387, %v379
    %v500 = vpack.c.b16 %v388, %v380
    %v501 = vpack.c.b16 %v389, %v381
    %v502 = vpack.c.b16 %v390, %v382
    %v503 = vpack.c.b16 %v391, %v383
    %v504 = vpack.c.b16 %v392, %v384
    %v505 = vpack.c.b16 %v401, %v393
    %v506 = vpack.c.b16 %v402, %v394
    %v507 = vpack.c.b16 %v403, %v395
    %v508 = vpack.c.b16 %v404, %v396
    %v509 = vpack.c.b16 %v405, %v397
    %v510 = vpack.c.b16 %v406, %v398
    %v511 = vpack.c.b16 %v407, %v399
    %v512 = vpack.c.b16 %v408, %v400
    %v513 = vpack.c.b16 %v417, %v409
    %v514 = vpack.c.b16 %v418, %v410
    %v515 = vpack.c.b16 %v419, %v411
    %v516 = vpack.c.b16 %v420, %v412
    %v517 = vpack.c.b16 %v421, %v413
    %v518 = vpack.c.b16 %v422, %v414
    %v519 = vpack.c.b16 %v423, %v415
    %v520 = vpack.c.b16 %v424, %v416
    %v521 = vpack.c.b16 %v433, %v425
    %v522 = vpack.c.b16 %v434, %v426
    %v523 = vpack.c.b16 %v435, %v427
    %v524 = vpack.c.b16 %v436, %v428
    %v525 = vpack.c.b16 %v437, %v429
    %v526 = vpack.c.b16 %v438, %v430
    %v527 = vpack.c.b16 %v439, %v431
    %v528 = vpack.c.b16 %v440, %v432
    %v529 = vpack.c.b16 %v449, %v441
    %v530 = vpack.c.b16 %v450, %v442
    %v531 = vpack.c.b16 %v451, %v443
    %v532 = vpack.c.b16 %v452, %v444
    %v533 = vpack.c.b16 %v453, %v445
    %v534 = vpack.c.b16 %v454, %v446
    %v535 = vpack.c.b16 %v455, %v447
    %v536 = vpack.c.b16 %v456, %v448
    %v537 = vpack.c.b16 %v465, %v457
    %v538 = vpack.c.b16 %v466, %v458
    %v539 = vpack.c.b16 %v467, %v459
    %v540 = vpack.c.b16 %v468, %v460
    %v541 = vpack.c.b16 %v469, %v461
    %v542 = vpack.c.b16 %v470, %v462
    %v543 = vpack.c.b16 %v471, %v463
    %v544 = vpack.c.b16 %v472, %v464
    %v545 = vpack.c.b16 %v481, %v473
    %v546 = vpack.c.b16 %v482, %v474
    %v547 = vpack.c.b16 %v483, %v475
    %v548 = vpack.c.b16 %v484, %v476
    %v549 = vpack.c.b16 %v485, %v477
    %v550 = vpack.c.b16 %v486, %v478
    %v551 = vpack.c.b16 %v487, %v479
    %v552 = vpack.c.b16 %v488, %v480
    %617 = vmatprep.subr.bf16.mxu0 %v490
    %618 = vmatpush1.bf16.msra.mxu0 %v489
    %619 = vmatprep.subr.bf16.mxu0 %v498
    %620 = vmatpush1.bf16.msra.mxu0 %v497
    %621 = vmatprep.subr.bf16.mxu0 %v506
    %622 = vmatpush1.bf16.msra.mxu0 %v505
    %623 = vmatprep.subr.bf16.mxu0 %v514
    %624 = vmatpush1.bf16.msra.mxu0 %v513
    %625 = vmatprep.subr.bf16.mxu0 %v522
    %626 = vmatpush1.bf16.msra.mxu0 %v521
    %627 = vmatprep.subr.bf16.mxu0 %v530
    %628 = vmatpush1.bf16.msra.mxu0 %v529
    %629 = vmatprep.subr.bf16.mxu0 %v538
    %630 = vmatpush1.bf16.msra.mxu0 %v537
    %631 = vmatprep.subr.bf16.mxu0 %v546
    %632 = vmatpush1.bf16.msra.mxu0 %v545
    %633 = vmatprep.subr.bf16.mxu0 0
    %634 = vmatpush1.bf16.msra.mxu0 0
    %635 = vmatprep.subr.bf16.mxu0 0
    %636 = vmatpush1.bf16.msra.mxu0 0
    %637 = vmatprep.subr.bf16.mxu0 0
    %638 = vmatpush1.bf16.msra.mxu0 0
    %639 = vmatprep.subr.bf16.mxu0 0
    %640 = vmatpush1.bf16.msra.mxu0 0
    %641 = vmatprep.subr.bf16.mxu0 0
    %642 = vmatpush1.bf16.msra.mxu0 0
    %643 = vmatprep.subr.bf16.mxu0 0
    %644 = vmatpush1.bf16.msra.mxu0 0
    %645 = vmatprep.subr.bf16.mxu0 0
    %646 = vmatpush1.bf16.msra.mxu0 0
    %647 = vmatprep.subr.bf16.mxu0 0
    %648 = vmatpush1.bf16.msra.mxu0 0
    %649 = vmatprep.mubr.bf16.mxu0 0
    %650 = vmatmul.mubr.bf16.gmra.mrb[0].mxu0 %v190
    %v651 = vpop.f32.mrb[0].mxu0
    %v652 = vadd.f32 %v260, %v651
    %v653 = vpop.f32.mrb[0].mxu0
    %v654 = vadd.f32 %v264, %v653
    %v655 = vpop.f32.mrb[0].mxu0
    %v656 = vpop.f32.mrb[0].mxu0
    %657 = vdwg.mxu0
    %658 = vmatprep.subr.bf16.mxu0 %v492
    %659 = vmatpush1.bf16.msra.mxu0 %v491
    %660 = vmatprep.subr.bf16.mxu0 %v500
    %661 = vmatpush1.bf16.msra.mxu0 %v499
    %662 = vmatprep.subr.bf16.mxu0 %v508
    %663 = vmatpush1.bf16.msra.mxu0 %v507
    %664 = vmatprep.subr.bf16.mxu0 %v516
    %665 = vmatpush1.bf16.msra.mxu0 %v515
    %666 = vmatprep.subr.bf16.mxu0 %v524
    %667 = vmatpush1.bf16.msra.mxu0 %v523
    %668 = vmatprep.subr.bf16.mxu0 %v532
    %669 = vmatpush1.bf16.msra.mxu0 %v531
    %670 = vmatprep.subr.bf16.mxu0 %v540
    %671 = vmatpush1.bf16.msra.mxu0 %v539
    %672 = vmatprep.subr.bf16.mxu0 %v548
    %673 = vmatpush1.bf16.msra.mxu0 %v547
    %674 = vmatprep.subr.bf16.mxu0 0
    %675 = vmatpush1.bf16.msra.mxu0 0
    %676 = vmatprep.subr.bf16.mxu0 0
    %677 = vmatpush1.bf16.msra.mxu0 0
    %678 = vmatprep.subr.bf16.mxu0 0
    %679 = vmatpush1.bf16.msra.mxu0 0
    %680 = vmatprep.subr.bf16.mxu0 0
    %681 = vmatpush1.bf16.msra.mxu0 0
    %682 = vmatprep.subr.bf16.mxu0 0
    %683 = vmatpush1.bf16.msra.mxu0 0
    %684 = vmatprep.subr.bf16.mxu0 0
    %685 = vmatpush1.bf16.msra.mxu0 0
    %686 = vmatprep.subr.bf16.mxu0 0
    %687 = vmatpush1.bf16.msra.mxu0 0
    %688 = vmatprep.subr.bf16.mxu0 0
    %689 = vmatpush1.bf16.msra.mxu0 0
    %690 = vmatprep.mubr.bf16.mxu0 0
    %691 = vmatmul.mubr.bf16.gmra.mrb[0].mxu0 %v190
    %v692 = vpop.f32.mrb[0].mxu0
    %v693 = vadd.f32 %v268, %v692
    %v694 = vpop.f32.mrb[0].mxu0
    %v695 = vadd.f32 %v272, %v694
    %v696 = vpop.f32.mrb[0].mxu0
    %v697 = vpop.f32.mrb[0].mxu0
    %698 = vdwg.mxu0
    %699 = vmatprep.subr.bf16.mxu0 %v494
    %700 = vmatpush1.bf16.msra.mxu0 %v493
    %701 = vmatprep.subr.bf16.mxu0 %v502
    %702 = vmatpush1.bf16.msra.mxu0 %v501
    %703 = vmatprep.subr.bf16.mxu0 %v510
    %704 = vmatpush1.bf16.msra.mxu0 %v509
    %705 = vmatprep.subr.bf16.mxu0 %v518
    %706 = vmatpush1.bf16.msra.mxu0 %v517
    %707 = vmatprep.subr.bf16.mxu0 %v526
    %708 = vmatpush1.bf16.msra.mxu0 %v525
    %709 = vmatprep.subr.bf16.mxu0 %v534
    %710 = vmatpush1.bf16.msra.mxu0 %v533
    %711 = vmatprep.subr.bf16.mxu0 %v542
    %712 = vmatpush1.bf16.msra.mxu0 %v541
    %713 = vmatprep.subr.bf16.mxu0 %v550
    %714 = vmatpush1.bf16.msra.mxu0 %v549
    %715 = vmatprep.subr.bf16.mxu0 0
    %716 = vmatpush1.bf16.msra.mxu0 0
    %717 = vmatprep.subr.bf16.mxu0 0
    %718 = vmatpush1.bf16.msra.mxu0 0
    %719 = vmatprep.subr.bf16.mxu0 0
    %720 = vmatpush1.bf16.msra.mxu0 0
    %721 = vmatprep.subr.bf16.mxu0 0
    %722 = vmatpush1.bf16.msra.mxu0 0
    %723 = vmatprep.subr.bf16.mxu0 0
    %724 = vmatpush1.bf16.msra.mxu0 0
    %725 = vmatprep.subr.bf16.mxu0 0
    %726 = vmatpush1.bf16.msra.mxu0 0
    %727 = vmatprep.subr.bf16.mxu0 0
    %728 = vmatpush1.bf16.msra.mxu0 0
    %729 = vmatprep.subr.bf16.mxu0 0
    %730 = vmatpush1.bf16.msra.mxu0 0
    %731 = vmatprep.mubr.bf16.mxu0 0
    %732 = vmatmul.mubr.bf16.gmra.mrb[0].mxu0 %v190
    %v733 = vpop.f32.mrb[0].mxu0
    %v734 = vadd.f32 %v276, %v733
    %v735 = vpop.f32.mrb[0].mxu0
    %v736 = vadd.f32 %v280, %v735
    %v737 = vpop.f32.mrb[0].mxu0
    %v738 = vpop.f32.mrb[0].mxu0
    %739 = vdwg.mxu0
    %740 = vmatprep.subr.bf16.mxu0 %v496
    %741 = vmatpush1.bf16.msra.mxu0 %v495
    %742 = vmatprep.subr.bf16.mxu0 %v504
    %743 = vmatpush1.bf16.msra.mxu0 %v503
    %744 = vmatprep.subr.bf16.mxu0 %v512
    %745 = vmatpush1.bf16.msra.mxu0 %v511
    %746 = vmatprep.subr.bf16.mxu0 %v520
    %747 = vmatpush1.bf16.msra.mxu0 %v519
    %748 = vmatprep.subr.bf16.mxu0 %v528
    %749 = vmatpush1.bf16.msra.mxu0 %v527
    %750 = vmatprep.subr.bf16.mxu0 %v536
    %751 = vmatpush1.bf16.msra.mxu0 %v535
    %752 = vmatprep.subr.bf16.mxu0 %v544
    %753 = vmatpush1.bf16.msra.mxu0 %v543
    %754 = vmatprep.subr.bf16.mxu0 %v552
    %755 = vmatpush1.bf16.msra.mxu0 %v551
    %756 = vmatprep.subr.bf16.mxu0 0
    %757 = vmatpush1.bf16.msra.mxu0 0
    %758 = vmatprep.subr.bf16.mxu0 0
    %759 = vmatpush1.bf16.msra.mxu0 0
    %760 = vmatprep.subr.bf16.mxu0 0
    %761 = vmatpush1.bf16.msra.mxu0 0
    %762 = vmatprep.subr.bf16.mxu0 0
    %763 = vmatpush1.bf16.msra.mxu0 0
    %764 = vmatprep.subr.bf16.mxu0 0
    %765 = vmatpush1.bf16.msra.mxu0 0
    %766 = vmatprep.subr.bf16.mxu0 0
    %767 = vmatpush1.bf16.msra.mxu0 0
    %768 = vmatprep.subr.bf16.mxu0 0
    %769 = vmatpush1.bf16.msra.mxu0 0
    %770 = vmatprep.subr.bf16.mxu0 0
    %771 = vmatpush1.bf16.msra.mxu0 0
    %772 = vmatprep.mubr.bf16.mxu0 0
    %773 = vmatmul.mubr.bf16.gmra.mrb[0].mxu0 %v190
    %v774 = vpop.f32.mrb[0].mxu0
    %v775 = vadd.f32 %v284, %v774
    %v776 = vpop.f32.mrb[0].mxu0
    %v777 = vadd.f32 %v288, %v776
    %v778 = vpop.f32.mrb[0].mxu0
    %v779 = vpop.f32.mrb[0].mxu0
    %780 = vdwg.mxu0
    %v781 = vmax.f32 %v652, 0.0
    %v782 = vmax.f32 %v654, 0.0
    %v783 = vmax.f32 %v693, 0.0
    %v784 = vmax.f32 %v695, 0.0
    %v785 = vmax.f32 %v734, 0.0
    %v786 = vmax.f32 %v736, 0.0
    %v787 = vmax.f32 %v775, 0.0
    %v788 = vmax.f32 %v777, 0.0
    %v789 = vpack.c.bf16 %v781, %v781
    %v790 = vpack.c.bf16 %v782, %v782
    %v791 = vpack.c.bf16 %v783, %v783
    %v792 = vpack.c.bf16 %v784, %v784
    %v793 = vpack.c.bf16 %v785, %v785
    %v794 = vpack.c.bf16 %v786, %v786
    %v795 = vpack.c.bf16 %v787, %v787
    %v796 = vpack.c.bf16 %v788, %v788
    %v797 = vld [vmem:[#allocation8] sm:$0xff]
    %v798 = vld [vmem:[#allocation8 + $0x8] sm:$0xff]
    %v799 = vld [vmem:[#allocation8 + $0x10] sm:$0xff]
    %v800 = vld [vmem:[#allocation8 + $0x18] sm:$0xff]
    %v801 = vld [vmem:[#allocation8 + $0x20] sm:$0xff]
    %v802 = vld [vmem:[#allocation8 + $0x28] sm:$0xff]
    %v803 = vld [vmem:[#allocation8 + $0x30] sm:$0xff]
    %v804 = vld [vmem:[#allocation8 + $0x38] sm:$0xff]
    %v805 = vld [vmem:[#allocation8 + $0x40] sm:$0xff]
    %v806 = vld [vmem:[#allocation8 + $0x48] sm:$0xff]
    %v807 = vld [vmem:[#allocation8 + $0x50] sm:$0xff]
    %v808 = vld [vmem:[#allocation8 + $0x58] sm:$0xff]
    %v809 = vld [vmem:[#allocation8 + $0x60] sm:$0xff]
    %v810 = vld [vmem:[#allocation8 + $0x68] sm:$0xff]
    %v811 = vld [vmem:[#allocation8 + $0x70] sm:$0xff]
    %v812 = vld [vmem:[#allocation8 + $0x78] sm:$0xff]
    %v813 = vld [vmem:[#allocation8 + $0x80] sm:$0xff]
    %v814 = vld [vmem:[#allocation8 + $0x88] sm:$0xff]
    %v815 = vld [vmem:[#allocation8 + $0x90] sm:$0xff]
    %v816 = vld [vmem:[#allocation8 + $0x98] sm:$0xff]
    %v817 = vld [vmem:[#allocation8 + $0xa0] sm:$0xff]
    %v818 = vld [vmem:[#allocation8 + $0xa8] sm:$0xff]
    %v819 = vld [vmem:[#allocation8 + $0xb0] sm:$0xff]
    %v820 = vld [vmem:[#allocation8 + $0xb8] sm:$0xff]
    %v821 = vld [vmem:[#allocation8 + $0xc0] sm:$0xff]
    %v822 = vld [vmem:[#allocation8 + $0xc8] sm:$0xff]
    %v823 = vld [vmem:[#allocation8 + $0xd0] sm:$0xff]
    %v824 = vld [vmem:[#allocation8 + $0xd8] sm:$0xff]
    %v825 = vld [vmem:[#allocation8 + $0xe0] sm:$0xff]
    %v826 = vld [vmem:[#allocation8 + $0xe8] sm:$0xff]
    %v827 = vld [vmem:[#allocation8 + $0xf0] sm:$0xff]
    %v828 = vld [vmem:[#allocation8 + $0xf8] sm:$0xff]
    %v829 = vld [vmem:[#allocation8 + $0x100] sm:$0xff]
    %v830 = vld [vmem:[#allocation8 + $0x108] sm:$0xff]
    %v831 = vld [vmem:[#allocation8 + $0x110] sm:$0xff]
    %v832 = vld [vmem:[#allocation8 + $0x118] sm:$0xff]
    %v833 = vld [vmem:[#allocation8 + $0x120] sm:$0xff]
    %v834 = vld [vmem:[#allocation8 + $0x128] sm:$0xff]
    %v835 = vld [vmem:[#allocation8 + $0x130] sm:$0xff]
    %v836 = vld [vmem:[#allocation8 + $0x138] sm:$0xff]
    %v837 = vld [vmem:[#allocation8 + $0x140] sm:$0xff]
    %v838 = vld [vmem:[#allocation8 + $0x148] sm:$0xff]
    %v839 = vld [vmem:[#allocation8 + $0x150] sm:$0xff]
    %v840 = vld [vmem:[#allocation8 + $0x158] sm:$0xff]
    %v841 = vld [vmem:[#allocation8 + $0x160] sm:$0xff]
    %v842 = vld [vmem:[#allocation8 + $0x168] sm:$0xff]
    %v843 = vld [vmem:[#allocation8 + $0x170] sm:$0xff]
    %v844 = vld [vmem:[#allocation8 + $0x178] sm:$0xff]
    %v845 = vld [vmem:[#allocation8 + $0x180] sm:$0xff]
    %v846 = vld [vmem:[#allocation8 + $0x188] sm:$0xff]
    %v847 = vld [vmem:[#allocation8 + $0x190] sm:$0xff]
    %v848 = vld [vmem:[#allocation8 + $0x198] sm:$0xff]
    %v849 = vld [vmem:[#allocation8 + $0x1a0] sm:$0xff]
    %v850 = vld [vmem:[#allocation8 + $0x1a8] sm:$0xff]
    %v851 = vld [vmem:[#allocation8 + $0x1b0] sm:$0xff]
    %v852 = vld [vmem:[#allocation8 + $0x1b8] sm:$0xff]
    %v853 = vld [vmem:[#allocation8 + $0x1c0] sm:$0xff]
    %v854 = vld [vmem:[#allocation8 + $0x1c8] sm:$0xff]
    %v855 = vld [vmem:[#allocation8 + $0x1d0] sm:$0xff]
    %v856 = vld [vmem:[#allocation8 + $0x1d8] sm:$0xff]
    %v857 = vld [vmem:[#allocation8 + $0x1e0] sm:$0xff]
    %v858 = vld [vmem:[#allocation8 + $0x1e8] sm:$0xff]
    %v859 = vld [vmem:[#allocation8 + $0x1f0] sm:$0xff]
    %v860 = vld [vmem:[#allocation8 + $0x1f8] sm:$0xff]
    %v861 = vld [vmem:[#allocation8 + $0x200] sm:$0xff]
    %v862 = vld [vmem:[#allocation8 + $0x208] sm:$0xff]
    %v863 = vld [vmem:[#allocation8 + $0x210] sm:$0xff]
    %v864 = vld [vmem:[#allocation8 + $0x218] sm:$0xff]
    %v865 = vld [vmem:[#allocation8 + $0x220] sm:$0xff]
    %v866 = vld [vmem:[#allocation8 + $0x228] sm:$0xff]
    %v867 = vld [vmem:[#allocation8 + $0x230] sm:$0xff]
    %v868 = vld [vmem:[#allocation8 + $0x238] sm:$0xff]
    %v869 = vld [vmem:[#allocation8 + $0x240] sm:$0xff]
    %v870 = vld [vmem:[#allocation8 + $0x248] sm:$0xff]
    %v871 = vld [vmem:[#allocation8 + $0x250] sm:$0xff]
    %v872 = vld [vmem:[#allocation8 + $0x258] sm:$0xff]
    %v873 = vld [vmem:[#allocation8 + $0x260] sm:$0xff]
    %v874 = vld [vmem:[#allocation8 + $0x268] sm:$0xff]
    %v875 = vld [vmem:[#allocation8 + $0x270] sm:$0xff]
    %v876 = vld [vmem:[#allocation8 + $0x278] sm:$0xff]
    %v877 = vld [vmem:[#allocation8 + $0x280] sm:$0xff]
    %v878 = vld [vmem:[#allocation8 + $0x288] sm:$0xff]
    %v879 = vld [vmem:[#allocation8 + $0x290] sm:$0xff]
    %v880 = vld [vmem:[#allocation8 + $0x298] sm:$0xff]
    %v881 = vld [vmem:[#allocation8 + $0x2a0] sm:$0xff]
    %v882 = vld [vmem:[#allocation8 + $0x2a8] sm:$0xff]
    %v883 = vld [vmem:[#allocation8 + $0x2b0] sm:$0xff]
    %v884 = vld [vmem:[#allocation8 + $0x2b8] sm:$0xff]
    %v885 = vld [vmem:[#allocation8 + $0x2c0] sm:$0xff]
    %v886 = vld [vmem:[#allocation8 + $0x2c8] sm:$0xff]
    %v887 = vld [vmem:[#allocation8 + $0x2d0] sm:$0xff]
    %v888 = vld [vmem:[#allocation8 + $0x2d8] sm:$0xff]
    %v889 = vld [vmem:[#allocation8 + $0x2e0] sm:$0xff]
    %v890 = vld [vmem:[#allocation8 + $0x2e8] sm:$0xff]
    %v891 = vld [vmem:[#allocation8 + $0x2f0] sm:$0xff]
    %v892 = vld [vmem:[#allocation8 + $0x2f8] sm:$0xff]
    %v893 = vld [vmem:[#allocation8 + $0x300] sm:$0xff]
    %v894 = vld [vmem:[#allocation8 + $0x308] sm:$0xff]
    %v895 = vld [vmem:[#allocation8 + $0x310] sm:$0xff]
    %v896 = vld [vmem:[#allocation8 + $0x318] sm:$0xff]
    %v897 = vld [vmem:[#allocation8 + $0x320] sm:$0xff]
    %v898 = vld [vmem:[#allocation8 + $0x328] sm:$0xff]
    %v899 = vld [vmem:[#allocation8 + $0x330] sm:$0xff]
    %v900 = vld [vmem:[#allocation8 + $0x338] sm:$0xff]
    %v901 = vld [vmem:[#allocation8 + $0x340] sm:$0xff]
    %v902 = vld [vmem:[#allocation8 + $0x348] sm:$0xff]
    %v903 = vld [vmem:[#allocation8 + $0x350] sm:$0xff]
    %v904 = vld [vmem:[#allocation8 + $0x358] sm:$0xff]
    %v905 = vld [vmem:[#allocation8 + $0x360] sm:$0xff]
    %v906 = vld [vmem:[#allocation8 + $0x368] sm:$0xff]
    %v907 = vld [vmem:[#allocation8 + $0x370] sm:$0xff]
    %v908 = vld [vmem:[#allocation8 + $0x378] sm:$0xff]
    %v909 = vld [vmem:[#allocation8 + $0x380] sm:$0xff]
    %v910 = vld [vmem:[#allocation8 + $0x388] sm:$0xff]
    %v911 = vld [vmem:[#allocation8 + $0x390] sm:$0xff]
    %v912 = vld [vmem:[#allocation8 + $0x398] sm:$0xff]
    %v913 = vld [vmem:[#allocation8 + $0x3a0] sm:$0xff]
    %v914 = vld [vmem:[#allocation8 + $0x3a8] sm:$0xff]
    %v915 = vld [vmem:[#allocation8 + $0x3b0] sm:$0xff]
    %v916 = vld [vmem:[#allocation8 + $0x3b8] sm:$0xff]
    %v917 = vld [vmem:[#allocation8 + $0x3c0] sm:$0xff]
    %v918 = vld [vmem:[#allocation8 + $0x3c8] sm:$0xff]
    %v919 = vld [vmem:[#allocation8 + $0x3d0] sm:$0xff]
    %v920 = vld [vmem:[#allocation8 + $0x3d8] sm:$0xff]
    %v921 = vld [vmem:[#allocation8 + $0x3e0] sm:$0xff]
    %v922 = vld [vmem:[#allocation8 + $0x3e8] sm:$0xff]
    %v923 = vld [vmem:[#allocation8 + $0x3f0] sm:$0xff]
    %v924 = vld [vmem:[#allocation8 + $0x3f8] sm:$0xff]
    %v925 = vld [vmem:[#allocation8 + $0x400] sm:$0xff]
    %v926 = vld [vmem:[#allocation8 + $0x408] sm:$0xff]
    %v927 = vld [vmem:[#allocation8 + $0x410] sm:$0xff]
    %v928 = vld [vmem:[#allocation8 + $0x418] sm:$0xff]
    %v929 = vld [vmem:[#allocation8 + $0x420] sm:$0xff]
    %v930 = vld [vmem:[#allocation8 + $0x428] sm:$0xff]
    %v931 = vld [vmem:[#allocation8 + $0x430] sm:$0xff]
    %v932 = vld [vmem:[#allocation8 + $0x438] sm:$0xff]
    %v933 = vld [vmem:[#allocation8 + $0x440] sm:$0xff]
    %v934 = vld [vmem:[#allocation8 + $0x448] sm:$0xff]
    %v935 = vld [vmem:[#allocation8 + $0x450] sm:$0xff]
    %v936 = vld [vmem:[#allocation8 + $0x458] sm:$0xff]
    %v937 = vld [vmem:[#allocation8 + $0x460] sm:$0xff]
    %v938 = vld [vmem:[#allocation8 + $0x468] sm:$0xff]
    %v939 = vld [vmem:[#allocation8 + $0x470] sm:$0xff]
    %v940 = vld [vmem:[#allocation8 + $0x478] sm:$0xff]
    %v941 = vld [vmem:[#allocation8 + $0x480] sm:$0xff]
    %v942 = vld [vmem:[#allocation8 + $0x488] sm:$0xff]
    %v943 = vld [vmem:[#allocation8 + $0x490] sm:$0xff]
    %v944 = vld [vmem:[#allocation8 + $0x498] sm:$0xff]
    %v945 = vld [vmem:[#allocation8 + $0x4a0] sm:$0xff]
    %v946 = vld [vmem:[#allocation8 + $0x4a8] sm:$0xff]
    %v947 = vld [vmem:[#allocation8 + $0x4b0] sm:$0xff]
    %v948 = vld [vmem:[#allocation8 + $0x4b8] sm:$0xff]
    %v949 = vld [vmem:[#allocation8 + $0x4c0] sm:$0xff]
    %v950 = vld [vmem:[#allocation8 + $0x4c8] sm:$0xff]
    %v951 = vld [vmem:[#allocation8 + $0x4d0] sm:$0xff]
    %v952 = vld [vmem:[#allocation8 + $0x4d8] sm:$0xff]
    %v953 = vld [vmem:[#allocation8 + $0x4e0] sm:$0xff]
    %v954 = vld [vmem:[#allocation8 + $0x4e8] sm:$0xff]
    %v955 = vld [vmem:[#allocation8 + $0x4f0] sm:$0xff]
    %v956 = vld [vmem:[#allocation8 + $0x4f8] sm:$0xff]
    %v957 = vld [vmem:[#allocation8 + $0x500] sm:$0xff]
    %v958 = vld [vmem:[#allocation8 + $0x508] sm:$0xff]
    %v959 = vld [vmem:[#allocation8 + $0x510] sm:$0xff]
    %v960 = vld [vmem:[#allocation8 + $0x518] sm:$0xff]
    %v961 = vld [vmem:[#allocation8 + $0x520] sm:$0xff]
    %v962 = vld [vmem:[#allocation8 + $0x528] sm:$0xff]
    %v963 = vld [vmem:[#allocation8 + $0x530] sm:$0xff]
    %v964 = vld [vmem:[#allocation8 + $0x538] sm:$0xff]
    %v965 = vld [vmem:[#allocation8 + $0x540] sm:$0xff]
    %v966 = vld [vmem:[#allocation8 + $0x548] sm:$0xff]
    %v967 = vld [vmem:[#allocation8 + $0x550] sm:$0xff]
    %v968 = vld [vmem:[#allocation8 + $0x558] sm:$0xff]
    %v969 = vld [vmem:[#allocation8 + $0x560] sm:$0xff]
    %v970 = vld [vmem:[#allocation8 + $0x568] sm:$0xff]
    %v971 = vld [vmem:[#allocation8 + $0x570] sm:$0xff]
    %v972 = vld [vmem:[#allocation8 + $0x578] sm:$0xff]
    %v973 = vld [vmem:[#allocation8 + $0x580] sm:$0xff]
    %v974 = vld [vmem:[#allocation8 + $0x588] sm:$0xff]
    %v975 = vld [vmem:[#allocation8 + $0x590] sm:$0xff]
    %v976 = vld [vmem:[#allocation8 + $0x598] sm:$0xff]
    %v977 = vld [vmem:[#allocation8 + $0x5a0] sm:$0xff]
    %v978 = vld [vmem:[#allocation8 + $0x5a8] sm:$0xff]
    %v979 = vld [vmem:[#allocation8 + $0x5b0] sm:$0xff]
    %v980 = vld [vmem:[#allocation8 + $0x5b8] sm:$0xff]
    %v981 = vld [vmem:[#allocation8 + $0x5c0] sm:$0xff]
    %v982 = vld [vmem:[#allocation8 + $0x5c8] sm:$0xff]
    %v983 = vld [vmem:[#allocation8 + $0x5d0] sm:$0xff]
    %v984 = vld [vmem:[#allocation8 + $0x5d8] sm:$0xff]
    %v985 = vld [vmem:[#allocation8 + $0x5e0] sm:$0xff]
    %v986 = vld [vmem:[#allocation8 + $0x5e8] sm:$0xff]
    %v987 = vld [vmem:[#allocation8 + $0x5f0] sm:$0xff]
    %v988 = vld [vmem:[#allocation8 + $0x5f8] sm:$0xff]
    %v989 = vld [vmem:[#allocation8 + $0x600] sm:$0xff]
    %v990 = vld [vmem:[#allocation8 + $0x608] sm:$0xff]
    %v991 = vld [vmem:[#allocation8 + $0x610] sm:$0xff]
    %v992 = vld [vmem:[#allocation8 + $0x618] sm:$0xff]
    %v993 = vld [vmem:[#allocation8 + $0x620] sm:$0xff]
    %v994 = vld [vmem:[#allocation8 + $0x628] sm:$0xff]
    %v995 = vld [vmem:[#allocation8 + $0x630] sm:$0xff]
    %v996 = vld [vmem:[#allocation8 + $0x638] sm:$0xff]
    %v997 = vld [vmem:[#allocation8 + $0x640] sm:$0xff]
    %v998 = vld [vmem:[#allocation8 + $0x648] sm:$0xff]
    %v999 = vld [vmem:[#allocation8 + $0x650] sm:$0xff]
    %v1000 = vld [vmem:[#allocation8 + $0x658] sm:$0xff]
    %v1001 = vld [vmem:[#allocation8 + $0x660] sm:$0xff]
    %v1002 = vld [vmem:[#allocation8 + $0x668] sm:$0xff]
    %v1003 = vld [vmem:[#allocation8 + $0x670] sm:$0xff]
    %v1004 = vld [vmem:[#allocation8 + $0x678] sm:$0xff]
    %v1005 = vld [vmem:[#allocation8 + $0x680] sm:$0xff]
    %v1006 = vld [vmem:[#allocation8 + $0x688] sm:$0xff]
    %v1007 = vld [vmem:[#allocation8 + $0x690] sm:$0xff]
    %v1008 = vld [vmem:[#allocation8 + $0x698] sm:$0xff]
    %v1009 = vld [vmem:[#allocation8 + $0x6a0] sm:$0xff]
    %v1010 = vld [vmem:[#allocation8 + $0x6a8] sm:$0xff]
    %v1011 = vld [vmem:[#allocation8 + $0x6b0] sm:$0xff]
    %v1012 = vld [vmem:[#allocation8 + $0x6b8] sm:$0xff]
    %v1013 = vld [vmem:[#allocation8 + $0x6c0] sm:$0xff]
    %v1014 = vld [vmem:[#allocation8 + $0x6c8] sm:$0xff]
    %v1015 = vld [vmem:[#allocation8 + $0x6d0] sm:$0xff]
    %v1016 = vld [vmem:[#allocation8 + $0x6d8] sm:$0xff]
    %v1017 = vld [vmem:[#allocation8 + $0x6e0] sm:$0xff]
    %v1018 = vld [vmem:[#allocation8 + $0x6e8] sm:$0xff]
    %v1019 = vld [vmem:[#allocation8 + $0x6f0] sm:$0xff]
    %v1020 = vld [vmem:[#allocation8 + $0x6f8] sm:$0xff]
    %v1021 = vld [vmem:[#allocation8 + $0x700] sm:$0xff]
    %v1022 = vld [vmem:[#allocation8 + $0x708] sm:$0xff]
    %v1023 = vld [vmem:[#allocation8 + $0x710] sm:$0xff]
    %v1024 = vld [vmem:[#allocation8 + $0x718] sm:$0xff]
    %v1025 = vld [vmem:[#allocation8 + $0x720] sm:$0xff]
    %v1026 = vld [vmem:[#allocation8 + $0x728] sm:$0xff]
    %v1027 = vld [vmem:[#allocation8 + $0x730] sm:$0xff]
    %v1028 = vld [vmem:[#allocation8 + $0x738] sm:$0xff]
    %v1029 = vld [vmem:[#allocation8 + $0x740] sm:$0xff]
    %v1030 = vld [vmem:[#allocation8 + $0x748] sm:$0xff]
    %v1031 = vld [vmem:[#allocation8 + $0x750] sm:$0xff]
    %v1032 = vld [vmem:[#allocation8 + $0x758] sm:$0xff]
    %v1033 = vld [vmem:[#allocation8 + $0x760] sm:$0xff]
    %v1034 = vld [vmem:[#allocation8 + $0x768] sm:$0xff]
    %v1035 = vld [vmem:[#allocation8 + $0x770] sm:$0xff]
    %v1036 = vld [vmem:[#allocation8 + $0x778] sm:$0xff]
    %v1037 = vld [vmem:[#allocation8 + $0x780] sm:$0xff]
    %v1038 = vld [vmem:[#allocation8 + $0x788] sm:$0xff]
    %v1039 = vld [vmem:[#allocation8 + $0x790] sm:$0xff]
    %v1040 = vld [vmem:[#allocation8 + $0x798] sm:$0xff]
    %v1041 = vld [vmem:[#allocation8 + $0x7a0] sm:$0xff]
    %v1042 = vld [vmem:[#allocation8 + $0x7a8] sm:$0xff]
    %v1043 = vld [vmem:[#allocation8 + $0x7b0] sm:$0xff]
    %v1044 = vld [vmem:[#allocation8 + $0x7b8] sm:$0xff]
    %v1045 = vld [vmem:[#allocation8 + $0x7c0] sm:$0xff]
    %v1046 = vld [vmem:[#allocation8 + $0x7c8] sm:$0xff]
    %v1047 = vld [vmem:[#allocation8 + $0x7d0] sm:$0xff]
    %v1048 = vld [vmem:[#allocation8 + $0x7d8] sm:$0xff]
    %v1049 = vld [vmem:[#allocation8 + $0x7e0] sm:$0xff]
    %v1050 = vld [vmem:[#allocation8 + $0x7e8] sm:$0xff]
    %v1051 = vld [vmem:[#allocation8 + $0x7f0] sm:$0xff]
    %v1052 = vld [vmem:[#allocation8 + $0x7f8] sm:$0xff]
    %v1053 = vld [vmem:[%s4] sm:$0xf]
    %v1055 = vlaneseq
    %v1056 = vshrl.u32 %v1055, 7
    %v1057 = vsub.s32 0, %v1056
    %v1058 = vrot.slane %v1053, %v1057
    %v1059 = vlaneseq
    %v1060 = vshrl.u32 %v1059, 7
    %v1061 = vsub.s32 1, %v1060
    %v1062 = vrot.slane %v1053, %v1061
    %v1063 = vlaneseq
    %v1064 = vshrl.u32 %v1063, 7
    %v1065 = vsub.s32 2, %v1064
    %v1066 = vrot.slane %v1053, %v1065
    %v1067 = vlaneseq
    %v1068 = vshrl.u32 %v1067, 7
    %v1069 = vsub.s32 3, %v1068
    %v1070 = vrot.slane %v1053, %v1069
    %v1331 = vunpack.c.l.b16 %v797
    %v1332 = vunpack.c.h.b16 %v797
    %v1333 = vunpack.c.l.b16 %v798
    %v1334 = vunpack.c.h.b16 %v798
    %v1335 = vunpack.c.l.b16 %v799
    %v1336 = vunpack.c.h.b16 %v799
    %v1337 = vunpack.c.l.b16 %v800
    %v1338 = vunpack.c.h.b16 %v800
    %v1339 = vunpack.c.l.b16 %v801
    %v1340 = vunpack.c.h.b16 %v801
    %v1341 = vunpack.c.l.b16 %v802
    %v1342 = vunpack.c.h.b16 %v802
    %v1343 = vunpack.c.l.b16 %v803
    %v1344 = vunpack.c.h.b16 %v803
    %v1345 = vunpack.c.l.b16 %v804
    %v1346 = vunpack.c.h.b16 %v804
    %v1347 = vunpack.c.l.b16 %v805
    %v1348 = vunpack.c.h.b16 %v805
    %v1349 = vunpack.c.l.b16 %v806
    %v1350 = vunpack.c.h.b16 %v806
    %v1351 = vunpack.c.l.b16 %v807
    %v1352 = vunpack.c.h.b16 %v807
    %v1353 = vunpack.c.l.b16 %v808
    %v1354 = vunpack.c.h.b16 %v808
    %v1355 = vunpack.c.l.b16 %v809
    %v1356 = vunpack.c.h.b16 %v809
    %v1357 = vunpack.c.l.b16 %v810
    %v1358 = vunpack.c.h.b16 %v810
    %v1359 = vunpack.c.l.b16 %v811
    %v1360 = vunpack.c.h.b16 %v811
    %v1361 = vunpack.c.l.b16 %v812
    %v1362 = vunpack.c.h.b16 %v812
    %v1363 = vunpack.c.l.b16 %v813
    %v1364 = vunpack.c.h.b16 %v813
    %v1365 = vunpack.c.l.b16 %v814
    %v1366 = vunpack.c.h.b16 %v814
    %v1367 = vunpack.c.l.b16 %v815
    %v1368 = vunpack.c.h.b16 %v815
    %v1369 = vunpack.c.l.b16 %v816
    %v1370 = vunpack.c.h.b16 %v816
    %v1371 = vunpack.c.l.b16 %v817
    %v1372 = vunpack.c.h.b16 %v817
    %v1373 = vunpack.c.l.b16 %v818
    %v1374 = vunpack.c.h.b16 %v818
    %v1375 = vunpack.c.l.b16 %v819
    %v1376 = vunpack.c.h.b16 %v819
    %v1377 = vunpack.c.l.b16 %v820
    %v1378 = vunpack.c.h.b16 %v820
    %v1379 = vunpack.c.l.b16 %v821
    %v1380 = vunpack.c.h.b16 %v821
    %v1381 = vunpack.c.l.b16 %v822
    %v1382 = vunpack.c.h.b16 %v822
    %v1383 = vunpack.c.l.b16 %v823
    %v1384 = vunpack.c.h.b16 %v823
    %v1385 = vunpack.c.l.b16 %v824
    %v1386 = vunpack.c.h.b16 %v824
    %v1387 = vunpack.c.l.b16 %v825
    %v1388 = vunpack.c.h.b16 %v825
    %v1389 = vunpack.c.l.b16 %v826
    %v1390 = vunpack.c.h.b16 %v826
    %v1391 = vunpack.c.l.b16 %v827
    %v1392 = vunpack.c.h.b16 %v827
    %v1393 = vunpack.c.l.b16 %v828
    %v1394 = vunpack.c.h.b16 %v828
    %v1395 = vunpack.c.l.b16 %v829
    %v1396 = vunpack.c.h.b16 %v829
    %v1397 = vunpack.c.l.b16 %v830
    %v1398 = vunpack.c.h.b16 %v830
    %v1399 = vunpack.c.l.b16 %v831
    %v1400 = vunpack.c.h.b16 %v831
    %v1401 = vunpack.c.l.b16 %v832
    %v1402 = vunpack.c.h.b16 %v832
    %v1403 = vunpack.c.l.b16 %v833
    %v1404 = vunpack.c.h.b16 %v833
    %v1405 = vunpack.c.l.b16 %v834
    %v1406 = vunpack.c.h.b16 %v834
    %v1407 = vunpack.c.l.b16 %v835
    %v1408 = vunpack.c.h.b16 %v835
    %v1409 = vunpack.c.l.b16 %v836
    %v1410 = vunpack.c.h.b16 %v836
    %v1411 = vunpack.c.l.b16 %v837
    %v1412 = vunpack.c.h.b16 %v837
    %v1413 = vunpack.c.l.b16 %v838
    %v1414 = vunpack.c.h.b16 %v838
    %v1415 = vunpack.c.l.b16 %v839
    %v1416 = vunpack.c.h.b16 %v839
    %v1417 = vunpack.c.l.b16 %v840
    %v1418 = vunpack.c.h.b16 %v840
    %v1419 = vunpack.c.l.b16 %v841
    %v1420 = vunpack.c.h.b16 %v841
    %v1421 = vunpack.c.l.b16 %v842
    %v1422 = vunpack.c.h.b16 %v842
    %v1423 = vunpack.c.l.b16 %v843
    %v1424 = vunpack.c.h.b16 %v843
    %v1425 = vunpack.c.l.b16 %v844
    %v1426 = vunpack.c.h.b16 %v844
    %v1427 = vunpack.c.l.b16 %v845
    %v1428 = vunpack.c.h.b16 %v845
    %v1429 = vunpack.c.l.b16 %v846
    %v1430 = vunpack.c.h.b16 %v846
    %v1431 = vunpack.c.l.b16 %v847
    %v1432 = vunpack.c.h.b16 %v847
    %v1433 = vunpack.c.l.b16 %v848
    %v1434 = vunpack.c.h.b16 %v848
    %v1435 = vunpack.c.l.b16 %v849
    %v1436 = vunpack.c.h.b16 %v849
    %v1437 = vunpack.c.l.b16 %v850
    %v1438 = vunpack.c.h.b16 %v850
    %v1439 = vunpack.c.l.b16 %v851
    %v1440 = vunpack.c.h.b16 %v851
    %v1441 = vunpack.c.l.b16 %v852
    %v1442 = vunpack.c.h.b16 %v852
    %v1443 = vunpack.c.l.b16 %v853
    %v1444 = vunpack.c.h.b16 %v853
    %v1445 = vunpack.c.l.b16 %v854
    %v1446 = vunpack.c.h.b16 %v854
    %v1447 = vunpack.c.l.b16 %v855
    %v1448 = vunpack.c.h.b16 %v855
    %v1449 = vunpack.c.l.b16 %v856
    %v1450 = vunpack.c.h.b16 %v856
    %v1451 = vunpack.c.l.b16 %v857
    %v1452 = vunpack.c.h.b16 %v857
    %v1453 = vunpack.c.l.b16 %v858
    %v1454 = vunpack.c.h.b16 %v858
    %v1455 = vunpack.c.l.b16 %v859
    %v1456 = vunpack.c.h.b16 %v859
    %v1457 = vunpack.c.l.b16 %v860
    %v1458 = vunpack.c.h.b16 %v860
    %v1459 = vunpack.c.l.b16 %v861
    %v1460 = vunpack.c.h.b16 %v861
    %v1461 = vunpack.c.l.b16 %v862
    %v1462 = vunpack.c.h.b16 %v862
    %v1463 = vunpack.c.l.b16 %v863
    %v1464 = vunpack.c.h.b16 %v863
    %v1465 = vunpack.c.l.b16 %v864
    %v1466 = vunpack.c.h.b16 %v864
    %v1467 = vunpack.c.l.b16 %v865
    %v1468 = vunpack.c.h.b16 %v865
    %v1469 = vunpack.c.l.b16 %v866
    %v1470 = vunpack.c.h.b16 %v866
    %v1471 = vunpack.c.l.b16 %v867
    %v1472 = vunpack.c.h.b16 %v867
    %v1473 = vunpack.c.l.b16 %v868
    %v1474 = vunpack.c.h.b16 %v868
    %v1475 = vunpack.c.l.b16 %v869
    %v1476 = vunpack.c.h.b16 %v869
    %v1477 = vunpack.c.l.b16 %v870
    %v1478 = vunpack.c.h.b16 %v870
    %v1479 = vunpack.c.l.b16 %v871
    %v1480 = vunpack.c.h.b16 %v871
    %v1481 = vunpack.c.l.b16 %v872
    %v1482 = vunpack.c.h.b16 %v872
    %v1483 = vunpack.c.l.b16 %v873
    %v1484 = vunpack.c.h.b16 %v873
    %v1485 = vunpack.c.l.b16 %v874
    %v1486 = vunpack.c.h.b16 %v874
    %v1487 = vunpack.c.l.b16 %v875
    %v1488 = vunpack.c.h.b16 %v875
    %v1489 = vunpack.c.l.b16 %v876
    %v1490 = vunpack.c.h.b16 %v876
    %v1491 = vunpack.c.l.b16 %v877
    %v1492 = vunpack.c.h.b16 %v877
    %v1493 = vunpack.c.l.b16 %v878
    %v1494 = vunpack.c.h.b16 %v878
    %v1495 = vunpack.c.l.b16 %v879
    %v1496 = vunpack.c.h.b16 %v879
    %v1497 = vunpack.c.l.b16 %v880
    %v1498 = vunpack.c.h.b16 %v880
    %v1499 = vunpack.c.l.b16 %v881
    %v1500 = vunpack.c.h.b16 %v881
    %v1501 = vunpack.c.l.b16 %v882
    %v1502 = vunpack.c.h.b16 %v882
    %v1503 = vunpack.c.l.b16 %v883
    %v1504 = vunpack.c.h.b16 %v883
    %v1505 = vunpack.c.l.b16 %v884
    %v1506 = vunpack.c.h.b16 %v884
    %v1507 = vunpack.c.l.b16 %v885
    %v1508 = vunpack.c.h.b16 %v885
    %v1509 = vunpack.c.l.b16 %v886
    %v1510 = vunpack.c.h.b16 %v886
    %v1511 = vunpack.c.l.b16 %v887
    %v1512 = vunpack.c.h.b16 %v887
    %v1513 = vunpack.c.l.b16 %v888
    %v1514 = vunpack.c.h.b16 %v888
    %v1515 = vunpack.c.l.b16 %v889
    %v1516 = vunpack.c.h.b16 %v889
    %v1517 = vunpack.c.l.b16 %v890
    %v1518 = vunpack.c.h.b16 %v890
    %v1519 = vunpack.c.l.b16 %v891
    %v1520 = vunpack.c.h.b16 %v891
    %v1521 = vunpack.c.l.b16 %v892
    %v1522 = vunpack.c.h.b16 %v892
    %v1523 = vunpack.c.l.b16 %v893
    %v1524 = vunpack.c.h.b16 %v893
    %v1525 = vunpack.c.l.b16 %v894
    %v1526 = vunpack.c.h.b16 %v894
    %v1527 = vunpack.c.l.b16 %v895
    %v1528 = vunpack.c.h.b16 %v895
    %v1529 = vunpack.c.l.b16 %v896
    %v1530 = vunpack.c.h.b16 %v896
    %v1531 = vunpack.c.l.b16 %v897
    %v1532 = vunpack.c.h.b16 %v897
    %v1533 = vunpack.c.l.b16 %v898
    %v1534 = vunpack.c.h.b16 %v898
    %v1535 = vunpack.c.l.b16 %v899
    %v1536 = vunpack.c.h.b16 %v899
    %v1537 = vunpack.c.l.b16 %v900
    %v1538 = vunpack.c.h.b16 %v900
    %v1539 = vunpack.c.l.b16 %v901
    %v1540 = vunpack.c.h.b16 %v901
    %v1541 = vunpack.c.l.b16 %v902
    %v1542 = vunpack.c.h.b16 %v902
    %v1543 = vunpack.c.l.b16 %v903
    %v1544 = vunpack.c.h.b16 %v903
    %v1545 = vunpack.c.l.b16 %v904
    %v1546 = vunpack.c.h.b16 %v904
    %v1547 = vunpack.c.l.b16 %v905
    %v1548 = vunpack.c.h.b16 %v905
    %v1549 = vunpack.c.l.b16 %v906
    %v1550 = vunpack.c.h.b16 %v906
    %v1551 = vunpack.c.l.b16 %v907
    %v1552 = vunpack.c.h.b16 %v907
    %v1553 = vunpack.c.l.b16 %v908
    %v1554 = vunpack.c.h.b16 %v908
    %v1555 = vunpack.c.l.b16 %v909
    %v1556 = vunpack.c.h.b16 %v909
    %v1557 = vunpack.c.l.b16 %v910
    %v1558 = vunpack.c.h.b16 %v910
    %v1559 = vunpack.c.l.b16 %v911
    %v1560 = vunpack.c.h.b16 %v911
    %v1561 = vunpack.c.l.b16 %v912
    %v1562 = vunpack.c.h.b16 %v912
    %v1563 = vunpack.c.l.b16 %v913
    %v1564 = vunpack.c.h.b16 %v913
    %v1565 = vunpack.c.l.b16 %v914
    %v1566 = vunpack.c.h.b16 %v914
    %v1567 = vunpack.c.l.b16 %v915
    %v1568 = vunpack.c.h.b16 %v915
    %v1569 = vunpack.c.l.b16 %v916
    %v1570 = vunpack.c.h.b16 %v916
    %v1571 = vunpack.c.l.b16 %v917
    %v1572 = vunpack.c.h.b16 %v917
    %v1573 = vunpack.c.l.b16 %v918
    %v1574 = vunpack.c.h.b16 %v918
    %v1575 = vunpack.c.l.b16 %v919
    %v1576 = vunpack.c.h.b16 %v919
    %v1577 = vunpack.c.l.b16 %v920
    %v1578 = vunpack.c.h.b16 %v920
    %v1579 = vunpack.c.l.b16 %v921
    %v1580 = vunpack.c.h.b16 %v921
    %v1581 = vunpack.c.l.b16 %v922
    %v1582 = vunpack.c.h.b16 %v922
    %v1583 = vunpack.c.l.b16 %v923
    %v1584 = vunpack.c.h.b16 %v923
    %v1585 = vunpack.c.l.b16 %v924
    %v1586 = vunpack.c.h.b16 %v924
    %v1587 = vunpack.c.l.b16 %v925
    %v1588 = vunpack.c.h.b16 %v925
    %v1589 = vunpack.c.l.b16 %v926
    %v1590 = vunpack.c.h.b16 %v926
    %v1591 = vunpack.c.l.b16 %v927
    %v1592 = vunpack.c.h.b16 %v927
    %v1593 = vunpack.c.l.b16 %v928
    %v1594 = vunpack.c.h.b16 %v928
    %v1595 = vunpack.c.l.b16 %v929
    %v1596 = vunpack.c.h.b16 %v929
    %v1597 = vunpack.c.l.b16 %v930
    %v1598 = vunpack.c.h.b16 %v930
    %v1599 = vunpack.c.l.b16 %v931
    %v1600 = vunpack.c.h.b16 %v931
    %v1601 = vunpack.c.l.b16 %v932
    %v1602 = vunpack.c.h.b16 %v932
    %v1603 = vunpack.c.l.b16 %v933
    %v1604 = vunpack.c.h.b16 %v933
    %v1605 = vunpack.c.l.b16 %v934
    %v1606 = vunpack.c.h.b16 %v934
    %v1607 = vunpack.c.l.b16 %v935
    %v1608 = vunpack.c.h.b16 %v935
    %v1609 = vunpack.c.l.b16 %v936
    %v1610 = vunpack.c.h.b16 %v936
    %v1611 = vunpack.c.l.b16 %v937
    %v1612 = vunpack.c.h.b16 %v937
    %v1613 = vunpack.c.l.b16 %v938
    %v1614 = vunpack.c.h.b16 %v938
    %v1615 = vunpack.c.l.b16 %v939
    %v1616 = vunpack.c.h.b16 %v939
    %v1617 = vunpack.c.l.b16 %v940
    %v1618 = vunpack.c.h.b16 %v940
    %v1619 = vunpack.c.l.b16 %v941
    %v1620 = vunpack.c.h.b16 %v941
    %v1621 = vunpack.c.l.b16 %v942
    %v1622 = vunpack.c.h.b16 %v942
    %v1623 = vunpack.c.l.b16 %v943
    %v1624 = vunpack.c.h.b16 %v943
    %v1625 = vunpack.c.l.b16 %v944
    %v1626 = vunpack.c.h.b16 %v944
    %v1627 = vunpack.c.l.b16 %v945
    %v1628 = vunpack.c.h.b16 %v945
    %v1629 = vunpack.c.l.b16 %v946
    %v1630 = vunpack.c.h.b16 %v946
    %v1631 = vunpack.c.l.b16 %v947
    %v1632 = vunpack.c.h.b16 %v947
    %v1633 = vunpack.c.l.b16 %v948
    %v1634 = vunpack.c.h.b16 %v948
    %v1635 = vunpack.c.l.b16 %v949
    %v1636 = vunpack.c.h.b16 %v949
    %v1637 = vunpack.c.l.b16 %v950
    %v1638 = vunpack.c.h.b16 %v950
    %v1639 = vunpack.c.l.b16 %v951
    %v1640 = vunpack.c.h.b16 %v951
    %v1641 = vunpack.c.l.b16 %v952
    %v1642 = vunpack.c.h.b16 %v952
    %v1643 = vunpack.c.l.b16 %v953
    %v1644 = vunpack.c.h.b16 %v953
    %v1645 = vunpack.c.l.b16 %v954
    %v1646 = vunpack.c.h.b16 %v954
    %v1647 = vunpack.c.l.b16 %v955
    %v1648 = vunpack.c.h.b16 %v955
    %v1649 = vunpack.c.l.b16 %v956
    %v1650 = vunpack.c.h.b16 %v956
    %v1651 = vunpack.c.l.b16 %v957
    %v1652 = vunpack.c.h.b16 %v957
    %v1653 = vunpack.c.l.b16 %v958
    %v1654 = vunpack.c.h.b16 %v958
    %v1655 = vunpack.c.l.b16 %v959
    %v1656 = vunpack.c.h.b16 %v959
    %v1657 = vunpack.c.l.b16 %v960
    %v1658 = vunpack.c.h.b16 %v960
    %v1659 = vunpack.c.l.b16 %v961
    %v1660 = vunpack.c.h.b16 %v961
    %v1661 = vunpack.c.l.b16 %v962
    %v1662 = vunpack.c.h.b16 %v962
    %v1663 = vunpack.c.l.b16 %v963
    %v1664 = vunpack.c.h.b16 %v963
    %v1665 = vunpack.c.l.b16 %v964
    %v1666 = vunpack.c.h.b16 %v964
    %v1667 = vunpack.c.l.b16 %v965
    %v1668 = vunpack.c.h.b16 %v965
    %v1669 = vunpack.c.l.b16 %v966
    %v1670 = vunpack.c.h.b16 %v966
    %v1671 = vunpack.c.l.b16 %v967
    %v1672 = vunpack.c.h.b16 %v967
    %v1673 = vunpack.c.l.b16 %v968
    %v1674 = vunpack.c.h.b16 %v968
    %v1675 = vunpack.c.l.b16 %v969
    %v1676 = vunpack.c.h.b16 %v969
    %v1677 = vunpack.c.l.b16 %v970
    %v1678 = vunpack.c.h.b16 %v970
    %v1679 = vunpack.c.l.b16 %v971
    %v1680 = vunpack.c.h.b16 %v971
    %v1681 = vunpack.c.l.b16 %v972
    %v1682 = vunpack.c.h.b16 %v972
    %v1683 = vunpack.c.l.b16 %v973
    %v1684 = vunpack.c.h.b16 %v973
    %v1685 = vunpack.c.l.b16 %v974
    %v1686 = vunpack.c.h.b16 %v974
    %v1687 = vunpack.c.l.b16 %v975
    %v1688 = vunpack.c.h.b16 %v975
    %v1689 = vunpack.c.l.b16 %v976
    %v1690 = vunpack.c.h.b16 %v976
    %v1691 = vunpack.c.l.b16 %v977
    %v1692 = vunpack.c.h.b16 %v977
    %v1693 = vunpack.c.l.b16 %v978
    %v1694 = vunpack.c.h.b16 %v978
    %v1695 = vunpack.c.l.b16 %v979
    %v1696 = vunpack.c.h.b16 %v979
    %v1697 = vunpack.c.l.b16 %v980
    %v1698 = vunpack.c.h.b16 %v980
    %v1699 = vunpack.c.l.b16 %v981
    %v1700 = vunpack.c.h.b16 %v981
    %v1701 = vunpack.c.l.b16 %v982
    %v1702 = vunpack.c.h.b16 %v982
    %v1703 = vunpack.c.l.b16 %v983
    %v1704 = vunpack.c.h.b16 %v983
    %v1705 = vunpack.c.l.b16 %v984
    %v1706 = vunpack.c.h.b16 %v984
    %v1707 = vunpack.c.l.b16 %v985
    %v1708 = vunpack.c.h.b16 %v985
    %v1709 = vunpack.c.l.b16 %v986
    %v1710 = vunpack.c.h.b16 %v986
    %v1711 = vunpack.c.l.b16 %v987
    %v1712 = vunpack.c.h.b16 %v987
    %v1713 = vunpack.c.l.b16 %v988
    %v1714 = vunpack.c.h.b16 %v988
    %v1715 = vunpack.c.l.b16 %v989
    %v1716 = vunpack.c.h.b16 %v989
    %v1717 = vunpack.c.l.b16 %v990
    %v1718 = vunpack.c.h.b16 %v990
    %v1719 = vunpack.c.l.b16 %v991
    %v1720 = vunpack.c.h.b16 %v991
    %v1721 = vunpack.c.l.b16 %v992
    %v1722 = vunpack.c.h.b16 %v992
    %v1723 = vunpack.c.l.b16 %v993
    %v1724 = vunpack.c.h.b16 %v993
    %v1725 = vunpack.c.l.b16 %v994
    %v1726 = vunpack.c.h.b16 %v994
    %v1727 = vunpack.c.l.b16 %v995
    %v1728 = vunpack.c.h.b16 %v995
    %v1729 = vunpack.c.l.b16 %v996
    %v1730 = vunpack.c.h.b16 %v996
    %v1731 = vunpack.c.l.b16 %v997
    %v1732 = vunpack.c.h.b16 %v997
    %v1733 = vunpack.c.l.b16 %v998
    %v1734 = vunpack.c.h.b16 %v998
    %v1735 = vunpack.c.l.b16 %v999
    %v1736 = vunpack.c.h.b16 %v999
    %v1737 = vunpack.c.l.b16 %v1000
    %v1738 = vunpack.c.h.b16 %v1000
    %v1739 = vunpack.c.l.b16 %v1001
    %v1740 = vunpack.c.h.b16 %v1001
    %v1741 = vunpack.c.l.b16 %v1002
    %v1742 = vunpack.c.h.b16 %v1002
    %v1743 = vunpack.c.l.b16 %v1003
    %v1744 = vunpack.c.h.b16 %v1003
    %v1745 = vunpack.c.l.b16 %v1004
    %v1746 = vunpack.c.h.b16 %v1004
    %v1747 = vunpack.c.l.b16 %v1005
    %v1748 = vunpack.c.h.b16 %v1005
    %v1749 = vunpack.c.l.b16 %v1006
    %v1750 = vunpack.c.h.b16 %v1006
    %v1751 = vunpack.c.l.b16 %v1007
    %v1752 = vunpack.c.h.b16 %v1007
    %v1753 = vunpack.c.l.b16 %v1008
    %v1754 = vunpack.c.h.b16 %v1008
    %v1755 = vunpack.c.l.b16 %v1009
    %v1756 = vunpack.c.h.b16 %v1009
    %v1757 = vunpack.c.l.b16 %v1010
    %v1758 = vunpack.c.h.b16 %v1010
    %v1759 = vunpack.c.l.b16 %v1011
    %v1760 = vunpack.c.h.b16 %v1011
    %v1761 = vunpack.c.l.b16 %v1012
    %v1762 = vunpack.c.h.b16 %v1012
    %v1763 = vunpack.c.l.b16 %v1013
    %v1764 = vunpack.c.h.b16 %v1013
    %v1765 = vunpack.c.l.b16 %v1014
    %v1766 = vunpack.c.h.b16 %v1014
    %v1767 = vunpack.c.l.b16 %v1015
    %v1768 = vunpack.c.h.b16 %v1015
    %v1769 = vunpack.c.l.b16 %v1016
    %v1770 = vunpack.c.h.b16 %v1016
    %v1771 = vunpack.c.l.b16 %v1017
    %v1772 = vunpack.c.h.b16 %v1017
    %v1773 = vunpack.c.l.b16 %v1018
    %v1774 = vunpack.c.h.b16 %v1018
    %v1775 = vunpack.c.l.b16 %v1019
    %v1776 = vunpack.c.h.b16 %v1019
    %v1777 = vunpack.c.l.b16 %v1020
    %v1778 = vunpack.c.h.b16 %v1020
    %v1779 = vunpack.c.l.b16 %v1021
    %v1780 = vunpack.c.h.b16 %v1021
    %v1781 = vunpack.c.l.b16 %v1022
    %v1782 = vunpack.c.h.b16 %v1022
    %v1783 = vunpack.c.l.b16 %v1023
    %v1784 = vunpack.c.h.b16 %v1023
    %v1785 = vunpack.c.l.b16 %v1024
    %v1786 = vunpack.c.h.b16 %v1024
    %v1787 = vunpack.c.l.b16 %v1025
    %v1788 = vunpack.c.h.b16 %v1025
    %v1789 = vunpack.c.l.b16 %v1026
    %v1790 = vunpack.c.h.b16 %v1026
    %v1791 = vunpack.c.l.b16 %v1027
    %v1792 = vunpack.c.h.b16 %v1027
    %v1793 = vunpack.c.l.b16 %v1028
    %v1794 = vunpack.c.h.b16 %v1028
    %v1795 = vunpack.c.l.b16 %v1029
    %v1796 = vunpack.c.h.b16 %v1029
    %v1797 = vunpack.c.l.b16 %v1030
    %v1798 = vunpack.c.h.b16 %v1030
    %v1799 = vunpack.c.l.b16 %v1031
    %v1800 = vunpack.c.h.b16 %v1031
    %v1801 = vunpack.c.l.b16 %v1032
    %v1802 = vunpack.c.h.b16 %v1032
    %v1803 = vunpack.c.l.b16 %v1033
    %v1804 = vunpack.c.h.b16 %v1033
    %v1805 = vunpack.c.l.b16 %v1034
    %v1806 = vunpack.c.h.b16 %v1034
    %v1807 = vunpack.c.l.b16 %v1035
    %v1808 = vunpack.c.h.b16 %v1035
    %v1809 = vunpack.c.l.b16 %v1036
    %v1810 = vunpack.c.h.b16 %v1036
    %v1811 = vunpack.c.l.b16 %v1037
    %v1812 = vunpack.c.h.b16 %v1037
    %v1813 = vunpack.c.l.b16 %v1038
    %v1814 = vunpack.c.h.b16 %v1038
    %v1815 = vunpack.c.l.b16 %v1039
    %v1816 = vunpack.c.h.b16 %v1039
    %v1817 = vunpack.c.l.b16 %v1040
    %v1818 = vunpack.c.h.b16 %v1040
    %v1819 = vunpack.c.l.b16 %v1041
    %v1820 = vunpack.c.h.b16 %v1041
    %v1821 = vunpack.c.l.b16 %v1042
    %v1822 = vunpack.c.h.b16 %v1042
    %v1823 = vunpack.c.l.b16 %v1043
    %v1824 = vunpack.c.h.b16 %v1043
    %v1825 = vunpack.c.l.b16 %v1044
    %v1826 = vunpack.c.h.b16 %v1044
    %v1827 = vunpack.c.l.b16 %v1045
    %v1828 = vunpack.c.h.b16 %v1045
    %v1829 = vunpack.c.l.b16 %v1046
    %v1830 = vunpack.c.h.b16 %v1046
    %v1831 = vunpack.c.l.b16 %v1047
    %v1832 = vunpack.c.h.b16 %v1047
    %v1833 = vunpack.c.l.b16 %v1048
    %v1834 = vunpack.c.h.b16 %v1048
    %v1835 = vunpack.c.l.b16 %v1049
    %v1836 = vunpack.c.h.b16 %v1049
    %v1837 = vunpack.c.l.b16 %v1050
    %v1838 = vunpack.c.h.b16 %v1050
    %v1839 = vunpack.c.l.b16 %v1051
    %v1840 = vunpack.c.h.b16 %v1051
    %v1841 = vunpack.c.l.b16 %v1052
    %v1842 = vunpack.c.h.b16 %v1052
    %v1843 = vpack.c.b16 %v1335, %v1331
    %v1844 = vpack.c.b16 %v1336, %v1332
    %v1845 = vpack.c.b16 %v1337, %v1333
    %v1846 = vpack.c.b16 %v1338, %v1334
    %v1847 = vpack.c.b16 %v1343, %v1339
    %v1848 = vpack.c.b16 %v1344, %v1340
    %v1849 = vpack.c.b16 %v1345, %v1341
    %v1850 = vpack.c.b16 %v1346, %v1342
    %v1851 = vpack.c.b16 %v1351, %v1347
    %v1852 = vpack.c.b16 %v1352, %v1348
    %v1853 = vpack.c.b16 %v1353, %v1349
    %v1854 = vpack.c.b16 %v1354, %v1350
    %v1855 = vpack.c.b16 %v1359, %v1355
    %v1856 = vpack.c.b16 %v1360, %v1356
    %v1857 = vpack.c.b16 %v1361, %v1357
    %v1858 = vpack.c.b16 %v1362, %v1358
    %v1859 = vpack.c.b16 %v1367, %v1363
    %v1860 = vpack.c.b16 %v1368, %v1364
    %v1861 = vpack.c.b16 %v1369, %v1365
    %v1862 = vpack.c.b16 %v1370, %v1366
    %v1863 = vpack.c.b16 %v1375, %v1371
    %v1864 = vpack.c.b16 %v1376, %v1372
    %v1865 = vpack.c.b16 %v1377, %v1373
    %v1866 = vpack.c.b16 %v1378, %v1374
    %v1867 = vpack.c.b16 %v1383, %v1379
    %v1868 = vpack.c.b16 %v1384, %v1380
    %v1869 = vpack.c.b16 %v1385, %v1381
    %v1870 = vpack.c.b16 %v1386, %v1382
    %v1871 = vpack.c.b16 %v1391, %v1387
    %v1872 = vpack.c.b16 %v1392, %v1388
    %v1873 = vpack.c.b16 %v1393, %v1389
    %v1874 = vpack.c.b16 %v1394, %v1390
    %v1875 = vpack.c.b16 %v1399, %v1395
    %v1876 = vpack.c.b16 %v1400, %v1396
    %v1877 = vpack.c.b16 %v1401, %v1397
    %v1878 = vpack.c.b16 %v1402, %v1398
    %v1879 = vpack.c.b16 %v1407, %v1403
    %v1880 = vpack.c.b16 %v1408, %v1404
    %v1881 = vpack.c.b16 %v1409, %v1405
    %v1882 = vpack.c.b16 %v1410, %v1406
    %v1883 = vpack.c.b16 %v1415, %v1411
    %v1884 = vpack.c.b16 %v1416, %v1412
    %v1885 = vpack.c.b16 %v1417, %v1413
    %v1886 = vpack.c.b16 %v1418, %v1414
    %v1887 = vpack.c.b16 %v1423, %v1419
    %v1888 = vpack.c.b16 %v1424, %v1420
    %v1889 = vpack.c.b16 %v1425, %v1421
    %v1890 = vpack.c.b16 %v1426, %v1422
    %v1891 = vpack.c.b16 %v1431, %v1427
    %v1892 = vpack.c.b16 %v1432, %v1428
    %v1893 = vpack.c.b16 %v1433, %v1429
    %v1894 = vpack.c.b16 %v1434, %v1430
    %v1895 = vpack.c.b16 %v1439, %v1435
    %v1896 = vpack.c.b16 %v1440, %v1436
    %v1897 = vpack.c.b16 %v1441, %v1437
    %v1898 = vpack.c.b16 %v1442, %v1438
    %v1899 = vpack.c.b16 %v1447, %v1443
    %v1900 = vpack.c.b16 %v1448, %v1444
    %v1901 = vpack.c.b16 %v1449, %v1445
    %v1902 = vpack.c.b16 %v1450, %v1446
    %v1903 = vpack.c.b16 %v1455, %v1451
    %v1904 = vpack.c.b16 %v1456, %v1452
    %v1905 = vpack.c.b16 %v1457, %v1453
    %v1906 = vpack.c.b16 %v1458, %v1454
    %v1907 = vpack.c.b16 %v1463, %v1459
    %v1908 = vpack.c.b16 %v1464, %v1460
    %v1909 = vpack.c.b16 %v1465, %v1461
    %v1910 = vpack.c.b16 %v1466, %v1462
    %v1911 = vpack.c.b16 %v1471, %v1467
    %v1912 = vpack.c.b16 %v1472, %v1468
    %v1913 = vpack.c.b16 %v1473, %v1469
    %v1914 = vpack.c.b16 %v1474, %v1470
    %v1915 = vpack.c.b16 %v1479, %v1475
    %v1916 = vpack.c.b16 %v1480, %v1476
    %v1917 = vpack.c.b16 %v1481, %v1477
    %v1918 = vpack.c.b16 %v1482, %v1478
    %v1919 = vpack.c.b16 %v1487, %v1483
    %v1920 = vpack.c.b16 %v1488, %v1484
    %v1921 = vpack.c.b16 %v1489, %v1485
    %v1922 = vpack.c.b16 %v1490, %v1486
    %v1923 = vpack.c.b16 %v1495, %v1491
    %v1924 = vpack.c.b16 %v1496, %v1492
    %v1925 = vpack.c.b16 %v1497, %v1493
    %v1926 = vpack.c.b16 %v1498, %v1494
    %v1927 = vpack.c.b16 %v1503, %v1499
    %v1928 = vpack.c.b16 %v1504, %v1500
    %v1929 = vpack.c.b16 %v1505, %v1501
    %v1930 = vpack.c.b16 %v1506, %v1502
    %v1931 = vpack.c.b16 %v1511, %v1507
    %v1932 = vpack.c.b16 %v1512, %v1508
    %v1933 = vpack.c.b16 %v1513, %v1509
    %v1934 = vpack.c.b16 %v1514, %v1510
    %v1935 = vpack.c.b16 %v1519, %v1515
    %v1936 = vpack.c.b16 %v1520, %v1516
    %v1937 = vpack.c.b16 %v1521, %v1517
    %v1938 = vpack.c.b16 %v1522, %v1518
    %v1939 = vpack.c.b16 %v1527, %v1523
    %v1940 = vpack.c.b16 %v1528, %v1524
    %v1941 = vpack.c.b16 %v1529, %v1525
    %v1942 = vpack.c.b16 %v1530, %v1526
    %v1943 = vpack.c.b16 %v1535, %v1531
    %v1944 = vpack.c.b16 %v1536, %v1532
    %v1945 = vpack.c.b16 %v1537, %v1533
    %v1946 = vpack.c.b16 %v1538, %v1534
    %v1947 = vpack.c.b16 %v1543, %v1539
    %v1948 = vpack.c.b16 %v1544, %v1540
    %v1949 = vpack.c.b16 %v1545, %v1541
    %v1950 = vpack.c.b16 %v1546, %v1542
    %v1951 = vpack.c.b16 %v1551, %v1547
    %v1952 = vpack.c.b16 %v1552, %v1548
    %v1953 = vpack.c.b16 %v1553, %v1549
    %v1954 = vpack.c.b16 %v1554, %v1550
    %v1955 = vpack.c.b16 %v1559, %v1555
    %v1956 = vpack.c.b16 %v1560, %v1556
    %v1957 = vpack.c.b16 %v1561, %v1557
    %v1958 = vpack.c.b16 %v1562, %v1558
    %v1959 = vpack.c.b16 %v1567, %v1563
    %v1960 = vpack.c.b16 %v1568, %v1564
    %v1961 = vpack.c.b16 %v1569, %v1565
    %v1962 = vpack.c.b16 %v1570, %v1566
    %v1963 = vpack.c.b16 %v1575, %v1571
    %v1964 = vpack.c.b16 %v1576, %v1572
    %v1965 = vpack.c.b16 %v1577, %v1573
    %v1966 = vpack.c.b16 %v1578, %v1574
    %v1967 = vpack.c.b16 %v1583, %v1579
    %v1968 = vpack.c.b16 %v1584, %v1580
    %v1969 = vpack.c.b16 %v1585, %v1581
    %v1970 = vpack.c.b16 %v1586, %v1582
    %v1971 = vpack.c.b16 %v1591, %v1587
    %v1972 = vpack.c.b16 %v1592, %v1588
    %v1973 = vpack.c.b16 %v1593, %v1589
    %v1974 = vpack.c.b16 %v1594, %v1590
    %v1975 = vpack.c.b16 %v1599, %v1595
    %v1976 = vpack.c.b16 %v1600, %v1596
    %v1977 = vpack.c.b16 %v1601, %v1597
    %v1978 = vpack.c.b16 %v1602, %v1598
    %v1979 = vpack.c.b16 %v1607, %v1603
    %v1980 = vpack.c.b16 %v1608, %v1604
    %v1981 = vpack.c.b16 %v1609, %v1605
    %v1982 = vpack.c.b16 %v1610, %v1606
    %v1983 = vpack.c.b16 %v1615, %v1611
    %v1984 = vpack.c.b16 %v1616, %v1612
    %v1985 = vpack.c.b16 %v1617, %v1613
    %v1986 = vpack.c.b16 %v1618, %v1614
    %v1987 = vpack.c.b16 %v1623, %v1619
    %v1988 = vpack.c.b16 %v1624, %v1620
    %v1989 = vpack.c.b16 %v1625, %v1621
    %v1990 = vpack.c.b16 %v1626, %v1622
    %v1991 = vpack.c.b16 %v1631, %v1627
    %v1992 = vpack.c.b16 %v1632, %v1628
    %v1993 = vpack.c.b16 %v1633, %v1629
    %v1994 = vpack.c.b16 %v1634, %v1630
    %v1995 = vpack.c.b16 %v1639, %v1635
    %v1996 = vpack.c.b16 %v1640, %v1636
    %v1997 = vpack.c.b16 %v1641, %v1637
    %v1998 = vpack.c.b16 %v1642, %v1638
    %v1999 = vpack.c.b16 %v1647, %v1643
    %v2000 = vpack.c.b16 %v1648, %v1644
    %v2001 = vpack.c.b16 %v1649, %v1645
    %v2002 = vpack.c.b16 %v1650, %v1646
    %v2003 = vpack.c.b16 %v1655, %v1651
    %v2004 = vpack.c.b16 %v1656, %v1652
    %v2005 = vpack.c.b16 %v1657, %v1653
    %v2006 = vpack.c.b16 %v1658, %v1654
    %v2007 = vpack.c.b16 %v1663, %v1659
    %v2008 = vpack.c.b16 %v1664, %v1660
    %v2009 = vpack.c.b16 %v1665, %v1661
    %v2010 = vpack.c.b16 %v1666, %v1662
    %v2011 = vpack.c.b16 %v1671, %v1667
    %v2012 = vpack.c.b16 %v1672, %v1668
    %v2013 = vpack.c.b16 %v1673, %v1669
    %v2014 = vpack.c.b16 %v1674, %v1670
    %v2015 = vpack.c.b16 %v1679, %v1675
    %v2016 = vpack.c.b16 %v1680, %v1676
    %v2017 = vpack.c.b16 %v1681, %v1677
    %v2018 = vpack.c.b16 %v1682, %v1678
    %v2019 = vpack.c.b16 %v1687, %v1683
    %v2020 = vpack.c.b16 %v1688, %v1684
    %v2021 = vpack.c.b16 %v1689, %v1685
    %v2022 = vpack.c.b16 %v1690, %v1686
    %v2023 = vpack.c.b16 %v1695, %v1691
    %v2024 = vpack.c.b16 %v1696, %v1692
    %v2025 = vpack.c.b16 %v1697, %v1693
    %v2026 = vpack.c.b16 %v1698, %v1694
    %v2027 = vpack.c.b16 %v1703, %v1699
    %v2028 = vpack.c.b16 %v1704, %v1700
    %v2029 = vpack.c.b16 %v1705, %v1701
    %v2030 = vpack.c.b16 %v1706, %v1702
    %v2031 = vpack.c.b16 %v1711, %v1707
    %v2032 = vpack.c.b16 %v1712, %v1708
    %v2033 = vpack.c.b16 %v1713, %v1709
    %v2034 = vpack.c.b16 %v1714, %v1710
    %v2035 = vpack.c.b16 %v1719, %v1715
    %v2036 = vpack.c.b16 %v1720, %v1716
    %v2037 = vpack.c.b16 %v1721, %v1717
    %v2038 = vpack.c.b16 %v1722, %v1718
    %v2039 = vpack.c.b16 %v1727, %v1723
    %v2040 = vpack.c.b16 %v1728, %v1724
    %v2041 = vpack.c.b16 %v1729, %v1725
    %v2042 = vpack.c.b16 %v1730, %v1726
    %v2043 = vpack.c.b16 %v1735, %v1731
    %v2044 = vpack.c.b16 %v1736, %v1732
    %v2045 = vpack.c.b16 %v1737, %v1733
    %v2046 = vpack.c.b16 %v1738, %v1734
    %v2047 = vpack.c.b16 %v1743, %v1739
    %v2048 = vpack.c.b16 %v1744, %v1740
    %v2049 = vpack.c.b16 %v1745, %v1741
    %v2050 = vpack.c.b16 %v1746, %v1742
    %v2051 = vpack.c.b16 %v1751, %v1747
    %v2052 = vpack.c.b16 %v1752, %v1748
    %v2053 = vpack.c.b16 %v1753, %v1749
    %v2054 = vpack.c.b16 %v1754, %v1750
    %v2055 = vpack.c.b16 %v1759, %v1755
    %v2056 = vpack.c.b16 %v1760, %v1756
    %v2057 = vpack.c.b16 %v1761, %v1757
    %v2058 = vpack.c.b16 %v1762, %v1758
    %v2059 = vpack.c.b16 %v1767, %v1763
    %v2060 = vpack.c.b16 %v1768, %v1764
    %v2061 = vpack.c.b16 %v1769, %v1765
    %v2062 = vpack.c.b16 %v1770, %v1766
    %v2063 = vpack.c.b16 %v1775, %v1771
    %v2064 = vpack.c.b16 %v1776, %v1772
    %v2065 = vpack.c.b16 %v1777, %v1773
    %v2066 = vpack.c.b16 %v1778, %v1774
    %v2067 = vpack.c.b16 %v1783, %v1779
    %v2068 = vpack.c.b16 %v1784, %v1780
    %v2069 = vpack.c.b16 %v1785, %v1781
    %v2070 = vpack.c.b16 %v1786, %v1782
    %v2071 = vpack.c.b16 %v1791, %v1787
    %v2072 = vpack.c.b16 %v1792, %v1788
    %v2073 = vpack.c.b16 %v1793, %v1789
    %v2074 = vpack.c.b16 %v1794, %v1790
    %v2075 = vpack.c.b16 %v1799, %v1795
    %v2076 = vpack.c.b16 %v1800, %v1796
    %v2077 = vpack.c.b16 %v1801, %v1797
    %v2078 = vpack.c.b16 %v1802, %v1798
    %v2079 = vpack.c.b16 %v1807, %v1803
    %v2080 = vpack.c.b16 %v1808, %v1804
    %v2081 = vpack.c.b16 %v1809, %v1805
    %v2082 = vpack.c.b16 %v1810, %v1806
    %v2083 = vpack.c.b16 %v1815, %v1811
    %v2084 = vpack.c.b16 %v1816, %v1812
    %v2085 = vpack.c.b16 %v1817, %v1813
    %v2086 = vpack.c.b16 %v1818, %v1814
    %v2087 = vpack.c.b16 %v1823, %v1819
    %v2088 = vpack.c.b16 %v1824, %v1820
    %v2089 = vpack.c.b16 %v1825, %v1821
    %v2090 = vpack.c.b16 %v1826, %v1822
    %v2091 = vpack.c.b16 %v1831, %v1827
    %v2092 = vpack.c.b16 %v1832, %v1828
    %v2093 = vpack.c.b16 %v1833, %v1829
    %v2094 = vpack.c.b16 %v1834, %v1830
    %v2095 = vpack.c.b16 %v1839, %v1835
    %v2096 = vpack.c.b16 %v1840, %v1836
    %v2097 = vpack.c.b16 %v1841, %v1837
    %v2098 = vpack.c.b16 %v1842, %v1838
    %2355 = vmatprep.subr.bf16.mxu0 %v1844
    %2356 = vmatpush1.bf16.msra.mxu0 %v1843
    %2357 = vmatprep.subr.bf16.mxu0 %v1848
    %2358 = vmatpush1.bf16.msra.mxu0 %v1847
    %2359 = vmatprep.subr.bf16.mxu0 %v1852
    %2360 = vmatpush1.bf16.msra.mxu0 %v1851
    %2361 = vmatprep.subr.bf16.mxu0 %v1856
    %2362 = vmatpush1.bf16.msra.mxu0 %v1855
    %2363 = vmatprep.subr.bf16.mxu0 %v1860
    %2364 = vmatpush1.bf16.msra.mxu0 %v1859
    %2365 = vmatprep.subr.bf16.mxu0 %v1864
    %2366 = vmatpush1.bf16.msra.mxu0 %v1863
    %2367 = vmatprep.subr.bf16.mxu0 %v1868
    %2368 = vmatpush1.bf16.msra.mxu0 %v1867
    %2369 = vmatprep.subr.bf16.mxu0 %v1872
    %2370 = vmatpush1.bf16.msra.mxu0 %v1871
    %2371 = vmatprep.subr.bf16.mxu0 %v1876
    %2372 = vmatpush1.bf16.msra.mxu0 %v1875
    %2373 = vmatprep.subr.bf16.mxu0 %v1880
    %2374 = vmatpush1.bf16.msra.mxu0 %v1879
    %2375 = vmatprep.subr.bf16.mxu0 %v1884
    %2376 = vmatpush1.bf16.msra.mxu0 %v1883
    %2377 = vmatprep.subr.bf16.mxu0 %v1888
    %2378 = vmatpush1.bf16.msra.mxu0 %v1887
    %2379 = vmatprep.subr.bf16.mxu0 %v1892
    %2380 = vmatpush1.bf16.msra.mxu0 %v1891
    %2381 = vmatprep.subr.bf16.mxu0 %v1896
    %2382 = vmatpush1.bf16.msra.mxu0 %v1895
    %2383 = vmatprep.subr.bf16.mxu0 %v1900
    %2384 = vmatpush1.bf16.msra.mxu0 %v1899
    %2385 = vmatprep.subr.bf16.mxu0 %v1904
    %2386 = vmatpush1.bf16.msra.mxu0 %v1903
    %2387 = vmatprep.mubr.bf16.mxu0 %v790
    %2388 = vmatmul.mubr.bf16.gmra.mrb[0].mxu0 %v789
    %v2389 = vpop.f32.mrb[0].mxu0
    %v2390 = vadd.f32 %v1058, %v2389
    %v2391 = vpop.f32.mrb[0].mxu0
    %v2392 = vadd.f32 %v1062, %v2391
    %v2393 = vpop.f32.mrb[0].mxu0
    %v2394 = vpop.f32.mrb[0].mxu0
    %2395 = vdwg.mxu0
    %2396 = vmatprep.subr.bf16.mxu0 %v1908
    %2397 = vmatpush1.bf16.msra.mxu0 %v1907
    %2398 = vmatprep.subr.bf16.mxu0 %v1912
    %2399 = vmatpush1.bf16.msra.mxu0 %v1911
    %2400 = vmatprep.subr.bf16.mxu0 %v1916
    %2401 = vmatpush1.bf16.msra.mxu0 %v1915
    %2402 = vmatprep.subr.bf16.mxu0 %v1920
    %2403 = vmatpush1.bf16.msra.mxu0 %v1919
    %2404 = vmatprep.subr.bf16.mxu0 %v1924
    %2405 = vmatpush1.bf16.msra.mxu0 %v1923
    %2406 = vmatprep.subr.bf16.mxu0 %v1928
    %2407 = vmatpush1.bf16.msra.mxu0 %v1927
    %2408 = vmatprep.subr.bf16.mxu0 %v1932
    %2409 = vmatpush1.bf16.msra.mxu0 %v1931
    %2410 = vmatprep.subr.bf16.mxu0 %v1936
    %2411 = vmatpush1.bf16.msra.mxu0 %v1935
    %2412 = vmatprep.subr.bf16.mxu0 %v1940
    %2413 = vmatpush1.bf16.msra.mxu0 %v1939
    %2414 = vmatprep.subr.bf16.mxu0 %v1944
    %2415 = vmatpush1.bf16.msra.mxu0 %v1943
    %2416 = vmatprep.subr.bf16.mxu0 %v1948
    %2417 = vmatpush1.bf16.msra.mxu0 %v1947
    %2418 = vmatprep.subr.bf16.mxu0 %v1952
    %2419 = vmatpush1.bf16.msra.mxu0 %v1951
    %2420 = vmatprep.subr.bf16.mxu0 %v1956
    %2421 = vmatpush1.bf16.msra.mxu0 %v1955
    %2422 = vmatprep.subr.bf16.mxu0 %v1960
    %2423 = vmatpush1.bf16.msra.mxu0 %v1959
    %2424 = vmatprep.subr.bf16.mxu0 %v1964
    %2425 = vmatpush1.bf16.msra.mxu0 %v1963
    %2426 = vmatprep.subr.bf16.mxu0 %v1968
    %2427 = vmatpush1.bf16.msra.mxu0 %v1967
    %2428 = vmatprep.mubr.bf16.mxu0 %v792
    %2429 = vmatmul.mubr.bf16.gmra.mrb[0].mxu0 %v791
    %v2430 = vpop.f32.mrb[0].mxu0
    %v2431 = vadd.f32 %v2390, %v2430
    %v2432 = vpop.f32.mrb[0].mxu0
    %v2433 = vadd.f32 %v2392, %v2432
    %v2434 = vpop.f32.mrb[0].mxu0
    %v2435 = vpop.f32.mrb[0].mxu0
    %2436 = vdwg.mxu0
    %2437 = vmatprep.subr.bf16.mxu0 %v1972
    %2438 = vmatpush1.bf16.msra.mxu0 %v1971
    %2439 = vmatprep.subr.bf16.mxu0 %v1976
    %2440 = vmatpush1.bf16.msra.mxu0 %v1975
    %2441 = vmatprep.subr.bf16.mxu0 %v1980
    %2442 = vmatpush1.bf16.msra.mxu0 %v1979
    %2443 = vmatprep.subr.bf16.mxu0 %v1984
    %2444 = vmatpush1.bf16.msra.mxu0 %v1983
    %2445 = vmatprep.subr.bf16.mxu0 %v1988
    %2446 = vmatpush1.bf16.msra.mxu0 %v1987
    %2447 = vmatprep.subr.bf16.mxu0 %v1992
    %2448 = vmatpush1.bf16.msra.mxu0 %v1991
    %2449 = vmatprep.subr.bf16.mxu0 %v1996
    %2450 = vmatpush1.bf16.msra.mxu0 %v1995
    %2451 = vmatprep.subr.bf16.mxu0 %v2000
    %2452 = vmatpush1.bf16.msra.mxu0 %v1999
    %2453 = vmatprep.subr.bf16.mxu0 %v2004
    %2454 = vmatpush1.bf16.msra.mxu0 %v2003
    %2455 = vmatprep.subr.bf16.mxu0 %v2008
    %2456 = vmatpush1.bf16.msra.mxu0 %v2007
    %2457 = vmatprep.subr.bf16.mxu0 %v2012
    %2458 = vmatpush1.bf16.msra.mxu0 %v2011
    %2459 = vmatprep.subr.bf16.mxu0 %v2016
    %2460 = vmatpush1.bf16.msra.mxu0 %v2015
    %2461 = vmatprep.subr.bf16.mxu0 %v2020
    %2462 = vmatpush1.bf16.msra.mxu0 %v2019
    %2463 = vmatprep.subr.bf16.mxu0 %v2024
    %2464 = vmatpush1.bf16.msra.mxu0 %v2023
    %2465 = vmatprep.subr.bf16.mxu0 %v2028
    %2466 = vmatpush1.bf16.msra.mxu0 %v2027
    %2467 = vmatprep.subr.bf16.mxu0 %v2032
    %2468 = vmatpush1.bf16.msra.mxu0 %v2031
    %2469 = vmatprep.mubr.bf16.mxu0 %v794
    %2470 = vmatmul.mubr.bf16.gmra.mrb[0].mxu0 %v793
    %v2471 = vpop.f32.mrb[0].mxu0
    %v2472 = vadd.f32 %v2431, %v2471
    %v2473 = vpop.f32.mrb[0].mxu0
    %v2474 = vadd.f32 %v2433, %v2473
    %v2475 = vpop.f32.mrb[0].mxu0
    %v2476 = vpop.f32.mrb[0].mxu0
    %2477 = vdwg.mxu0
    %2478 = vmatprep.subr.bf16.mxu0 %v2036
    %2479 = vmatpush1.bf16.msra.mxu0 %v2035
    %2480 = vmatprep.subr.bf16.mxu0 %v2040
    %2481 = vmatpush1.bf16.msra.mxu0 %v2039
    %2482 = vmatprep.subr.bf16.mxu0 %v2044
    %2483 = vmatpush1.bf16.msra.mxu0 %v2043
    %2484 = vmatprep.subr.bf16.mxu0 %v2048
    %2485 = vmatpush1.bf16.msra.mxu0 %v2047
    %2486 = vmatprep.subr.bf16.mxu0 %v2052
    %2487 = vmatpush1.bf16.msra.mxu0 %v2051
    %2488 = vmatprep.subr.bf16.mxu0 %v2056
    %2489 = vmatpush1.bf16.msra.mxu0 %v2055
    %2490 = vmatprep.subr.bf16.mxu0 %v2060
    %2491 = vmatpush1.bf16.msra.mxu0 %v2059
    %2492 = vmatprep.subr.bf16.mxu0 %v2064
    %2493 = vmatpush1.bf16.msra.mxu0 %v2063
    %2494 = vmatprep.subr.bf16.mxu0 %v2068
    %2495 = vmatpush1.bf16.msra.mxu0 %v2067
    %2496 = vmatprep.subr.bf16.mxu0 %v2072
    %2497 = vmatpush1.bf16.msra.mxu0 %v2071
    %2498 = vmatprep.subr.bf16.mxu0 %v2076
    %2499 = vmatpush1.bf16.msra.mxu0 %v2075
    %2500 = vmatprep.subr.bf16.mxu0 %v2080
    %2501 = vmatpush1.bf16.msra.mxu0 %v2079
    %2502 = vmatprep.subr.bf16.mxu0 %v2084
    %2503 = vmatpush1.bf16.msra.mxu0 %v2083
    %2504 = vmatprep.subr.bf16.mxu0 %v2088
    %2505 = vmatpush1.bf16.msra.mxu0 %v2087
    %2506 = vmatprep.subr.bf16.mxu0 %v2092
    %2507 = vmatpush1.bf16.msra.mxu0 %v2091
    %2508 = vmatprep.subr.bf16.mxu0 %v2096
    %2509 = vmatpush1.bf16.msra.mxu0 %v2095
    %2510 = vmatprep.mubr.bf16.mxu0 %v796
    %2511 = vmatmul.mubr.bf16.gmra.mrb[0].mxu0 %v795
    %v2512 = vpop.f32.mrb[0].mxu0
    %v2513 = vadd.f32 %v2472, %v2512
    %v2514 = vpop.f32.mrb[0].mxu0
    %v2515 = vadd.f32 %v2474, %v2514
    %v2516 = vpop.f32.mrb[0].mxu0
    %v2517 = vpop.f32.mrb[0].mxu0
    %2518 = vdwg.mxu0
    %2519 = vmatprep.subr.bf16.mxu0 %v1846
    %2520 = vmatpush1.bf16.msra.mxu0 %v1845
    %2521 = vmatprep.subr.bf16.mxu0 %v1850
    %2522 = vmatpush1.bf16.msra.mxu0 %v1849
    %2523 = vmatprep.subr.bf16.mxu0 %v1854
    %2524 = vmatpush1.bf16.msra.mxu0 %v1853
    %2525 = vmatprep.subr.bf16.mxu0 %v1858
    %2526 = vmatpush1.bf16.msra.mxu0 %v1857
    %2527 = vmatprep.subr.bf16.mxu0 %v1862
    %2528 = vmatpush1.bf16.msra.mxu0 %v1861
    %2529 = vmatprep.subr.bf16.mxu0 %v1866
    %2530 = vmatpush1.bf16.msra.mxu0 %v1865
    %2531 = vmatprep.subr.bf16.mxu0 %v1870
    %2532 = vmatpush1.bf16.msra.mxu0 %v1869
    %2533 = vmatprep.subr.bf16.mxu0 %v1874
    %2534 = vmatpush1.bf16.msra.mxu0 %v1873
    %2535 = vmatprep.subr.bf16.mxu0 %v1878
    %2536 = vmatpush1.bf16.msra.mxu0 %v1877
    %2537 = vmatprep.subr.bf16.mxu0 %v1882
    %2538 = vmatpush1.bf16.msra.mxu0 %v1881
    %2539 = vmatprep.subr.bf16.mxu0 %v1886
    %2540 = vmatpush1.bf16.msra.mxu0 %v1885
    %2541 = vmatprep.subr.bf16.mxu0 %v1890
    %2542 = vmatpush1.bf16.msra.mxu0 %v1889
    %2543 = vmatprep.subr.bf16.mxu0 %v1894
    %2544 = vmatpush1.bf16.msra.mxu0 %v1893
    %2545 = vmatprep.subr.bf16.mxu0 %v1898
    %2546 = vmatpush1.bf16.msra.mxu0 %v1897
    %2547 = vmatprep.subr.bf16.mxu0 %v1902
    %2548 = vmatpush1.bf16.msra.mxu0 %v1901
    %2549 = vmatprep.subr.bf16.mxu0 %v1906
    %2550 = vmatpush1.bf16.msra.mxu0 %v1905
    %2551 = vmatprep.mubr.bf16.mxu0 %v790
    %2552 = vmatmul.mubr.bf16.gmra.mrb[0].mxu0 %v789
    %v2553 = vpop.f32.mrb[0].mxu0
    %v2554 = vadd.f32 %v1066, %v2553
    %v2555 = vpop.f32.mrb[0].mxu0
    %v2556 = vadd.f32 %v1070, %v2555
    %v2557 = vpop.f32.mrb[0].mxu0
    %v2558 = vpop.f32.mrb[0].mxu0
    %2559 = vdwg.mxu0
    %2560 = vmatprep.subr.bf16.mxu0 %v1910
    %2561 = vmatpush1.bf16.msra.mxu0 %v1909
    %2562 = vmatprep.subr.bf16.mxu0 %v1914
    %2563 = vmatpush1.bf16.msra.mxu0 %v1913
    %2564 = vmatprep.subr.bf16.mxu0 %v1918
    %2565 = vmatpush1.bf16.msra.mxu0 %v1917
    %2566 = vmatprep.subr.bf16.mxu0 %v1922
    %2567 = vmatpush1.bf16.msra.mxu0 %v1921
    %2568 = vmatprep.subr.bf16.mxu0 %v1926
    %2569 = vmatpush1.bf16.msra.mxu0 %v1925
    %2570 = vmatprep.subr.bf16.mxu0 %v1930
    %2571 = vmatpush1.bf16.msra.mxu0 %v1929
    %2572 = vmatprep.subr.bf16.mxu0 %v1934
    %2573 = vmatpush1.bf16.msra.mxu0 %v1933
    %2574 = vmatprep.subr.bf16.mxu0 %v1938
    %2575 = vmatpush1.bf16.msra.mxu0 %v1937
    %2576 = vmatprep.subr.bf16.mxu0 %v1942
    %2577 = vmatpush1.bf16.msra.mxu0 %v1941
    %2578 = vmatprep.subr.bf16.mxu0 %v1946
    %2579 = vmatpush1.bf16.msra.mxu0 %v1945
    %2580 = vmatprep.subr.bf16.mxu0 %v1950
    %2581 = vmatpush1.bf16.msra.mxu0 %v1949
    %2582 = vmatprep.subr.bf16.mxu0 %v1954
    %2583 = vmatpush1.bf16.msra.mxu0 %v1953
    %2584 = vmatprep.subr.bf16.mxu0 %v1958
    %2585 = vmatpush1.bf16.msra.mxu0 %v1957
    %2586 = vmatprep.subr.bf16.mxu0 %v1962
    %2587 = vmatpush1.bf16.msra.mxu0 %v1961
    %2588 = vmatprep.subr.bf16.mxu0 %v1966
    %2589 = vmatpush1.bf16.msra.mxu0 %v1965
    %2590 = vmatprep.subr.bf16.mxu0 %v1970
    %2591 = vmatpush1.bf16.msra.mxu0 %v1969
    %2592 = vmatprep.mubr.bf16.mxu0 %v792
    %2593 = vmatmul.mubr.bf16.gmra.mrb[0].mxu0 %v791
    %v2594 = vpop.f32.mrb[0].mxu0
    %v2595 = vadd.f32 %v2554, %v2594
    %v2596 = vpop.f32.mrb[0].mxu0
    %v2597 = vadd.f32 %v2556, %v2596
    %v2598 = vpop.f32.mrb[0].mxu0
    %v2599 = vpop.f32.mrb[0].mxu0
    %2600 = vdwg.mxu0
    %2601 = vmatprep.subr.bf16.mxu0 %v1974
    %2602 = vmatpush1.bf16.msra.mxu0 %v1973
    %2603 = vmatprep.subr.bf16.mxu0 %v1978
    %2604 = vmatpush1.bf16.msra.mxu0 %v1977
    %2605 = vmatprep.subr.bf16.mxu0 %v1982
    %2606 = vmatpush1.bf16.msra.mxu0 %v1981
    %2607 = vmatprep.subr.bf16.mxu0 %v1986
    %2608 = vmatpush1.bf16.msra.mxu0 %v1985
    %2609 = vmatprep.subr.bf16.mxu0 %v1990
    %2610 = vmatpush1.bf16.msra.mxu0 %v1989
    %2611 = vmatprep.subr.bf16.mxu0 %v1994
    %2612 = vmatpush1.bf16.msra.mxu0 %v1993
    %2613 = vmatprep.subr.bf16.mxu0 %v1998
    %2614 = vmatpush1.bf16.msra.mxu0 %v1997
    %2615 = vmatprep.subr.bf16.mxu0 %v2002
    %2616 = vmatpush1.bf16.msra.mxu0 %v2001
    %2617 = vmatprep.subr.bf16.mxu0 %v2006
    %2618 = vmatpush1.bf16.msra.mxu0 %v2005
    %2619 = vmatprep.subr.bf16.mxu0 %v2010
    %2620 = vmatpush1.bf16.msra.mxu0 %v2009
    %2621 = vmatprep.subr.bf16.mxu0 %v2014
    %2622 = vmatpush1.bf16.msra.mxu0 %v2013
    %2623 = vmatprep.subr.bf16.mxu0 %v2018
    %2624 = vmatpush1.bf16.msra.mxu0 %v2017
    %2625 = vmatprep.subr.bf16.mxu0 %v2022
    %2626 = vmatpush1.bf16.msra.mxu0 %v2021
    %2627 = vmatprep.subr.bf16.mxu0 %v2026
    %2628 = vmatpush1.bf16.msra.mxu0 %v2025
    %2629 = vmatprep.subr.bf16.mxu0 %v2030
    %2630 = vmatpush1.bf16.msra.mxu0 %v2029
    %2631 = vmatprep.subr.bf16.mxu0 %v2034
    %2632 = vmatpush1.bf16.msra.mxu0 %v2033
    %2633 = vmatprep.mubr.bf16.mxu0 %v794
    %2634 = vmatmul.mubr.bf16.gmra.mrb[0].mxu0 %v793
    %v2635 = vpop.f32.mrb[0].mxu0
    %v2636 = vadd.f32 %v2595, %v2635
    %v2637 = vpop.f32.mrb[0].mxu0
    %v2638 = vadd.f32 %v2597, %v2637
    %v2639 = vpop.f32.mrb[0].mxu0
    %v2640 = vpop.f32.mrb[0].mxu0
    %2641 = vdwg.mxu0
    %2642 = vmatprep.subr.bf16.mxu0 %v2038
    %2643 = vmatpush1.bf16.msra.mxu0 %v2037
    %2644 = vmatprep.subr.bf16.mxu0 %v2042
    %2645 = vmatpush1.bf16.msra.mxu0 %v2041
    %2646 = vmatprep.subr.bf16.mxu0 %v2046
    %2647 = vmatpush1.bf16.msra.mxu0 %v2045
    %2648 = vmatprep.subr.bf16.mxu0 %v2050
    %2649 = vmatpush1.bf16.msra.mxu0 %v2049
    %2650 = vmatprep.subr.bf16.mxu0 %v2054
    %2651 = vmatpush1.bf16.msra.mxu0 %v2053
    %2652 = vmatprep.subr.bf16.mxu0 %v2058
    %2653 = vmatpush1.bf16.msra.mxu0 %v2057
    %2654 = vmatprep.subr.bf16.mxu0 %v2062
    %2655 = vmatpush1.bf16.msra.mxu0 %v2061
    %2656 = vmatprep.subr.bf16.mxu0 %v2066
    %2657 = vmatpush1.bf16.msra.mxu0 %v2065
    %2658 = vmatprep.subr.bf16.mxu0 %v2070
    %2659 = vmatpush1.bf16.msra.mxu0 %v2069
    %2660 = vmatprep.subr.bf16.mxu0 %v2074
    %2661 = vmatpush1.bf16.msra.mxu0 %v2073
    %2662 = vmatprep.subr.bf16.mxu0 %v2078
    %2663 = vmatpush1.bf16.msra.mxu0 %v2077
    %2664 = vmatprep.subr.bf16.mxu0 %v2082
    %2665 = vmatpush1.bf16.msra.mxu0 %v2081
    %2666 = vmatprep.subr.bf16.mxu0 %v2086
    %2667 = vmatpush1.bf16.msra.mxu0 %v2085
    %2668 = vmatprep.subr.bf16.mxu0 %v2090
    %2669 = vmatpush1.bf16.msra.mxu0 %v2089
    %2670 = vmatprep.subr.bf16.mxu0 %v2094
    %2671 = vmatpush1.bf16.msra.mxu0 %v2093
    %2672 = vmatprep.subr.bf16.mxu0 %v2098
    %2673 = vmatpush1.bf16.msra.mxu0 %v2097
    %2674 = vmatprep.mubr.bf16.mxu0 %v796
    %2675 = vmatmul.mubr.bf16.gmra.mrb[0].mxu0 %v795
    %v2676 = vpop.f32.mrb[0].mxu0
    %v2677 = vadd.f32 %v2636, %v2676
    %v2678 = vpop.f32.mrb[0].mxu0
    %v2679 = vadd.f32 %v2638, %v2678
    %v2680 = vpop.f32.mrb[0].mxu0
    %v2681 = vpop.f32.mrb[0].mxu0
    %2682 = vdwg.mxu0
    %v2683 = vmax.f32 %v2513, 0.0
    %v2684 = vmax.f32 %v2515, 0.0
    %v2685 = vmax.f32 %v2677, 0.0
    %v2686 = vmax.f32 %v2679, 0.0
    %v2687 = vpack.c.bf16 %v2683, %v2683
    %v2688 = vpack.c.bf16 %v2684, %v2684
    %v2689 = vpack.c.bf16 %v2685, %v2685
    %v2690 = vpack.c.bf16 %v2686, %v2686
    %v2691 = vld [vmem:[#allocation10] sm:$0xff]
    %v2692 = vld [vmem:[#allocation10 + $0x8] sm:$0xff]
    %v2693 = vld [vmem:[#allocation10 + $0x10] sm:$0xff]
    %v2694 = vld [vmem:[#allocation10 + $0x18] sm:$0xff]
    %v2695 = vld [vmem:[#allocation10 + $0x20] sm:$0xff]
    %v2696 = vld [vmem:[#allocation10 + $0x28] sm:$0xff]
    %v2697 = vld [vmem:[#allocation10 + $0x30] sm:$0xff]
    %v2698 = vld [vmem:[#allocation10 + $0x38] sm:$0xff]
    %v2699 = vld [vmem:[#allocation10 + $0x40] sm:$0xff]
    %v2700 = vld [vmem:[#allocation10 + $0x48] sm:$0xff]
    %v2701 = vld [vmem:[#allocation10 + $0x50] sm:$0xff]
    %v2702 = vld [vmem:[#allocation10 + $0x58] sm:$0xff]
    %v2703 = vld [vmem:[#allocation10 + $0x60] sm:$0xff]
    %v2704 = vld [vmem:[#allocation10 + $0x68] sm:$0xff]
    %v2705 = vld [vmem:[#allocation10 + $0x70] sm:$0xff]
    %v2706 = vld [vmem:[#allocation10 + $0x78] sm:$0xff]
    %v2707 = vld [vmem:[#allocation10 + $0x80] sm:$0xff]
    %v2708 = vld [vmem:[#allocation10 + $0x88] sm:$0xff]
    %v2709 = vld [vmem:[#allocation10 + $0x90] sm:$0xff]
    %v2710 = vld [vmem:[#allocation10 + $0x98] sm:$0xff]
    %v2711 = vld [vmem:[#allocation10 + $0xa0] sm:$0xff]
    %v2712 = vld [vmem:[#allocation10 + $0xa8] sm:$0xff]
    %v2713 = vld [vmem:[#allocation10 + $0xb0] sm:$0xff]
    %v2714 = vld [vmem:[#allocation10 + $0xb8] sm:$0xff]
    %v2715 = vld [vmem:[#allocation10 + $0xc0] sm:$0xff]
    %v2716 = vld [vmem:[#allocation10 + $0xc8] sm:$0xff]
    %v2717 = vld [vmem:[#allocation10 + $0xd0] sm:$0xff]
    %v2718 = vld [vmem:[#allocation10 + $0xd8] sm:$0xff]
    %v2719 = vld [vmem:[#allocation10 + $0xe0] sm:$0xff]
    %v2720 = vld [vmem:[#allocation10 + $0xe8] sm:$0xff]
    %v2721 = vld [vmem:[#allocation10 + $0xf0] sm:$0xff]
    %v2722 = vld [vmem:[#allocation10 + $0xf8] sm:$0xff]
    %v2723 = vld [vmem:[#allocation10 + $0x100] sm:$0xff]
    %v2724 = vld [vmem:[#allocation10 + $0x108] sm:$0xff]
    %v2725 = vld [vmem:[#allocation10 + $0x110] sm:$0xff]
    %v2726 = vld [vmem:[#allocation10 + $0x118] sm:$0xff]
    %v2727 = vld [vmem:[#allocation10 + $0x120] sm:$0xff]
    %v2728 = vld [vmem:[#allocation10 + $0x128] sm:$0xff]
    %v2729 = vld [vmem:[#allocation10 + $0x130] sm:$0xff]
    %v2730 = vld [vmem:[#allocation10 + $0x138] sm:$0xff]
    %v2731 = vld [vmem:[#allocation10 + $0x140] sm:$0xff]
    %v2732 = vld [vmem:[#allocation10 + $0x148] sm:$0xff]
    %v2733 = vld [vmem:[#allocation10 + $0x150] sm:$0xff]
    %v2734 = vld [vmem:[#allocation10 + $0x158] sm:$0xff]
    %v2735 = vld [vmem:[#allocation10 + $0x160] sm:$0xff]
    %v2736 = vld [vmem:[#allocation10 + $0x168] sm:$0xff]
    %v2737 = vld [vmem:[#allocation10 + $0x170] sm:$0xff]
    %v2738 = vld [vmem:[#allocation10 + $0x178] sm:$0xff]
    %v2739 = vld [vmem:[#allocation10 + $0x180] sm:$0xff]
    %v2740 = vld [vmem:[#allocation10 + $0x188] sm:$0xff]
    %v2741 = vld [vmem:[#allocation10 + $0x190] sm:$0xff]
    %v2742 = vld [vmem:[#allocation10 + $0x198] sm:$0xff]
    %v2743 = vld [vmem:[#allocation10 + $0x1a0] sm:$0xff]
    %v2744 = vld [vmem:[#allocation10 + $0x1a8] sm:$0xff]
    %v2745 = vld [vmem:[#allocation10 + $0x1b0] sm:$0xff]
    %v2746 = vld [vmem:[#allocation10 + $0x1b8] sm:$0xff]
    %v2747 = vld [vmem:[#allocation10 + $0x1c0] sm:$0xff]
    %v2748 = vld [vmem:[#allocation10 + $0x1c8] sm:$0xff]
    %v2749 = vld [vmem:[#allocation10 + $0x1d0] sm:$0xff]
    %v2750 = vld [vmem:[#allocation10 + $0x1d8] sm:$0xff]
    %v2751 = vld [vmem:[#allocation10 + $0x1e0] sm:$0xff]
    %v2752 = vld [vmem:[#allocation10 + $0x1e8] sm:$0xff]
    %v2753 = vld [vmem:[#allocation10 + $0x1f0] sm:$0xff]
    %v2754 = vld [vmem:[#allocation10 + $0x1f8] sm:$0xff]
    %v2755 = vld [vmem:[%s6] sm:$0x3]
    %v2757 = vlaneseq
    %v2758 = vshrl.u32 %v2757, 7
    %v2759 = vsub.s32 0, %v2758
    %v2760 = vrot.slane %v2755, %v2759
    %v2761 = vlaneseq
    %v2762 = vshrl.u32 %v2761, 7
    %v2763 = vsub.s32 1, %v2762
    %v2764 = vrot.slane %v2755, %v2763
    %v2831 = vunpack.c.l.b16 %v2691
    %v2832 = vunpack.c.h.b16 %v2691
    %v2833 = vunpack.c.l.b16 %v2692
    %v2834 = vunpack.c.h.b16 %v2692
    %v2835 = vunpack.c.l.b16 %v2693
    %v2836 = vunpack.c.h.b16 %v2693
    %v2837 = vunpack.c.l.b16 %v2694
    %v2838 = vunpack.c.h.b16 %v2694
    %v2839 = vunpack.c.l.b16 %v2695
    %v2840 = vunpack.c.h.b16 %v2695
    %v2841 = vunpack.c.l.b16 %v2696
    %v2842 = vunpack.c.h.b16 %v2696
    %v2843 = vunpack.c.l.b16 %v2697
    %v2844 = vunpack.c.h.b16 %v2697
    %v2845 = vunpack.c.l.b16 %v2698
    %v2846 = vunpack.c.h.b16 %v2698
    %v2847 = vunpack.c.l.b16 %v2699
    %v2848 = vunpack.c.h.b16 %v2699
    %v2849 = vunpack.c.l.b16 %v2700
    %v2850 = vunpack.c.h.b16 %v2700
    %v2851 = vunpack.c.l.b16 %v2701
    %v2852 = vunpack.c.h.b16 %v2701
    %v2853 = vunpack.c.l.b16 %v2702
    %v2854 = vunpack.c.h.b16 %v2702
    %v2855 = vunpack.c.l.b16 %v2703
    %v2856 = vunpack.c.h.b16 %v2703
    %v2857 = vunpack.c.l.b16 %v2704
    %v2858 = vunpack.c.h.b16 %v2704
    %v2859 = vunpack.c.l.b16 %v2705
    %v2860 = vunpack.c.h.b16 %v2705
    %v2861 = vunpack.c.l.b16 %v2706
    %v2862 = vunpack.c.h.b16 %v2706
    %v2863 = vunpack.c.l.b16 %v2707
    %v2864 = vunpack.c.h.b16 %v2707
    %v2865 = vunpack.c.l.b16 %v2708
    %v2866 = vunpack.c.h.b16 %v2708
    %v2867 = vunpack.c.l.b16 %v2709
    %v2868 = vunpack.c.h.b16 %v2709
    %v2869 = vunpack.c.l.b16 %v2710
    %v2870 = vunpack.c.h.b16 %v2710
    %v2871 = vunpack.c.l.b16 %v2711
    %v2872 = vunpack.c.h.b16 %v2711
    %v2873 = vunpack.c.l.b16 %v2712
    %v2874 = vunpack.c.h.b16 %v2712
    %v2875 = vunpack.c.l.b16 %v2713
    %v2876 = vunpack.c.h.b16 %v2713
    %v2877 = vunpack.c.l.b16 %v2714
    %v2878 = vunpack.c.h.b16 %v2714
    %v2879 = vunpack.c.l.b16 %v2715
    %v2880 = vunpack.c.h.b16 %v2715
    %v2881 = vunpack.c.l.b16 %v2716
    %v2882 = vunpack.c.h.b16 %v2716
    %v2883 = vunpack.c.l.b16 %v2717
    %v2884 = vunpack.c.h.b16 %v2717
    %v2885 = vunpack.c.l.b16 %v2718
    %v2886 = vunpack.c.h.b16 %v2718
    %v2887 = vunpack.c.l.b16 %v2719
    %v2888 = vunpack.c.h.b16 %v2719
    %v2889 = vunpack.c.l.b16 %v2720
    %v2890 = vunpack.c.h.b16 %v2720
    %v2891 = vunpack.c.l.b16 %v2721
    %v2892 = vunpack.c.h.b16 %v2721
    %v2893 = vunpack.c.l.b16 %v2722
    %v2894 = vunpack.c.h.b16 %v2722
    %v2895 = vunpack.c.l.b16 %v2723
    %v2896 = vunpack.c.h.b16 %v2723
    %v2897 = vunpack.c.l.b16 %v2724
    %v2898 = vunpack.c.h.b16 %v2724
    %v2899 = vunpack.c.l.b16 %v2725
    %v2900 = vunpack.c.h.b16 %v2725
    %v2901 = vunpack.c.l.b16 %v2726
    %v2902 = vunpack.c.h.b16 %v2726
    %v2903 = vunpack.c.l.b16 %v2727
    %v2904 = vunpack.c.h.b16 %v2727
    %v2905 = vunpack.c.l.b16 %v2728
    %v2906 = vunpack.c.h.b16 %v2728
    %v2907 = vunpack.c.l.b16 %v2729
    %v2908 = vunpack.c.h.b16 %v2729
    %v2909 = vunpack.c.l.b16 %v2730
    %v2910 = vunpack.c.h.b16 %v2730
    %v2911 = vunpack.c.l.b16 %v2731
    %v2912 = vunpack.c.h.b16 %v2731
    %v2913 = vunpack.c.l.b16 %v2732
    %v2914 = vunpack.c.h.b16 %v2732
    %v2915 = vunpack.c.l.b16 %v2733
    %v2916 = vunpack.c.h.b16 %v2733
    %v2917 = vunpack.c.l.b16 %v2734
    %v2918 = vunpack.c.h.b16 %v2734
    %v2919 = vunpack.c.l.b16 %v2735
    %v2920 = vunpack.c.h.b16 %v2735
    %v2921 = vunpack.c.l.b16 %v2736
    %v2922 = vunpack.c.h.b16 %v2736
    %v2923 = vunpack.c.l.b16 %v2737
    %v2924 = vunpack.c.h.b16 %v2737
    %v2925 = vunpack.c.l.b16 %v2738
    %v2926 = vunpack.c.h.b16 %v2738
    %v2927 = vunpack.c.l.b16 %v2739
    %v2928 = vunpack.c.h.b16 %v2739
    %v2929 = vunpack.c.l.b16 %v2740
    %v2930 = vunpack.c.h.b16 %v2740
    %v2931 = vunpack.c.l.b16 %v2741
    %v2932 = vunpack.c.h.b16 %v2741
    %v2933 = vunpack.c.l.b16 %v2742
    %v2934 = vunpack.c.h.b16 %v2742
    %v2935 = vunpack.c.l.b16 %v2743
    %v2936 = vunpack.c.h.b16 %v2743
    %v2937 = vunpack.c.l.b16 %v2744
    %v2938 = vunpack.c.h.b16 %v2744
    %v2939 = vunpack.c.l.b16 %v2745
    %v2940 = vunpack.c.h.b16 %v2745
    %v2941 = vunpack.c.l.b16 %v2746
    %v2942 = vunpack.c.h.b16 %v2746
    %v2943 = vunpack.c.l.b16 %v2747
    %v2944 = vunpack.c.h.b16 %v2747
    %v2945 = vunpack.c.l.b16 %v2748
    %v2946 = vunpack.c.h.b16 %v2748
    %v2947 = vunpack.c.l.b16 %v2749
    %v2948 = vunpack.c.h.b16 %v2749
    %v2949 = vunpack.c.l.b16 %v2750
    %v2950 = vunpack.c.h.b16 %v2750
    %v2951 = vunpack.c.l.b16 %v2751
    %v2952 = vunpack.c.h.b16 %v2751
    %v2953 = vunpack.c.l.b16 %v2752
    %v2954 = vunpack.c.h.b16 %v2752
    %v2955 = vunpack.c.l.b16 %v2753
    %v2956 = vunpack.c.h.b16 %v2753
    %v2957 = vunpack.c.l.b16 %v2754
    %v2958 = vunpack.c.h.b16 %v2754
    %v2959 = vpack.c.b16 %v2833, %v2831
    %v2960 = vpack.c.b16 %v2834, %v2832
    %v2961 = vpack.c.b16 %v2837, %v2835
    %v2962 = vpack.c.b16 %v2838, %v2836
    %v2963 = vpack.c.b16 %v2841, %v2839
    %v2964 = vpack.c.b16 %v2842, %v2840
    %v2965 = vpack.c.b16 %v2845, %v2843
    %v2966 = vpack.c.b16 %v2846, %v2844
    %v2967 = vpack.c.b16 %v2849, %v2847
    %v2968 = vpack.c.b16 %v2850, %v2848
    %v2969 = vpack.c.b16 %v2853, %v2851
    %v2970 = vpack.c.b16 %v2854, %v2852
    %v2971 = vpack.c.b16 %v2857, %v2855
    %v2972 = vpack.c.b16 %v2858, %v2856
    %v2973 = vpack.c.b16 %v2861, %v2859
    %v2974 = vpack.c.b16 %v2862, %v2860
    %v2975 = vpack.c.b16 %v2865, %v2863
    %v2976 = vpack.c.b16 %v2866, %v2864
    %v2977 = vpack.c.b16 %v2869, %v2867
    %v2978 = vpack.c.b16 %v2870, %v2868
    %v2979 = vpack.c.b16 %v2873, %v2871
    %v2980 = vpack.c.b16 %v2874, %v2872
    %v2981 = vpack.c.b16 %v2877, %v2875
    %v2982 = vpack.c.b16 %v2878, %v2876
    %v2983 = vpack.c.b16 %v2881, %v2879
    %v2984 = vpack.c.b16 %v2882, %v2880
    %v2985 = vpack.c.b16 %v2885, %v2883
    %v2986 = vpack.c.b16 %v2886, %v2884
    %v2987 = vpack.c.b16 %v2889, %v2887
    %v2988 = vpack.c.b16 %v2890, %v2888
    %v2989 = vpack.c.b16 %v2893, %v2891
    %v2990 = vpack.c.b16 %v2894, %v2892
    %v2991 = vpack.c.b16 %v2897, %v2895
    %v2992 = vpack.c.b16 %v2898, %v2896
    %v2993 = vpack.c.b16 %v2901, %v2899
    %v2994 = vpack.c.b16 %v2902, %v2900
    %v2995 = vpack.c.b16 %v2905, %v2903
    %v2996 = vpack.c.b16 %v2906, %v2904
    %v2997 = vpack.c.b16 %v2909, %v2907
    %v2998 = vpack.c.b16 %v2910, %v2908
    %v2999 = vpack.c.b16 %v2913, %v2911
    %v3000 = vpack.c.b16 %v2914, %v2912
    %v3001 = vpack.c.b16 %v2917, %v2915
    %v3002 = vpack.c.b16 %v2918, %v2916
    %v3003 = vpack.c.b16 %v2921, %v2919
    %v3004 = vpack.c.b16 %v2922, %v2920
    %v3005 = vpack.c.b16 %v2925, %v2923
    %v3006 = vpack.c.b16 %v2926, %v2924
    %v3007 = vpack.c.b16 %v2929, %v2927
    %v3008 = vpack.c.b16 %v2930, %v2928
    %v3009 = vpack.c.b16 %v2933, %v2931
    %v3010 = vpack.c.b16 %v2934, %v2932
    %v3011 = vpack.c.b16 %v2937, %v2935
    %v3012 = vpack.c.b16 %v2938, %v2936
    %v3013 = vpack.c.b16 %v2941, %v2939
    %v3014 = vpack.c.b16 %v2942, %v2940
    %v3015 = vpack.c.b16 %v2945, %v2943
    %v3016 = vpack.c.b16 %v2946, %v2944
    %v3017 = vpack.c.b16 %v2949, %v2947
    %v3018 = vpack.c.b16 %v2950, %v2948
    %v3019 = vpack.c.b16 %v2953, %v2951
    %v3020 = vpack.c.b16 %v2954, %v2952
    %v3021 = vpack.c.b16 %v2957, %v2955
    %v3022 = vpack.c.b16 %v2958, %v2956
    %3087 = vmatprep.subr.bf16.mxu0 %v2960
    %3088 = vmatpush1.bf16.msra.mxu0 %v2959
    %3089 = vmatprep.subr.bf16.mxu0 %v2962
    %3090 = vmatpush1.bf16.msra.mxu0 %v2961
    %3091 = vmatprep.subr.bf16.mxu0 %v2964
    %3092 = vmatpush1.bf16.msra.mxu0 %v2963
    %3093 = vmatprep.subr.bf16.mxu0 %v2966
    %3094 = vmatpush1.bf16.msra.mxu0 %v2965
    %3095 = vmatprep.subr.bf16.mxu0 %v2968
    %3096 = vmatpush1.bf16.msra.mxu0 %v2967
    %3097 = vmatprep.subr.bf16.mxu0 %v2970
    %3098 = vmatpush1.bf16.msra.mxu0 %v2969
    %3099 = vmatprep.subr.bf16.mxu0 %v2972
    %3100 = vmatpush1.bf16.msra.mxu0 %v2971
    %3101 = vmatprep.subr.bf16.mxu0 %v2974
    %3102 = vmatpush1.bf16.msra.mxu0 %v2973
    %3103 = vmatprep.subr.bf16.mxu0 %v2976
    %3104 = vmatpush1.bf16.msra.mxu0 %v2975
    %3105 = vmatprep.subr.bf16.mxu0 %v2978
    %3106 = vmatpush1.bf16.msra.mxu0 %v2977
    %3107 = vmatprep.subr.bf16.mxu0 %v2980
    %3108 = vmatpush1.bf16.msra.mxu0 %v2979
    %3109 = vmatprep.subr.bf16.mxu0 %v2982
    %3110 = vmatpush1.bf16.msra.mxu0 %v2981
    %3111 = vmatprep.subr.bf16.mxu0 %v2984
    %3112 = vmatpush1.bf16.msra.mxu0 %v2983
    %3113 = vmatprep.subr.bf16.mxu0 %v2986
    %3114 = vmatpush1.bf16.msra.mxu0 %v2985
    %3115 = vmatprep.subr.bf16.mxu0 %v2988
    %3116 = vmatpush1.bf16.msra.mxu0 %v2987
    %3117 = vmatprep.subr.bf16.mxu0 %v2990
    %3118 = vmatpush1.bf16.msra.mxu0 %v2989
    %3119 = vmatprep.mubr.bf16.mxu0 %v2688
    %3120 = vmatmul.mubr.bf16.gmra.mrb[0].mxu0 %v2687
    %v3121 = vpop.f32.mrb[0].mxu0
    %v3122 = vadd.f32 %v2760, %v3121
    %v3123 = vpop.f32.mrb[0].mxu0
    %v3124 = vadd.f32 %v2764, %v3123
    %v3125 = vpop.f32.mrb[0].mxu0
    %v3126 = vpop.f32.mrb[0].mxu0
    %3127 = vdwg.mxu0
    %3128 = vmatprep.subr.bf16.mxu0 %v2992
    %3129 = vmatpush1.bf16.msra.mxu0 %v2991
    %3130 = vmatprep.subr.bf16.mxu0 %v2994
    %3131 = vmatpush1.bf16.msra.mxu0 %v2993
    %3132 = vmatprep.subr.bf16.mxu0 %v2996
    %3133 = vmatpush1.bf16.msra.mxu0 %v2995
    %3134 = vmatprep.subr.bf16.mxu0 %v2998
    %3135 = vmatpush1.bf16.msra.mxu0 %v2997
    %3136 = vmatprep.subr.bf16.mxu0 %v3000
    %3137 = vmatpush1.bf16.msra.mxu0 %v2999
    %3138 = vmatprep.subr.bf16.mxu0 %v3002
    %3139 = vmatpush1.bf16.msra.mxu0 %v3001
    %3140 = vmatprep.subr.bf16.mxu0 %v3004
    %3141 = vmatpush1.bf16.msra.mxu0 %v3003
    %3142 = vmatprep.subr.bf16.mxu0 %v3006
    %3143 = vmatpush1.bf16.msra.mxu0 %v3005
    %3144 = vmatprep.subr.bf16.mxu0 %v3008
    %3145 = vmatpush1.bf16.msra.mxu0 %v3007
    %3146 = vmatprep.subr.bf16.mxu0 %v3010
    %3147 = vmatpush1.bf16.msra.mxu0 %v3009
    %3148 = vmatprep.subr.bf16.mxu0 %v3012
    %3149 = vmatpush1.bf16.msra.mxu0 %v3011
    %3150 = vmatprep.subr.bf16.mxu0 %v3014
    %3151 = vmatpush1.bf16.msra.mxu0 %v3013
    %3152 = vmatprep.subr.bf16.mxu0 %v3016
    %3153 = vmatpush1.bf16.msra.mxu0 %v3015
    %3154 = vmatprep.subr.bf16.mxu0 %v3018
    %3155 = vmatpush1.bf16.msra.mxu0 %v3017
    %3156 = vmatprep.subr.bf16.mxu0 %v3020
    %3157 = vmatpush1.bf16.msra.mxu0 %v3019
    %3158 = vmatprep.subr.bf16.mxu0 %v3022
    %3159 = vmatpush1.bf16.msra.mxu0 %v3021
    %3160 = vmatprep.mubr.bf16.mxu0 %v2690
    %3161 = vmatmul.mubr.bf16.gmra.mrb[0].mxu0 %v2689
    %v3162 = vpop.f32.mrb[0].mxu0
    %v3163 = vadd.f32 %v3122, %v3162
    %v3164 = vpop.f32.mrb[0].mxu0
    %v3165 = vadd.f32 %v3124, %v3164
    %v3166 = vpop.f32.mrb[0].mxu0
    %v3167 = vpop.f32.mrb[0].mxu0
    %3168 = vdwg.mxu0
    %v3169 = vmax.f32 %v3163, 0.0
    %v3170 = vmax.f32 %v3165, 0.0
    %v3171 = vpack.c.bf16 %v3169, %v3169
    %v3172 = vpack.c.bf16 %v3170, %v3170
    %v3173 = vld [vmem:[#allocation11] sm:$0xf]
    %v3174 = vld [vmem:[#allocation11 + $0x4] sm:$0xf]
    %v3175 = vld [vmem:[#allocation11 + $0x8] sm:$0xf]
    %v3176 = vld [vmem:[#allocation11 + $0xc] sm:$0xf]
    %v3177 = vld [vmem:[#allocation11 + $0x10] sm:$0xf]
    %v3178 = vld [vmem:[#allocation11 + $0x14] sm:$0xf]
    %v3179 = vld [vmem:[#allocation11 + $0x18] sm:$0xf]
    %v3180 = vld [vmem:[#allocation11 + $0x1c] sm:$0xf]
    %v3181 = vld [vmem:[#allocation11 + $0x20] sm:$0xf]
    %v3182 = vld [vmem:[#allocation11 + $0x24] sm:$0xf]
    %v3183 = vld [vmem:[#allocation11 + $0x28] sm:$0xf]
    %v3184 = vld [vmem:[#allocation11 + $0x2c] sm:$0xf]
    %v3185 = vld [vmem:[#allocation11 + $0x30] sm:$0xf]
    %v3186 = vld [vmem:[#allocation11 + $0x34] sm:$0xf]
    %v3187 = vld [vmem:[#allocation11 + $0x38] sm:$0xf]
    %v3188 = vld [vmem:[#allocation11 + $0x3c] sm:$0xf]
    %v3189 = vld [vmem:[#allocation11 + $0x40] sm:$0xf]
    %v3190 = vld [vmem:[#allocation11 + $0x44] sm:$0xf]
    %v3191 = vld [vmem:[#allocation11 + $0x48] sm:$0xf]
    %v3192 = vld [vmem:[#allocation11 + $0x4c] sm:$0xf]
    %v3193 = vld [vmem:[#allocation11 + $0x50] sm:$0xf]
    %v3194 = vld [vmem:[#allocation11 + $0x54] sm:$0xf]
    %v3195 = vld [vmem:[#allocation11 + $0x58] sm:$0xf]
    %v3196 = vld [vmem:[#allocation11 + $0x5c] sm:$0xf]
    %v3197 = vld [vmem:[#allocation11 + $0x60] sm:$0xf]
    %v3198 = vld [vmem:[#allocation11 + $0x64] sm:$0xf]
    %v3199 = vld [vmem:[#allocation11 + $0x68] sm:$0xf]
    %v3200 = vld [vmem:[#allocation11 + $0x6c] sm:$0xf]
    %v3201 = vld [vmem:[#allocation11 + $0x70] sm:$0xf]
    %v3202 = vld [vmem:[#allocation11 + $0x74] sm:$0xf]
    %v3203 = vld [vmem:[#allocation11 + $0x78] sm:$0xf]
    %v3204 = vld [vmem:[#allocation11 + $0x7c] sm:$0xf]
    %v3205 = vld [vmem:[%s8] sm:$0x1]
    %v3207 = vlaneseq
    %v3208 = vshrl.u32 %v3207, 7
    %v3209 = vsub.s32 0, %v3208
    %v3210 = vrot.slane %v3205, %v3209
    %v3244 = vunpack.c.l.b16 %v3173
    %v3245 = vunpack.c.l.b16 %v3174
    %v3246 = vunpack.c.l.b16 %v3175
    %v3247 = vunpack.c.l.b16 %v3176
    %v3248 = vunpack.c.l.b16 %v3177
    %v3249 = vunpack.c.l.b16 %v3178
    %v3250 = vunpack.c.l.b16 %v3179
    %v3251 = vunpack.c.l.b16 %v3180
    %v3252 = vunpack.c.l.b16 %v3181
    %v3253 = vunpack.c.l.b16 %v3182
    %v3254 = vunpack.c.l.b16 %v3183
    %v3255 = vunpack.c.l.b16 %v3184
    %v3256 = vunpack.c.l.b16 %v3185
    %v3257 = vunpack.c.l.b16 %v3186
    %v3258 = vunpack.c.l.b16 %v3187
    %v3259 = vunpack.c.l.b16 %v3188
    %v3260 = vunpack.c.l.b16 %v3189
    %v3261 = vunpack.c.l.b16 %v3190
    %v3262 = vunpack.c.l.b16 %v3191
    %v3263 = vunpack.c.l.b16 %v3192
    %v3264 = vunpack.c.l.b16 %v3193
    %v3265 = vunpack.c.l.b16 %v3194
    %v3266 = vunpack.c.l.b16 %v3195
    %v3267 = vunpack.c.l.b16 %v3196
    %v3268 = vunpack.c.l.b16 %v3197
    %v3269 = vunpack.c.l.b16 %v3198
    %v3270 = vunpack.c.l.b16 %v3199
    %v3271 = vunpack.c.l.b16 %v3200
    %v3272 = vunpack.c.l.b16 %v3201
    %v3273 = vunpack.c.l.b16 %v3202
    %v3274 = vunpack.c.l.b16 %v3203
    %v3275 = vunpack.c.l.b16 %v3204
    %v3276 = vpack.c.b16 %v3245, %v3244
    %v3277 = vpack.c.b16 %v3247, %v3246
    %v3278 = vpack.c.b16 %v3249, %v3248
    %v3279 = vpack.c.b16 %v3251, %v3250
    %v3280 = vpack.c.b16 %v3253, %v3252
    %v3281 = vpack.c.b16 %v3255, %v3254
    %v3282 = vpack.c.b16 %v3257, %v3256
    %v3283 = vpack.c.b16 %v3259, %v3258
    %v3284 = vpack.c.b16 %v3261, %v3260
    %v3285 = vpack.c.b16 %v3263, %v3262
    %v3286 = vpack.c.b16 %v3265, %v3264
    %v3287 = vpack.c.b16 %v3267, %v3266
    %v3288 = vpack.c.b16 %v3269, %v3268
    %v3289 = vpack.c.b16 %v3271, %v3270
    %v3290 = vpack.c.b16 %v3273, %v3272
    %v3291 = vpack.c.b16 %v3275, %v3274
    %3308 = vmatprep.subr.bf16.mxu0 0
    %3309 = vmatpush1.bf16.msra.mxu0 %v3276
    %3310 = vmatprep.subr.bf16.mxu0 0
    %3311 = vmatpush1.bf16.msra.mxu0 %v3277
    %3312 = vmatprep.subr.bf16.mxu0 0
    %3313 = vmatpush1.bf16.msra.mxu0 %v3278
    %3314 = vmatprep.subr.bf16.mxu0 0
    %3315 = vmatpush1.bf16.msra.mxu0 %v3279
    %3316 = vmatprep.subr.bf16.mxu0 0
    %3317 = vmatpush1.bf16.msra.mxu0 %v3280
    %3318 = vmatprep.subr.bf16.mxu0 0
    %3319 = vmatpush1.bf16.msra.mxu0 %v3281
    %3320 = vmatprep.subr.bf16.mxu0 0
    %3321 = vmatpush1.bf16.msra.mxu0 %v3282
    %3322 = vmatprep.subr.bf16.mxu0 0
    %3323 = vmatpush1.bf16.msra.mxu0 %v3283
    %3324 = vmatprep.subr.bf16.mxu0 0
    %3325 = vmatpush1.bf16.msra.mxu0 %v3284
    %3326 = vmatprep.subr.bf16.mxu0 0
    %3327 = vmatpush1.bf16.msra.mxu0 %v3285
    %3328 = vmatprep.subr.bf16.mxu0 0
    %3329 = vmatpush1.bf16.msra.mxu0 %v3286
    %3330 = vmatprep.subr.bf16.mxu0 0
    %3331 = vmatpush1.bf16.msra.mxu0 %v3287
    %3332 = vmatprep.subr.bf16.mxu0 0
    %3333 = vmatpush1.bf16.msra.mxu0 %v3288
    %3334 = vmatprep.subr.bf16.mxu0 0
    %3335 = vmatpush1.bf16.msra.mxu0 %v3289
    %3336 = vmatprep.subr.bf16.mxu0 0
    %3337 = vmatpush1.bf16.msra.mxu0 %v3290
    %3338 = vmatprep.subr.bf16.mxu0 0
    %3339 = vmatpush1.bf16.msra.mxu0 %v3291
    %3340 = vmatprep.mubr.bf16.mxu0 %v3172
    %3341 = vmatmul.mubr.bf16.gmra.mrb[0].mxu0 %v3171
    %v3342 = vpop.f32.mrb[0].mxu0
    %v3343 = vadd.f32 %v3210, %v3342
    %v3344 = vpop.f32.mrb[0].mxu0
    %v3345 = vpop.f32.mrb[0].mxu0
    %v3346 = vpop.f32.mrb[0].mxu0
    %3347 = vdwg.mxu0
    %v3348 = vpack.c.bf16 %v3343, %v3343
    %v3349 = vld [vmem:[#allocation13] sm:$0xff]
    %v3350 = vld [vmem:[#allocation13 + $0x8] sm:$0xff]
    %v3351 = vld [vmem:[#allocation13 + $0x10] sm:$0xff]
    %v3352 = vld [vmem:[#allocation13 + $0x18] sm:$0xff]
    %v3353 = vld [vmem:[#allocation13 + $0x20] sm:$0xff]
    %v3354 = vld [vmem:[#allocation13 + $0x28] sm:$0xff]
    %v3355 = vld [vmem:[#allocation13 + $0x30] sm:$0xff]
    %v3356 = vld [vmem:[#allocation13 + $0x38] sm:$0xff]
    %v3357 = vld [vmem:[#allocation13 + $0x40] sm:$0xff]
    %v3358 = vld [vmem:[#allocation13 + $0x48] sm:$0xff]
    %v3359 = vld [vmem:[#allocation13 + $0x50] sm:$0xff]
    %v3360 = vld [vmem:[#allocation13 + $0x58] sm:$0xff]
    %v3361 = vld [vmem:[#allocation13 + $0x60] sm:$0xff]
    %v3362 = vld [vmem:[#allocation13 + $0x68] sm:$0xff]
    %v3363 = vld [vmem:[#allocation13 + $0x70] sm:$0xff]
    %v3364 = vld [vmem:[#allocation13 + $0x78] sm:$0xff]
    %v3365 = vld [vmem:[%s10] sm:$0x3]
    %v3367 = vlaneseq
    %v3368 = vshrl.u32 %v3367, 7
    %v3369 = vsub.s32 0, %v3368
    %v3370 = vrot.slane %v3365, %v3369
    %v3371 = vlaneseq
    %v3372 = vshrl.u32 %v3371, 7
    %v3373 = vsub.s32 1, %v3372
    %v3374 = vrot.slane %v3365, %v3373
    %v3393 = vunpack.c.l.b16 %v3349
    %v3394 = vunpack.c.h.b16 %v3349
    %v3395 = vunpack.c.l.b16 %v3350
    %v3396 = vunpack.c.h.b16 %v3350
    %v3397 = vunpack.c.l.b16 %v3351
    %v3398 = vunpack.c.h.b16 %v3351
    %v3399 = vunpack.c.l.b16 %v3352
    %v3400 = vunpack.c.h.b16 %v3352
    %v3401 = vunpack.c.l.b16 %v3353
    %v3402 = vunpack.c.h.b16 %v3353
    %v3403 = vunpack.c.l.b16 %v3354
    %v3404 = vunpack.c.h.b16 %v3354
    %v3405 = vunpack.c.l.b16 %v3355
    %v3406 = vunpack.c.h.b16 %v3355
    %v3407 = vunpack.c.l.b16 %v3356
    %v3408 = vunpack.c.h.b16 %v3356
    %v3409 = vunpack.c.l.b16 %v3357
    %v3410 = vunpack.c.h.b16 %v3357
    %v3411 = vunpack.c.l.b16 %v3358
    %v3412 = vunpack.c.h.b16 %v3358
    %v3413 = vunpack.c.l.b16 %v3359
    %v3414 = vunpack.c.h.b16 %v3359
    %v3415 = vunpack.c.l.b16 %v3360
    %v3416 = vunpack.c.h.b16 %v3360
    %v3417 = vunpack.c.l.b16 %v3361
    %v3418 = vunpack.c.h.b16 %v3361
    %v3419 = vunpack.c.l.b16 %v3362
    %v3420 = vunpack.c.h.b16 %v3362
    %v3421 = vunpack.c.l.b16 %v3363
    %v3422 = vunpack.c.h.b16 %v3363
    %v3423 = vunpack.c.l.b16 %v3364
    %v3424 = vunpack.c.h.b16 %v3364
    %v3425 = vpack.c.b16 %v3395, %v3393
    %v3426 = vpack.c.b16 %v3396, %v3394
    %v3427 = vpack.c.b16 %v3399, %v3397
    %v3428 = vpack.c.b16 %v3400, %v3398
    %v3429 = vpack.c.b16 %v3403, %v3401
    %v3430 = vpack.c.b16 %v3404, %v3402
    %v3431 = vpack.c.b16 %v3407, %v3405
    %v3432 = vpack.c.b16 %v3408, %v3406
    %v3433 = vpack.c.b16 %v3411, %v3409
    %v3434 = vpack.c.b16 %v3412, %v3410
    %v3435 = vpack.c.b16 %v3415, %v3413
    %v3436 = vpack.c.b16 %v3416, %v3414
    %v3437 = vpack.c.b16 %v3419, %v3417
    %v3438 = vpack.c.b16 %v3420, %v3418
    %v3439 = vpack.c.b16 %v3423, %v3421
    %v3440 = vpack.c.b16 %v3424, %v3422
    %3457 = vmatprep.subr.bf16.mxu0 %v3426
    %3458 = vmatpush1.bf16.msra.mxu0 %v3425
    %3459 = vmatprep.subr.bf16.mxu0 %v3428
    %3460 = vmatpush1.bf16.msra.mxu0 %v3427
    %3461 = vmatprep.subr.bf16.mxu0 %v3430
    %3462 = vmatpush1.bf16.msra.mxu0 %v3429
    %3463 = vmatprep.subr.bf16.mxu0 %v3432
    %3464 = vmatpush1.bf16.msra.mxu0 %v3431
    %3465 = vmatprep.subr.bf16.mxu0 %v3434
    %3466 = vmatpush1.bf16.msra.mxu0 %v3433
    %3467 = vmatprep.subr.bf16.mxu0 %v3436
    %3468 = vmatpush1.bf16.msra.mxu0 %v3435
    %3469 = vmatprep.subr.bf16.mxu0 %v3438
    %3470 = vmatpush1.bf16.msra.mxu0 %v3437
    %3471 = vmatprep.subr.bf16.mxu0 %v3440
    %3472 = vmatpush1.bf16.msra.mxu0 %v3439
    %3473 = vmatprep.subr.bf16.mxu0 0
    %3474 = vmatpush1.bf16.msra.mxu0 0
    %3475 = vmatprep.subr.bf16.mxu0 0
    %3476 = vmatpush1.bf16.msra.mxu0 0
    %3477 = vmatprep.subr.bf16.mxu0 0
    %3478 = vmatpush1.bf16.msra.mxu0 0
    %3479 = vmatprep.subr.bf16.mxu0 0
    %3480 = vmatpush1.bf16.msra.mxu0 0
    %3481 = vmatprep.subr.bf16.mxu0 0
    %3482 = vmatpush1.bf16.msra.mxu0 0
    %3483 = vmatprep.subr.bf16.mxu0 0
    %3484 = vmatpush1.bf16.msra.mxu0 0
    %3485 = vmatprep.subr.bf16.mxu0 0
    %3486 = vmatpush1.bf16.msra.mxu0 0
    %3487 = vmatprep.subr.bf16.mxu0 0
    %3488 = vmatpush1.bf16.msra.mxu0 0
    %3489 = vmatprep.mubr.bf16.mxu0 0
    %3490 = vmatmul.mubr.bf16.gmra.mrb[0].mxu0 %v3348
    %v3491 = vpop.f32.mrb[0].mxu0
    %v3492 = vadd.f32 %v3370, %v3491
    %v3493 = vpop.f32.mrb[0].mxu0
    %v3494 = vadd.f32 %v3374, %v3493
    %v3495 = vpop.f32.mrb[0].mxu0
    %v3496 = vpop.f32.mrb[0].mxu0
    %3497 = vdwg.mxu0
    %v3498 = vmax.f32 %v3492, 0.0
    %v3499 = vmax.f32 %v3494, 0.0
    %v3500 = vpack.c.bf16 %v3498, %v3498
    %v3501 = vpack.c.bf16 %v3499, %v3499
    %v3502 = vld [vmem:[#allocation14] sm:$0xff]
    %v3503 = vld [vmem:[#allocation14 + $0x8] sm:$0xff]
    %v3504 = vld [vmem:[#allocation14 + $0x10] sm:$0xff]
    %v3505 = vld [vmem:[#allocation14 + $0x18] sm:$0xff]
    %v3506 = vld [vmem:[#allocation14 + $0x20] sm:$0xff]
    %v3507 = vld [vmem:[#allocation14 + $0x28] sm:$0xff]
    %v3508 = vld [vmem:[#allocation14 + $0x30] sm:$0xff]
    %v3509 = vld [vmem:[#allocation14 + $0x38] sm:$0xff]
    %v3510 = vld [vmem:[#allocation14 + $0x40] sm:$0xff]
    %v3511 = vld [vmem:[#allocation14 + $0x48] sm:$0xff]
    %v3512 = vld [vmem:[#allocation14 + $0x50] sm:$0xff]
    %v3513 = vld [vmem:[#allocation14 + $0x58] sm:$0xff]
    %v3514 = vld [vmem:[#allocation14 + $0x60] sm:$0xff]
    %v3515 = vld [vmem:[#allocation14 + $0x68] sm:$0xff]
    %v3516 = vld [vmem:[#allocation14 + $0x70] sm:$0xff]
    %v3517 = vld [vmem:[#allocation14 + $0x78] sm:$0xff]
    %v3518 = vld [vmem:[#allocation14 + $0x80] sm:$0xff]
    %v3519 = vld [vmem:[#allocation14 + $0x88] sm:$0xff]
    %v3520 = vld [vmem:[#allocation14 + $0x90] sm:$0xff]
    %v3521 = vld [vmem:[#allocation14 + $0x98] sm:$0xff]
    %v3522 = vld [vmem:[#allocation14 + $0xa0] sm:$0xff]
    %v3523 = vld [vmem:[#allocation14 + $0xa8] sm:$0xff]
    %v3524 = vld [vmem:[#allocation14 + $0xb0] sm:$0xff]
    %v3525 = vld [vmem:[#allocation14 + $0xb8] sm:$0xff]
    %v3526 = vld [vmem:[#allocation14 + $0xc0] sm:$0xff]
    %v3527 = vld [vmem:[#allocation14 + $0xc8] sm:$0xff]
    %v3528 = vld [vmem:[#allocation14 + $0xd0] sm:$0xff]
    %v3529 = vld [vmem:[#allocation14 + $0xd8] sm:$0xff]
    %v3530 = vld [vmem:[#allocation14 + $0xe0] sm:$0xff]
    %v3531 = vld [vmem:[#allocation14 + $0xe8] sm:$0xff]
    %v3532 = vld [vmem:[#allocation14 + $0xf0] sm:$0xff]
    %v3533 = vld [vmem:[#allocation14 + $0xf8] sm:$0xff]
    %v3534 = vld [vmem:[#allocation14 + $0x100] sm:$0xff]
    %v3535 = vld [vmem:[#allocation14 + $0x108] sm:$0xff]
    %v3536 = vld [vmem:[#allocation14 + $0x110] sm:$0xff]
    %v3537 = vld [vmem:[#allocation14 + $0x118] sm:$0xff]
    %v3538 = vld [vmem:[#allocation14 + $0x120] sm:$0xff]
    %v3539 = vld [vmem:[#allocation14 + $0x128] sm:$0xff]
    %v3540 = vld [vmem:[#allocation14 + $0x130] sm:$0xff]
    %v3541 = vld [vmem:[#allocation14 + $0x138] sm:$0xff]
    %v3542 = vld [vmem:[#allocation14 + $0x140] sm:$0xff]
    %v3543 = vld [vmem:[#allocation14 + $0x148] sm:$0xff]
    %v3544 = vld [vmem:[#allocation14 + $0x150] sm:$0xff]
    %v3545 = vld [vmem:[#allocation14 + $0x158] sm:$0xff]
    %v3546 = vld [vmem:[#allocation14 + $0x160] sm:$0xff]
    %v3547 = vld [vmem:[#allocation14 + $0x168] sm:$0xff]
    %v3548 = vld [vmem:[#allocation14 + $0x170] sm:$0xff]
    %v3549 = vld [vmem:[#allocation14 + $0x178] sm:$0xff]
    %v3550 = vld [vmem:[#allocation14 + $0x180] sm:$0xff]
    %v3551 = vld [vmem:[#allocation14 + $0x188] sm:$0xff]
    %v3552 = vld [vmem:[#allocation14 + $0x190] sm:$0xff]
    %v3553 = vld [vmem:[#allocation14 + $0x198] sm:$0xff]
    %v3554 = vld [vmem:[#allocation14 + $0x1a0] sm:$0xff]
    %v3555 = vld [vmem:[#allocation14 + $0x1a8] sm:$0xff]
    %v3556 = vld [vmem:[#allocation14 + $0x1b0] sm:$0xff]
    %v3557 = vld [vmem:[#allocation14 + $0x1b8] sm:$0xff]
    %v3558 = vld [vmem:[#allocation14 + $0x1c0] sm:$0xff]
    %v3559 = vld [vmem:[#allocation14 + $0x1c8] sm:$0xff]
    %v3560 = vld [vmem:[#allocation14 + $0x1d0] sm:$0xff]
    %v3561 = vld [vmem:[#allocation14 + $0x1d8] sm:$0xff]
    %v3562 = vld [vmem:[#allocation14 + $0x1e0] sm:$0xff]
    %v3563 = vld [vmem:[#allocation14 + $0x1e8] sm:$0xff]
    %v3564 = vld [vmem:[#allocation14 + $0x1f0] sm:$0xff]
    %v3565 = vld [vmem:[#allocation14 + $0x1f8] sm:$0xff]
    %v3566 = vld [vmem:[%s12] sm:$0xf]
    %v3568 = vlaneseq
    %v3569 = vshrl.u32 %v3568, 7
    %v3570 = vsub.s32 0, %v3569
    %v3571 = vrot.slane %v3566, %v3570
    %v3572 = vlaneseq
    %v3573 = vshrl.u32 %v3572, 7
    %v3574 = vsub.s32 1, %v3573
    %v3575 = vrot.slane %v3566, %v3574
    %v3576 = vlaneseq
    %v3577 = vshrl.u32 %v3576, 7
    %v3578 = vsub.s32 2, %v3577
    %v3579 = vrot.slane %v3566, %v3578
    %v3580 = vlaneseq
    %v3581 = vshrl.u32 %v3580, 7
    %v3582 = vsub.s32 3, %v3581
    %v3583 = vrot.slane %v3566, %v3582
    %v3652 = vunpack.c.l.b16 %v3502
    %v3653 = vunpack.c.h.b16 %v3502
    %v3654 = vunpack.c.l.b16 %v3503
    %v3655 = vunpack.c.h.b16 %v3503
    %v3656 = vunpack.c.l.b16 %v3504
    %v3657 = vunpack.c.h.b16 %v3504
    %v3658 = vunpack.c.l.b16 %v3505
    %v3659 = vunpack.c.h.b16 %v3505
    %v3660 = vunpack.c.l.b16 %v3506
    %v3661 = vunpack.c.h.b16 %v3506
    %v3662 = vunpack.c.l.b16 %v3507
    %v3663 = vunpack.c.h.b16 %v3507
    %v3664 = vunpack.c.l.b16 %v3508
    %v3665 = vunpack.c.h.b16 %v3508
    %v3666 = vunpack.c.l.b16 %v3509
    %v3667 = vunpack.c.h.b16 %v3509
    %v3668 = vunpack.c.l.b16 %v3510
    %v3669 = vunpack.c.h.b16 %v3510
    %v3670 = vunpack.c.l.b16 %v3511
    %v3671 = vunpack.c.h.b16 %v3511
    %v3672 = vunpack.c.l.b16 %v3512
    %v3673 = vunpack.c.h.b16 %v3512
    %v3674 = vunpack.c.l.b16 %v3513
    %v3675 = vunpack.c.h.b16 %v3513
    %v3676 = vunpack.c.l.b16 %v3514
    %v3677 = vunpack.c.h.b16 %v3514
    %v3678 = vunpack.c.l.b16 %v3515
    %v3679 = vunpack.c.h.b16 %v3515
    %v3680 = vunpack.c.l.b16 %v3516
    %v3681 = vunpack.c.h.b16 %v3516
    %v3682 = vunpack.c.l.b16 %v3517
    %v3683 = vunpack.c.h.b16 %v3517
    %v3684 = vunpack.c.l.b16 %v3518
    %v3685 = vunpack.c.h.b16 %v3518
    %v3686 = vunpack.c.l.b16 %v3519
    %v3687 = vunpack.c.h.b16 %v3519
    %v3688 = vunpack.c.l.b16 %v3520
    %v3689 = vunpack.c.h.b16 %v3520
    %v3690 = vunpack.c.l.b16 %v3521
    %v3691 = vunpack.c.h.b16 %v3521
    %v3692 = vunpack.c.l.b16 %v3522
    %v3693 = vunpack.c.h.b16 %v3522
    %v3694 = vunpack.c.l.b16 %v3523
    %v3695 = vunpack.c.h.b16 %v3523
    %v3696 = vunpack.c.l.b16 %v3524
    %v3697 = vunpack.c.h.b16 %v3524
    %v3698 = vunpack.c.l.b16 %v3525
    %v3699 = vunpack.c.h.b16 %v3525
    %v3700 = vunpack.c.l.b16 %v3526
    %v3701 = vunpack.c.h.b16 %v3526
    %v3702 = vunpack.c.l.b16 %v3527
    %v3703 = vunpack.c.h.b16 %v3527
    %v3704 = vunpack.c.l.b16 %v3528
    %v3705 = vunpack.c.h.b16 %v3528
    %v3706 = vunpack.c.l.b16 %v3529
    %v3707 = vunpack.c.h.b16 %v3529
    %v3708 = vunpack.c.l.b16 %v3530
    %v3709 = vunpack.c.h.b16 %v3530
    %v3710 = vunpack.c.l.b16 %v3531
    %v3711 = vunpack.c.h.b16 %v3531
    %v3712 = vunpack.c.l.b16 %v3532
    %v3713 = vunpack.c.h.b16 %v3532
    %v3714 = vunpack.c.l.b16 %v3533
    %v3715 = vunpack.c.h.b16 %v3533
    %v3716 = vunpack.c.l.b16 %v3534
    %v3717 = vunpack.c.h.b16 %v3534
    %v3718 = vunpack.c.l.b16 %v3535
    %v3719 = vunpack.c.h.b16 %v3535
    %v3720 = vunpack.c.l.b16 %v3536
    %v3721 = vunpack.c.h.b16 %v3536
    %v3722 = vunpack.c.l.b16 %v3537
    %v3723 = vunpack.c.h.b16 %v3537
    %v3724 = vunpack.c.l.b16 %v3538
    %v3725 = vunpack.c.h.b16 %v3538
    %v3726 = vunpack.c.l.b16 %v3539
    %v3727 = vunpack.c.h.b16 %v3539
    %v3728 = vunpack.c.l.b16 %v3540
    %v3729 = vunpack.c.h.b16 %v3540
    %v3730 = vunpack.c.l.b16 %v3541
    %v3731 = vunpack.c.h.b16 %v3541
    %v3732 = vunpack.c.l.b16 %v3542
    %v3733 = vunpack.c.h.b16 %v3542
    %v3734 = vunpack.c.l.b16 %v3543
    %v3735 = vunpack.c.h.b16 %v3543
    %v3736 = vunpack.c.l.b16 %v3544
    %v3737 = vunpack.c.h.b16 %v3544
    %v3738 = vunpack.c.l.b16 %v3545
    %v3739 = vunpack.c.h.b16 %v3545
    %v3740 = vunpack.c.l.b16 %v3546
    %v3741 = vunpack.c.h.b16 %v3546
    %v3742 = vunpack.c.l.b16 %v3547
    %v3743 = vunpack.c.h.b16 %v3547
    %v3744 = vunpack.c.l.b16 %v3548
    %v3745 = vunpack.c.h.b16 %v3548
    %v3746 = vunpack.c.l.b16 %v3549
    %v3747 = vunpack.c.h.b16 %v3549
    %v3748 = vunpack.c.l.b16 %v3550
    %v3749 = vunpack.c.h.b16 %v3550
    %v3750 = vunpack.c.l.b16 %v3551
    %v3751 = vunpack.c.h.b16 %v3551
    %v3752 = vunpack.c.l.b16 %v3552
    %v3753 = vunpack.c.h.b16 %v3552
    %v3754 = vunpack.c.l.b16 %v3553
    %v3755 = vunpack.c.h.b16 %v3553
    %v3756 = vunpack.c.l.b16 %v3554
    %v3757 = vunpack.c.h.b16 %v3554
    %v3758 = vunpack.c.l.b16 %v3555
    %v3759 = vunpack.c.h.b16 %v3555
    %v3760 = vunpack.c.l.b16 %v3556
    %v3761 = vunpack.c.h.b16 %v3556
    %v3762 = vunpack.c.l.b16 %v3557
    %v3763 = vunpack.c.h.b16 %v3557
    %v3764 = vunpack.c.l.b16 %v3558
    %v3765 = vunpack.c.h.b16 %v3558
    %v3766 = vunpack.c.l.b16 %v3559
    %v3767 = vunpack.c.h.b16 %v3559
    %v3768 = vunpack.c.l.b16 %v3560
    %v3769 = vunpack.c.h.b16 %v3560
    %v3770 = vunpack.c.l.b16 %v3561
    %v3771 = vunpack.c.h.b16 %v3561
    %v3772 = vunpack.c.l.b16 %v3562
    %v3773 = vunpack.c.h.b16 %v3562
    %v3774 = vunpack.c.l.b16 %v3563
    %v3775 = vunpack.c.h.b16 %v3563
    %v3776 = vunpack.c.l.b16 %v3564
    %v3777 = vunpack.c.h.b16 %v3564
    %v3778 = vunpack.c.l.b16 %v3565
    %v3779 = vunpack.c.h.b16 %v3565
    %v3780 = vpack.c.b16 %v3656, %v3652
    %v3781 = vpack.c.b16 %v3657, %v3653
    %v3782 = vpack.c.b16 %v3658, %v3654
    %v3783 = vpack.c.b16 %v3659, %v3655
    %v3784 = vpack.c.b16 %v3664, %v3660
    %v3785 = vpack.c.b16 %v3665, %v3661
    %v3786 = vpack.c.b16 %v3666, %v3662
    %v3787 = vpack.c.b16 %v3667, %v3663
    %v3788 = vpack.c.b16 %v3672, %v3668
    %v3789 = vpack.c.b16 %v3673, %v3669
    %v3790 = vpack.c.b16 %v3674, %v3670
    %v3791 = vpack.c.b16 %v3675, %v3671
    %v3792 = vpack.c.b16 %v3680, %v3676
    %v3793 = vpack.c.b16 %v3681, %v3677
    %v3794 = vpack.c.b16 %v3682, %v3678
    %v3795 = vpack.c.b16 %v3683, %v3679
    %v3796 = vpack.c.b16 %v3688, %v3684
    %v3797 = vpack.c.b16 %v3689, %v3685
    %v3798 = vpack.c.b16 %v3690, %v3686
    %v3799 = vpack.c.b16 %v3691, %v3687
    %v3800 = vpack.c.b16 %v3696, %v3692
    %v3801 = vpack.c.b16 %v3697, %v3693
    %v3802 = vpack.c.b16 %v3698, %v3694
    %v3803 = vpack.c.b16 %v3699, %v3695
    %v3804 = vpack.c.b16 %v3704, %v3700
    %v3805 = vpack.c.b16 %v3705, %v3701
    %v3806 = vpack.c.b16 %v3706, %v3702
    %v3807 = vpack.c.b16 %v3707, %v3703
    %v3808 = vpack.c.b16 %v3712, %v3708
    %v3809 = vpack.c.b16 %v3713, %v3709
    %v3810 = vpack.c.b16 %v3714, %v3710
    %v3811 = vpack.c.b16 %v3715, %v3711
    %v3812 = vpack.c.b16 %v3720, %v3716
    %v3813 = vpack.c.b16 %v3721, %v3717
    %v3814 = vpack.c.b16 %v3722, %v3718
    %v3815 = vpack.c.b16 %v3723, %v3719
    %v3816 = vpack.c.b16 %v3728, %v3724
    %v3817 = vpack.c.b16 %v3729, %v3725
    %v3818 = vpack.c.b16 %v3730, %v3726
    %v3819 = vpack.c.b16 %v3731, %v3727
    %v3820 = vpack.c.b16 %v3736, %v3732
    %v3821 = vpack.c.b16 %v3737, %v3733
    %v3822 = vpack.c.b16 %v3738, %v3734
    %v3823 = vpack.c.b16 %v3739, %v3735
    %v3824 = vpack.c.b16 %v3744, %v3740
    %v3825 = vpack.c.b16 %v3745, %v3741
    %v3826 = vpack.c.b16 %v3746, %v3742
    %v3827 = vpack.c.b16 %v3747, %v3743
    %v3828 = vpack.c.b16 %v3752, %v3748
    %v3829 = vpack.c.b16 %v3753, %v3749
    %v3830 = vpack.c.b16 %v3754, %v3750
    %v3831 = vpack.c.b16 %v3755, %v3751
    %v3832 = vpack.c.b16 %v3760, %v3756
    %v3833 = vpack.c.b16 %v3761, %v3757
    %v3834 = vpack.c.b16 %v3762, %v3758
    %v3835 = vpack.c.b16 %v3763, %v3759
    %v3836 = vpack.c.b16 %v3768, %v3764
    %v3837 = vpack.c.b16 %v3769, %v3765
    %v3838 = vpack.c.b16 %v3770, %v3766
    %v3839 = vpack.c.b16 %v3771, %v3767
    %v3840 = vpack.c.b16 %v3776, %v3772
    %v3841 = vpack.c.b16 %v3777, %v3773
    %v3842 = vpack.c.b16 %v3778, %v3774
    %v3843 = vpack.c.b16 %v3779, %v3775
    %3908 = vmatprep.subr.bf16.mxu0 %v3781
    %3909 = vmatpush1.bf16.msra.mxu0 %v3780
    %3910 = vmatprep.subr.bf16.mxu0 %v3785
    %3911 = vmatpush1.bf16.msra.mxu0 %v3784
    %3912 = vmatprep.subr.bf16.mxu0 %v3789
    %3913 = vmatpush1.bf16.msra.mxu0 %v3788
    %3914 = vmatprep.subr.bf16.mxu0 %v3793
    %3915 = vmatpush1.bf16.msra.mxu0 %v3792
    %3916 = vmatprep.subr.bf16.mxu0 %v3797
    %3917 = vmatpush1.bf16.msra.mxu0 %v3796
    %3918 = vmatprep.subr.bf16.mxu0 %v3801
    %3919 = vmatpush1.bf16.msra.mxu0 %v3800
    %3920 = vmatprep.subr.bf16.mxu0 %v3805
    %3921 = vmatpush1.bf16.msra.mxu0 %v3804
    %3922 = vmatprep.subr.bf16.mxu0 %v3809
    %3923 = vmatpush1.bf16.msra.mxu0 %v3808
    %3924 = vmatprep.subr.bf16.mxu0 %v3813
    %3925 = vmatpush1.bf16.msra.mxu0 %v3812
    %3926 = vmatprep.subr.bf16.mxu0 %v3817
    %3927 = vmatpush1.bf16.msra.mxu0 %v3816
    %3928 = vmatprep.subr.bf16.mxu0 %v3821
    %3929 = vmatpush1.bf16.msra.mxu0 %v3820
    %3930 = vmatprep.subr.bf16.mxu0 %v3825
    %3931 = vmatpush1.bf16.msra.mxu0 %v3824
    %3932 = vmatprep.subr.bf16.mxu0 %v3829
    %3933 = vmatpush1.bf16.msra.mxu0 %v3828
    %3934 = vmatprep.subr.bf16.mxu0 %v3833
    %3935 = vmatpush1.bf16.msra.mxu0 %v3832
    %3936 = vmatprep.subr.bf16.mxu0 %v3837
    %3937 = vmatpush1.bf16.msra.mxu0 %v3836
    %3938 = vmatprep.subr.bf16.mxu0 %v3841
    %3939 = vmatpush1.bf16.msra.mxu0 %v3840
    %3940 = vmatprep.mubr.bf16.mxu0 %v3501
    %3941 = vmatmul.mubr.bf16.gmra.mrb[0].mxu0 %v3500
    %v3942 = vpop.f32.mrb[0].mxu0
    %v3943 = vadd.f32 %v3571, %v3942
    %v3944 = vpop.f32.mrb[0].mxu0
    %v3945 = vadd.f32 %v3575, %v3944
    %v3946 = vpop.f32.mrb[0].mxu0
    %v3947 = vpop.f32.mrb[0].mxu0
    %3948 = vdwg.mxu0
    %3949 = vmatprep.subr.bf16.mxu0 %v3783
    %3950 = vmatpush1.bf16.msra.mxu0 %v3782
    %3951 = vmatprep.subr.bf16.mxu0 %v3787
    %3952 = vmatpush1.bf16.msra.mxu0 %v3786
    %3953 = vmatprep.subr.bf16.mxu0 %v3791
    %3954 = vmatpush1.bf16.msra.mxu0 %v3790
    %3955 = vmatprep.subr.bf16.mxu0 %v3795
    %3956 = vmatpush1.bf16.msra.mxu0 %v3794
    %3957 = vmatprep.subr.bf16.mxu0 %v3799
    %3958 = vmatpush1.bf16.msra.mxu0 %v3798
    %3959 = vmatprep.subr.bf16.mxu0 %v3803
    %3960 = vmatpush1.bf16.msra.mxu0 %v3802
    %3961 = vmatprep.subr.bf16.mxu0 %v3807
    %3962 = vmatpush1.bf16.msra.mxu0 %v3806
    %3963 = vmatprep.subr.bf16.mxu0 %v3811
    %3964 = vmatpush1.bf16.msra.mxu0 %v3810
    %3965 = vmatprep.subr.bf16.mxu0 %v3815
    %3966 = vmatpush1.bf16.msra.mxu0 %v3814
    %3967 = vmatprep.subr.bf16.mxu0 %v3819
    %3968 = vmatpush1.bf16.msra.mxu0 %v3818
    %3969 = vmatprep.subr.bf16.mxu0 %v3823
    %3970 = vmatpush1.bf16.msra.mxu0 %v3822
    %3971 = vmatprep.subr.bf16.mxu0 %v3827
    %3972 = vmatpush1.bf16.msra.mxu0 %v3826
    %3973 = vmatprep.subr.bf16.mxu0 %v3831
    %3974 = vmatpush1.bf16.msra.mxu0 %v3830
    %3975 = vmatprep.subr.bf16.mxu0 %v3835
    %3976 = vmatpush1.bf16.msra.mxu0 %v3834
    %3977 = vmatprep.subr.bf16.mxu0 %v3839
    %3978 = vmatpush1.bf16.msra.mxu0 %v3838
    %3979 = vmatprep.subr.bf16.mxu0 %v3843
    %3980 = vmatpush1.bf16.msra.mxu0 %v3842
    %3981 = vmatprep.mubr.bf16.mxu0 %v3501
    %3982 = vmatmul.mubr.bf16.gmra.mrb[0].mxu0 %v3500
    %v3983 = vpop.f32.mrb[0].mxu0
    %v3984 = vadd.f32 %v3579, %v3983
    %v3985 = vpop.f32.mrb[0].mxu0
    %v3986 = vadd.f32 %v3583, %v3985
    %v3987 = vpop.f32.mrb[0].mxu0
    %v3988 = vpop.f32.mrb[0].mxu0
    %3989 = vdwg.mxu0
    %v3990 = vmax.f32 %v3943, 0.0
    %v3991 = vmax.f32 %v3945, 0.0
    %v3992 = vmax.f32 %v3984, 0.0
    %v3993 = vmax.f32 %v3986, 0.0
    %v3994 = vpack.c.bf16 %v3990, %v3990
    %v3995 = vpack.c.bf16 %v3991, %v3991
    %v3996 = vpack.c.bf16 %v3992, %v3992
    %v3997 = vpack.c.bf16 %v3993, %v3993
    %v3998 = vld [vmem:[#allocation16] sm:$0xff]
    %v3999 = vld [vmem:[#allocation16 + $0x8] sm:$0xff]
    %v4000 = vld [vmem:[#allocation16 + $0x10] sm:$0xff]
    %v4001 = vld [vmem:[#allocation16 + $0x18] sm:$0xff]
    %v4002 = vld [vmem:[#allocation16 + $0x20] sm:$0xff]
    %v4003 = vld [vmem:[#allocation16 + $0x28] sm:$0xff]
    %v4004 = vld [vmem:[#allocation16 + $0x30] sm:$0xff]
    %v4005 = vld [vmem:[#allocation16 + $0x38] sm:$0xff]
    %v4006 = vld [vmem:[#allocation16 + $0x40] sm:$0xff]
    %v4007 = vld [vmem:[#allocation16 + $0x48] sm:$0xff]
    %v4008 = vld [vmem:[#allocation16 + $0x50] sm:$0xff]
    %v4009 = vld [vmem:[#allocation16 + $0x58] sm:$0xff]
    %v4010 = vld [vmem:[#allocation16 + $0x60] sm:$0xff]
    %v4011 = vld [vmem:[#allocation16 + $0x68] sm:$0xff]
    %v4012 = vld [vmem:[#allocation16 + $0x70] sm:$0xff]
    %v4013 = vld [vmem:[#allocation16 + $0x78] sm:$0xff]
    %v4014 = vld [vmem:[#allocation16 + $0x80] sm:$0xff]
    %v4015 = vld [vmem:[#allocation16 + $0x88] sm:$0xff]
    %v4016 = vld [vmem:[#allocation16 + $0x90] sm:$0xff]
    %v4017 = vld [vmem:[#allocation16 + $0x98] sm:$0xff]
    %v4018 = vld [vmem:[#allocation16 + $0xa0] sm:$0xff]
    %v4019 = vld [vmem:[#allocation16 + $0xa8] sm:$0xff]
    %v4020 = vld [vmem:[#allocation16 + $0xb0] sm:$0xff]
    %v4021 = vld [vmem:[#allocation16 + $0xb8] sm:$0xff]
    %v4022 = vld [vmem:[#allocation16 + $0xc0] sm:$0xff]
    %v4023 = vld [vmem:[#allocation16 + $0xc8] sm:$0xff]
    %v4024 = vld [vmem:[#allocation16 + $0xd0] sm:$0xff]
    %v4025 = vld [vmem:[#allocation16 + $0xd8] sm:$0xff]
    %v4026 = vld [vmem:[#allocation16 + $0xe0] sm:$0xff]
    %v4027 = vld [vmem:[#allocation16 + $0xe8] sm:$0xff]
    %v4028 = vld [vmem:[#allocation16 + $0xf0] sm:$0xff]
    %v4029 = vld [vmem:[#allocation16 + $0xf8] sm:$0xff]
    %v4030 = vld [vmem:[#allocation16 + $0x100] sm:$0xff]
    %v4031 = vld [vmem:[#allocation16 + $0x108] sm:$0xff]
    %v4032 = vld [vmem:[#allocation16 + $0x110] sm:$0xff]
    %v4033 = vld [vmem:[#allocation16 + $0x118] sm:$0xff]
    %v4034 = vld [vmem:[#allocation16 + $0x120] sm:$0xff]
    %v4035 = vld [vmem:[#allocation16 + $0x128] sm:$0xff]
    %v4036 = vld [vmem:[#allocation16 + $0x130] sm:$0xff]
    %v4037 = vld [vmem:[#allocation16 + $0x138] sm:$0xff]
    %v4038 = vld [vmem:[#allocation16 + $0x140] sm:$0xff]
    %v4039 = vld [vmem:[#allocation16 + $0x148] sm:$0xff]
    %v4040 = vld [vmem:[#allocation16 + $0x150] sm:$0xff]
    %v4041 = vld [vmem:[#allocation16 + $0x158] sm:$0xff]
    %v4042 = vld [vmem:[#allocation16 + $0x160] sm:$0xff]
    %v4043 = vld [vmem:[#allocation16 + $0x168] sm:$0xff]
    %v4044 = vld [vmem:[#allocation16 + $0x170] sm:$0xff]
    %v4045 = vld [vmem:[#allocation16 + $0x178] sm:$0xff]
    %v4046 = vld [vmem:[#allocation16 + $0x180] sm:$0xff]
    %v4047 = vld [vmem:[#allocation16 + $0x188] sm:$0xff]
    %v4048 = vld [vmem:[#allocation16 + $0x190] sm:$0xff]
    %v4049 = vld [vmem:[#allocation16 + $0x198] sm:$0xff]
    %v4050 = vld [vmem:[#allocation16 + $0x1a0] sm:$0xff]
    %v4051 = vld [vmem:[#allocation16 + $0x1a8] sm:$0xff]
    %v4052 = vld [vmem:[#allocation16 + $0x1b0] sm:$0xff]
    %v4053 = vld [vmem:[#allocation16 + $0x1b8] sm:$0xff]
    %v4054 = vld [vmem:[#allocation16 + $0x1c0] sm:$0xff]
    %v4055 = vld [vmem:[#allocation16 + $0x1c8] sm:$0xff]
    %v4056 = vld [vmem:[#allocation16 + $0x1d0] sm:$0xff]
    %v4057 = vld [vmem:[#allocation16 + $0x1d8] sm:$0xff]
    %v4058 = vld [vmem:[#allocation16 + $0x1e0] sm:$0xff]
    %v4059 = vld [vmem:[#allocation16 + $0x1e8] sm:$0xff]
    %v4060 = vld [vmem:[#allocation16 + $0x1f0] sm:$0xff]
    %v4061 = vld [vmem:[#allocation16 + $0x1f8] sm:$0xff]
    %v4062 = vld [vmem:[#allocation16 + $0x200] sm:$0xff]
    %v4063 = vld [vmem:[#allocation16 + $0x208] sm:$0xff]
    %v4064 = vld [vmem:[#allocation16 + $0x210] sm:$0xff]
    %v4065 = vld [vmem:[#allocation16 + $0x218] sm:$0xff]
    %v4066 = vld [vmem:[#allocation16 + $0x220] sm:$0xff]
    %v4067 = vld [vmem:[#allocation16 + $0x228] sm:$0xff]
    %v4068 = vld [vmem:[#allocation16 + $0x230] sm:$0xff]
    %v4069 = vld [vmem:[#allocation16 + $0x238] sm:$0xff]
    %v4070 = vld [vmem:[#allocation16 + $0x240] sm:$0xff]
    %v4071 = vld [vmem:[#allocation16 + $0x248] sm:$0xff]
    %v4072 = vld [vmem:[#allocation16 + $0x250] sm:$0xff]
    %v4073 = vld [vmem:[#allocation16 + $0x258] sm:$0xff]
    %v4074 = vld [vmem:[#allocation16 + $0x260] sm:$0xff]
    %v4075 = vld [vmem:[#allocation16 + $0x268] sm:$0xff]
    %v4076 = vld [vmem:[#allocation16 + $0x270] sm:$0xff]
    %v4077 = vld [vmem:[#allocation16 + $0x278] sm:$0xff]
    %v4078 = vld [vmem:[#allocation16 + $0x280] sm:$0xff]
    %v4079 = vld [vmem:[#allocation16 + $0x288] sm:$0xff]
    %v4080 = vld [vmem:[#allocation16 + $0x290] sm:$0xff]
    %v4081 = vld [vmem:[#allocation16 + $0x298] sm:$0xff]
    %v4082 = vld [vmem:[#allocation16 + $0x2a0] sm:$0xff]
    %v4083 = vld [vmem:[#allocation16 + $0x2a8] sm:$0xff]
    %v4084 = vld [vmem:[#allocation16 + $0x2b0] sm:$0xff]
    %v4085 = vld [vmem:[#allocation16 + $0x2b8] sm:$0xff]
    %v4086 = vld [vmem:[#allocation16 + $0x2c0] sm:$0xff]
    %v4087 = vld [vmem:[#allocation16 + $0x2c8] sm:$0xff]
    %v4088 = vld [vmem:[#allocation16 + $0x2d0] sm:$0xff]
    %v4089 = vld [vmem:[#allocation16 + $0x2d8] sm:$0xff]
    %v4090 = vld [vmem:[#allocation16 + $0x2e0] sm:$0xff]
    %v4091 = vld [vmem:[#allocation16 + $0x2e8] sm:$0xff]
    %v4092 = vld [vmem:[#allocation16 + $0x2f0] sm:$0xff]
    %v4093 = vld [vmem:[#allocation16 + $0x2f8] sm:$0xff]
    %v4094 = vld [vmem:[#allocation16 + $0x300] sm:$0xff]
    %v4095 = vld [vmem:[#allocation16 + $0x308] sm:$0xff]
    %v4096 = vld [vmem:[#allocation16 + $0x310] sm:$0xff]
    %v4097 = vld [vmem:[#allocation16 + $0x318] sm:$0xff]
    %v4098 = vld [vmem:[#allocation16 + $0x320] sm:$0xff]
    %v4099 = vld [vmem:[#allocation16 + $0x328] sm:$0xff]
    %v4100 = vld [vmem:[#allocation16 + $0x330] sm:$0xff]
    %v4101 = vld [vmem:[#allocation16 + $0x338] sm:$0xff]
    %v4102 = vld [vmem:[#allocation16 + $0x340] sm:$0xff]
    %v4103 = vld [vmem:[#allocation16 + $0x348] sm:$0xff]
    %v4104 = vld [vmem:[#allocation16 + $0x350] sm:$0xff]
    %v4105 = vld [vmem:[#allocation16 + $0x358] sm:$0xff]
    %v4106 = vld [vmem:[#allocation16 + $0x360] sm:$0xff]
    %v4107 = vld [vmem:[#allocation16 + $0x368] sm:$0xff]
    %v4108 = vld [vmem:[#allocation16 + $0x370] sm:$0xff]
    %v4109 = vld [vmem:[#allocation16 + $0x378] sm:$0xff]
    %v4110 = vld [vmem:[#allocation16 + $0x380] sm:$0xff]
    %v4111 = vld [vmem:[#allocation16 + $0x388] sm:$0xff]
    %v4112 = vld [vmem:[#allocation16 + $0x390] sm:$0xff]
    %v4113 = vld [vmem:[#allocation16 + $0x398] sm:$0xff]
    %v4114 = vld [vmem:[#allocation16 + $0x3a0] sm:$0xff]
    %v4115 = vld [vmem:[#allocation16 + $0x3a8] sm:$0xff]
    %v4116 = vld [vmem:[#allocation16 + $0x3b0] sm:$0xff]
    %v4117 = vld [vmem:[#allocation16 + $0x3b8] sm:$0xff]
    %v4118 = vld [vmem:[#allocation16 + $0x3c0] sm:$0xff]
    %v4119 = vld [vmem:[#allocation16 + $0x3c8] sm:$0xff]
    %v4120 = vld [vmem:[#allocation16 + $0x3d0] sm:$0xff]
    %v4121 = vld [vmem:[#allocation16 + $0x3d8] sm:$0xff]
    %v4122 = vld [vmem:[#allocation16 + $0x3e0] sm:$0xff]
    %v4123 = vld [vmem:[#allocation16 + $0x3e8] sm:$0xff]
    %v4124 = vld [vmem:[#allocation16 + $0x3f0] sm:$0xff]
    %v4125 = vld [vmem:[#allocation16 + $0x3f8] sm:$0xff]
    %v4126 = vld [vmem:[#allocation16 + $0x400] sm:$0xff]
    %v4127 = vld [vmem:[#allocation16 + $0x408] sm:$0xff]
    %v4128 = vld [vmem:[#allocation16 + $0x410] sm:$0xff]
    %v4129 = vld [vmem:[#allocation16 + $0x418] sm:$0xff]
    %v4130 = vld [vmem:[#allocation16 + $0x420] sm:$0xff]
    %v4131 = vld [vmem:[#allocation16 + $0x428] sm:$0xff]
    %v4132 = vld [vmem:[#allocation16 + $0x430] sm:$0xff]
    %v4133 = vld [vmem:[#allocation16 + $0x438] sm:$0xff]
    %v4134 = vld [vmem:[#allocation16 + $0x440] sm:$0xff]
    %v4135 = vld [vmem:[#allocation16 + $0x448] sm:$0xff]
    %v4136 = vld [vmem:[#allocation16 + $0x450] sm:$0xff]
    %v4137 = vld [vmem:[#allocation16 + $0x458] sm:$0xff]
    %v4138 = vld [vmem:[#allocation16 + $0x460] sm:$0xff]
    %v4139 = vld [vmem:[#allocation16 + $0x468] sm:$0xff]
    %v4140 = vld [vmem:[#allocation16 + $0x470] sm:$0xff]
    %v4141 = vld [vmem:[#allocation16 + $0x478] sm:$0xff]
    %v4142 = vld [vmem:[#allocation16 + $0x480] sm:$0xff]
    %v4143 = vld [vmem:[#allocation16 + $0x488] sm:$0xff]
    %v4144 = vld [vmem:[#allocation16 + $0x490] sm:$0xff]
    %v4145 = vld [vmem:[#allocation16 + $0x498] sm:$0xff]
    %v4146 = vld [vmem:[#allocation16 + $0x4a0] sm:$0xff]
    %v4147 = vld [vmem:[#allocation16 + $0x4a8] sm:$0xff]
    %v4148 = vld [vmem:[#allocation16 + $0x4b0] sm:$0xff]
    %v4149 = vld [vmem:[#allocation16 + $0x4b8] sm:$0xff]
    %v4150 = vld [vmem:[#allocation16 + $0x4c0] sm:$0xff]
    %v4151 = vld [vmem:[#allocation16 + $0x4c8] sm:$0xff]
    %v4152 = vld [vmem:[#allocation16 + $0x4d0] sm:$0xff]
    %v4153 = vld [vmem:[#allocation16 + $0x4d8] sm:$0xff]
    %v4154 = vld [vmem:[#allocation16 + $0x4e0] sm:$0xff]
    %v4155 = vld [vmem:[#allocation16 + $0x4e8] sm:$0xff]
    %v4156 = vld [vmem:[#allocation16 + $0x4f0] sm:$0xff]
    %v4157 = vld [vmem:[#allocation16 + $0x4f8] sm:$0xff]
    %v4158 = vld [vmem:[#allocation16 + $0x500] sm:$0xff]
    %v4159 = vld [vmem:[#allocation16 + $0x508] sm:$0xff]
    %v4160 = vld [vmem:[#allocation16 + $0x510] sm:$0xff]
    %v4161 = vld [vmem:[#allocation16 + $0x518] sm:$0xff]
    %v4162 = vld [vmem:[#allocation16 + $0x520] sm:$0xff]
    %v4163 = vld [vmem:[#allocation16 + $0x528] sm:$0xff]
    %v4164 = vld [vmem:[#allocation16 + $0x530] sm:$0xff]
    %v4165 = vld [vmem:[#allocation16 + $0x538] sm:$0xff]
    %v4166 = vld [vmem:[#allocation16 + $0x540] sm:$0xff]
    %v4167 = vld [vmem:[#allocation16 + $0x548] sm:$0xff]
    %v4168 = vld [vmem:[#allocation16 + $0x550] sm:$0xff]
    %v4169 = vld [vmem:[#allocation16 + $0x558] sm:$0xff]
    %v4170 = vld [vmem:[#allocation16 + $0x560] sm:$0xff]
    %v4171 = vld [vmem:[#allocation16 + $0x568] sm:$0xff]
    %v4172 = vld [vmem:[#allocation16 + $0x570] sm:$0xff]
    %v4173 = vld [vmem:[#allocation16 + $0x578] sm:$0xff]
    %v4174 = vld [vmem:[#allocation16 + $0x580] sm:$0xff]
    %v4175 = vld [vmem:[#allocation16 + $0x588] sm:$0xff]
    %v4176 = vld [vmem:[#allocation16 + $0x590] sm:$0xff]
    %v4177 = vld [vmem:[#allocation16 + $0x598] sm:$0xff]
    %v4178 = vld [vmem:[#allocation16 + $0x5a0] sm:$0xff]
    %v4179 = vld [vmem:[#allocation16 + $0x5a8] sm:$0xff]
    %v4180 = vld [vmem:[#allocation16 + $0x5b0] sm:$0xff]
    %v4181 = vld [vmem:[#allocation16 + $0x5b8] sm:$0xff]
    %v4182 = vld [vmem:[#allocation16 + $0x5c0] sm:$0xff]
    %v4183 = vld [vmem:[#allocation16 + $0x5c8] sm:$0xff]
    %v4184 = vld [vmem:[#allocation16 + $0x5d0] sm:$0xff]
    %v4185 = vld [vmem:[#allocation16 + $0x5d8] sm:$0xff]
    %v4186 = vld [vmem:[#allocation16 + $0x5e0] sm:$0xff]
    %v4187 = vld [vmem:[#allocation16 + $0x5e8] sm:$0xff]
    %v4188 = vld [vmem:[#allocation16 + $0x5f0] sm:$0xff]
    %v4189 = vld [vmem:[#allocation16 + $0x5f8] sm:$0xff]
    %v4190 = vld [vmem:[#allocation16 + $0x600] sm:$0xff]
    %v4191 = vld [vmem:[#allocation16 + $0x608] sm:$0xff]
    %v4192 = vld [vmem:[#allocation16 + $0x610] sm:$0xff]
    %v4193 = vld [vmem:[#allocation16 + $0x618] sm:$0xff]
    %v4194 = vld [vmem:[#allocation16 + $0x620] sm:$0xff]
    %v4195 = vld [vmem:[#allocation16 + $0x628] sm:$0xff]
    %v4196 = vld [vmem:[#allocation16 + $0x630] sm:$0xff]
    %v4197 = vld [vmem:[#allocation16 + $0x638] sm:$0xff]
    %v4198 = vld [vmem:[#allocation16 + $0x640] sm:$0xff]
    %v4199 = vld [vmem:[#allocation16 + $0x648] sm:$0xff]
    %v4200 = vld [vmem:[#allocation16 + $0x650] sm:$0xff]
    %v4201 = vld [vmem:[#allocation16 + $0x658] sm:$0xff]
    %v4202 = vld [vmem:[#allocation16 + $0x660] sm:$0xff]
    %v4203 = vld [vmem:[#allocation16 + $0x668] sm:$0xff]
    %v4204 = vld [vmem:[#allocation16 + $0x670] sm:$0xff]
    %v4205 = vld [vmem:[#allocation16 + $0x678] sm:$0xff]
    %v4206 = vld [vmem:[#allocation16 + $0x680] sm:$0xff]
    %v4207 = vld [vmem:[#allocation16 + $0x688] sm:$0xff]
    %v4208 = vld [vmem:[#allocation16 + $0x690] sm:$0xff]
    %v4209 = vld [vmem:[#allocation16 + $0x698] sm:$0xff]
    %v4210 = vld [vmem:[#allocation16 + $0x6a0] sm:$0xff]
    %v4211 = vld [vmem:[#allocation16 + $0x6a8] sm:$0xff]
    %v4212 = vld [vmem:[#allocation16 + $0x6b0] sm:$0xff]
    %v4213 = vld [vmem:[#allocation16 + $0x6b8] sm:$0xff]
    %v4214 = vld [vmem:[#allocation16 + $0x6c0] sm:$0xff]
    %v4215 = vld [vmem:[#allocation16 + $0x6c8] sm:$0xff]
    %v4216 = vld [vmem:[#allocation16 + $0x6d0] sm:$0xff]
    %v4217 = vld [vmem:[#allocation16 + $0x6d8] sm:$0xff]
    %v4218 = vld [vmem:[#allocation16 + $0x6e0] sm:$0xff]
    %v4219 = vld [vmem:[#allocation16 + $0x6e8] sm:$0xff]
    %v4220 = vld [vmem:[#allocation16 + $0x6f0] sm:$0xff]
    %v4221 = vld [vmem:[#allocation16 + $0x6f8] sm:$0xff]
    %v4222 = vld [vmem:[#allocation16 + $0x700] sm:$0xff]
    %v4223 = vld [vmem:[#allocation16 + $0x708] sm:$0xff]
    %v4224 = vld [vmem:[#allocation16 + $0x710] sm:$0xff]
    %v4225 = vld [vmem:[#allocation16 + $0x718] sm:$0xff]
    %v4226 = vld [vmem:[#allocation16 + $0x720] sm:$0xff]
    %v4227 = vld [vmem:[#allocation16 + $0x728] sm:$0xff]
    %v4228 = vld [vmem:[#allocation16 + $0x730] sm:$0xff]
    %v4229 = vld [vmem:[#allocation16 + $0x738] sm:$0xff]
    %v4230 = vld [vmem:[#allocation16 + $0x740] sm:$0xff]
    %v4231 = vld [vmem:[#allocation16 + $0x748] sm:$0xff]
    %v4232 = vld [vmem:[#allocation16 + $0x750] sm:$0xff]
    %v4233 = vld [vmem:[#allocation16 + $0x758] sm:$0xff]
    %v4234 = vld [vmem:[#allocation16 + $0x760] sm:$0xff]
    %v4235 = vld [vmem:[#allocation16 + $0x768] sm:$0xff]
    %v4236 = vld [vmem:[#allocation16 + $0x770] sm:$0xff]
    %v4237 = vld [vmem:[#allocation16 + $0x778] sm:$0xff]
    %v4238 = vld [vmem:[#allocation16 + $0x780] sm:$0xff]
    %v4239 = vld [vmem:[#allocation16 + $0x788] sm:$0xff]
    %v4240 = vld [vmem:[#allocation16 + $0x790] sm:$0xff]
    %v4241 = vld [vmem:[#allocation16 + $0x798] sm:$0xff]
    %v4242 = vld [vmem:[#allocation16 + $0x7a0] sm:$0xff]
    %v4243 = vld [vmem:[#allocation16 + $0x7a8] sm:$0xff]
    %v4244 = vld [vmem:[#allocation16 + $0x7b0] sm:$0xff]
    %v4245 = vld [vmem:[#allocation16 + $0x7b8] sm:$0xff]
    %v4246 = vld [vmem:[#allocation16 + $0x7c0] sm:$0xff]
    %v4247 = vld [vmem:[#allocation16 + $0x7c8] sm:$0xff]
    %v4248 = vld [vmem:[#allocation16 + $0x7d0] sm:$0xff]
    %v4249 = vld [vmem:[#allocation16 + $0x7d8] sm:$0xff]
    %v4250 = vld [vmem:[#allocation16 + $0x7e0] sm:$0xff]
    %v4251 = vld [vmem:[#allocation16 + $0x7e8] sm:$0xff]
    %v4252 = vld [vmem:[#allocation16 + $0x7f0] sm:$0xff]
    %v4253 = vld [vmem:[#allocation16 + $0x7f8] sm:$0xff]
    %v4254 = vld [vmem:[%s14] sm:$0xff]
    %v4256 = vlaneseq
    %v4257 = vshrl.u32 %v4256, 7
    %v4258 = vsub.s32 0, %v4257
    %v4259 = vrot.slane %v4254, %v4258
    %v4260 = vlaneseq
    %v4261 = vshrl.u32 %v4260, 7
    %v4262 = vsub.s32 1, %v4261
    %v4263 = vrot.slane %v4254, %v4262
    %v4264 = vlaneseq
    %v4265 = vshrl.u32 %v4264, 7
    %v4266 = vsub.s32 2, %v4265
    %v4267 = vrot.slane %v4254, %v4266
    %v4268 = vlaneseq
    %v4269 = vshrl.u32 %v4268, 7
    %v4270 = vsub.s32 3, %v4269
    %v4271 = vrot.slane %v4254, %v4270
    %v4272 = vlaneseq
    %v4273 = vshrl.u32 %v4272, 7
    %v4274 = vsub.s32 4, %v4273
    %v4275 = vrot.slane %v4254, %v4274
    %v4276 = vlaneseq
    %v4277 = vshrl.u32 %v4276, 7
    %v4278 = vsub.s32 5, %v4277
    %v4279 = vrot.slane %v4254, %v4278
    %v4280 = vlaneseq
    %v4281 = vshrl.u32 %v4280, 7
    %v4282 = vsub.s32 6, %v4281
    %v4283 = vrot.slane %v4254, %v4282
    %v4284 = vlaneseq
    %v4285 = vshrl.u32 %v4284, 7
    %v4286 = vsub.s32 7, %v4285
    %v4287 = vrot.slane %v4254, %v4286
    %v4552 = vunpack.c.l.b16 %v3998
    %v4553 = vunpack.c.h.b16 %v3998
    %v4554 = vunpack.c.l.b16 %v3999
    %v4555 = vunpack.c.h.b16 %v3999
    %v4556 = vunpack.c.l.b16 %v4000
    %v4557 = vunpack.c.h.b16 %v4000
    %v4558 = vunpack.c.l.b16 %v4001
    %v4559 = vunpack.c.h.b16 %v4001
    %v4560 = vunpack.c.l.b16 %v4002
    %v4561 = vunpack.c.h.b16 %v4002
    %v4562 = vunpack.c.l.b16 %v4003
    %v4563 = vunpack.c.h.b16 %v4003
    %v4564 = vunpack.c.l.b16 %v4004
    %v4565 = vunpack.c.h.b16 %v4004
    %v4566 = vunpack.c.l.b16 %v4005
    %v4567 = vunpack.c.h.b16 %v4005
    %v4568 = vunpack.c.l.b16 %v4006
    %v4569 = vunpack.c.h.b16 %v4006
    %v4570 = vunpack.c.l.b16 %v4007
    %v4571 = vunpack.c.h.b16 %v4007
    %v4572 = vunpack.c.l.b16 %v4008
    %v4573 = vunpack.c.h.b16 %v4008
    %v4574 = vunpack.c.l.b16 %v4009
    %v4575 = vunpack.c.h.b16 %v4009
    %v4576 = vunpack.c.l.b16 %v4010
    %v4577 = vunpack.c.h.b16 %v4010
    %v4578 = vunpack.c.l.b16 %v4011
    %v4579 = vunpack.c.h.b16 %v4011
    %v4580 = vunpack.c.l.b16 %v4012
    %v4581 = vunpack.c.h.b16 %v4012
    %v4582 = vunpack.c.l.b16 %v4013
    %v4583 = vunpack.c.h.b16 %v4013
    %v4584 = vunpack.c.l.b16 %v4014
    %v4585 = vunpack.c.h.b16 %v4014
    %v4586 = vunpack.c.l.b16 %v4015
    %v4587 = vunpack.c.h.b16 %v4015
    %v4588 = vunpack.c.l.b16 %v4016
    %v4589 = vunpack.c.h.b16 %v4016
    %v4590 = vunpack.c.l.b16 %v4017
    %v4591 = vunpack.c.h.b16 %v4017
    %v4592 = vunpack.c.l.b16 %v4018
    %v4593 = vunpack.c.h.b16 %v4018
    %v4594 = vunpack.c.l.b16 %v4019
    %v4595 = vunpack.c.h.b16 %v4019
    %v4596 = vunpack.c.l.b16 %v4020
    %v4597 = vunpack.c.h.b16 %v4020
    %v4598 = vunpack.c.l.b16 %v4021
    %v4599 = vunpack.c.h.b16 %v4021
    %v4600 = vunpack.c.l.b16 %v4022
    %v4601 = vunpack.c.h.b16 %v4022
    %v4602 = vunpack.c.l.b16 %v4023
    %v4603 = vunpack.c.h.b16 %v4023
    %v4604 = vunpack.c.l.b16 %v4024
    %v4605 = vunpack.c.h.b16 %v4024
    %v4606 = vunpack.c.l.b16 %v4025
    %v4607 = vunpack.c.h.b16 %v4025
    %v4608 = vunpack.c.l.b16 %v4026
    %v4609 = vunpack.c.h.b16 %v4026
    %v4610 = vunpack.c.l.b16 %v4027
    %v4611 = vunpack.c.h.b16 %v4027
    %v4612 = vunpack.c.l.b16 %v4028
    %v4613 = vunpack.c.h.b16 %v4028
    %v4614 = vunpack.c.l.b16 %v4029
    %v4615 = vunpack.c.h.b16 %v4029
    %v4616 = vunpack.c.l.b16 %v4030
    %v4617 = vunpack.c.h.b16 %v4030
    %v4618 = vunpack.c.l.b16 %v4031
    %v4619 = vunpack.c.h.b16 %v4031
    %v4620 = vunpack.c.l.b16 %v4032
    %v4621 = vunpack.c.h.b16 %v4032
    %v4622 = vunpack.c.l.b16 %v4033
    %v4623 = vunpack.c.h.b16 %v4033
    %v4624 = vunpack.c.l.b16 %v4034
    %v4625 = vunpack.c.h.b16 %v4034
    %v4626 = vunpack.c.l.b16 %v4035
    %v4627 = vunpack.c.h.b16 %v4035
    %v4628 = vunpack.c.l.b16 %v4036
    %v4629 = vunpack.c.h.b16 %v4036
    %v4630 = vunpack.c.l.b16 %v4037
    %v4631 = vunpack.c.h.b16 %v4037
    %v4632 = vunpack.c.l.b16 %v4038
    %v4633 = vunpack.c.h.b16 %v4038
    %v4634 = vunpack.c.l.b16 %v4039
    %v4635 = vunpack.c.h.b16 %v4039
    %v4636 = vunpack.c.l.b16 %v4040
    %v4637 = vunpack.c.h.b16 %v4040
    %v4638 = vunpack.c.l.b16 %v4041
    %v4639 = vunpack.c.h.b16 %v4041
    %v4640 = vunpack.c.l.b16 %v4042
    %v4641 = vunpack.c.h.b16 %v4042
    %v4642 = vunpack.c.l.b16 %v4043
    %v4643 = vunpack.c.h.b16 %v4043
    %v4644 = vunpack.c.l.b16 %v4044
    %v4645 = vunpack.c.h.b16 %v4044
    %v4646 = vunpack.c.l.b16 %v4045
    %v4647 = vunpack.c.h.b16 %v4045
    %v4648 = vunpack.c.l.b16 %v4046
    %v4649 = vunpack.c.h.b16 %v4046
    %v4650 = vunpack.c.l.b16 %v4047
    %v4651 = vunpack.c.h.b16 %v4047
    %v4652 = vunpack.c.l.b16 %v4048
    %v4653 = vunpack.c.h.b16 %v4048
    %v4654 = vunpack.c.l.b16 %v4049
    %v4655 = vunpack.c.h.b16 %v4049
    %v4656 = vunpack.c.l.b16 %v4050
    %v4657 = vunpack.c.h.b16 %v4050
    %v4658 = vunpack.c.l.b16 %v4051
    %v4659 = vunpack.c.h.b16 %v4051
    %v4660 = vunpack.c.l.b16 %v4052
    %v4661 = vunpack.c.h.b16 %v4052
    %v4662 = vunpack.c.l.b16 %v4053
    %v4663 = vunpack.c.h.b16 %v4053
    %v4664 = vunpack.c.l.b16 %v4054
    %v4665 = vunpack.c.h.b16 %v4054
    %v4666 = vunpack.c.l.b16 %v4055
    %v4667 = vunpack.c.h.b16 %v4055
    %v4668 = vunpack.c.l.b16 %v4056
    %v4669 = vunpack.c.h.b16 %v4056
    %v4670 = vunpack.c.l.b16 %v4057
    %v4671 = vunpack.c.h.b16 %v4057
    %v4672 = vunpack.c.l.b16 %v4058
    %v4673 = vunpack.c.h.b16 %v4058
    %v4674 = vunpack.c.l.b16 %v4059
    %v4675 = vunpack.c.h.b16 %v4059
    %v4676 = vunpack.c.l.b16 %v4060
    %v4677 = vunpack.c.h.b16 %v4060
    %v4678 = vunpack.c.l.b16 %v4061
    %v4679 = vunpack.c.h.b16 %v4061
    %v4680 = vunpack.c.l.b16 %v4062
    %v4681 = vunpack.c.h.b16 %v4062
    %v4682 = vunpack.c.l.b16 %v4063
    %v4683 = vunpack.c.h.b16 %v4063
    %v4684 = vunpack.c.l.b16 %v4064
    %v4685 = vunpack.c.h.b16 %v4064
    %v4686 = vunpack.c.l.b16 %v4065
    %v4687 = vunpack.c.h.b16 %v4065
    %v4688 = vunpack.c.l.b16 %v4066
    %v4689 = vunpack.c.h.b16 %v4066
    %v4690 = vunpack.c.l.b16 %v4067
    %v4691 = vunpack.c.h.b16 %v4067
    %v4692 = vunpack.c.l.b16 %v4068
    %v4693 = vunpack.c.h.b16 %v4068
    %v4694 = vunpack.c.l.b16 %v4069
    %v4695 = vunpack.c.h.b16 %v4069
    %v4696 = vunpack.c.l.b16 %v4070
    %v4697 = vunpack.c.h.b16 %v4070
    %v4698 = vunpack.c.l.b16 %v4071
    %v4699 = vunpack.c.h.b16 %v4071
    %v4700 = vunpack.c.l.b16 %v4072
    %v4701 = vunpack.c.h.b16 %v4072
    %v4702 = vunpack.c.l.b16 %v4073
    %v4703 = vunpack.c.h.b16 %v4073
    %v4704 = vunpack.c.l.b16 %v4074
    %v4705 = vunpack.c.h.b16 %v4074
    %v4706 = vunpack.c.l.b16 %v4075
    %v4707 = vunpack.c.h.b16 %v4075
    %v4708 = vunpack.c.l.b16 %v4076
    %v4709 = vunpack.c.h.b16 %v4076
    %v4710 = vunpack.c.l.b16 %v4077
    %v4711 = vunpack.c.h.b16 %v4077
    %v4712 = vunpack.c.l.b16 %v4078
    %v4713 = vunpack.c.h.b16 %v4078
    %v4714 = vunpack.c.l.b16 %v4079
    %v4715 = vunpack.c.h.b16 %v4079
    %v4716 = vunpack.c.l.b16 %v4080
    %v4717 = vunpack.c.h.b16 %v4080
    %v4718 = vunpack.c.l.b16 %v4081
    %v4719 = vunpack.c.h.b16 %v4081
    %v4720 = vunpack.c.l.b16 %v4082
    %v4721 = vunpack.c.h.b16 %v4082
    %v4722 = vunpack.c.l.b16 %v4083
    %v4723 = vunpack.c.h.b16 %v4083
    %v4724 = vunpack.c.l.b16 %v4084
    %v4725 = vunpack.c.h.b16 %v4084
    %v4726 = vunpack.c.l.b16 %v4085
    %v4727 = vunpack.c.h.b16 %v4085
    %v4728 = vunpack.c.l.b16 %v4086
    %v4729 = vunpack.c.h.b16 %v4086
    %v4730 = vunpack.c.l.b16 %v4087
    %v4731 = vunpack.c.h.b16 %v4087
    %v4732 = vunpack.c.l.b16 %v4088
    %v4733 = vunpack.c.h.b16 %v4088
    %v4734 = vunpack.c.l.b16 %v4089
    %v4735 = vunpack.c.h.b16 %v4089
    %v4736 = vunpack.c.l.b16 %v4090
    %v4737 = vunpack.c.h.b16 %v4090
    %v4738 = vunpack.c.l.b16 %v4091
    %v4739 = vunpack.c.h.b16 %v4091
    %v4740 = vunpack.c.l.b16 %v4092
    %v4741 = vunpack.c.h.b16 %v4092
    %v4742 = vunpack.c.l.b16 %v4093
    %v4743 = vunpack.c.h.b16 %v4093
    %v4744 = vunpack.c.l.b16 %v4094
    %v4745 = vunpack.c.h.b16 %v4094
    %v4746 = vunpack.c.l.b16 %v4095
    %v4747 = vunpack.c.h.b16 %v4095
    %v4748 = vunpack.c.l.b16 %v4096
    %v4749 = vunpack.c.h.b16 %v4096
    %v4750 = vunpack.c.l.b16 %v4097
    %v4751 = vunpack.c.h.b16 %v4097
    %v4752 = vunpack.c.l.b16 %v4098
    %v4753 = vunpack.c.h.b16 %v4098
    %v4754 = vunpack.c.l.b16 %v4099
    %v4755 = vunpack.c.h.b16 %v4099
    %v4756 = vunpack.c.l.b16 %v4100
    %v4757 = vunpack.c.h.b16 %v4100
    %v4758 = vunpack.c.l.b16 %v4101
    %v4759 = vunpack.c.h.b16 %v4101
    %v4760 = vunpack.c.l.b16 %v4102
    %v4761 = vunpack.c.h.b16 %v4102
    %v4762 = vunpack.c.l.b16 %v4103
    %v4763 = vunpack.c.h.b16 %v4103
    %v4764 = vunpack.c.l.b16 %v4104
    %v4765 = vunpack.c.h.b16 %v4104
    %v4766 = vunpack.c.l.b16 %v4105
    %v4767 = vunpack.c.h.b16 %v4105
    %v4768 = vunpack.c.l.b16 %v4106
    %v4769 = vunpack.c.h.b16 %v4106
    %v4770 = vunpack.c.l.b16 %v4107
    %v4771 = vunpack.c.h.b16 %v4107
    %v4772 = vunpack.c.l.b16 %v4108
    %v4773 = vunpack.c.h.b16 %v4108
    %v4774 = vunpack.c.l.b16 %v4109
    %v4775 = vunpack.c.h.b16 %v4109
    %v4776 = vunpack.c.l.b16 %v4110
    %v4777 = vunpack.c.h.b16 %v4110
    %v4778 = vunpack.c.l.b16 %v4111
    %v4779 = vunpack.c.h.b16 %v4111
    %v4780 = vunpack.c.l.b16 %v4112
    %v4781 = vunpack.c.h.b16 %v4112
    %v4782 = vunpack.c.l.b16 %v4113
    %v4783 = vunpack.c.h.b16 %v4113
    %v4784 = vunpack.c.l.b16 %v4114
    %v4785 = vunpack.c.h.b16 %v4114
    %v4786 = vunpack.c.l.b16 %v4115
    %v4787 = vunpack.c.h.b16 %v4115
    %v4788 = vunpack.c.l.b16 %v4116
    %v4789 = vunpack.c.h.b16 %v4116
    %v4790 = vunpack.c.l.b16 %v4117
    %v4791 = vunpack.c.h.b16 %v4117
    %v4792 = vunpack.c.l.b16 %v4118
    %v4793 = vunpack.c.h.b16 %v4118
    %v4794 = vunpack.c.l.b16 %v4119
    %v4795 = vunpack.c.h.b16 %v4119
    %v4796 = vunpack.c.l.b16 %v4120
    %v4797 = vunpack.c.h.b16 %v4120
    %v4798 = vunpack.c.l.b16 %v4121
    %v4799 = vunpack.c.h.b16 %v4121
    %v4800 = vunpack.c.l.b16 %v4122
    %v4801 = vunpack.c.h.b16 %v4122
    %v4802 = vunpack.c.l.b16 %v4123
    %v4803 = vunpack.c.h.b16 %v4123
    %v4804 = vunpack.c.l.b16 %v4124
    %v4805 = vunpack.c.h.b16 %v4124
    %v4806 = vunpack.c.l.b16 %v4125
    %v4807 = vunpack.c.h.b16 %v4125
    %v4808 = vunpack.c.l.b16 %v4126
    %v4809 = vunpack.c.h.b16 %v4126
    %v4810 = vunpack.c.l.b16 %v4127
    %v4811 = vunpack.c.h.b16 %v4127
    %v4812 = vunpack.c.l.b16 %v4128
    %v4813 = vunpack.c.h.b16 %v4128
    %v4814 = vunpack.c.l.b16 %v4129
    %v4815 = vunpack.c.h.b16 %v4129
    %v4816 = vunpack.c.l.b16 %v4130
    %v4817 = vunpack.c.h.b16 %v4130
    %v4818 = vunpack.c.l.b16 %v4131
    %v4819 = vunpack.c.h.b16 %v4131
    %v4820 = vunpack.c.l.b16 %v4132
    %v4821 = vunpack.c.h.b16 %v4132
    %v4822 = vunpack.c.l.b16 %v4133
    %v4823 = vunpack.c.h.b16 %v4133
    %v4824 = vunpack.c.l.b16 %v4134
    %v4825 = vunpack.c.h.b16 %v4134
    %v4826 = vunpack.c.l.b16 %v4135
    %v4827 = vunpack.c.h.b16 %v4135
    %v4828 = vunpack.c.l.b16 %v4136
    %v4829 = vunpack.c.h.b16 %v4136
    %v4830 = vunpack.c.l.b16 %v4137
    %v4831 = vunpack.c.h.b16 %v4137
    %v4832 = vunpack.c.l.b16 %v4138
    %v4833 = vunpack.c.h.b16 %v4138
    %v4834 = vunpack.c.l.b16 %v4139
    %v4835 = vunpack.c.h.b16 %v4139
    %v4836 = vunpack.c.l.b16 %v4140
    %v4837 = vunpack.c.h.b16 %v4140
    %v4838 = vunpack.c.l.b16 %v4141
    %v4839 = vunpack.c.h.b16 %v4141
    %v4840 = vunpack.c.l.b16 %v4142
    %v4841 = vunpack.c.h.b16 %v4142
    %v4842 = vunpack.c.l.b16 %v4143
    %v4843 = vunpack.c.h.b16 %v4143
    %v4844 = vunpack.c.l.b16 %v4144
    %v4845 = vunpack.c.h.b16 %v4144
    %v4846 = vunpack.c.l.b16 %v4145
    %v4847 = vunpack.c.h.b16 %v4145
    %v4848 = vunpack.c.l.b16 %v4146
    %v4849 = vunpack.c.h.b16 %v4146
    %v4850 = vunpack.c.l.b16 %v4147
    %v4851 = vunpack.c.h.b16 %v4147
    %v4852 = vunpack.c.l.b16 %v4148
    %v4853 = vunpack.c.h.b16 %v4148
    %v4854 = vunpack.c.l.b16 %v4149
    %v4855 = vunpack.c.h.b16 %v4149
    %v4856 = vunpack.c.l.b16 %v4150
    %v4857 = vunpack.c.h.b16 %v4150
    %v4858 = vunpack.c.l.b16 %v4151
    %v4859 = vunpack.c.h.b16 %v4151
    %v4860 = vunpack.c.l.b16 %v4152
    %v4861 = vunpack.c.h.b16 %v4152
    %v4862 = vunpack.c.l.b16 %v4153
    %v4863 = vunpack.c.h.b16 %v4153
    %v4864 = vunpack.c.l.b16 %v4154
    %v4865 = vunpack.c.h.b16 %v4154
    %v4866 = vunpack.c.l.b16 %v4155
    %v4867 = vunpack.c.h.b16 %v4155
    %v4868 = vunpack.c.l.b16 %v4156
    %v4869 = vunpack.c.h.b16 %v4156
    %v4870 = vunpack.c.l.b16 %v4157
    %v4871 = vunpack.c.h.b16 %v4157
    %v4872 = vunpack.c.l.b16 %v4158
    %v4873 = vunpack.c.h.b16 %v4158
    %v4874 = vunpack.c.l.b16 %v4159
    %v4875 = vunpack.c.h.b16 %v4159
    %v4876 = vunpack.c.l.b16 %v4160
    %v4877 = vunpack.c.h.b16 %v4160
    %v4878 = vunpack.c.l.b16 %v4161
    %v4879 = vunpack.c.h.b16 %v4161
    %v4880 = vunpack.c.l.b16 %v4162
    %v4881 = vunpack.c.h.b16 %v4162
    %v4882 = vunpack.c.l.b16 %v4163
    %v4883 = vunpack.c.h.b16 %v4163
    %v4884 = vunpack.c.l.b16 %v4164
    %v4885 = vunpack.c.h.b16 %v4164
    %v4886 = vunpack.c.l.b16 %v4165
    %v4887 = vunpack.c.h.b16 %v4165
    %v4888 = vunpack.c.l.b16 %v4166
    %v4889 = vunpack.c.h.b16 %v4166
    %v4890 = vunpack.c.l.b16 %v4167
    %v4891 = vunpack.c.h.b16 %v4167
    %v4892 = vunpack.c.l.b16 %v4168
    %v4893 = vunpack.c.h.b16 %v4168
    %v4894 = vunpack.c.l.b16 %v4169
    %v4895 = vunpack.c.h.b16 %v4169
    %v4896 = vunpack.c.l.b16 %v4170
    %v4897 = vunpack.c.h.b16 %v4170
    %v4898 = vunpack.c.l.b16 %v4171
    %v4899 = vunpack.c.h.b16 %v4171
    %v4900 = vunpack.c.l.b16 %v4172
    %v4901 = vunpack.c.h.b16 %v4172
    %v4902 = vunpack.c.l.b16 %v4173
    %v4903 = vunpack.c.h.b16 %v4173
    %v4904 = vunpack.c.l.b16 %v4174
    %v4905 = vunpack.c.h.b16 %v4174
    %v4906 = vunpack.c.l.b16 %v4175
    %v4907 = vunpack.c.h.b16 %v4175
    %v4908 = vunpack.c.l.b16 %v4176
    %v4909 = vunpack.c.h.b16 %v4176
    %v4910 = vunpack.c.l.b16 %v4177
    %v4911 = vunpack.c.h.b16 %v4177
    %v4912 = vunpack.c.l.b16 %v4178
    %v4913 = vunpack.c.h.b16 %v4178
    %v4914 = vunpack.c.l.b16 %v4179
    %v4915 = vunpack.c.h.b16 %v4179
    %v4916 = vunpack.c.l.b16 %v4180
    %v4917 = vunpack.c.h.b16 %v4180
    %v4918 = vunpack.c.l.b16 %v4181
    %v4919 = vunpack.c.h.b16 %v4181
    %v4920 = vunpack.c.l.b16 %v4182
    %v4921 = vunpack.c.h.b16 %v4182
    %v4922 = vunpack.c.l.b16 %v4183
    %v4923 = vunpack.c.h.b16 %v4183
    %v4924 = vunpack.c.l.b16 %v4184
    %v4925 = vunpack.c.h.b16 %v4184
    %v4926 = vunpack.c.l.b16 %v4185
    %v4927 = vunpack.c.h.b16 %v4185
    %v4928 = vunpack.c.l.b16 %v4186
    %v4929 = vunpack.c.h.b16 %v4186
    %v4930 = vunpack.c.l.b16 %v4187
    %v4931 = vunpack.c.h.b16 %v4187
    %v4932 = vunpack.c.l.b16 %v4188
    %v4933 = vunpack.c.h.b16 %v4188
    %v4934 = vunpack.c.l.b16 %v4189
    %v4935 = vunpack.c.h.b16 %v4189
    %v4936 = vunpack.c.l.b16 %v4190
    %v4937 = vunpack.c.h.b16 %v4190
    %v4938 = vunpack.c.l.b16 %v4191
    %v4939 = vunpack.c.h.b16 %v4191
    %v4940 = vunpack.c.l.b16 %v4192
    %v4941 = vunpack.c.h.b16 %v4192
    %v4942 = vunpack.c.l.b16 %v4193
    %v4943 = vunpack.c.h.b16 %v4193
    %v4944 = vunpack.c.l.b16 %v4194
    %v4945 = vunpack.c.h.b16 %v4194
    %v4946 = vunpack.c.l.b16 %v4195
    %v4947 = vunpack.c.h.b16 %v4195
    %v4948 = vunpack.c.l.b16 %v4196
    %v4949 = vunpack.c.h.b16 %v4196
    %v4950 = vunpack.c.l.b16 %v4197
    %v4951 = vunpack.c.h.b16 %v4197
    %v4952 = vunpack.c.l.b16 %v4198
    %v4953 = vunpack.c.h.b16 %v4198
    %v4954 = vunpack.c.l.b16 %v4199
    %v4955 = vunpack.c.h.b16 %v4199
    %v4956 = vunpack.c.l.b16 %v4200
    %v4957 = vunpack.c.h.b16 %v4200
    %v4958 = vunpack.c.l.b16 %v4201
    %v4959 = vunpack.c.h.b16 %v4201
    %v4960 = vunpack.c.l.b16 %v4202
    %v4961 = vunpack.c.h.b16 %v4202
    %v4962 = vunpack.c.l.b16 %v4203
    %v4963 = vunpack.c.h.b16 %v4203
    %v4964 = vunpack.c.l.b16 %v4204
    %v4965 = vunpack.c.h.b16 %v4204
    %v4966 = vunpack.c.l.b16 %v4205
    %v4967 = vunpack.c.h.b16 %v4205
    %v4968 = vunpack.c.l.b16 %v4206
    %v4969 = vunpack.c.h.b16 %v4206
    %v4970 = vunpack.c.l.b16 %v4207
    %v4971 = vunpack.c.h.b16 %v4207
    %v4972 = vunpack.c.l.b16 %v4208
    %v4973 = vunpack.c.h.b16 %v4208
    %v4974 = vunpack.c.l.b16 %v4209
    %v4975 = vunpack.c.h.b16 %v4209
    %v4976 = vunpack.c.l.b16 %v4210
    %v4977 = vunpack.c.h.b16 %v4210
    %v4978 = vunpack.c.l.b16 %v4211
    %v4979 = vunpack.c.h.b16 %v4211
    %v4980 = vunpack.c.l.b16 %v4212
    %v4981 = vunpack.c.h.b16 %v4212
    %v4982 = vunpack.c.l.b16 %v4213
    %v4983 = vunpack.c.h.b16 %v4213
    %v4984 = vunpack.c.l.b16 %v4214
    %v4985 = vunpack.c.h.b16 %v4214
    %v4986 = vunpack.c.l.b16 %v4215
    %v4987 = vunpack.c.h.b16 %v4215
    %v4988 = vunpack.c.l.b16 %v4216
    %v4989 = vunpack.c.h.b16 %v4216
    %v4990 = vunpack.c.l.b16 %v4217
    %v4991 = vunpack.c.h.b16 %v4217
    %v4992 = vunpack.c.l.b16 %v4218
    %v4993 = vunpack.c.h.b16 %v4218
    %v4994 = vunpack.c.l.b16 %v4219
    %v4995 = vunpack.c.h.b16 %v4219
    %v4996 = vunpack.c.l.b16 %v4220
    %v4997 = vunpack.c.h.b16 %v4220
    %v4998 = vunpack.c.l.b16 %v4221
    %v4999 = vunpack.c.h.b16 %v4221
    %v5000 = vunpack.c.l.b16 %v4222
    %v5001 = vunpack.c.h.b16 %v4222
    %v5002 = vunpack.c.l.b16 %v4223
    %v5003 = vunpack.c.h.b16 %v4223
    %v5004 = vunpack.c.l.b16 %v4224
    %v5005 = vunpack.c.h.b16 %v4224
    %v5006 = vunpack.c.l.b16 %v4225
    %v5007 = vunpack.c.h.b16 %v4225
    %v5008 = vunpack.c.l.b16 %v4226
    %v5009 = vunpack.c.h.b16 %v4226
    %v5010 = vunpack.c.l.b16 %v4227
    %v5011 = vunpack.c.h.b16 %v4227
    %v5012 = vunpack.c.l.b16 %v4228
    %v5013 = vunpack.c.h.b16 %v4228
    %v5014 = vunpack.c.l.b16 %v4229
    %v5015 = vunpack.c.h.b16 %v4229
    %v5016 = vunpack.c.l.b16 %v4230
    %v5017 = vunpack.c.h.b16 %v4230
    %v5018 = vunpack.c.l.b16 %v4231
    %v5019 = vunpack.c.h.b16 %v4231
    %v5020 = vunpack.c.l.b16 %v4232
    %v5021 = vunpack.c.h.b16 %v4232
    %v5022 = vunpack.c.l.b16 %v4233
    %v5023 = vunpack.c.h.b16 %v4233
    %v5024 = vunpack.c.l.b16 %v4234
    %v5025 = vunpack.c.h.b16 %v4234
    %v5026 = vunpack.c.l.b16 %v4235
    %v5027 = vunpack.c.h.b16 %v4235
    %v5028 = vunpack.c.l.b16 %v4236
    %v5029 = vunpack.c.h.b16 %v4236
    %v5030 = vunpack.c.l.b16 %v4237
    %v5031 = vunpack.c.h.b16 %v4237
    %v5032 = vunpack.c.l.b16 %v4238
    %v5033 = vunpack.c.h.b16 %v4238
    %v5034 = vunpack.c.l.b16 %v4239
    %v5035 = vunpack.c.h.b16 %v4239
    %v5036 = vunpack.c.l.b16 %v4240
    %v5037 = vunpack.c.h.b16 %v4240
    %v5038 = vunpack.c.l.b16 %v4241
    %v5039 = vunpack.c.h.b16 %v4241
    %v5040 = vunpack.c.l.b16 %v4242
    %v5041 = vunpack.c.h.b16 %v4242
    %v5042 = vunpack.c.l.b16 %v4243
    %v5043 = vunpack.c.h.b16 %v4243
    %v5044 = vunpack.c.l.b16 %v4244
    %v5045 = vunpack.c.h.b16 %v4244
    %v5046 = vunpack.c.l.b16 %v4245
    %v5047 = vunpack.c.h.b16 %v4245
    %v5048 = vunpack.c.l.b16 %v4246
    %v5049 = vunpack.c.h.b16 %v4246
    %v5050 = vunpack.c.l.b16 %v4247
    %v5051 = vunpack.c.h.b16 %v4247
    %v5052 = vunpack.c.l.b16 %v4248
    %v5053 = vunpack.c.h.b16 %v4248
    %v5054 = vunpack.c.l.b16 %v4249
    %v5055 = vunpack.c.h.b16 %v4249
    %v5056 = vunpack.c.l.b16 %v4250
    %v5057 = vunpack.c.h.b16 %v4250
    %v5058 = vunpack.c.l.b16 %v4251
    %v5059 = vunpack.c.h.b16 %v4251
    %v5060 = vunpack.c.l.b16 %v4252
    %v5061 = vunpack.c.h.b16 %v4252
    %v5062 = vunpack.c.l.b16 %v4253
    %v5063 = vunpack.c.h.b16 %v4253
    %v5064 = vpack.c.b16 %v4560, %v4552
    %v5065 = vpack.c.b16 %v4561, %v4553
    %v5066 = vpack.c.b16 %v4562, %v4554
    %v5067 = vpack.c.b16 %v4563, %v4555
    %v5068 = vpack.c.b16 %v4564, %v4556
    %v5069 = vpack.c.b16 %v4565, %v4557
    %v5070 = vpack.c.b16 %v4566, %v4558
    %v5071 = vpack.c.b16 %v4567, %v4559
    %v5072 = vpack.c.b16 %v4576, %v4568
    %v5073 = vpack.c.b16 %v4577, %v4569
    %v5074 = vpack.c.b16 %v4578, %v4570
    %v5075 = vpack.c.b16 %v4579, %v4571
    %v5076 = vpack.c.b16 %v4580, %v4572
    %v5077 = vpack.c.b16 %v4581, %v4573
    %v5078 = vpack.c.b16 %v4582, %v4574
    %v5079 = vpack.c.b16 %v4583, %v4575
    %v5080 = vpack.c.b16 %v4592, %v4584
    %v5081 = vpack.c.b16 %v4593, %v4585
    %v5082 = vpack.c.b16 %v4594, %v4586
    %v5083 = vpack.c.b16 %v4595, %v4587
    %v5084 = vpack.c.b16 %v4596, %v4588
    %v5085 = vpack.c.b16 %v4597, %v4589
    %v5086 = vpack.c.b16 %v4598, %v4590
    %v5087 = vpack.c.b16 %v4599, %v4591
    %v5088 = vpack.c.b16 %v4608, %v4600
    %v5089 = vpack.c.b16 %v4609, %v4601
    %v5090 = vpack.c.b16 %v4610, %v4602
    %v5091 = vpack.c.b16 %v4611, %v4603
    %v5092 = vpack.c.b16 %v4612, %v4604
    %v5093 = vpack.c.b16 %v4613, %v4605
    %v5094 = vpack.c.b16 %v4614, %v4606
    %v5095 = vpack.c.b16 %v4615, %v4607
    %v5096 = vpack.c.b16 %v4624, %v4616
    %v5097 = vpack.c.b16 %v4625, %v4617
    %v5098 = vpack.c.b16 %v4626, %v4618
    %v5099 = vpack.c.b16 %v4627, %v4619
    %v5100 = vpack.c.b16 %v4628, %v4620
    %v5101 = vpack.c.b16 %v4629, %v4621
    %v5102 = vpack.c.b16 %v4630, %v4622
    %v5103 = vpack.c.b16 %v4631, %v4623
    %v5104 = vpack.c.b16 %v4640, %v4632
    %v5105 = vpack.c.b16 %v4641, %v4633
    %v5106 = vpack.c.b16 %v4642, %v4634
    %v5107 = vpack.c.b16 %v4643, %v4635
    %v5108 = vpack.c.b16 %v4644, %v4636
    %v5109 = vpack.c.b16 %v4645, %v4637
    %v5110 = vpack.c.b16 %v4646, %v4638
    %v5111 = vpack.c.b16 %v4647, %v4639
    %v5112 = vpack.c.b16 %v4656, %v4648
    %v5113 = vpack.c.b16 %v4657, %v4649
    %v5114 = vpack.c.b16 %v4658, %v4650
    %v5115 = vpack.c.b16 %v4659, %v4651
    %v5116 = vpack.c.b16 %v4660, %v4652
    %v5117 = vpack.c.b16 %v4661, %v4653
    %v5118 = vpack.c.b16 %v4662, %v4654
    %v5119 = vpack.c.b16 %v4663, %v4655
    %v5120 = vpack.c.b16 %v4672, %v4664
    %v5121 = vpack.c.b16 %v4673, %v4665
    %v5122 = vpack.c.b16 %v4674, %v4666
    %v5123 = vpack.c.b16 %v4675, %v4667
    %v5124 = vpack.c.b16 %v4676, %v4668
    %v5125 = vpack.c.b16 %v4677, %v4669
    %v5126 = vpack.c.b16 %v4678, %v4670
    %v5127 = vpack.c.b16 %v4679, %v4671
    %v5128 = vpack.c.b16 %v4688, %v4680
    %v5129 = vpack.c.b16 %v4689, %v4681
    %v5130 = vpack.c.b16 %v4690, %v4682
    %v5131 = vpack.c.b16 %v4691, %v4683
    %v5132 = vpack.c.b16 %v4692, %v4684
    %v5133 = vpack.c.b16 %v4693, %v4685
    %v5134 = vpack.c.b16 %v4694, %v4686
    %v5135 = vpack.c.b16 %v4695, %v4687
    %v5136 = vpack.c.b16 %v4704, %v4696
    %v5137 = vpack.c.b16 %v4705, %v4697
    %v5138 = vpack.c.b16 %v4706, %v4698
    %v5139 = vpack.c.b16 %v4707, %v4699
    %v5140 = vpack.c.b16 %v4708, %v4700
    %v5141 = vpack.c.b16 %v4709, %v4701
    %v5142 = vpack.c.b16 %v4710, %v4702
    %v5143 = vpack.c.b16 %v4711, %v4703
    %v5144 = vpack.c.b16 %v4720, %v4712
    %v5145 = vpack.c.b16 %v4721, %v4713
    %v5146 = vpack.c.b16 %v4722, %v4714
    %v5147 = vpack.c.b16 %v4723, %v4715
    %v5148 = vpack.c.b16 %v4724, %v4716
    %v5149 = vpack.c.b16 %v4725, %v4717
    %v5150 = vpack.c.b16 %v4726, %v4718
    %v5151 = vpack.c.b16 %v4727, %v4719
    %v5152 = vpack.c.b16 %v4736, %v4728
    %v5153 = vpack.c.b16 %v4737, %v4729
    %v5154 = vpack.c.b16 %v4738, %v4730
    %v5155 = vpack.c.b16 %v4739, %v4731
    %v5156 = vpack.c.b16 %v4740, %v4732
    %v5157 = vpack.c.b16 %v4741, %v4733
    %v5158 = vpack.c.b16 %v4742, %v4734
    %v5159 = vpack.c.b16 %v4743, %v4735
    %v5160 = vpack.c.b16 %v4752, %v4744
    %v5161 = vpack.c.b16 %v4753, %v4745
    %v5162 = vpack.c.b16 %v4754, %v4746
    %v5163 = vpack.c.b16 %v4755, %v4747
    %v5164 = vpack.c.b16 %v4756, %v4748
    %v5165 = vpack.c.b16 %v4757, %v4749
    %v5166 = vpack.c.b16 %v4758, %v4750
    %v5167 = vpack.c.b16 %v4759, %v4751
    %v5168 = vpack.c.b16 %v4768, %v4760
    %v5169 = vpack.c.b16 %v4769, %v4761
    %v5170 = vpack.c.b16 %v4770, %v4762
    %v5171 = vpack.c.b16 %v4771, %v4763
    %v5172 = vpack.c.b16 %v4772, %v4764
    %v5173 = vpack.c.b16 %v4773, %v4765
    %v5174 = vpack.c.b16 %v4774, %v4766
    %v5175 = vpack.c.b16 %v4775, %v4767
    %v5176 = vpack.c.b16 %v4784, %v4776
    %v5177 = vpack.c.b16 %v4785, %v4777
    %v5178 = vpack.c.b16 %v4786, %v4778
    %v5179 = vpack.c.b16 %v4787, %v4779
    %v5180 = vpack.c.b16 %v4788, %v4780
    %v5181 = vpack.c.b16 %v4789, %v4781
    %v5182 = vpack.c.b16 %v4790, %v4782
    %v5183 = vpack.c.b16 %v4791, %v4783
    %v5184 = vpack.c.b16 %v4800, %v4792
    %v5185 = vpack.c.b16 %v4801, %v4793
    %v5186 = vpack.c.b16 %v4802, %v4794
    %v5187 = vpack.c.b16 %v4803, %v4795
    %v5188 = vpack.c.b16 %v4804, %v4796
    %v5189 = vpack.c.b16 %v4805, %v4797
    %v5190 = vpack.c.b16 %v4806, %v4798
    %v5191 = vpack.c.b16 %v4807, %v4799
    %v5192 = vpack.c.b16 %v4816, %v4808
    %v5193 = vpack.c.b16 %v4817, %v4809
    %v5194 = vpack.c.b16 %v4818, %v4810
    %v5195 = vpack.c.b16 %v4819, %v4811
    %v5196 = vpack.c.b16 %v4820, %v4812
    %v5197 = vpack.c.b16 %v4821, %v4813
    %v5198 = vpack.c.b16 %v4822, %v4814
    %v5199 = vpack.c.b16 %v4823, %v4815
    %v5200 = vpack.c.b16 %v4832, %v4824
    %v5201 = vpack.c.b16 %v4833, %v4825
    %v5202 = vpack.c.b16 %v4834, %v4826
    %v5203 = vpack.c.b16 %v4835, %v4827
    %v5204 = vpack.c.b16 %v4836, %v4828
    %v5205 = vpack.c.b16 %v4837, %v4829
    %v5206 = vpack.c.b16 %v4838, %v4830
    %v5207 = vpack.c.b16 %v4839, %v4831
    %v5208 = vpack.c.b16 %v4848, %v4840
    %v5209 = vpack.c.b16 %v4849, %v4841
    %v5210 = vpack.c.b16 %v4850, %v4842
    %v5211 = vpack.c.b16 %v4851, %v4843
    %v5212 = vpack.c.b16 %v4852, %v4844
    %v5213 = vpack.c.b16 %v4853, %v4845
    %v5214 = vpack.c.b16 %v4854, %v4846
    %v5215 = vpack.c.b16 %v4855, %v4847
    %v5216 = vpack.c.b16 %v4864, %v4856
    %v5217 = vpack.c.b16 %v4865, %v4857
    %v5218 = vpack.c.b16 %v4866, %v4858
    %v5219 = vpack.c.b16 %v4867, %v4859
    %v5220 = vpack.c.b16 %v4868, %v4860
    %v5221 = vpack.c.b16 %v4869, %v4861
    %v5222 = vpack.c.b16 %v4870, %v4862
    %v5223 = vpack.c.b16 %v4871, %v4863
    %v5224 = vpack.c.b16 %v4880, %v4872
    %v5225 = vpack.c.b16 %v4881, %v4873
    %v5226 = vpack.c.b16 %v4882, %v4874
    %v5227 = vpack.c.b16 %v4883, %v4875
    %v5228 = vpack.c.b16 %v4884, %v4876
    %v5229 = vpack.c.b16 %v4885, %v4877
    %v5230 = vpack.c.b16 %v4886, %v4878
    %v5231 = vpack.c.b16 %v4887, %v4879
    %v5232 = vpack.c.b16 %v4896, %v4888
    %v5233 = vpack.c.b16 %v4897, %v4889
    %v5234 = vpack.c.b16 %v4898, %v4890
    %v5235 = vpack.c.b16 %v4899, %v4891
    %v5236 = vpack.c.b16 %v4900, %v4892
    %v5237 = vpack.c.b16 %v4901, %v4893
    %v5238 = vpack.c.b16 %v4902, %v4894
    %v5239 = vpack.c.b16 %v4903, %v4895
    %v5240 = vpack.c.b16 %v4912, %v4904
    %v5241 = vpack.c.b16 %v4913, %v4905
    %v5242 = vpack.c.b16 %v4914, %v4906
    %v5243 = vpack.c.b16 %v4915, %v4907
    %v5244 = vpack.c.b16 %v4916, %v4908
    %v5245 = vpack.c.b16 %v4917, %v4909
    %v5246 = vpack.c.b16 %v4918, %v4910
    %v5247 = vpack.c.b16 %v4919, %v4911
    %v5248 = vpack.c.b16 %v4928, %v4920
    %v5249 = vpack.c.b16 %v4929, %v4921
    %v5250 = vpack.c.b16 %v4930, %v4922
    %v5251 = vpack.c.b16 %v4931, %v4923
    %v5252 = vpack.c.b16 %v4932, %v4924
    %v5253 = vpack.c.b16 %v4933, %v4925
    %v5254 = vpack.c.b16 %v4934, %v4926
    %v5255 = vpack.c.b16 %v4935, %v4927
    %v5256 = vpack.c.b16 %v4944, %v4936
    %v5257 = vpack.c.b16 %v4945, %v4937
    %v5258 = vpack.c.b16 %v4946, %v4938
    %v5259 = vpack.c.b16 %v4947, %v4939
    %v5260 = vpack.c.b16 %v4948, %v4940
    %v5261 = vpack.c.b16 %v4949, %v4941
    %v5262 = vpack.c.b16 %v4950, %v4942
    %v5263 = vpack.c.b16 %v4951, %v4943
    %v5264 = vpack.c.b16 %v4960, %v4952
    %v5265 = vpack.c.b16 %v4961, %v4953
    %v5266 = vpack.c.b16 %v4962, %v4954
    %v5267 = vpack.c.b16 %v4963, %v4955
    %v5268 = vpack.c.b16 %v4964, %v4956
    %v5269 = vpack.c.b16 %v4965, %v4957
    %v5270 = vpack.c.b16 %v4966, %v4958
    %v5271 = vpack.c.b16 %v4967, %v4959
    %v5272 = vpack.c.b16 %v4976, %v4968
    %v5273 = vpack.c.b16 %v4977, %v4969
    %v5274 = vpack.c.b16 %v4978, %v4970
    %v5275 = vpack.c.b16 %v4979, %v4971
    %v5276 = vpack.c.b16 %v4980, %v4972
    %v5277 = vpack.c.b16 %v4981, %v4973
    %v5278 = vpack.c.b16 %v4982, %v4974
    %v5279 = vpack.c.b16 %v4983, %v4975
    %v5280 = vpack.c.b16 %v4992, %v4984
    %v5281 = vpack.c.b16 %v4993, %v4985
    %v5282 = vpack.c.b16 %v4994, %v4986
    %v5283 = vpack.c.b16 %v4995, %v4987
    %v5284 = vpack.c.b16 %v4996, %v4988
    %v5285 = vpack.c.b16 %v4997, %v4989
    %v5286 = vpack.c.b16 %v4998, %v4990
    %v5287 = vpack.c.b16 %v4999, %v4991
    %v5288 = vpack.c.b16 %v5008, %v5000
    %v5289 = vpack.c.b16 %v5009, %v5001
    %v5290 = vpack.c.b16 %v5010, %v5002
    %v5291 = vpack.c.b16 %v5011, %v5003
    %v5292 = vpack.c.b16 %v5012, %v5004
    %v5293 = vpack.c.b16 %v5013, %v5005
    %v5294 = vpack.c.b16 %v5014, %v5006
    %v5295 = vpack.c.b16 %v5015, %v5007
    %v5296 = vpack.c.b16 %v5024, %v5016
    %v5297 = vpack.c.b16 %v5025, %v5017
    %v5298 = vpack.c.b16 %v5026, %v5018
    %v5299 = vpack.c.b16 %v5027, %v5019
    %v5300 = vpack.c.b16 %v5028, %v5020
    %v5301 = vpack.c.b16 %v5029, %v5021
    %v5302 = vpack.c.b16 %v5030, %v5022
    %v5303 = vpack.c.b16 %v5031, %v5023
    %v5304 = vpack.c.b16 %v5040, %v5032
    %v5305 = vpack.c.b16 %v5041, %v5033
    %v5306 = vpack.c.b16 %v5042, %v5034
    %v5307 = vpack.c.b16 %v5043, %v5035
    %v5308 = vpack.c.b16 %v5044, %v5036
    %v5309 = vpack.c.b16 %v5045, %v5037
    %v5310 = vpack.c.b16 %v5046, %v5038
    %v5311 = vpack.c.b16 %v5047, %v5039
    %v5312 = vpack.c.b16 %v5056, %v5048
    %v5313 = vpack.c.b16 %v5057, %v5049
    %v5314 = vpack.c.b16 %v5058, %v5050
    %v5315 = vpack.c.b16 %v5059, %v5051
    %v5316 = vpack.c.b16 %v5060, %v5052
    %v5317 = vpack.c.b16 %v5061, %v5053
    %v5318 = vpack.c.b16 %v5062, %v5054
    %v5319 = vpack.c.b16 %v5063, %v5055
    %5576 = vmatprep.subr.bf16.mxu0 %v5065
    %5577 = vmatpush1.bf16.msra.mxu0 %v5064
    %5578 = vmatprep.subr.bf16.mxu0 %v5073
    %5579 = vmatpush1.bf16.msra.mxu0 %v5072
    %5580 = vmatprep.subr.bf16.mxu0 %v5081
    %5581 = vmatpush1.bf16.msra.mxu0 %v5080
    %5582 = vmatprep.subr.bf16.mxu0 %v5089
    %5583 = vmatpush1.bf16.msra.mxu0 %v5088
    %5584 = vmatprep.subr.bf16.mxu0 %v5097
    %5585 = vmatpush1.bf16.msra.mxu0 %v5096
    %5586 = vmatprep.subr.bf16.mxu0 %v5105
    %5587 = vmatpush1.bf16.msra.mxu0 %v5104
    %5588 = vmatprep.subr.bf16.mxu0 %v5113
    %5589 = vmatpush1.bf16.msra.mxu0 %v5112
    %5590 = vmatprep.subr.bf16.mxu0 %v5121
    %5591 = vmatpush1.bf16.msra.mxu0 %v5120
    %5592 = vmatprep.subr.bf16.mxu0 %v5129
    %5593 = vmatpush1.bf16.msra.mxu0 %v5128
    %5594 = vmatprep.subr.bf16.mxu0 %v5137
    %5595 = vmatpush1.bf16.msra.mxu0 %v5136
    %5596 = vmatprep.subr.bf16.mxu0 %v5145
    %5597 = vmatpush1.bf16.msra.mxu0 %v5144
    %5598 = vmatprep.subr.bf16.mxu0 %v5153
    %5599 = vmatpush1.bf16.msra.mxu0 %v5152
    %5600 = vmatprep.subr.bf16.mxu0 %v5161
    %5601 = vmatpush1.bf16.msra.mxu0 %v5160
    %5602 = vmatprep.subr.bf16.mxu0 %v5169
    %5603 = vmatpush1.bf16.msra.mxu0 %v5168
    %5604 = vmatprep.subr.bf16.mxu0 %v5177
    %5605 = vmatpush1.bf16.msra.mxu0 %v5176
    %5606 = vmatprep.subr.bf16.mxu0 %v5185
    %5607 = vmatpush1.bf16.msra.mxu0 %v5184
    %5608 = vmatprep.mubr.bf16.mxu0 %v3995
    %5609 = vmatmul.mubr.bf16.gmra.mrb[0].mxu0 %v3994
    %v5610 = vpop.f32.mrb[0].mxu0
    %v5611 = vadd.f32 %v4259, %v5610
    %v5612 = vpop.f32.mrb[0].mxu0
    %v5613 = vadd.f32 %v4263, %v5612
    %v5614 = vpop.f32.mrb[0].mxu0
    %v5615 = vpop.f32.mrb[0].mxu0
    %5616 = vdwg.mxu0
    %5617 = vmatprep.subr.bf16.mxu0 %v5193
    %5618 = vmatpush1.bf16.msra.mxu0 %v5192
    %5619 = vmatprep.subr.bf16.mxu0 %v5201
    %5620 = vmatpush1.bf16.msra.mxu0 %v5200
    %5621 = vmatprep.subr.bf16.mxu0 %v5209
    %5622 = vmatpush1.bf16.msra.mxu0 %v5208
    %5623 = vmatprep.subr.bf16.mxu0 %v5217
    %5624 = vmatpush1.bf16.msra.mxu0 %v5216
    %5625 = vmatprep.subr.bf16.mxu0 %v5225
    %5626 = vmatpush1.bf16.msra.mxu0 %v5224
    %5627 = vmatprep.subr.bf16.mxu0 %v5233
    %5628 = vmatpush1.bf16.msra.mxu0 %v5232
    %5629 = vmatprep.subr.bf16.mxu0 %v5241
    %5630 = vmatpush1.bf16.msra.mxu0 %v5240
    %5631 = vmatprep.subr.bf16.mxu0 %v5249
    %5632 = vmatpush1.bf16.msra.mxu0 %v5248
    %5633 = vmatprep.subr.bf16.mxu0 %v5257
    %5634 = vmatpush1.bf16.msra.mxu0 %v5256
    %5635 = vmatprep.subr.bf16.mxu0 %v5265
    %5636 = vmatpush1.bf16.msra.mxu0 %v5264
    %5637 = vmatprep.subr.bf16.mxu0 %v5273
    %5638 = vmatpush1.bf16.msra.mxu0 %v5272
    %5639 = vmatprep.subr.bf16.mxu0 %v5281
    %5640 = vmatpush1.bf16.msra.mxu0 %v5280
    %5641 = vmatprep.subr.bf16.mxu0 %v5289
    %5642 = vmatpush1.bf16.msra.mxu0 %v5288
    %5643 = vmatprep.subr.bf16.mxu0 %v5297
    %5644 = vmatpush1.bf16.msra.mxu0 %v5296
    %5645 = vmatprep.subr.bf16.mxu0 %v5305
    %5646 = vmatpush1.bf16.msra.mxu0 %v5304
    %5647 = vmatprep.subr.bf16.mxu0 %v5313
    %5648 = vmatpush1.bf16.msra.mxu0 %v5312
    %5649 = vmatprep.mubr.bf16.mxu0 %v3997
    %5650 = vmatmul.mubr.bf16.gmra.mrb[0].mxu0 %v3996
    %v5651 = vpop.f32.mrb[0].mxu0
    %v5652 = vadd.f32 %v5611, %v5651
    %v5653 = vpop.f32.mrb[0].mxu0
    %v5654 = vadd.f32 %v5613, %v5653
    %v5655 = vpop.f32.mrb[0].mxu0
    %v5656 = vpop.f32.mrb[0].mxu0
    %5657 = vdwg.mxu0
    %5658 = vmatprep.subr.bf16.mxu0 %v5067
    %5659 = vmatpush1.bf16.msra.mxu0 %v5066
    %5660 = vmatprep.subr.bf16.mxu0 %v5075
    %5661 = vmatpush1.bf16.msra.mxu0 %v5074
    %5662 = vmatprep.subr.bf16.mxu0 %v5083
    %5663 = vmatpush1.bf16.msra.mxu0 %v5082
    %5664 = vmatprep.subr.bf16.mxu0 %v5091
    %5665 = vmatpush1.bf16.msra.mxu0 %v5090
    %5666 = vmatprep.subr.bf16.mxu0 %v5099
    %5667 = vmatpush1.bf16.msra.mxu0 %v5098
    %5668 = vmatprep.subr.bf16.mxu0 %v5107
    %5669 = vmatpush1.bf16.msra.mxu0 %v5106
    %5670 = vmatprep.subr.bf16.mxu0 %v5115
    %5671 = vmatpush1.bf16.msra.mxu0 %v5114
    %5672 = vmatprep.subr.bf16.mxu0 %v5123
    %5673 = vmatpush1.bf16.msra.mxu0 %v5122
    %5674 = vmatprep.subr.bf16.mxu0 %v5131
    %5675 = vmatpush1.bf16.msra.mxu0 %v5130
    %5676 = vmatprep.subr.bf16.mxu0 %v5139
    %5677 = vmatpush1.bf16.msra.mxu0 %v5138
    %5678 = vmatprep.subr.bf16.mxu0 %v5147
    %5679 = vmatpush1.bf16.msra.mxu0 %v5146
    %5680 = vmatprep.subr.bf16.mxu0 %v5155
    %5681 = vmatpush1.bf16.msra.mxu0 %v5154
    %5682 = vmatprep.subr.bf16.mxu0 %v5163
    %5683 = vmatpush1.bf16.msra.mxu0 %v5162
    %5684 = vmatprep.subr.bf16.mxu0 %v5171
    %5685 = vmatpush1.bf16.msra.mxu0 %v5170
    %5686 = vmatprep.subr.bf16.mxu0 %v5179
    %5687 = vmatpush1.bf16.msra.mxu0 %v5178
    %5688 = vmatprep.subr.bf16.mxu0 %v5187
    %5689 = vmatpush1.bf16.msra.mxu0 %v5186
    %5690 = vmatprep.mubr.bf16.mxu0 %v3995
    %5691 = vmatmul.mubr.bf16.gmra.mrb[0].mxu0 %v3994
    %v5692 = vpop.f32.mrb[0].mxu0
    %v5693 = vadd.f32 %v4267, %v5692
    %v5694 = vpop.f32.mrb[0].mxu0
    %v5695 = vadd.f32 %v4271, %v5694
    %v5696 = vpop.f32.mrb[0].mxu0
    %v5697 = vpop.f32.mrb[0].mxu0
    %5698 = vdwg.mxu0
    %5699 = vmatprep.subr.bf16.mxu0 %v5195
    %5700 = vmatpush1.bf16.msra.mxu0 %v5194
    %5701 = vmatprep.subr.bf16.mxu0 %v5203
    %5702 = vmatpush1.bf16.msra.mxu0 %v5202
    %5703 = vmatprep.subr.bf16.mxu0 %v5211
    %5704 = vmatpush1.bf16.msra.mxu0 %v5210
    %5705 = vmatprep.subr.bf16.mxu0 %v5219
    %5706 = vmatpush1.bf16.msra.mxu0 %v5218
    %5707 = vmatprep.subr.bf16.mxu0 %v5227
    %5708 = vmatpush1.bf16.msra.mxu0 %v5226
    %5709 = vmatprep.subr.bf16.mxu0 %v5235
    %5710 = vmatpush1.bf16.msra.mxu0 %v5234
    %5711 = vmatprep.subr.bf16.mxu0 %v5243
    %5712 = vmatpush1.bf16.msra.mxu0 %v5242
    %5713 = vmatprep.subr.bf16.mxu0 %v5251
    %5714 = vmatpush1.bf16.msra.mxu0 %v5250
    %5715 = vmatprep.subr.bf16.mxu0 %v5259
    %5716 = vmatpush1.bf16.msra.mxu0 %v5258
    %5717 = vmatprep.subr.bf16.mxu0 %v5267
    %5718 = vmatpush1.bf16.msra.mxu0 %v5266
    %5719 = vmatprep.subr.bf16.mxu0 %v5275
    %5720 = vmatpush1.bf16.msra.mxu0 %v5274
    %5721 = vmatprep.subr.bf16.mxu0 %v5283
    %5722 = vmatpush1.bf16.msra.mxu0 %v5282
    %5723 = vmatprep.subr.bf16.mxu0 %v5291
    %5724 = vmatpush1.bf16.msra.mxu0 %v5290
    %5725 = vmatprep.subr.bf16.mxu0 %v5299
    %5726 = vmatpush1.bf16.msra.mxu0 %v5298
    %5727 = vmatprep.subr.bf16.mxu0 %v5307
    %5728 = vmatpush1.bf16.msra.mxu0 %v5306
    %5729 = vmatprep.subr.bf16.mxu0 %v5315
    %5730 = vmatpush1.bf16.msra.mxu0 %v5314
    %5731 = vmatprep.mubr.bf16.mxu0 %v3997
    %5732 = vmatmul.mubr.bf16.gmra.mrb[0].mxu0 %v3996
    %v5733 = vpop.f32.mrb[0].mxu0
    %v5734 = vadd.f32 %v5693, %v5733
    %v5735 = vpop.f32.mrb[0].mxu0
    %v5736 = vadd.f32 %v5695, %v5735
    %v5737 = vpop.f32.mrb[0].mxu0
    %v5738 = vpop.f32.mrb[0].mxu0
    %5739 = vdwg.mxu0
    %5740 = vmatprep.subr.bf16.mxu0 %v5069
    %5741 = vmatpush1.bf16.msra.mxu0 %v5068
    %5742 = vmatprep.subr.bf16.mxu0 %v5077
    %5743 = vmatpush1.bf16.msra.mxu0 %v5076
    %5744 = vmatprep.subr.bf16.mxu0 %v5085
    %5745 = vmatpush1.bf16.msra.mxu0 %v5084
    %5746 = vmatprep.subr.bf16.mxu0 %v5093
    %5747 = vmatpush1.bf16.msra.mxu0 %v5092
    %5748 = vmatprep.subr.bf16.mxu0 %v5101
    %5749 = vmatpush1.bf16.msra.mxu0 %v5100
    %5750 = vmatprep.subr.bf16.mxu0 %v5109
    %5751 = vmatpush1.bf16.msra.mxu0 %v5108
    %5752 = vmatprep.subr.bf16.mxu0 %v5117
    %5753 = vmatpush1.bf16.msra.mxu0 %v5116
    %5754 = vmatprep.subr.bf16.mxu0 %v5125
    %5755 = vmatpush1.bf16.msra.mxu0 %v5124
    %5756 = vmatprep.subr.bf16.mxu0 %v5133
    %5757 = vmatpush1.bf16.msra.mxu0 %v5132
    %5758 = vmatprep.subr.bf16.mxu0 %v5141
    %5759 = vmatpush1.bf16.msra.mxu0 %v5140
    %5760 = vmatprep.subr.bf16.mxu0 %v5149
    %5761 = vmatpush1.bf16.msra.mxu0 %v5148
    %5762 = vmatprep.subr.bf16.mxu0 %v5157
    %5763 = vmatpush1.bf16.msra.mxu0 %v5156
    %5764 = vmatprep.subr.bf16.mxu0 %v5165
    %5765 = vmatpush1.bf16.msra.mxu0 %v5164
    %5766 = vmatprep.subr.bf16.mxu0 %v5173
    %5767 = vmatpush1.bf16.msra.mxu0 %v5172
    %5768 = vmatprep.subr.bf16.mxu0 %v5181
    %5769 = vmatpush1.bf16.msra.mxu0 %v5180
    %5770 = vmatprep.subr.bf16.mxu0 %v5189
    %5771 = vmatpush1.bf16.msra.mxu0 %v5188
    %5772 = vmatprep.mubr.bf16.mxu0 %v3995
    %5773 = vmatmul.mubr.bf16.gmra.mrb[0].mxu0 %v3994
    %v5774 = vpop.f32.mrb[0].mxu0
    %v5775 = vadd.f32 %v4275, %v5774
    %v5776 = vpop.f32.mrb[0].mxu0
    %v5777 = vadd.f32 %v4279, %v5776
    %v5778 = vpop.f32.mrb[0].mxu0
    %v5779 = vpop.f32.mrb[0].mxu0
    %5780 = vdwg.mxu0
    %5781 = vmatprep.subr.bf16.mxu0 %v5197
    %5782 = vmatpush1.bf16.msra.mxu0 %v5196
    %5783 = vmatprep.subr.bf16.mxu0 %v5205
    %5784 = vmatpush1.bf16.msra.mxu0 %v5204
    %5785 = vmatprep.subr.bf16.mxu0 %v5213
    %5786 = vmatpush1.bf16.msra.mxu0 %v5212
    %5787 = vmatprep.subr.bf16.mxu0 %v5221
    %5788 = vmatpush1.bf16.msra.mxu0 %v5220
    %5789 = vmatprep.subr.bf16.mxu0 %v5229
    %5790 = vmatpush1.bf16.msra.mxu0 %v5228
    %5791 = vmatprep.subr.bf16.mxu0 %v5237
    %5792 = vmatpush1.bf16.msra.mxu0 %v5236
    %5793 = vmatprep.subr.bf16.mxu0 %v5245
    %5794 = vmatpush1.bf16.msra.mxu0 %v5244
    %5795 = vmatprep.subr.bf16.mxu0 %v5253
    %5796 = vmatpush1.bf16.msra.mxu0 %v5252
    %5797 = vmatprep.subr.bf16.mxu0 %v5261
    %5798 = vmatpush1.bf16.msra.mxu0 %v5260
    %5799 = vmatprep.subr.bf16.mxu0 %v5269
    %5800 = vmatpush1.bf16.msra.mxu0 %v5268
    %5801 = vmatprep.subr.bf16.mxu0 %v5277
    %5802 = vmatpush1.bf16.msra.mxu0 %v5276
    %5803 = vmatprep.subr.bf16.mxu0 %v5285
    %5804 = vmatpush1.bf16.msra.mxu0 %v5284
    %5805 = vmatprep.subr.bf16.mxu0 %v5293
    %5806 = vmatpush1.bf16.msra.mxu0 %v5292
    %5807 = vmatprep.subr.bf16.mxu0 %v5301
    %5808 = vmatpush1.bf16.msra.mxu0 %v5300
    %5809 = vmatprep.subr.bf16.mxu0 %v5309
    %5810 = vmatpush1.bf16.msra.mxu0 %v5308
    %5811 = vmatprep.subr.bf16.mxu0 %v5317
    %5812 = vmatpush1.bf16.msra.mxu0 %v5316
    %5813 = vmatprep.mubr.bf16.mxu0 %v3997
    %5814 = vmatmul.mubr.bf16.gmra.mrb[0].mxu0 %v3996
    %v5815 = vpop.f32.mrb[0].mxu0
    %v5816 = vadd.f32 %v5775, %v5815
    %v5817 = vpop.f32.mrb[0].mxu0
    %v5818 = vadd.f32 %v5777, %v5817
    %v5819 = vpop.f32.mrb[0].mxu0
    %v5820 = vpop.f32.mrb[0].mxu0
    %5821 = vdwg.mxu0
    %5822 = vmatprep.subr.bf16.mxu0 %v5071
    %5823 = vmatpush1.bf16.msra.mxu0 %v5070
    %5824 = vmatprep.subr.bf16.mxu0 %v5079
    %5825 = vmatpush1.bf16.msra.mxu0 %v5078
    %5826 = vmatprep.subr.bf16.mxu0 %v5087
    %5827 = vmatpush1.bf16.msra.mxu0 %v5086
    %5828 = vmatprep.subr.bf16.mxu0 %v5095
    %5829 = vmatpush1.bf16.msra.mxu0 %v5094
    %5830 = vmatprep.subr.bf16.mxu0 %v5103
    %5831 = vmatpush1.bf16.msra.mxu0 %v5102
    %5832 = vmatprep.subr.bf16.mxu0 %v5111
    %5833 = vmatpush1.bf16.msra.mxu0 %v5110
    %5834 = vmatprep.subr.bf16.mxu0 %v5119
    %5835 = vmatpush1.bf16.msra.mxu0 %v5118
    %5836 = vmatprep.subr.bf16.mxu0 %v5127
    %5837 = vmatpush1.bf16.msra.mxu0 %v5126
    %5838 = vmatprep.subr.bf16.mxu0 %v5135
    %5839 = vmatpush1.bf16.msra.mxu0 %v5134
    %5840 = vmatprep.subr.bf16.mxu0 %v5143
    %5841 = vmatpush1.bf16.msra.mxu0 %v5142
    %5842 = vmatprep.subr.bf16.mxu0 %v5151
    %5843 = vmatpush1.bf16.msra.mxu0 %v5150
    %5844 = vmatprep.subr.bf16.mxu0 %v5159
    %5845 = vmatpush1.bf16.msra.mxu0 %v5158
    %5846 = vmatprep.subr.bf16.mxu0 %v5167
    %5847 = vmatpush1.bf16.msra.mxu0 %v5166
    %5848 = vmatprep.subr.bf16.mxu0 %v5175
    %5849 = vmatpush1.bf16.msra.mxu0 %v5174
    %5850 = vmatprep.subr.bf16.mxu0 %v5183
    %5851 = vmatpush1.bf16.msra.mxu0 %v5182
    %5852 = vmatprep.subr.bf16.mxu0 %v5191
    %5853 = vmatpush1.bf16.msra.mxu0 %v5190
    %5854 = vmatprep.mubr.bf16.mxu0 %v3995
    %5855 = vmatmul.mubr.bf16.gmra.mrb[0].mxu0 %v3994
    %v5856 = vpop.f32.mrb[0].mxu0
    %v5857 = vadd.f32 %v4283, %v5856
    %v5858 = vpop.f32.mrb[0].mxu0
    %v5859 = vadd.f32 %v4287, %v5858
    %v5860 = vpop.f32.mrb[0].mxu0
    %v5861 = vpop.f32.mrb[0].mxu0
    %5862 = vdwg.mxu0
    %5863 = vmatprep.subr.bf16.mxu0 %v5199
    %5864 = vmatpush1.bf16.msra.mxu0 %v5198
    %5865 = vmatprep.subr.bf16.mxu0 %v5207
    %5866 = vmatpush1.bf16.msra.mxu0 %v5206
    %5867 = vmatprep.subr.bf16.mxu0 %v5215
    %5868 = vmatpush1.bf16.msra.mxu0 %v5214
    %5869 = vmatprep.subr.bf16.mxu0 %v5223
    %5870 = vmatpush1.bf16.msra.mxu0 %v5222
    %5871 = vmatprep.subr.bf16.mxu0 %v5231
    %5872 = vmatpush1.bf16.msra.mxu0 %v5230
    %5873 = vmatprep.subr.bf16.mxu0 %v5239
    %5874 = vmatpush1.bf16.msra.mxu0 %v5238
    %5875 = vmatprep.subr.bf16.mxu0 %v5247
    %5876 = vmatpush1.bf16.msra.mxu0 %v5246
    %5877 = vmatprep.subr.bf16.mxu0 %v5255
    %5878 = vmatpush1.bf16.msra.mxu0 %v5254
    %5879 = vmatprep.subr.bf16.mxu0 %v5263
    %5880 = vmatpush1.bf16.msra.mxu0 %v5262
    %5881 = vmatprep.subr.bf16.mxu0 %v5271
    %5882 = vmatpush1.bf16.msra.mxu0 %v5270
    %5883 = vmatprep.subr.bf16.mxu0 %v5279
    %5884 = vmatpush1.bf16.msra.mxu0 %v5278
    %5885 = vmatprep.subr.bf16.mxu0 %v5287
    %5886 = vmatpush1.bf16.msra.mxu0 %v5286
    %5887 = vmatprep.subr.bf16.mxu0 %v5295
    %5888 = vmatpush1.bf16.msra.mxu0 %v5294
    %5889 = vmatprep.subr.bf16.mxu0 %v5303
    %5890 = vmatpush1.bf16.msra.mxu0 %v5302
    %5891 = vmatprep.subr.bf16.mxu0 %v5311
    %5892 = vmatpush1.bf16.msra.mxu0 %v5310
    %5893 = vmatprep.subr.bf16.mxu0 %v5319
    %5894 = vmatpush1.bf16.msra.mxu0 %v5318
    %5895 = vmatprep.mubr.bf16.mxu0 %v3997
    %5896 = vmatmul.mubr.bf16.gmra.mrb[0].mxu0 %v3996
    %v5897 = vpop.f32.mrb[0].mxu0
    %v5898 = vadd.f32 %v5857, %v5897
    %v5899 = vpop.f32.mrb[0].mxu0
    %v5900 = vadd.f32 %v5859, %v5899
    %v5901 = vpop.f32.mrb[0].mxu0
    %v5902 = vpop.f32.mrb[0].mxu0
    %5903 = vdwg.mxu0
    %v5904 = vmax.f32 %v5652, 0.0
    %v5905 = vmax.f32 %v5654, 0.0
    %v5906 = vmax.f32 %v5734, 0.0
    %v5907 = vmax.f32 %v5736, 0.0
    %v5908 = vmax.f32 %v5816, 0.0
    %v5909 = vmax.f32 %v5818, 0.0
    %v5910 = vmax.f32 %v5898, 0.0
    %v5911 = vmax.f32 %v5900, 0.0
    %v5912 = vpack.c.bf16 %v5904, %v5904
    %v5913 = vpack.c.bf16 %v5905, %v5905
    %v5914 = vpack.c.bf16 %v5906, %v5906
    %v5915 = vpack.c.bf16 %v5907, %v5907
    %v5916 = vpack.c.bf16 %v5908, %v5908
    %v5917 = vpack.c.bf16 %v5909, %v5909
    %v5918 = vpack.c.bf16 %v5910, %v5910
    %v5919 = vpack.c.bf16 %v5911, %v5911
    %v5920 = vld [vmem:[#allocation17] sm:$0xf]
    %v5921 = vld [vmem:[#allocation17 + $0x4] sm:$0xf]
    %v5922 = vld [vmem:[#allocation17 + $0x8] sm:$0xf]
    %v5923 = vld [vmem:[#allocation17 + $0xc] sm:$0xf]
    %v5924 = vld [vmem:[#allocation17 + $0x10] sm:$0xf]
    %v5925 = vld [vmem:[#allocation17 + $0x14] sm:$0xf]
    %v5926 = vld [vmem:[#allocation17 + $0x18] sm:$0xf]
    %v5927 = vld [vmem:[#allocation17 + $0x1c] sm:$0xf]
    %v5928 = vld [vmem:[#allocation17 + $0x20] sm:$0xf]
    %v5929 = vld [vmem:[#allocation17 + $0x24] sm:$0xf]
    %v5930 = vld [vmem:[#allocation17 + $0x28] sm:$0xf]
    %v5931 = vld [vmem:[#allocation17 + $0x2c] sm:$0xf]
    %v5932 = vld [vmem:[#allocation17 + $0x30] sm:$0xf]
    %v5933 = vld [vmem:[#allocation17 + $0x34] sm:$0xf]
    %v5934 = vld [vmem:[#allocation17 + $0x38] sm:$0xf]
    %v5935 = vld [vmem:[#allocation17 + $0x3c] sm:$0xf]
    %v5936 = vld [vmem:[#allocation17 + $0x40] sm:$0xf]
    %v5937 = vld [vmem:[#allocation17 + $0x44] sm:$0xf]
    %v5938 = vld [vmem:[#allocation17 + $0x48] sm:$0xf]
    %v5939 = vld [vmem:[#allocation17 + $0x4c] sm:$0xf]
    %v5940 = vld [vmem:[#allocation17 + $0x50] sm:$0xf]
    %v5941 = vld [vmem:[#allocation17 + $0x54] sm:$0xf]
    %v5942 = vld [vmem:[#allocation17 + $0x58] sm:$0xf]
    %v5943 = vld [vmem:[#allocation17 + $0x5c] sm:$0xf]
    %v5944 = vld [vmem:[#allocation17 + $0x60] sm:$0xf]
    %v5945 = vld [vmem:[#allocation17 + $0x64] sm:$0xf]
    %v5946 = vld [vmem:[#allocation17 + $0x68] sm:$0xf]
    %v5947 = vld [vmem:[#allocation17 + $0x6c] sm:$0xf]
    %v5948 = vld [vmem:[#allocation17 + $0x70] sm:$0xf]
    %v5949 = vld [vmem:[#allocation17 + $0x74] sm:$0xf]
    %v5950 = vld [vmem:[#allocation17 + $0x78] sm:$0xf]
    %v5951 = vld [vmem:[#allocation17 + $0x7c] sm:$0xf]
    %v5952 = vld [vmem:[#allocation17 + $0x80] sm:$0xf]
    %v5953 = vld [vmem:[#allocation17 + $0x84] sm:$0xf]
    %v5954 = vld [vmem:[#allocation17 + $0x88] sm:$0xf]
    %v5955 = vld [vmem:[#allocation17 + $0x8c] sm:$0xf]
    %v5956 = vld [vmem:[#allocation17 + $0x90] sm:$0xf]
    %v5957 = vld [vmem:[#allocation17 + $0x94] sm:$0xf]
    %v5958 = vld [vmem:[#allocation17 + $0x98] sm:$0xf]
    %v5959 = vld [vmem:[#allocation17 + $0x9c] sm:$0xf]
    %v5960 = vld [vmem:[#allocation17 + $0xa0] sm:$0xf]
    %v5961 = vld [vmem:[#allocation17 + $0xa4] sm:$0xf]
    %v5962 = vld [vmem:[#allocation17 + $0xa8] sm:$0xf]
    %v5963 = vld [vmem:[#allocation17 + $0xac] sm:$0xf]
    %v5964 = vld [vmem:[#allocation17 + $0xb0] sm:$0xf]
    %v5965 = vld [vmem:[#allocation17 + $0xb4] sm:$0xf]
    %v5966 = vld [vmem:[#allocation17 + $0xb8] sm:$0xf]
    %v5967 = vld [vmem:[#allocation17 + $0xbc] sm:$0xf]
    %v5968 = vld [vmem:[#allocation17 + $0xc0] sm:$0xf]
    %v5969 = vld [vmem:[#allocation17 + $0xc4] sm:$0xf]
    %v5970 = vld [vmem:[#allocation17 + $0xc8] sm:$0xf]
    %v5971 = vld [vmem:[#allocation17 + $0xcc] sm:$0xf]
    %v5972 = vld [vmem:[#allocation17 + $0xd0] sm:$0xf]
    %v5973 = vld [vmem:[#allocation17 + $0xd4] sm:$0xf]
    %v5974 = vld [vmem:[#allocation17 + $0xd8] sm:$0xf]
    %v5975 = vld [vmem:[#allocation17 + $0xdc] sm:$0xf]
    %v5976 = vld [vmem:[#allocation17 + $0xe0] sm:$0xf]
    %v5977 = vld [vmem:[#allocation17 + $0xe4] sm:$0xf]
    %v5978 = vld [vmem:[#allocation17 + $0xe8] sm:$0xf]
    %v5979 = vld [vmem:[#allocation17 + $0xec] sm:$0xf]
    %v5980 = vld [vmem:[#allocation17 + $0xf0] sm:$0xf]
    %v5981 = vld [vmem:[#allocation17 + $0xf4] sm:$0xf]
    %v5982 = vld [vmem:[#allocation17 + $0xf8] sm:$0xf]
    %v5983 = vld [vmem:[#allocation17 + $0xfc] sm:$0xf]
    %v5984 = vld [vmem:[#allocation17 + $0x100] sm:$0xf]
    %v5985 = vld [vmem:[#allocation17 + $0x104] sm:$0xf]
    %v5986 = vld [vmem:[#allocation17 + $0x108] sm:$0xf]
    %v5987 = vld [vmem:[#allocation17 + $0x10c] sm:$0xf]
    %v5988 = vld [vmem:[#allocation17 + $0x110] sm:$0xf]
    %v5989 = vld [vmem:[#allocation17 + $0x114] sm:$0xf]
    %v5990 = vld [vmem:[#allocation17 + $0x118] sm:$0xf]
    %v5991 = vld [vmem:[#allocation17 + $0x11c] sm:$0xf]
    %v5992 = vld [vmem:[#allocation17 + $0x120] sm:$0xf]
    %v5993 = vld [vmem:[#allocation17 + $0x124] sm:$0xf]
    %v5994 = vld [vmem:[#allocation17 + $0x128] sm:$0xf]
    %v5995 = vld [vmem:[#allocation17 + $0x12c] sm:$0xf]
    %v5996 = vld [vmem:[#allocation17 + $0x130] sm:$0xf]
    %v5997 = vld [vmem:[#allocation17 + $0x134] sm:$0xf]
    %v5998 = vld [vmem:[#allocation17 + $0x138] sm:$0xf]
    %v5999 = vld [vmem:[#allocation17 + $0x13c] sm:$0xf]
    %v6000 = vld [vmem:[#allocation17 + $0x140] sm:$0xf]
    %v6001 = vld [vmem:[#allocation17 + $0x144] sm:$0xf]
    %v6002 = vld [vmem:[#allocation17 + $0x148] sm:$0xf]
    %v6003 = vld [vmem:[#allocation17 + $0x14c] sm:$0xf]
    %v6004 = vld [vmem:[#allocation17 + $0x150] sm:$0xf]
    %v6005 = vld [vmem:[#allocation17 + $0x154] sm:$0xf]
    %v6006 = vld [vmem:[#allocation17 + $0x158] sm:$0xf]
    %v6007 = vld [vmem:[#allocation17 + $0x15c] sm:$0xf]
    %v6008 = vld [vmem:[#allocation17 + $0x160] sm:$0xf]
    %v6009 = vld [vmem:[#allocation17 + $0x164] sm:$0xf]
    %v6010 = vld [vmem:[#allocation17 + $0x168] sm:$0xf]
    %v6011 = vld [vmem:[#allocation17 + $0x16c] sm:$0xf]
    %v6012 = vld [vmem:[#allocation17 + $0x170] sm:$0xf]
    %v6013 = vld [vmem:[#allocation17 + $0x174] sm:$0xf]
    %v6014 = vld [vmem:[#allocation17 + $0x178] sm:$0xf]
    %v6015 = vld [vmem:[#allocation17 + $0x17c] sm:$0xf]
    %v6016 = vld [vmem:[#allocation17 + $0x180] sm:$0xf]
    %v6017 = vld [vmem:[#allocation17 + $0x184] sm:$0xf]
    %v6018 = vld [vmem:[#allocation17 + $0x188] sm:$0xf]
    %v6019 = vld [vmem:[#allocation17 + $0x18c] sm:$0xf]
    %v6020 = vld [vmem:[#allocation17 + $0x190] sm:$0xf]
    %v6021 = vld [vmem:[#allocation17 + $0x194] sm:$0xf]
    %v6022 = vld [vmem:[#allocation17 + $0x198] sm:$0xf]
    %v6023 = vld [vmem:[#allocation17 + $0x19c] sm:$0xf]
    %v6024 = vld [vmem:[#allocation17 + $0x1a0] sm:$0xf]
    %v6025 = vld [vmem:[#allocation17 + $0x1a4] sm:$0xf]
    %v6026 = vld [vmem:[#allocation17 + $0x1a8] sm:$0xf]
    %v6027 = vld [vmem:[#allocation17 + $0x1ac] sm:$0xf]
    %v6028 = vld [vmem:[#allocation17 + $0x1b0] sm:$0xf]
    %v6029 = vld [vmem:[#allocation17 + $0x1b4] sm:$0xf]
    %v6030 = vld [vmem:[#allocation17 + $0x1b8] sm:$0xf]
    %v6031 = vld [vmem:[#allocation17 + $0x1bc] sm:$0xf]
    %v6032 = vld [vmem:[#allocation17 + $0x1c0] sm:$0xf]
    %v6033 = vld [vmem:[#allocation17 + $0x1c4] sm:$0xf]
    %v6034 = vld [vmem:[#allocation17 + $0x1c8] sm:$0xf]
    %v6035 = vld [vmem:[#allocation17 + $0x1cc] sm:$0xf]
    %v6036 = vld [vmem:[#allocation17 + $0x1d0] sm:$0xf]
    %v6037 = vld [vmem:[#allocation17 + $0x1d4] sm:$0xf]
    %v6038 = vld [vmem:[#allocation17 + $0x1d8] sm:$0xf]
    %v6039 = vld [vmem:[#allocation17 + $0x1dc] sm:$0xf]
    %v6040 = vld [vmem:[#allocation17 + $0x1e0] sm:$0xf]
    %v6041 = vld [vmem:[#allocation17 + $0x1e4] sm:$0xf]
    %v6042 = vld [vmem:[#allocation17 + $0x1e8] sm:$0xf]
    %v6043 = vld [vmem:[#allocation17 + $0x1ec] sm:$0xf]
    %v6044 = vld [vmem:[#allocation17 + $0x1f0] sm:$0xf]
    %v6045 = vld [vmem:[#allocation17 + $0x1f4] sm:$0xf]
    %v6046 = vld [vmem:[#allocation17 + $0x1f8] sm:$0xf]
    %v6047 = vld [vmem:[#allocation17 + $0x1fc] sm:$0xf]
    %v6048 = vld [vmem:[%s16] sm:$0x1]
    %v6050 = vlaneseq
    %v6051 = vshrl.u32 %v6050, 7
    %v6052 = vsub.s32 0, %v6051
    %v6053 = vrot.slane %v6048, %v6052
    %v6183 = vunpack.c.l.b16 %v5920
    %v6184 = vunpack.c.l.b16 %v5921
    %v6185 = vunpack.c.l.b16 %v5922
    %v6186 = vunpack.c.l.b16 %v5923
    %v6187 = vunpack.c.l.b16 %v5924
    %v6188 = vunpack.c.l.b16 %v5925
    %v6189 = vunpack.c.l.b16 %v5926
    %v6190 = vunpack.c.l.b16 %v5927
    %v6191 = vunpack.c.l.b16 %v5928
    %v6192 = vunpack.c.l.b16 %v5929
    %v6193 = vunpack.c.l.b16 %v5930
    %v6194 = vunpack.c.l.b16 %v5931
    %v6195 = vunpack.c.l.b16 %v5932
    %v6196 = vunpack.c.l.b16 %v5933
    %v6197 = vunpack.c.l.b16 %v5934
    %v6198 = vunpack.c.l.b16 %v5935
    %v6199 = vunpack.c.l.b16 %v5936
    %v6200 = vunpack.c.l.b16 %v5937
    %v6201 = vunpack.c.l.b16 %v5938
    %v6202 = vunpack.c.l.b16 %v5939
    %v6203 = vunpack.c.l.b16 %v5940
    %v6204 = vunpack.c.l.b16 %v5941
    %v6205 = vunpack.c.l.b16 %v5942
    %v6206 = vunpack.c.l.b16 %v5943
    %v6207 = vunpack.c.l.b16 %v5944
    %v6208 = vunpack.c.l.b16 %v5945
    %v6209 = vunpack.c.l.b16 %v5946
    %v6210 = vunpack.c.l.b16 %v5947
    %v6211 = vunpack.c.l.b16 %v5948
    %v6212 = vunpack.c.l.b16 %v5949
    %v6213 = vunpack.c.l.b16 %v5950
    %v6214 = vunpack.c.l.b16 %v5951
    %v6215 = vunpack.c.l.b16 %v5952
    %v6216 = vunpack.c.l.b16 %v5953
    %v6217 = vunpack.c.l.b16 %v5954
    %v6218 = vunpack.c.l.b16 %v5955
    %v6219 = vunpack.c.l.b16 %v5956
    %v6220 = vunpack.c.l.b16 %v5957
    %v6221 = vunpack.c.l.b16 %v5958
    %v6222 = vunpack.c.l.b16 %v5959
    %v6223 = vunpack.c.l.b16 %v5960
    %v6224 = vunpack.c.l.b16 %v5961
    %v6225 = vunpack.c.l.b16 %v5962
    %v6226 = vunpack.c.l.b16 %v5963
    %v6227 = vunpack.c.l.b16 %v5964
    %v6228 = vunpack.c.l.b16 %v5965
    %v6229 = vunpack.c.l.b16 %v5966
    %v6230 = vunpack.c.l.b16 %v5967
    %v6231 = vunpack.c.l.b16 %v5968
    %v6232 = vunpack.c.l.b16 %v5969
    %v6233 = vunpack.c.l.b16 %v5970
    %v6234 = vunpack.c.l.b16 %v5971
    %v6235 = vunpack.c.l.b16 %v5972
    %v6236 = vunpack.c.l.b16 %v5973
    %v6237 = vunpack.c.l.b16 %v5974
    %v6238 = vunpack.c.l.b16 %v5975
    %v6239 = vunpack.c.l.b16 %v5976
    %v6240 = vunpack.c.l.b16 %v5977
    %v6241 = vunpack.c.l.b16 %v5978
    %v6242 = vunpack.c.l.b16 %v5979
    %v6243 = vunpack.c.l.b16 %v5980
    %v6244 = vunpack.c.l.b16 %v5981
    %v6245 = vunpack.c.l.b16 %v5982
    %v6246 = vunpack.c.l.b16 %v5983
    %v6247 = vunpack.c.l.b16 %v5984
    %v6248 = vunpack.c.l.b16 %v5985
    %v6249 = vunpack.c.l.b16 %v5986
    %v6250 = vunpack.c.l.b16 %v5987
    %v6251 = vunpack.c.l.b16 %v5988
    %v6252 = vunpack.c.l.b16 %v5989
    %v6253 = vunpack.c.l.b16 %v5990
    %v6254 = vunpack.c.l.b16 %v5991
    %v6255 = vunpack.c.l.b16 %v5992
    %v6256 = vunpack.c.l.b16 %v5993
    %v6257 = vunpack.c.l.b16 %v5994
    %v6258 = vunpack.c.l.b16 %v5995
    %v6259 = vunpack.c.l.b16 %v5996
    %v6260 = vunpack.c.l.b16 %v5997
    %v6261 = vunpack.c.l.b16 %v5998
    %v6262 = vunpack.c.l.b16 %v5999
    %v6263 = vunpack.c.l.b16 %v6000
    %v6264 = vunpack.c.l.b16 %v6001
    %v6265 = vunpack.c.l.b16 %v6002
    %v6266 = vunpack.c.l.b16 %v6003
    %v6267 = vunpack.c.l.b16 %v6004
    %v6268 = vunpack.c.l.b16 %v6005
    %v6269 = vunpack.c.l.b16 %v6006
    %v6270 = vunpack.c.l.b16 %v6007
    %v6271 = vunpack.c.l.b16 %v6008
    %v6272 = vunpack.c.l.b16 %v6009
    %v6273 = vunpack.c.l.b16 %v6010
    %v6274 = vunpack.c.l.b16 %v6011
    %v6275 = vunpack.c.l.b16 %v6012
    %v6276 = vunpack.c.l.b16 %v6013
    %v6277 = vunpack.c.l.b16 %v6014
    %v6278 = vunpack.c.l.b16 %v6015
    %v6279 = vunpack.c.l.b16 %v6016
    %v6280 = vunpack.c.l.b16 %v6017
    %v6281 = vunpack.c.l.b16 %v6018
    %v6282 = vunpack.c.l.b16 %v6019
    %v6283 = vunpack.c.l.b16 %v6020
    %v6284 = vunpack.c.l.b16 %v6021
    %v6285 = vunpack.c.l.b16 %v6022
    %v6286 = vunpack.c.l.b16 %v6023
    %v6287 = vunpack.c.l.b16 %v6024
    %v6288 = vunpack.c.l.b16 %v6025
    %v6289 = vunpack.c.l.b16 %v6026
    %v6290 = vunpack.c.l.b16 %v6027
    %v6291 = vunpack.c.l.b16 %v6028
    %v6292 = vunpack.c.l.b16 %v6029
    %v6293 = vunpack.c.l.b16 %v6030
    %v6294 = vunpack.c.l.b16 %v6031
    %v6295 = vunpack.c.l.b16 %v6032
    %v6296 = vunpack.c.l.b16 %v6033
    %v6297 = vunpack.c.l.b16 %v6034
    %v6298 = vunpack.c.l.b16 %v6035
    %v6299 = vunpack.c.l.b16 %v6036
    %v6300 = vunpack.c.l.b16 %v6037
    %v6301 = vunpack.c.l.b16 %v6038
    %v6302 = vunpack.c.l.b16 %v6039
    %v6303 = vunpack.c.l.b16 %v6040
    %v6304 = vunpack.c.l.b16 %v6041
    %v6305 = vunpack.c.l.b16 %v6042
    %v6306 = vunpack.c.l.b16 %v6043
    %v6307 = vunpack.c.l.b16 %v6044
    %v6308 = vunpack.c.l.b16 %v6045
    %v6309 = vunpack.c.l.b16 %v6046
    %v6310 = vunpack.c.l.b16 %v6047
    %v6311 = vpack.c.b16 %v6184, %v6183
    %v6312 = vpack.c.b16 %v6186, %v6185
    %v6313 = vpack.c.b16 %v6188, %v6187
    %v6314 = vpack.c.b16 %v6190, %v6189
    %v6315 = vpack.c.b16 %v6192, %v6191
    %v6316 = vpack.c.b16 %v6194, %v6193
    %v6317 = vpack.c.b16 %v6196, %v6195
    %v6318 = vpack.c.b16 %v6198, %v6197
    %v6319 = vpack.c.b16 %v6200, %v6199
    %v6320 = vpack.c.b16 %v6202, %v6201
    %v6321 = vpack.c.b16 %v6204, %v6203
    %v6322 = vpack.c.b16 %v6206, %v6205
    %v6323 = vpack.c.b16 %v6208, %v6207
    %v6324 = vpack.c.b16 %v6210, %v6209
    %v6325 = vpack.c.b16 %v6212, %v6211
    %v6326 = vpack.c.b16 %v6214, %v6213
    %v6327 = vpack.c.b16 %v6216, %v6215
    %v6328 = vpack.c.b16 %v6218, %v6217
    %v6329 = vpack.c.b16 %v6220, %v6219
    %v6330 = vpack.c.b16 %v6222, %v6221
    %v6331 = vpack.c.b16 %v6224, %v6223
    %v6332 = vpack.c.b16 %v6226, %v6225
    %v6333 = vpack.c.b16 %v6228, %v6227
    %v6334 = vpack.c.b16 %v6230, %v6229
    %v6335 = vpack.c.b16 %v6232, %v6231
    %v6336 = vpack.c.b16 %v6234, %v6233
    %v6337 = vpack.c.b16 %v6236, %v6235
    %v6338 = vpack.c.b16 %v6238, %v6237
    %v6339 = vpack.c.b16 %v6240, %v6239
    %v6340 = vpack.c.b16 %v6242, %v6241
    %v6341 = vpack.c.b16 %v6244, %v6243
    %v6342 = vpack.c.b16 %v6246, %v6245
    %v6343 = vpack.c.b16 %v6248, %v6247
    %v6344 = vpack.c.b16 %v6250, %v6249
    %v6345 = vpack.c.b16 %v6252, %v6251
    %v6346 = vpack.c.b16 %v6254, %v6253
    %v6347 = vpack.c.b16 %v6256, %v6255
    %v6348 = vpack.c.b16 %v6258, %v6257
    %v6349 = vpack.c.b16 %v6260, %v6259
    %v6350 = vpack.c.b16 %v6262, %v6261
    %v6351 = vpack.c.b16 %v6264, %v6263
    %v6352 = vpack.c.b16 %v6266, %v6265
    %v6353 = vpack.c.b16 %v6268, %v6267
    %v6354 = vpack.c.b16 %v6270, %v6269
    %v6355 = vpack.c.b16 %v6272, %v6271
    %v6356 = vpack.c.b16 %v6274, %v6273
    %v6357 = vpack.c.b16 %v6276, %v6275
    %v6358 = vpack.c.b16 %v6278, %v6277
    %v6359 = vpack.c.b16 %v6280, %v6279
    %v6360 = vpack.c.b16 %v6282, %v6281
    %v6361 = vpack.c.b16 %v6284, %v6283
    %v6362 = vpack.c.b16 %v6286, %v6285
    %v6363 = vpack.c.b16 %v6288, %v6287
    %v6364 = vpack.c.b16 %v6290, %v6289
    %v6365 = vpack.c.b16 %v6292, %v6291
    %v6366 = vpack.c.b16 %v6294, %v6293
    %v6367 = vpack.c.b16 %v6296, %v6295
    %v6368 = vpack.c.b16 %v6298, %v6297
    %v6369 = vpack.c.b16 %v6300, %v6299
    %v6370 = vpack.c.b16 %v6302, %v6301
    %v6371 = vpack.c.b16 %v6304, %v6303
    %v6372 = vpack.c.b16 %v6306, %v6305
    %v6373 = vpack.c.b16 %v6308, %v6307
    %v6374 = vpack.c.b16 %v6310, %v6309
    %6439 = vmatprep.subr.bf16.mxu0 0
    %6440 = vmatpush1.bf16.msra.mxu0 %v6311
    %6441 = vmatprep.subr.bf16.mxu0 0
    %6442 = vmatpush1.bf16.msra.mxu0 %v6312
    %6443 = vmatprep.subr.bf16.mxu0 0
    %6444 = vmatpush1.bf16.msra.mxu0 %v6313
    %6445 = vmatprep.subr.bf16.mxu0 0
    %6446 = vmatpush1.bf16.msra.mxu0 %v6314
    %6447 = vmatprep.subr.bf16.mxu0 0
    %6448 = vmatpush1.bf16.msra.mxu0 %v6315
    %6449 = vmatprep.subr.bf16.mxu0 0
    %6450 = vmatpush1.bf16.msra.mxu0 %v6316
    %6451 = vmatprep.subr.bf16.mxu0 0
    %6452 = vmatpush1.bf16.msra.mxu0 %v6317
    %6453 = vmatprep.subr.bf16.mxu0 0
    %6454 = vmatpush1.bf16.msra.mxu0 %v6318
    %6455 = vmatprep.subr.bf16.mxu0 0
    %6456 = vmatpush1.bf16.msra.mxu0 %v6319
    %6457 = vmatprep.subr.bf16.mxu0 0
    %6458 = vmatpush1.bf16.msra.mxu0 %v6320
    %6459 = vmatprep.subr.bf16.mxu0 0
    %6460 = vmatpush1.bf16.msra.mxu0 %v6321
    %6461 = vmatprep.subr.bf16.mxu0 0
    %6462 = vmatpush1.bf16.msra.mxu0 %v6322
    %6463 = vmatprep.subr.bf16.mxu0 0
    %6464 = vmatpush1.bf16.msra.mxu0 %v6323
    %6465 = vmatprep.subr.bf16.mxu0 0
    %6466 = vmatpush1.bf16.msra.mxu0 %v6324
    %6467 = vmatprep.subr.bf16.mxu0 0
    %6468 = vmatpush1.bf16.msra.mxu0 %v6325
    %6469 = vmatprep.subr.bf16.mxu0 0
    %6470 = vmatpush1.bf16.msra.mxu0 %v6326
    %6471 = vmatprep.mubr.bf16.mxu0 %v5913
    %6472 = vmatmul.mubr.bf16.gmra.mrb[0].mxu0 %v5912
    %v6473 = vpop.f32.mrb[0].mxu0
    %v6474 = vadd.f32 %v6053, %v6473
    %v6475 = vpop.f32.mrb[0].mxu0
    %v6476 = vpop.f32.mrb[0].mxu0
    %v6477 = vpop.f32.mrb[0].mxu0
    %6478 = vdwg.mxu0
    %6479 = vmatprep.subr.bf16.mxu0 0
    %6480 = vmatpush1.bf16.msra.mxu0 %v6327
    %6481 = vmatprep.subr.bf16.mxu0 0
    %6482 = vmatpush1.bf16.msra.mxu0 %v6328
    %6483 = vmatprep.subr.bf16.mxu0 0
    %6484 = vmatpush1.bf16.msra.mxu0 %v6329
    %6485 = vmatprep.subr.bf16.mxu0 0
    %6486 = vmatpush1.bf16.msra.mxu0 %v6330
    %6487 = vmatprep.subr.bf16.mxu0 0
    %6488 = vmatpush1.bf16.msra.mxu0 %v6331
    %6489 = vmatprep.subr.bf16.mxu0 0
    %6490 = vmatpush1.bf16.msra.mxu0 %v6332
    %6491 = vmatprep.subr.bf16.mxu0 0
    %6492 = vmatpush1.bf16.msra.mxu0 %v6333
    %6493 = vmatprep.subr.bf16.mxu0 0
    %6494 = vmatpush1.bf16.msra.mxu0 %v6334
    %6495 = vmatprep.subr.bf16.mxu0 0
    %6496 = vmatpush1.bf16.msra.mxu0 %v6335
    %6497 = vmatprep.subr.bf16.mxu0 0
    %6498 = vmatpush1.bf16.msra.mxu0 %v6336
    %6499 = vmatprep.subr.bf16.mxu0 0
    %6500 = vmatpush1.bf16.msra.mxu0 %v6337
    %6501 = vmatprep.subr.bf16.mxu0 0
    %6502 = vmatpush1.bf16.msra.mxu0 %v6338
    %6503 = vmatprep.subr.bf16.mxu0 0
    %6504 = vmatpush1.bf16.msra.mxu0 %v6339
    %6505 = vmatprep.subr.bf16.mxu0 0
    %6506 = vmatpush1.bf16.msra.mxu0 %v6340
    %6507 = vmatprep.subr.bf16.mxu0 0
    %6508 = vmatpush1.bf16.msra.mxu0 %v6341
    %6509 = vmatprep.subr.bf16.mxu0 0
    %6510 = vmatpush1.bf16.msra.mxu0 %v6342
    %6511 = vmatprep.mubr.bf16.mxu0 %v5915
    %6512 = vmatmul.mubr.bf16.gmra.mrb[0].mxu0 %v5914
    %v6513 = vpop.f32.mrb[0].mxu0
    %v6514 = vadd.f32 %v6474, %v6513
    %v6515 = vpop.f32.mrb[0].mxu0
    %v6516 = vpop.f32.mrb[0].mxu0
    %v6517 = vpop.f32.mrb[0].mxu0
    %6518 = vdwg.mxu0
    %6519 = vmatprep.subr.bf16.mxu0 0
    %6520 = vmatpush1.bf16.msra.mxu0 %v6343
    %6521 = vmatprep.subr.bf16.mxu0 0
    %6522 = vmatpush1.bf16.msra.mxu0 %v6344
    %6523 = vmatprep.subr.bf16.mxu0 0
    %6524 = vmatpush1.bf16.msra.mxu0 %v6345
    %6525 = vmatprep.subr.bf16.mxu0 0
    %6526 = vmatpush1.bf16.msra.mxu0 %v6346
    %6527 = vmatprep.subr.bf16.mxu0 0
    %6528 = vmatpush1.bf16.msra.mxu0 %v6347
    %6529 = vmatprep.subr.bf16.mxu0 0
    %6530 = vmatpush1.bf16.msra.mxu0 %v6348
    %6531 = vmatprep.subr.bf16.mxu0 0
    %6532 = vmatpush1.bf16.msra.mxu0 %v6349
    %6533 = vmatprep.subr.bf16.mxu0 0
    %6534 = vmatpush1.bf16.msra.mxu0 %v6350
    %6535 = vmatprep.subr.bf16.mxu0 0
    %6536 = vmatpush1.bf16.msra.mxu0 %v6351
    %6537 = vmatprep.subr.bf16.mxu0 0
    %6538 = vmatpush1.bf16.msra.mxu0 %v6352
    %6539 = vmatprep.subr.bf16.mxu0 0
    %6540 = vmatpush1.bf16.msra.mxu0 %v6353
    %6541 = vmatprep.subr.bf16.mxu0 0
    %6542 = vmatpush1.bf16.msra.mxu0 %v6354
    %6543 = vmatprep.subr.bf16.mxu0 0
    %6544 = vmatpush1.bf16.msra.mxu0 %v6355
    %6545 = vmatprep.subr.bf16.mxu0 0
    %6546 = vmatpush1.bf16.msra.mxu0 %v6356
    %6547 = vmatprep.subr.bf16.mxu0 0
    %6548 = vmatpush1.bf16.msra.mxu0 %v6357
    %6549 = vmatprep.subr.bf16.mxu0 0
    %6550 = vmatpush1.bf16.msra.mxu0 %v6358
    %6551 = vmatprep.mubr.bf16.mxu0 %v5917
    %6552 = vmatmul.mubr.bf16.gmra.mrb[0].mxu0 %v5916
    %v6553 = vpop.f32.mrb[0].mxu0
    %v6554 = vadd.f32 %v6514, %v6553
    %v6555 = vpop.f32.mrb[0].mxu0
    %v6556 = vpop.f32.mrb[0].mxu0
    %v6557 = vpop.f32.mrb[0].mxu0
    %6558 = vdwg.mxu0
    %6559 = vmatprep.subr.bf16.mxu0 0
    %6560 = vmatpush1.bf16.msra.mxu0 %v6359
    %6561 = vmatprep.subr.bf16.mxu0 0
    %6562 = vmatpush1.bf16.msra.mxu0 %v6360
    %6563 = vmatprep.subr.bf16.mxu0 0
    %6564 = vmatpush1.bf16.msra.mxu0 %v6361
    %6565 = vmatprep.subr.bf16.mxu0 0
    %6566 = vmatpush1.bf16.msra.mxu0 %v6362
    %6567 = vmatprep.subr.bf16.mxu0 0
    %6568 = vmatpush1.bf16.msra.mxu0 %v6363
    %6569 = vmatprep.subr.bf16.mxu0 0
    %6570 = vmatpush1.bf16.msra.mxu0 %v6364
    %6571 = vmatprep.subr.bf16.mxu0 0
    %6572 = vmatpush1.bf16.msra.mxu0 %v6365
    %6573 = vmatprep.subr.bf16.mxu0 0
    %6574 = vmatpush1.bf16.msra.mxu0 %v6366
    %6575 = vmatprep.subr.bf16.mxu0 0
    %6576 = vmatpush1.bf16.msra.mxu0 %v6367
    %6577 = vmatprep.subr.bf16.mxu0 0
    %6578 = vmatpush1.bf16.msra.mxu0 %v6368
    %6579 = vmatprep.subr.bf16.mxu0 0
    %6580 = vmatpush1.bf16.msra.mxu0 %v6369
    %6581 = vmatprep.subr.bf16.mxu0 0
    %6582 = vmatpush1.bf16.msra.mxu0 %v6370
    %6583 = vmatprep.subr.bf16.mxu0 0
    %6584 = vmatpush1.bf16.msra.mxu0 %v6371
    %6585 = vmatprep.subr.bf16.mxu0 0
    %6586 = vmatpush1.bf16.msra.mxu0 %v6372
    %6587 = vmatprep.subr.bf16.mxu0 0
    %6588 = vmatpush1.bf16.msra.mxu0 %v6373
    %6589 = vmatprep.subr.bf16.mxu0 0
    %6590 = vmatpush1.bf16.msra.mxu0 %v6374
    %6591 = vmatprep.mubr.bf16.mxu0 %v5919
    %6592 = vmatmul.mubr.bf16.gmra.mrb[0].mxu0 %v5918
    %v6593 = vpop.f32.mrb[0].mxu0
    %v6594 = vadd.f32 %v6554, %v6593
    %v6595 = vpop.f32.mrb[0].mxu0
    %v6596 = vpop.f32.mrb[0].mxu0
    %v6597 = vpop.f32.mrb[0].mxu0
    %6598 = vdwg.mxu0
    %v6599 = vpack.c.bf16 %v6594, %v6594
    %6600 = vst [vmem:[#allocation19] sm:$0xf] %v6599
    // Predicated region
    $region110: #{tpu_custom_call.1} parent=1 // pred_check
      _
    $region111: #{tpu_custom_call.1} parent=1 // pred_check_branch
      %6602 = sbr.rel (0) target = $region113
    $region112: #{tpu_custom_call.1} parent=1 // pred_region
      %s6604 = ssub.s32 64, 64
      %6605 = vsyncadd [#allocation4], %s6604
      %s6607 = sshll.u32 [#allocation19], 4
      %s6608 = int_to_ptr.vmem [resolvable:$true] %s6607
      %6610 = dma.vmem_to_hbm [thread:$0]  %s6608, 64, %s17, [#allocation4]
    $region113: #{tpu_custom_call.1} parent=1 // pred_fallthru
      _
    // Predicated region
    $region114: #{tpu_custom_call.1} parent=1 // pred_check
      _
    $region115: #{tpu_custom_call.1} parent=1 // pred_check_branch
      %6612 = sbr.rel (0) target = $region117
    $region116: #{tpu_custom_call.1} parent=1 // pred_region
      %6613 = dma.done [#allocation4], 64
    $region117: #{tpu_custom_call.1} parent=1 // pred_fallthru
      _
    %6614 = vsyncpa [#allocation3], 1
    %6615 = vsyncpa [#allocation6], 1
    %6616 = vsyncpa [#allocation9], 1
    %6617 = vsyncpa [#allocation12], 1
    %6618 = vsyncpa [#allocation15], 1
    %6619 = vsyncpa [#allocation18], 1
    %6620 = vsyncpa [#allocation4], 1

// kernel: tpu_custom_call.1
$region0: #{tpu_custom_call.1}
  #allocation0 [shape = 'u32[]', space=smem, size = 0x4, offset = 0x4, fixed_abs, tag = 'smem constant byte address 0x4 - core index']
  #allocation1 [shape = 'u32[144,128]{1,0:T(1,128)}', space=vmem, size = 0x12000, scoped, tag = 'internal scratch']
  %s0 = inlined_call_operand.hbm [shape: bf16[8,128], index: 0, kind: input, shape index: {}]
  %s1 = inlined_call_operand.hbm [shape: bf16[128,1024], index: 1, kind: input, shape index: {}]
  %s2 = inlined_call_operand.hbm [shape: f32[1,1024], index: 2, kind: input, shape index: {}]
  %s3 = inlined_call_operand.hbm [shape: bf16[1024,512], index: 3, kind: input, shape index: {}]
  %s4 = inlined_call_operand.vmem [shape: f32[1,512], index: 4, kind: input, shape index: {}]
  %s5 = inlined_call_operand.hbm [shape: bf16[512,256], index: 5, kind: input, shape index: {}]
  %s6 = inlined_call_operand.vmem [shape: f32[1,256], index: 6, kind: input, shape index: {}]
  %s7 = inlined_call_operand.hbm [shape: bf16[256,128], index: 7, kind: input, shape index: {}]
  %s8 = inlined_call_operand.vmem [shape: f32[1,128], index: 8, kind: input, shape index: {}]
  %s9 = inlined_call_operand.hbm [shape: bf16[128,256], index: 9, kind: input, shape index: {}]
  %s10 = inlined_call_operand.vmem [shape: f32[1,256], index: 10, kind: input, shape index: {}]
  %s11 = inlined_call_operand.hbm [shape: bf16[256,512], index: 11, kind: input, shape index: {}]
  %s12 = inlined_call_operand.vmem [shape: f32[1,512], index: 12, kind: input, shape index: {}]
  %s13 = inlined_call_operand.hbm [shape: bf16[512,1024], index: 13, kind: input, shape index: {}]
  %s14 = inlined_call_operand.vmem [shape: f32[1,1024], index: 14, kind: input, shape index: {}]
  %s15 = inlined_call_operand.hbm [shape: bf16[1024,128], index: 15, kind: input, shape index: {}]
  %s16 = inlined_call_operand.vmem [shape: f32[1,128], index: 16, kind: input, shape index: {}]
  %s17 = inlined_call_operand.hbm [shape: bf16[8,128], index: 17, kind: output, shape index: {}]
  %s18 = sld [smem:[#allocation0]]
  $region118: #{tpu_custom_call.1} parent=0
    _
  %s20 = ssub.s32 1, %s18
  %s21 = scalar_select 0, %s20, %s18
  $region1: #{tpu_custom_call.1} parent=0
    #allocation2 [shape = 'u8[2048]{0}', space=vmem, size = 0x800, scoped, tag = 'input window, operand 0, single buffered']
    #allocation3 [shape = 's32[1]{0}', space=sflag, size = 0x4, scoped, tag = 'scoped memory for tpu_custom_call.1']
    #allocation4 [shape = 's32[1]{0}', space=sflag, size = 0x4, scoped, tag = 'scoped memory for tpu_custom_call.1']
    #allocation5 [shape = 'u8[262144]{0}', space=vmem, size = 0x40000, scoped, tag = 'input window, operand 1, single buffered']
    #allocation6 [shape = 's32[1]{0}', space=sflag, size = 0x4, scoped, tag = 'scoped memory for tpu_custom_call.1']
    #allocation7 [shape = 'u8[4096]{0}', space=vmem, size = 0x1000, scoped, tag = 'input window, operand 2, single buffered']
    #allocation8 [shape = 'u8[1048576]{0}', space=vmem, size = 0x100000, scoped, tag = 'input window, operand 3, single buffered']
    #allocation9 [shape = 's32[1]{0}', space=sflag, size = 0x4, scoped, tag = 'scoped memory for tpu_custom_call.1']
    #allocation10 [shape = 'u8[262144]{0}', space=vmem, size = 0x40000, scoped, tag = 'input window, operand 5, single buffered']
    #allocation11 [shape = 'u8[65536]{0}', space=vmem, size = 0x10000, scoped, tag = 'input window, operand 7, single buffered']
    #allocation12 [shape = 's32[1]{0}', space=sflag, size = 0x4, scoped, tag = 'scoped memory for tpu_custom_call.1']
    #allocation13 [shape = 'u8[65536]{0}', space=vmem, size = 0x10000, scoped, tag = 'input window, operand 9, single buffered']
    #allocation14 [shape = 'u8[262144]{0}', space=vmem, size = 0x40000, scoped, tag = 'input window, operand 11, single buffered']
    #allocation15 [shape = 's32[1]{0}', space=sflag, size = 0x4, scoped, tag = 'scoped memory for tpu_custom_call.1']
    #allocation16 [shape = 'u8[1048576]{0}', space=vmem, size = 0x100000, scoped, tag = 'input window, operand 13, single buffered']
    #allocation17 [shape = 'u8[262144]{0}', space=vmem, size = 0x40000, scoped, tag = 'input window, operand 15, single buffered']
    #allocation18 [shape = 's32[1]{0}', space=sflag, size = 0x4, scoped, tag = 'scoped memory for tpu_custom_call.1']
    #allocation19 [shape = 'u8[2048]{0}', space=vmem, size = 0x800, scoped, tag = 'output window, operand 0, single buffered']
    %22 = vsyncpa [#allocation3], 0
    %23 = vsyncpa [#allocation6], 0
    %24 = vsyncpa [#allocation9], 0
    %25 = vsyncpa [#allocation12], 0
    %26 = vsyncpa [#allocation15], 0
    %27 = vsyncpa [#allocation18], 0
    %28 = vsyncpa [#allocation4], 0
    // Predicated region
    $region2: #{tpu_custom_call.1} parent=1 // pred_check
      _
    $region3: #{tpu_custom_call.1} parent=1 // pred_check_branch
      %30 = sbr.rel (0) target = $region5
    $region4: #{tpu_custom_call.1} parent=1 // pred_region
      %s32 = ssub.s32 64, 64
      %33 = vsyncadd [#allocation3], %s32
      %s35 = sshll.u32 [#allocation2], 4
      %s36 = int_to_ptr.vmem [resolvable:$true] %s35
      %38 = dma.hbm_to_vmem [thread:$0]  %s0, 64, %s36, [#allocation3]
    $region5: #{tpu_custom_call.1} parent=1 // pred_fallthru
      _
    // Predicated region
    $region6: #{tpu_custom_call.1} parent=1 // pred_check
      _
    $region7: #{tpu_custom_call.1} parent=1 // pred_check_branch
      %40 = sbr.rel (0) target = $region9
    $region8: #{tpu_custom_call.1} parent=1 // pred_region
      %s42 = ssub.s32 8192, 8192
      %43 = vsyncadd [#allocation6], %s42
      %s44 = sshll.u32 [#allocation5], 4
      %s45 = int_to_ptr.vmem [resolvable:$true] %s44
      %50 = dma.hbm_to_vmem [thread:$0]  %s1, 8192, %s45, [#allocation6], 512, 512, 32
    $region9: #{tpu_custom_call.1} parent=1 // pred_fallthru
      _
    // Predicated region
    $region10: #{tpu_custom_call.1} parent=1 // pred_check
      _
    $region11: #{tpu_custom_call.1} parent=1 // pred_check_branch
      %52 = sbr.rel (0) target = $region13
    $region12: #{tpu_custom_call.1} parent=1 // pred_region
      %s54 = ssub.s32 128, 128
      %55 = vsyncadd [#allocation6], %s54
      %s57 = sshll.u32 [#allocation7], 4
      %s58 = int_to_ptr.vmem [resolvable:$true] %s57
      %60 = dma.hbm_to_vmem [thread:$0]  %s2, 128, %s58, [#allocation6]
    $region13: #{tpu_custom_call.1} parent=1 // pred_fallthru
      _
    // Predicated region
    $region14: #{tpu_custom_call.1} parent=1 // pred_check
      _
    $region15: #{tpu_custom_call.1} parent=1 // pred_check_branch
      %62 = sbr.rel (0) target = $region17
    $region16: #{tpu_custom_call.1} parent=1 // pred_region
      %s64 = ssub.s32 32768, 32768
      %65 = vsyncadd [#allocation9], %s64
      %s66 = sshll.u32 [#allocation8], 4
      %s67 = int_to_ptr.vmem [resolvable:$true] %s66
      %72 = dma.hbm_to_vmem [thread:$0]  %s3, 32768, %s67, [#allocation9], 256, 256, 16
    $region17: #{tpu_custom_call.1} parent=1 // pred_fallthru
      _
    // Predicated region
    $region18: #{tpu_custom_call.1} parent=1 // pred_check
      _
    $region19: #{tpu_custom_call.1} parent=1 // pred_check_branch
      %74 = sbr.rel (0) target = $region21
    $region20: #{tpu_custom_call.1} parent=1 // pred_region
      _
    $region21: #{tpu_custom_call.1} parent=1 // pred_fallthru
      _
    // Predicated region
    $region22: #{tpu_custom_call.1} parent=1 // pred_check
      _
    $region23: #{tpu_custom_call.1} parent=1 // pred_check_branch
      %76 = sbr.rel (0) target = $region25
    $region24: #{tpu_custom_call.1} parent=1 // pred_region
      %s78 = ssub.s32 8192, 8192
      %79 = vsyncadd [#allocation9], %s78
      %s80 = sshll.u32 [#allocation10], 4
      %s81 = int_to_ptr.vmem [resolvable:$true] %s80
      %86 = dma.hbm_to_vmem [thread:$0]  %s5, 8192, %s81, [#allocation9], 128, 128, 8
    $region25: #{tpu_custom_call.1} parent=1 // pred_fallthru
      _
    // Predicated region
    $region26: #{tpu_custom_call.1} parent=1 // pred_check
      _
    $region27: #{tpu_custom_call.1} parent=1 // pred_check_branch
      %88 = sbr.rel (0) target = $region29
    $region28: #{tpu_custom_call.1} parent=1 // pred_region
      _
    $region29: #{tpu_custom_call.1} parent=1 // pred_fallthru
      _
    // Predicated region
    $region30: #{tpu_custom_call.1} parent=1 // pred_check
      _
    $region31: #{tpu_custom_call.1} parent=1 // pred_check_branch
      %90 = sbr.rel (0) target = $region33
    $region32: #{tpu_custom_call.1} parent=1 // pred_region
      %s92 = ssub.s32 2048, 2048
      %93 = vsyncadd [#allocation12], %s92
      %s94 = sshll.u32 [#allocation11], 4
      %s95 = int_to_ptr.vmem [resolvable:$true] %s94
      %100 = dma.hbm_to_vmem [thread:$0]  %s7, 2048, %s95, [#allocation12], 64, 64, 4
    $region33: #{tpu_custom_call.1} parent=1 // pred_fallthru
      _
    // Predicated region
    $region34: #{tpu_custom_call.1} parent=1 // pred_check
      _
    $region35: #{tpu_custom_call.1} parent=1 // pred_check_branch
      %102 = sbr.rel (0) target = $region37
    $region36: #{tpu_custom_call.1} parent=1 // pred_region
      _
    $region37: #{tpu_custom_call.1} parent=1 // pred_fallthru
      _
    // Predicated region
    $region38: #{tpu_custom_call.1} parent=1 // pred_check
      _
    $region39: #{tpu_custom_call.1} parent=1 // pred_check_branch
      %104 = sbr.rel (0) target = $region41
    $region40: #{tpu_custom_call.1} parent=1 // pred_region
      %s106 = ssub.s32 2048, 2048
      %107 = vsyncadd [#allocation12], %s106
      %s108 = sshll.u32 [#allocation13], 4
      %s109 = int_to_ptr.vmem [resolvable:$true] %s108
      %114 = dma.hbm_to_vmem [thread:$0]  %s9, 2048, %s109, [#allocation12], 128, 128, 8
    $region41: #{tpu_custom_call.1} parent=1 // pred_fallthru
      _
    // Predicated region
    $region42: #{tpu_custom_call.1} parent=1 // pred_check
      _
    $region43: #{tpu_custom_call.1} parent=1 // pred_check_branch
      %116 = sbr.rel (0) target = $region45
    $region44: #{tpu_custom_call.1} parent=1 // pred_region
      _
    $region45: #{tpu_custom_call.1} parent=1 // pred_fallthru
      _
    // Predicated region
    $region46: #{tpu_custom_call.1} parent=1 // pred_check
      _
    $region47: #{tpu_custom_call.1} parent=1 // pred_check_branch
      %118 = sbr.rel (0) target = $region49
    $region48: #{tpu_custom_call.1} parent=1 // pred_region
      %s120 = ssub.s32 8192, 8192
      %121 = vsyncadd [#allocation15], %s120
      %s122 = sshll.u32 [#allocation14], 4
      %s123 = int_to_ptr.vmem [resolvable:$true] %s122
      %128 = dma.hbm_to_vmem [thread:$0]  %s11, 8192, %s123, [#allocation15], 256, 256, 16
    $region49: #{tpu_custom_call.1} parent=1 // pred_fallthru
      _
    // Predicated region
    $region50: #{tpu_custom_call.1} parent=1 // pred_check
      _
    $region51: #{tpu_custom_call.1} parent=1 // pred_check_branch
      %130 = sbr.rel (0) target = $region53
    $region52: #{tpu_custom_call.1} parent=1 // pred_region
      _
    $region53: #{tpu_custom_call.1} parent=1 // pred_fallthru
      _
    // Predicated region
    $region54: #{tpu_custom_call.1} parent=1 // pred_check
      _
    $region55: #{tpu_custom_call.1} parent=1 // pred_check_branch
      %132 = sbr.rel (0) target = $region57
    $region56: #{tpu_custom_call.1} parent=1 // pred_region
      %s134 = ssub.s32 32768, 32768
      %135 = vsyncadd [#allocation15], %s134
      %s136 = sshll.u32 [#allocation16], 4
      %s137 = int_to_ptr.vmem [resolvable:$true] %s136
      %142 = dma.hbm_to_vmem [thread:$0]  %s13, 32768, %s137, [#allocation15], 512, 512, 32
    $region57: #{tpu_custom_call.1} parent=1 // pred_fallthru
      _
    // Predicated region
    $region58: #{tpu_custom_call.1} parent=1 // pred_check
      _
    $region59: #{tpu_custom_call.1} parent=1 // pred_check_branch
      %144 = sbr.rel (0) target = $region61
    $region60: #{tpu_custom_call.1} parent=1 // pred_region
      _
    $region61: #{tpu_custom_call.1} parent=1 // pred_fallthru
      _
    // Predicated region
    $region62: #{tpu_custom_call.1} parent=1 // pred_check
      _
    $region63: #{tpu_custom_call.1} parent=1 // pred_check_branch
      %146 = sbr.rel (0) target = $region65
    $region64: #{tpu_custom_call.1} parent=1 // pred_region
      %s148 = ssub.s32 8192, 8192
      %149 = vsyncadd [#allocation18], %s148
      %s150 = sshll.u32 [#allocation17], 4
      %s151 = int_to_ptr.vmem [resolvable:$true] %s150
      %156 = dma.hbm_to_vmem [thread:$0]  %s15, 8192, %s151, [#allocation18], 64, 64, 4
    $region65: #{tpu_custom_call.1} parent=1 // pred_fallthru
      _
    // Predicated region
    $region66: #{tpu_custom_call.1} parent=1 // pred_check
      _
    $region67: #{tpu_custom_call.1} parent=1 // pred_check_branch
      %158 = sbr.rel (0) target = $region69
    $region68: #{tpu_custom_call.1} parent=1 // pred_region
      _
    $region69: #{tpu_custom_call.1} parent=1 // pred_fallthru
      _
    // Predicated region
    $region70: #{tpu_custom_call.1} parent=1 // pred_check
      _
    $region71: #{tpu_custom_call.1} parent=1 // pred_check_branch
      %160 = sbr.rel (0) target = $region73
    $region72: #{tpu_custom_call.1} parent=1 // pred_region
      %161 = dma.done [#allocation3], 64
    $region73: #{tpu_custom_call.1} parent=1 // pred_fallthru
      _
    // Predicated region
    $region74: #{tpu_custom_call.1} parent=1 // pred_check
      _
    $region75: #{tpu_custom_call.1} parent=1 // pred_check_branch
      %163 = sbr.rel (0) target = $region77
    $region76: #{tpu_custom_call.1} parent=1 // pred_region
      %164 = dma.done [#allocation6], 8192
    $region77: #{tpu_custom_call.1} parent=1 // pred_fallthru
      _
    // Predicated region
    $region78: #{tpu_custom_call.1} parent=1 // pred_check
      _
    $region79: #{tpu_custom_call.1} parent=1 // pred_check_branch
      %166 = sbr.rel (0) target = $region81
    $region80: #{tpu_custom_call.1} parent=1 // pred_region
      %167 = dma.done [#allocation6], 128
    $region81: #{tpu_custom_call.1} parent=1 // pred_fallthru
      _
    // Predicated region
    $region82: #{tpu_custom_call.1} parent=1 // pred_check
      _
    $region83: #{tpu_custom_call.1} parent=1 // pred_check_branch
      %169 = sbr.rel (0) target = $region85
    $region84: #{tpu_custom_call.1} parent=1 // pred_region
      %170 = dma.done [#allocation9], 32768
    $region85: #{tpu_custom_call.1} parent=1 // pred_fallthru
      _
    // Predicated region
    $region86: #{tpu_custom_call.1} parent=1 // pred_check
      _
    $region87: #{tpu_custom_call.1} parent=1 // pred_check_branch
      %172 = sbr.rel (0) target = $region89
    $region88: #{tpu_custom_call.1} parent=1 // pred_region
      %173 = dma.done [#allocation9], 8192
    $region89: #{tpu_custom_call.1} parent=1 // pred_fallthru
      _
    // Predicated region
    $region90: #{tpu_custom_call.1} parent=1 // pred_check
      _
    $region91: #{tpu_custom_call.1} parent=1 // pred_check_branch
      %175 = sbr.rel (0) target = $region93
    $region92: #{tpu_custom_call.1} parent=1 // pred_region
      %176 = dma.done [#allocation12], 2048
    $region93: #{tpu_custom_call.1} parent=1 // pred_fallthru
      _
    // Predicated region
    $region94: #{tpu_custom_call.1} parent=1 // pred_check
      _
    $region95: #{tpu_custom_call.1} parent=1 // pred_check_branch
      %178 = sbr.rel (0) target = $region97
    $region96: #{tpu_custom_call.1} parent=1 // pred_region
      %179 = dma.done [#allocation12], 2048
    $region97: #{tpu_custom_call.1} parent=1 // pred_fallthru
      _
    // Predicated region
    $region98: #{tpu_custom_call.1} parent=1 // pred_check
      _
    $region99: #{tpu_custom_call.1} parent=1 // pred_check_branch
      %181 = sbr.rel (0) target = $region101
    $region100: #{tpu_custom_call.1} parent=1 // pred_region
      %182 = dma.done [#allocation15], 8192
    $region101: #{tpu_custom_call.1} parent=1 // pred_fallthru
      _
    // Predicated region
    $region102: #{tpu_custom_call.1} parent=1 // pred_check
      _
    $region103: #{tpu_custom_call.1} parent=1 // pred_check_branch
      %184 = sbr.rel (0) target = $region105
    $region104: #{tpu_custom_call.1} parent=1 // pred_region
      %185 = dma.done [#allocation15], 32768
    $region105: #{tpu_custom_call.1} parent=1 // pred_fallthru
      _
    // Predicated region
    $region106: #{tpu_custom_call.1} parent=1 // pred_check
      _
    $region107: #{tpu_custom_call.1} parent=1 // pred_check_branch
      %187 = sbr.rel (0) target = $region109
    $region108: #{tpu_custom_call.1} parent=1 // pred_region
      %188 = dma.done [#allocation18], 8192
    $region109: #{tpu_custom_call.1} parent=1 // pred_fallthru
      _
    %v190 = vld [vmem:[#allocation2] sm:$0xf]
    %v191 = vld [vmem:[#allocation5] sm:$0xff]
    %v192 = vld [vmem:[#allocation5 + $0x8] sm:$0xff]
    %v193 = vld [vmem:[#allocation5 + $0x10] sm:$0xff]
    %v194 = vld [vmem:[#allocation5 + $0x18] sm:$0xff]
    %v195 = vld [vmem:[#allocation5 + $0x20] sm:$0xff]
    %v196 = vld [vmem:[#allocation5 + $0x28] sm:$0xff]
    %v197 = vld [vmem:[#allocation5 + $0x30] sm:$0xff]
    %v198 = vld [vmem:[#allocation5 + $0x38] sm:$0xff]
    %v199 = vld [vmem:[#allocation5 + $0x40] sm:$0xff]
    %v200 = vld [vmem:[#allocation5 + $0x48] sm:$0xff]
    %v201 = vld [vmem:[#allocation5 + $0x50] sm:$0xff]
    %v202 = vld [vmem:[#allocation5 + $0x58] sm:$0xff]
    %v203 = vld [vmem:[#allocation5 + $0x60] sm:$0xff]
    %v204 = vld [vmem:[#allocation5 + $0x68] sm:$0xff]
    %v205 = vld [vmem:[#allocation5 + $0x70] sm:$0xff]
    %v206 = vld [vmem:[#allocation5 + $0x78] sm:$0xff]
    %v207 = vld [vmem:[#allocation5 + $0x80] sm:$0xff]
    %v208 = vld [vmem:[#allocation5 + $0x88] sm:$0xff]
    %v209 = vld [vmem:[#allocation5 + $0x90] sm:$0xff]
    %v210 = vld [vmem:[#allocation5 + $0x98] sm:$0xff]
    %v211 = vld [vmem:[#allocation5 + $0xa0] sm:$0xff]
    %v212 = vld [vmem:[#allocation5 + $0xa8] sm:$0xff]
    %v213 = vld [vmem:[#allocation5 + $0xb0] sm:$0xff]
    %v214 = vld [vmem:[#allocation5 + $0xb8] sm:$0xff]
    %v215 = vld [vmem:[#allocation5 + $0xc0] sm:$0xff]
    %v216 = vld [vmem:[#allocation5 + $0xc8] sm:$0xff]
    %v217 = vld [vmem:[#allocation5 + $0xd0] sm:$0xff]
    %v218 = vld [vmem:[#allocation5 + $0xd8] sm:$0xff]
    %v219 = vld [vmem:[#allocation5 + $0xe0] sm:$0xff]
    %v220 = vld [vmem:[#allocation5 + $0xe8] sm:$0xff]
    %v221 = vld [vmem:[#allocation5 + $0xf0] sm:$0xff]
    %v222 = vld [vmem:[#allocation5 + $0xf8] sm:$0xff]
    %v223 = vld [vmem:[#allocation5 + $0x100] sm:$0xff]
    %v224 = vld [vmem:[#allocation5 + $0x108] sm:$0xff]
    %v225 = vld [vmem:[#allocation5 + $0x110] sm:$0xff]
    %v226 = vld [vmem:[#allocation5 + $0x118] sm:$0xff]
    %v227 = vld [vmem:[#allocation5 + $0x120] sm:$0xff]
    %v228 = vld [vmem:[#allocation5 + $0x128] sm:$0xff]
    %v229 = vld [vmem:[#allocation5 + $0x130] sm:$0xff]
    %v230 = vld [vmem:[#allocation5 + $0x138] sm:$0xff]
    %v231 = vld [vmem:[#allocation5 + $0x140] sm:$0xff]
    %v232 = vld [vmem:[#allocation5 + $0x148] sm:$0xff]
    %v233 = vld [vmem:[#allocation5 + $0x150] sm:$0xff]
    %v234 = vld [vmem:[#allocation5 + $0x158] sm:$0xff]
    %v235 = vld [vmem:[#allocation5 + $0x160] sm:$0xff]
    %v236 = vld [vmem:[#allocation5 + $0x168] sm:$0xff]
    %v237 = vld [vmem:[#allocation5 + $0x170] sm:$0xff]
    %v238 = vld [vmem:[#allocation5 + $0x178] sm:$0xff]
    %v239 = vld [vmem:[#allocation5 + $0x180] sm:$0xff]
    %v240 = vld [vmem:[#allocation5 + $0x188] sm:$0xff]
    %v241 = vld [vmem:[#allocation5 + $0x190] sm:$0xff]
    %v242 = vld [vmem:[#allocation5 + $0x198] sm:$0xff]
    %v243 = vld [vmem:[#allocation5 + $0x1a0] sm:$0xff]
    %v244 = vld [vmem:[#allocation5 + $0x1a8] sm:$0xff]
    %v245 = vld [vmem:[#allocation5 + $0x1b0] sm:$0xff]
    %v246 = vld [vmem:[#allocation5 + $0x1b8] sm:$0xff]
    %v247 = vld [vmem:[#allocation5 + $0x1c0] sm:$0xff]
    %v248 = vld [vmem:[#allocation5 + $0x1c8] sm:$0xff]
    %v249 = vld [vmem:[#allocation5 + $0x1d0] sm:$0xff]
    %v250 = vld [vmem:[#allocation5 + $0x1d8] sm:$0xff]
    %v251 = vld [vmem:[#allocation5 + $0x1e0] sm:$0xff]
    %v252 = vld [vmem:[#allocation5 + $0x1e8] sm:$0xff]
    %v253 = vld [vmem:[#allocation5 + $0x1f0] sm:$0xff]
    %v254 = vld [vmem:[#allocation5 + $0x1f8] sm:$0xff]
    %v255 = vld [vmem:[#allocation7] sm:$0xff]
    %v257 = vlaneseq
    %v258 = vshrl.u32 %v257, 7
    %v259 = vsub.s32 0, %v258
    %v260 = vrot.slane %v255, %v259
    %v261 = vlaneseq
    %v262 = vshrl.u32 %v261, 7
    %v263 = vsub.s32 1, %v262
    %v264 = vrot.slane %v255, %v263
    %v265 = vlaneseq
    %v266 = vshrl.u32 %v265, 7
    %v267 = vsub.s32 2, %v266
    %v268 = vrot.slane %v255, %v267
    %v269 = vlaneseq
    %v270 = vshrl.u32 %v269, 7
    %v271 = vsub.s32 3, %v270
    %v272 = vrot.slane %v255, %v271
    %v273 = vlaneseq
    %v274 = vshrl.u32 %v273, 7
    %v275 = vsub.s32 4, %v274
    %v276 = vrot.slane %v255, %v275
    %v277 = vlaneseq
    %v278 = vshrl.u32 %v277, 7
    %v279 = vsub.s32 5, %v278
    %v280 = vrot.slane %v255, %v279
    %v281 = vlaneseq
    %v282 = vshrl.u32 %v281, 7
    %v283 = vsub.s32 6, %v282
    %v284 = vrot.slane %v255, %v283
    %v285 = vlaneseq
    %v286 = vshrl.u32 %v285, 7
    %v287 = vsub.s32 7, %v286
    %v288 = vrot.slane %v255, %v287
    %v361 = vunpack.c.l.b16 %v191
    %v362 = vunpack.c.h.b16 %v191
    %v363 = vunpack.c.l.b16 %v192
    %v364 = vunpack.c.h.b16 %v192
    %v365 = vunpack.c.l.b16 %v193
    %v366 = vunpack.c.h.b16 %v193
    %v367 = vunpack.c.l.b16 %v194
    %v368 = vunpack.c.h.b16 %v194
    %v369 = vunpack.c.l.b16 %v195
    %v370 = vunpack.c.h.b16 %v195
    %v371 = vunpack.c.l.b16 %v196
    %v372 = vunpack.c.h.b16 %v196
    %v373 = vunpack.c.l.b16 %v197
    %v374 = vunpack.c.h.b16 %v197
    %v375 = vunpack.c.l.b16 %v198
    %v376 = vunpack.c.h.b16 %v198
    %v377 = vunpack.c.l.b16 %v199
    %v378 = vunpack.c.h.b16 %v199
    %v379 = vunpack.c.l.b16 %v200
    %v380 = vunpack.c.h.b16 %v200
    %v381 = vunpack.c.l.b16 %v201
    %v382 = vunpack.c.h.b16 %v201
    %v383 = vunpack.c.l.b16 %v202
    %v384 = vunpack.c.h.b16 %v202
    %v385 = vunpack.c.l.b16 %v203
    %v386 = vunpack.c.h.b16 %v203
    %v387 = vunpack.c.l.b16 %v204
    %v388 = vunpack.c.h.b16 %v204
    %v389 = vunpack.c.l.b16 %v205
    %v390 = vunpack.c.h.b16 %v205
    %v391 = vunpack.c.l.b16 %v206
    %v392 = vunpack.c.h.b16 %v206
    %v393 = vunpack.c.l.b16 %v207
    %v394 = vunpack.c.h.b16 %v207
    %v395 = vunpack.c.l.b16 %v208
    %v396 = vunpack.c.h.b16 %v208
    %v397 = vunpack.c.l.b16 %v209
    %v398 = vunpack.c.h.b16 %v209
    %v399 = vunpack.c.l.b16 %v210
    %v400 = vunpack.c.h.b16 %v210
    %v401 = vunpack.c.l.b16 %v211
    %v402 = vunpack.c.h.b16 %v211
    %v403 = vunpack.c.l.b16 %v212
    %v404 = vunpack.c.h.b16 %v212
    %v405 = vunpack.c.l.b16 %v213
    %v406 = vunpack.c.h.b16 %v213
    %v407 = vunpack.c.l.b16 %v214
    %v408 = vunpack.c.h.b16 %v214
    %v409 = vunpack.c.l.b16 %v215
    %v410 = vunpack.c.h.b16 %v215
    %v411 = vunpack.c.l.b16 %v216
    %v412 = vunpack.c.h.b16 %v216
    %v413 = vunpack.c.l.b16 %v217
    %v414 = vunpack.c.h.b16 %v217
    %v415 = vunpack.c.l.b16 %v218
    %v416 = vunpack.c.h.b16 %v218
    %v417 = vunpack.c.l.b16 %v219
    %v418 = vunpack.c.h.b16 %v219
    %v419 = vunpack.c.l.b16 %v220
    %v420 = vunpack.c.h.b16 %v220
    %v421 = vunpack.c.l.b16 %v221
    %v422 = vunpack.c.h.b16 %v221
    %v423 = vunpack.c.l.b16 %v222
    %v424 = vunpack.c.h.b16 %v222
    %v425 = vunpack.c.l.b16 %v223
    %v426 = vunpack.c.h.b16 %v223
    %v427 = vunpack.c.l.b16 %v224
    %v428 = vunpack.c.h.b16 %v224
    %v429 = vunpack.c.l.b16 %v225
    %v430 = vunpack.c.h.b16 %v225
    %v431 = vunpack.c.l.b16 %v226
    %v432 = vunpack.c.h.b16 %v226
    %v433 = vunpack.c.l.b16 %v227
    %v434 = vunpack.c.h.b16 %v227
    %v435 = vunpack.c.l.b16 %v228
    %v436 = vunpack.c.h.b16 %v228
    %v437 = vunpack.c.l.b16 %v229
    %v438 = vunpack.c.h.b16 %v229
    %v439 = vunpack.c.l.b16 %v230
    %v440 = vunpack.c.h.b16 %v230
    %v441 = vunpack.c.l.b16 %v231
    %v442 = vunpack.c.h.b16 %v231
    %v443 = vunpack.c.l.b16 %v232
    %v444 = vunpack.c.h.b16 %v232
    %v445 = vunpack.c.l.b16 %v233
    %v446 = vunpack.c.h.b16 %v233
    %v447 = vunpack.c.l.b16 %v234
    %v448 = vunpack.c.h.b16 %v234
    %v449 = vunpack.c.l.b16 %v235
    %v450 = vunpack.c.h.b16 %v235
    %v451 = vunpack.c.l.b16 %v236
    %v452 = vunpack.c.h.b16 %v236
    %v453 = vunpack.c.l.b16 %v237
    %v454 = vunpack.c.h.b16 %v237
    %v455 = vunpack.c.l.b16 %v238
    %v456 = vunpack.c.h.b16 %v238
    %v457 = vunpack.c.l.b16 %v239
    %v458 = vunpack.c.h.b16 %v239
    %v459 = vunpack.c.l.b16 %v240
    %v460 = vunpack.c.h.b16 %v240
    %v461 = vunpack.c.l.b16 %v241
    %v462 = vunpack.c.h.b16 %v241
    %v463 = vunpack.c.l.b16 %v242
    %v464 = vunpack.c.h.b16 %v242
    %v465 = vunpack.c.l.b16 %v243
    %v466 = vunpack.c.h.b16 %v243
    %v467 = vunpack.c.l.b16 %v244
    %v468 = vunpack.c.h.b16 %v244
    %v469 = vunpack.c.l.b16 %v245
    %v470 = vunpack.c.h.b16 %v245
    %v471 = vunpack.c.l.b16 %v246
    %v472 = vunpack.c.h.b16 %v246
    %v473 = vunpack.c.l.b16 %v247
    %v474 = vunpack.c.h.b16 %v247
    %v475 = vunpack.c.l.b16 %v248
    %v476 = vunpack.c.h.b16 %v248
    %v477 = vunpack.c.l.b16 %v249
    %v478 = vunpack.c.h.b16 %v249
    %v479 = vunpack.c.l.b16 %v250
    %v480 = vunpack.c.h.b16 %v250
    %v481 = vunpack.c.l.b16 %v251
    %v482 = vunpack.c.h.b16 %v251
    %v483 = vunpack.c.l.b16 %v252
    %v484 = vunpack.c.h.b16 %v252
    %v485 = vunpack.c.l.b16 %v253
    %v486 = vunpack.c.h.b16 %v253
    %v487 = vunpack.c.l.b16 %v254
    %v488 = vunpack.c.h.b16 %v254
    %v489 = vpack.c.b16 %v369, %v361
    %v490 = vpack.c.b16 %v370, %v362
    %v491 = vpack.c.b16 %v371, %v363
    %v492 = vpack.c.b16 %v372, %v364
    %v493 = vpack.c.b16 %v373, %v365
    %v494 = vpack.c.b16 %v374, %v366
    %v495 = vpack.c.b16 %v375, %v367
    %v496 = vpack.c.b16 %v376, %v368
    %v497 = vpack.c.b16 %v385, %v377
    %v498 = vpack.c.b16 %v386, %v378
    %v499 = vpack.c.b16 %v387, %v379
    %v500 = vpack.c.b16 %v388, %v380
    %v501 = vpack.c.b16 %v389, %v381
    %v502 = vpack.c.b16 %v390, %v382
    %v503 = vpack.c.b16 %v391, %v383
    %v504 = vpack.c.b16 %v392, %v384
    %v505 = vpack.c.b16 %v401, %v393
    %v506 = vpack.c.b16 %v402, %v394
    %v507 = vpack.c.b16 %v403, %v395
    %v508 = vpack.c.b16 %v404, %v396
    %v509 = vpack.c.b16 %v405, %v397
    %v510 = vpack.c.b16 %v406, %v398
    %v511 = vpack.c.b16 %v407, %v399
    %v512 = vpack.c.b16 %v408, %v400
    %v513 = vpack.c.b16 %v417, %v409
    %v514 = vpack.c.b16 %v418, %v410
    %v515 = vpack.c.b16 %v419, %v411
    %v516 = vpack.c.b16 %v420, %v412
    %v517 = vpack.c.b16 %v421, %v413
    %v518 = vpack.c.b16 %v422, %v414
    %v519 = vpack.c.b16 %v423, %v415
    %v520 = vpack.c.b16 %v424, %v416
    %v521 = vpack.c.b16 %v433, %v425
    %v522 = vpack.c.b16 %v434, %v426
    %v523 = vpack.c.b16 %v435, %v427
    %v524 = vpack.c.b16 %v436, %v428
    %v525 = vpack.c.b16 %v437, %v429
    %v526 = vpack.c.b16 %v438, %v430
    %v527 = vpack.c.b16 %v439, %v431
    %v528 = vpack.c.b16 %v440, %v432
    %v529 = vpack.c.b16 %v449, %v441
    %v530 = vpack.c.b16 %v450, %v442
    %v531 = vpack.c.b16 %v451, %v443
    %v532 = vpack.c.b16 %v452, %v444
    %v533 = vpack.c.b16 %v453, %v445
    %v534 = vpack.c.b16 %v454, %v446
    %v535 = vpack.c.b16 %v455, %v447
    %v536 = vpack.c.b16 %v456, %v448
    %v537 = vpack.c.b16 %v465, %v457
    %v538 = vpack.c.b16 %v466, %v458
    %v539 = vpack.c.b16 %v467, %v459
    %v540 = vpack.c.b16 %v468, %v460
    %v541 = vpack.c.b16 %v469, %v461
    %v542 = vpack.c.b16 %v470, %v462
    %v543 = vpack.c.b16 %v471, %v463
    %v544 = vpack.c.b16 %v472, %v464
    %v545 = vpack.c.b16 %v481, %v473
    %v546 = vpack.c.b16 %v482, %v474
    %v547 = vpack.c.b16 %v483, %v475
    %v548 = vpack.c.b16 %v484, %v476
    %v549 = vpack.c.b16 %v485, %v477
    %v550 = vpack.c.b16 %v486, %v478
    %v551 = vpack.c.b16 %v487, %v479
    %v552 = vpack.c.b16 %v488, %v480
    %617 = vmatprep.subr.bf16.mxu0 %v490
    %618 = vmatpush1.bf16.msra.mxu0 %v489
    %619 = vmatprep.subr.bf16.mxu0 %v498
    %620 = vmatpush1.bf16.msra.mxu0 %v497
    %621 = vmatprep.subr.bf16.mxu0 %v506
    %622 = vmatpush1.bf16.msra.mxu0 %v505
    %623 = vmatprep.subr.bf16.mxu0 %v514
    %624 = vmatpush1.bf16.msra.mxu0 %v513
    %625 = vmatprep.subr.bf16.mxu0 %v522
    %626 = vmatpush1.bf16.msra.mxu0 %v521
    %627 = vmatprep.subr.bf16.mxu0 %v530
    %628 = vmatpush1.bf16.msra.mxu0 %v529
    %629 = vmatprep.subr.bf16.mxu0 %v538
    %630 = vmatpush1.bf16.msra.mxu0 %v537
    %631 = vmatprep.subr.bf16.mxu0 %v546
    %632 = vmatpush1.bf16.msra.mxu0 %v545
    %633 = vmatprep.subr.bf16.mxu0 0
    %634 = vmatpush1.bf16.msra.mxu0 0
    %635 = vmatprep.subr.bf16.mxu0 0
    %636 = vmatpush1.bf16.msra.mxu0 0
    %637 = vmatprep.subr.bf16.mxu0 0
    %638 = vmatpush1.bf16.msra.mxu0 0
    %639 = vmatprep.subr.bf16.mxu0 0
    %640 = vmatpush1.bf16.msra.mxu0 0
    %641 = vmatprep.subr.bf16.mxu0 0
    %642 = vmatpush1.bf16.msra.mxu0 0
    %643 = vmatprep.subr.bf16.mxu0 0
    %644 = vmatpush1.bf16.msra.mxu0 0
    %645 = vmatprep.subr.bf16.mxu0 0
    %646 = vmatpush1.bf16.msra.mxu0 0
    %647 = vmatprep.subr.bf16.mxu0 0
    %648 = vmatpush1.bf16.msra.mxu0 0
    %649 = vmatprep.mubr.bf16.mxu0 0
    %650 = vmatmul.mubr.bf16.gmra.mrb[0].mxu0 %v190
    %v651 = vpop.f32.mrb[0].mxu0
    %v652 = vadd.f32 %v260, %v651
    %v653 = vpop.f32.mrb[0].mxu0
    %v654 = vadd.f32 %v264, %v653
    %v655 = vpop.f32.mrb[0].mxu0
    %v656 = vpop.f32.mrb[0].mxu0
    %657 = vdwg.mxu0
    %658 = vmatprep.subr.bf16.mxu0 %v492
    %659 = vmatpush1.bf16.msra.mxu0 %v491
    %660 = vmatprep.subr.bf16.mxu0 %v500
    %661 = vmatpush1.bf16.msra.mxu0 %v499
    %662 = vmatprep.subr.bf16.mxu0 %v508
    %663 = vmatpush1.bf16.msra.mxu0 %v507
    %664 = vmatprep.subr.bf16.mxu0 %v516
    %665 = vmatpush1.bf16.msra.mxu0 %v515
    %666 = vmatprep.subr.bf16.mxu0 %v524
    %667 = vmatpush1.bf16.msra.mxu0 %v523
    %668 = vmatprep.subr.bf16.mxu0 %v532
    %669 = vmatpush1.bf16.msra.mxu0 %v531
    %670 = vmatprep.subr.bf16.mxu0 %v540
    %671 = vmatpush1.bf16.msra.mxu0 %v539
    %672 = vmatprep.subr.bf16.mxu0 %v548
    %673 = vmatpush1.bf16.msra.mxu0 %v547
    %674 = vmatprep.subr.bf16.mxu0 0
    %675 = vmatpush1.bf16.msra.mxu0 0
    %676 = vmatprep.subr.bf16.mxu0 0
    %677 = vmatpush1.bf16.msra.mxu0 0
    %678 = vmatprep.subr.bf16.mxu0 0
    %679 = vmatpush1.bf16.msra.mxu0 0
    %680 = vmatprep.subr.bf16.mxu0 0
    %681 = vmatpush1.bf16.msra.mxu0 0
    %682 = vmatprep.subr.bf16.mxu0 0
    %683 = vmatpush1.bf16.msra.mxu0 0
    %684 = vmatprep.subr.bf16.mxu0 0
    %685 = vmatpush1.bf16.msra.mxu0 0
    %686 = vmatprep.subr.bf16.mxu0 0
    %687 = vmatpush1.bf16.msra.mxu0 0
    %688 = vmatprep.subr.bf16.mxu0 0
    %689 = vmatpush1.bf16.msra.mxu0 0
    %690 = vmatprep.mubr.bf16.mxu0 0
    %691 = vmatmul.mubr.bf16.gmra.mrb[0].mxu0 %v190
    %v692 = vpop.f32.mrb[0].mxu0
    %v693 = vadd.f32 %v268, %v692
    %v694 = vpop.f32.mrb[0].mxu0
    %v695 = vadd.f32 %v272, %v694
    %v696 = vpop.f32.mrb[0].mxu0
    %v697 = vpop.f32.mrb[0].mxu0
    %698 = vdwg.mxu0
    %699 = vmatprep.subr.bf16.mxu0 %v494
    %700 = vmatpush1.bf16.msra.mxu0 %v493
    %701 = vmatprep.subr.bf16.mxu0 %v502
    %702 = vmatpush1.bf16.msra.mxu0 %v501
    %703 = vmatprep.subr.bf16.mxu0 %v510
    %704 = vmatpush1.bf16.msra.mxu0 %v509
    %705 = vmatprep.subr.bf16.mxu0 %v518
    %706 = vmatpush1.bf16.msra.mxu0 %v517
    %707 = vmatprep.subr.bf16.mxu0 %v526
    %708 = vmatpush1.bf16.msra.mxu0 %v525
    %709 = vmatprep.subr.bf16.mxu0 %v534
    %710 = vmatpush1.bf16.msra.mxu0 %v533
    %711 = vmatprep.subr.bf16.mxu0 %v542
    %712 = vmatpush1.bf16.msra.mxu0 %v541
    %713 = vmatprep.subr.bf16.mxu0 %v550
    %714 = vmatpush1.bf16.msra.mxu0 %v549
    %715 = vmatprep.subr.bf16.mxu0 0
    %716 = vmatpush1.bf16.msra.mxu0 0
    %717 = vmatprep.subr.bf16.mxu0 0
    %718 = vmatpush1.bf16.msra.mxu0 0
    %719 = vmatprep.subr.bf16.mxu0 0
    %720 = vmatpush1.bf16.msra.mxu0 0
    %721 = vmatprep.subr.bf16.mxu0 0
    %722 = vmatpush1.bf16.msra.mxu0 0
    %723 = vmatprep.subr.bf16.mxu0 0
    %724 = vmatpush1.bf16.msra.mxu0 0
    %725 = vmatprep.subr.bf16.mxu0 0
    %726 = vmatpush1.bf16.msra.mxu0 0
    %727 = vmatprep.subr.bf16.mxu0 0
    %728 = vmatpush1.bf16.msra.mxu0 0
    %729 = vmatprep.subr.bf16.mxu0 0
    %730 = vmatpush1.bf16.msra.mxu0 0
    %731 = vmatprep.mubr.bf16.mxu0 0
    %732 = vmatmul.mubr.bf16.gmra.mrb[0].mxu0 %v190
    %v733 = vpop.f32.mrb[0].mxu0
    %v734 = vadd.f32 %v276, %v733
    %v735 = vpop.f32.mrb[0].mxu0
    %v736 = vadd.f32 %v280, %v735
    %v737 = vpop.f32.mrb[0].mxu0
    %v738 = vpop.f32.mrb[0].mxu0
    %739 = vdwg.mxu0
    %740 = vmatprep.subr.bf16.mxu0 %v496
    %741 = vmatpush1.bf16.msra.mxu0 %v495
    %742 = vmatprep.subr.bf16.mxu0 %v504
    %743 = vmatpush1.bf16.msra.mxu0 %v503
    %744 = vmatprep.subr.bf16.mxu0 %v512
    %745 = vmatpush1.bf16.msra.mxu0 %v511
    %746 = vmatprep.subr.bf16.mxu0 %v520
    %747 = vmatpush1.bf16.msra.mxu0 %v519
    %748 = vmatprep.subr.bf16.mxu0 %v528
    %749 = vmatpush1.bf16.msra.mxu0 %v527
    %750 = vmatprep.subr.bf16.mxu0 %v536
    %751 = vmatpush1.bf16.msra.mxu0 %v535
    %752 = vmatprep.subr.bf16.mxu0 %v544
    %753 = vmatpush1.bf16.msra.mxu0 %v543
    %754 = vmatprep.subr.bf16.mxu0 %v552
    %755 = vmatpush1.bf16.msra.mxu0 %v551
    %756 = vmatprep.subr.bf16.mxu0 0
    %757 = vmatpush1.bf16.msra.mxu0 0
    %758 = vmatprep.subr.bf16.mxu0 0
    %759 = vmatpush1.bf16.msra.mxu0 0
    %760 = vmatprep.subr.bf16.mxu0 0
    %761 = vmatpush1.bf16.msra.mxu0 0
    %762 = vmatprep.subr.bf16.mxu0 0
    %763 = vmatpush1.bf16.msra.mxu0 0
    %764 = vmatprep.subr.bf16.mxu0 0
    %765 = vmatpush1.bf16.msra.mxu0 0
    %766 = vmatprep.subr.bf16.mxu0 0
    %767 = vmatpush1.bf16.msra.mxu0 0
    %768 = vmatprep.subr.bf16.mxu0 0
    %769 = vmatpush1.bf16.msra.mxu0 0
    %770 = vmatprep.subr.bf16.mxu0 0
    %771 = vmatpush1.bf16.msra.mxu0 0
    %772 = vmatprep.mubr.bf16.mxu0 0
    %773 = vmatmul.mubr.bf16.gmra.mrb[0].mxu0 %v190
    %v774 = vpop.f32.mrb[0].mxu0
    %v775 = vadd.f32 %v284, %v774
    %v776 = vpop.f32.mrb[0].mxu0
    %v777 = vadd.f32 %v288, %v776
    %v778 = vpop.f32.mrb[0].mxu0
    %v779 = vpop.f32.mrb[0].mxu0
    %780 = vdwg.mxu0
    %v781 = vmax.f32 %v652, 0.0
    %v782 = vmax.f32 %v654, 0.0
    %v783 = vmax.f32 %v693, 0.0
    %v784 = vmax.f32 %v695, 0.0
    %v785 = vmax.f32 %v734, 0.0
    %v786 = vmax.f32 %v736, 0.0
    %v787 = vmax.f32 %v775, 0.0
    %v788 = vmax.f32 %v777, 0.0
    %v789 = vpack.c.bf16 %v781, %v781
    %v790 = vpack.c.bf16 %v782, %v782
    %v791 = vpack.c.bf16 %v783, %v783
    %v792 = vpack.c.bf16 %v784, %v784
    %v793 = vpack.c.bf16 %v785, %v785
    %v794 = vpack.c.bf16 %v786, %v786
    %v795 = vpack.c.bf16 %v787, %v787
    %v796 = vpack.c.bf16 %v788, %v788
    %v797 = vld [vmem:[#allocation8] sm:$0xff]
    %v798 = vld [vmem:[#allocation8 + $0x8] sm:$0xff]
    %v799 = vld [vmem:[#allocation8 + $0x10] sm:$0xff]
    %v800 = vld [vmem:[#allocation8 + $0x18] sm:$0xff]
    %v801 = vld [vmem:[#allocation8 + $0x20] sm:$0xff]
    %v802 = vld [vmem:[#allocation8 + $0x28] sm:$0xff]
    %v803 = vld [vmem:[#allocation8 + $0x30] sm:$0xff]
    %v804 = vld [vmem:[#allocation8 + $0x38] sm:$0xff]
    %v805 = vld [vmem:[#allocation8 + $0x40] sm:$0xff]
    %v806 = vld [vmem:[#allocation8 + $0x48] sm:$0xff]
    %v807 = vld [vmem:[#allocation8 + $0x50] sm:$0xff]
    %v808 = vld [vmem:[#allocation8 + $0x58] sm:$0xff]
    %v809 = vld [vmem:[#allocation8 + $0x60] sm:$0xff]
    %v810 = vld [vmem:[#allocation8 + $0x68] sm:$0xff]
    %v811 = vld [vmem:[#allocation8 + $0x70] sm:$0xff]
    %v812 = vld [vmem:[#allocation8 + $0x78] sm:$0xff]
    %v813 = vld [vmem:[#allocation8 + $0x80] sm:$0xff]
    %v814 = vld [vmem:[#allocation8 + $0x88] sm:$0xff]
    %v815 = vld [vmem:[#allocation8 + $0x90] sm:$0xff]
    %v816 = vld [vmem:[#allocation8 + $0x98] sm:$0xff]
    %v817 = vld [vmem:[#allocation8 + $0xa0] sm:$0xff]
    %v818 = vld [vmem:[#allocation8 + $0xa8] sm:$0xff]
    %v819 = vld [vmem:[#allocation8 + $0xb0] sm:$0xff]
    %v820 = vld [vmem:[#allocation8 + $0xb8] sm:$0xff]
    %v821 = vld [vmem:[#allocation8 + $0xc0] sm:$0xff]
    %v822 = vld [vmem:[#allocation8 + $0xc8] sm:$0xff]
    %v823 = vld [vmem:[#allocation8 + $0xd0] sm:$0xff]
    %v824 = vld [vmem:[#allocation8 + $0xd8] sm:$0xff]
    %v825 = vld [vmem:[#allocation8 + $0xe0] sm:$0xff]
    %v826 = vld [vmem:[#allocation8 + $0xe8] sm:$0xff]
    %v827 = vld [vmem:[#allocation8 + $0xf0] sm:$0xff]
    %v828 = vld [vmem:[#allocation8 + $0xf8] sm:$0xff]
    %v829 = vld [vmem:[#allocation8 + $0x100] sm:$0xff]
    %v830 = vld [vmem:[#allocation8 + $0x108] sm:$0xff]
    %v831 = vld [vmem:[#allocation8 + $0x110] sm:$0xff]
    %v832 = vld [vmem:[#allocation8 + $0x118] sm:$0xff]
    %v833 = vld [vmem:[#allocation8 + $0x120] sm:$0xff]
    %v834 = vld [vmem:[#allocation8 + $0x128] sm:$0xff]
    %v835 = vld [vmem:[#allocation8 + $0x130] sm:$0xff]
    %v836 = vld [vmem:[#allocation8 + $0x138] sm:$0xff]
    %v837 = vld [vmem:[#allocation8 + $0x140] sm:$0xff]
    %v838 = vld [vmem:[#allocation8 + $0x148] sm:$0xff]
    %v839 = vld [vmem:[#allocation8 + $0x150] sm:$0xff]
    %v840 = vld [vmem:[#allocation8 + $0x158] sm:$0xff]
    %v841 = vld [vmem:[#allocation8 + $0x160] sm:$0xff]
    %v842 = vld [vmem:[#allocation8 + $0x168] sm:$0xff]
    %v843 = vld [vmem:[#allocation8 + $0x170] sm:$0xff]
    %v844 = vld [vmem:[#allocation8 + $0x178] sm:$0xff]
    %v845 = vld [vmem:[#allocation8 + $0x180] sm:$0xff]
    %v846 = vld [vmem:[#allocation8 + $0x188] sm:$0xff]
    %v847 = vld [vmem:[#allocation8 + $0x190] sm:$0xff]
    %v848 = vld [vmem:[#allocation8 + $0x198] sm:$0xff]
    %v849 = vld [vmem:[#allocation8 + $0x1a0] sm:$0xff]
    %v850 = vld [vmem:[#allocation8 + $0x1a8] sm:$0xff]
    %v851 = vld [vmem:[#allocation8 + $0x1b0] sm:$0xff]
    %v852 = vld [vmem:[#allocation8 + $0x1b8] sm:$0xff]
    %v853 = vld [vmem:[#allocation8 + $0x1c0] sm:$0xff]
    %v854 = vld [vmem:[#allocation8 + $0x1c8] sm:$0xff]
    %v855 = vld [vmem:[#allocation8 + $0x1d0] sm:$0xff]
    %v856 = vld [vmem:[#allocation8 + $0x1d8] sm:$0xff]
    %v857 = vld [vmem:[#allocation8 + $0x1e0] sm:$0xff]
    %v858 = vld [vmem:[#allocation8 + $0x1e8] sm:$0xff]
    %v859 = vld [vmem:[#allocation8 + $0x1f0] sm:$0xff]
    %v860 = vld [vmem:[#allocation8 + $0x1f8] sm:$0xff]
    %v861 = vld [vmem:[#allocation8 + $0x200] sm:$0xff]
    %v862 = vld [vmem:[#allocation8 + $0x208] sm:$0xff]
    %v863 = vld [vmem:[#allocation8 + $0x210] sm:$0xff]
    %v864 = vld [vmem:[#allocation8 + $0x218] sm:$0xff]
    %v865 = vld [vmem:[#allocation8 + $0x220] sm:$0xff]
    %v866 = vld [vmem:[#allocation8 + $0x228] sm:$0xff]
    %v867 = vld [vmem:[#allocation8 + $0x230] sm:$0xff]
    %v868 = vld [vmem:[#allocation8 + $0x238] sm:$0xff]
    %v869 = vld [vmem:[#allocation8 + $0x240] sm:$0xff]
    %v870 = vld [vmem:[#allocation8 + $0x248] sm:$0xff]
    %v871 = vld [vmem:[#allocation8 + $0x250] sm:$0xff]
    %v872 = vld [vmem:[#allocation8 + $0x258] sm:$0xff]
    %v873 = vld [vmem:[#allocation8 + $0x260] sm:$0xff]
    %v874 = vld [vmem:[#allocation8 + $0x268] sm:$0xff]
    %v875 = vld [vmem:[#allocation8 + $0x270] sm:$0xff]
    %v876 = vld [vmem:[#allocation8 + $0x278] sm:$0xff]
    %v877 = vld [vmem:[#allocation8 + $0x280] sm:$0xff]
    %v878 = vld [vmem:[#allocation8 + $0x288] sm:$0xff]
    %v879 = vld [vmem:[#allocation8 + $0x290] sm:$0xff]
    %v880 = vld [vmem:[#allocation8 + $0x298] sm:$0xff]
    %v881 = vld [vmem:[#allocation8 + $0x2a0] sm:$0xff]
    %v882 = vld [vmem:[#allocation8 + $0x2a8] sm:$0xff]
    %v883 = vld [vmem:[#allocation8 + $0x2b0] sm:$0xff]
    %v884 = vld [vmem:[#allocation8 + $0x2b8] sm:$0xff]
    %v885 = vld [vmem:[#allocation8 + $0x2c0] sm:$0xff]
    %v886 = vld [vmem:[#allocation8 + $0x2c8] sm:$0xff]
    %v887 = vld [vmem:[#allocation8 + $0x2d0] sm:$0xff]
    %v888 = vld [vmem:[#allocation8 + $0x2d8] sm:$0xff]
    %v889 = vld [vmem:[#allocation8 + $0x2e0] sm:$0xff]
    %v890 = vld [vmem:[#allocation8 + $0x2e8] sm:$0xff]
    %v891 = vld [vmem:[#allocation8 + $0x2f0] sm:$0xff]
    %v892 = vld [vmem:[#allocation8 + $0x2f8] sm:$0xff]
    %v893 = vld [vmem:[#allocation8 + $0x300] sm:$0xff]
    %v894 = vld [vmem:[#allocation8 + $0x308] sm:$0xff]
    %v895 = vld [vmem:[#allocation8 + $0x310] sm:$0xff]
    %v896 = vld [vmem:[#allocation8 + $0x318] sm:$0xff]
    %v897 = vld [vmem:[#allocation8 + $0x320] sm:$0xff]
    %v898 = vld [vmem:[#allocation8 + $0x328] sm:$0xff]
    %v899 = vld [vmem:[#allocation8 + $0x330] sm:$0xff]
    %v900 = vld [vmem:[#allocation8 + $0x338] sm:$0xff]
    %v901 = vld [vmem:[#allocation8 + $0x340] sm:$0xff]
    %v902 = vld [vmem:[#allocation8 + $0x348] sm:$0xff]
    %v903 = vld [vmem:[#allocation8 + $0x350] sm:$0xff]
    %v904 = vld [vmem:[#allocation8 + $0x358] sm:$0xff]
    %v905 = vld [vmem:[#allocation8 + $0x360] sm:$0xff]
    %v906 = vld [vmem:[#allocation8 + $0x368] sm:$0xff]
    %v907 = vld [vmem:[#allocation8 + $0x370] sm:$0xff]
    %v908 = vld [vmem:[#allocation8 + $0x378] sm:$0xff]
    %v909 = vld [vmem:[#allocation8 + $0x380] sm:$0xff]
    %v910 = vld [vmem:[#allocation8 + $0x388] sm:$0xff]
    %v911 = vld [vmem:[#allocation8 + $0x390] sm:$0xff]
    %v912 = vld [vmem:[#allocation8 + $0x398] sm:$0xff]
    %v913 = vld [vmem:[#allocation8 + $0x3a0] sm:$0xff]
    %v914 = vld [vmem:[#allocation8 + $0x3a8] sm:$0xff]
    %v915 = vld [vmem:[#allocation8 + $0x3b0] sm:$0xff]
    %v916 = vld [vmem:[#allocation8 + $0x3b8] sm:$0xff]
    %v917 = vld [vmem:[#allocation8 + $0x3c0] sm:$0xff]
    %v918 = vld [vmem:[#allocation8 + $0x3c8] sm:$0xff]
    %v919 = vld [vmem:[#allocation8 + $0x3d0] sm:$0xff]
    %v920 = vld [vmem:[#allocation8 + $0x3d8] sm:$0xff]
    %v921 = vld [vmem:[#allocation8 + $0x3e0] sm:$0xff]
    %v922 = vld [vmem:[#allocation8 + $0x3e8] sm:$0xff]
    %v923 = vld [vmem:[#allocation8 + $0x3f0] sm:$0xff]
    %v924 = vld [vmem:[#allocation8 + $0x3f8] sm:$0xff]
    %v925 = vld [vmem:[#allocation8 + $0x400] sm:$0xff]
    %v926 = vld [vmem:[#allocation8 + $0x408] sm:$0xff]
    %v927 = vld [vmem:[#allocation8 + $0x410] sm:$0xff]
    %v928 = vld [vmem:[#allocation8 + $0x418] sm:$0xff]
    %v929 = vld [vmem:[#allocation8 + $0x420] sm:$0xff]
    %v930 = vld [vmem:[#allocation8 + $0x428] sm:$0xff]
    %v931 = vld [vmem:[#allocation8 + $0x430] sm:$0xff]
    %v932 = vld [vmem:[#allocation8 + $0x438] sm:$0xff]
    %v933 = vld [vmem:[#allocation8 + $0x440] sm:$0xff]
    %v934 = vld [vmem:[#allocation8 + $0x448] sm:$0xff]
    %v935 = vld [vmem:[#allocation8 + $0x450] sm:$0xff]
    %v936 = vld [vmem:[#allocation8 + $0x458] sm:$0xff]
    %v937 = vld [vmem:[#allocation8 + $0x460] sm:$0xff]
    %v938 = vld [vmem:[#allocation8 + $0x468] sm:$0xff]
    %v939 = vld [vmem:[#allocation8 + $0x470] sm:$0xff]
    %v940 = vld [vmem:[#allocation8 + $0x478] sm:$0xff]
    %v941 = vld [vmem:[#allocation8 + $0x480] sm:$0xff]
    %v942 = vld [vmem:[#allocation8 + $0x488] sm:$0xff]
    %v943 = vld [vmem:[#allocation8 + $0x490] sm:$0xff]
    %v944 = vld [vmem:[#allocation8 + $0x498] sm:$0xff]
    %v945 = vld [vmem:[#allocation8 + $0x4a0] sm:$0xff]
    %v946 = vld [vmem:[#allocation8 + $0x4a8] sm:$0xff]
    %v947 = vld [vmem:[#allocation8 + $0x4b0] sm:$0xff]
    %v948 = vld [vmem:[#allocation8 + $0x4b8] sm:$0xff]
    %v949 = vld [vmem:[#allocation8 + $0x4c0] sm:$0xff]
    %v950 = vld [vmem:[#allocation8 + $0x4c8] sm:$0xff]
    %v951 = vld [vmem:[#allocation8 + $0x4d0] sm:$0xff]
    %v952 = vld [vmem:[#allocation8 + $0x4d8] sm:$0xff]
    %v953 = vld [vmem:[#allocation8 + $0x4e0] sm:$0xff]
    %v954 = vld [vmem:[#allocation8 + $0x4e8] sm:$0xff]
    %v955 = vld [vmem:[#allocation8 + $0x4f0] sm:$0xff]
    %v956 = vld [vmem:[#allocation8 + $0x4f8] sm:$0xff]
    %v957 = vld [vmem:[#allocation8 + $0x500] sm:$0xff]
    %v958 = vld [vmem:[#allocation8 + $0x508] sm:$0xff]
    %v959 = vld [vmem:[#allocation8 + $0x510] sm:$0xff]
    %v960 = vld [vmem:[#allocation8 + $0x518] sm:$0xff]
    %v961 = vld [vmem:[#allocation8 + $0x520] sm:$0xff]
    %v962 = vld [vmem:[#allocation8 + $0x528] sm:$0xff]
    %v963 = vld [vmem:[#allocation8 + $0x530] sm:$0xff]
    %v964 = vld [vmem:[#allocation8 + $0x538] sm:$0xff]
    %v965 = vld [vmem:[#allocation8 + $0x540] sm:$0xff]
    %v966 = vld [vmem:[#allocation8 + $0x548] sm:$0xff]
    %v967 = vld [vmem:[#allocation8 + $0x550] sm:$0xff]
    %v968 = vld [vmem:[#allocation8 + $0x558] sm:$0xff]
    %v969 = vld [vmem:[#allocation8 + $0x560] sm:$0xff]
    %v970 = vld [vmem:[#allocation8 + $0x568] sm:$0xff]
    %v971 = vld [vmem:[#allocation8 + $0x570] sm:$0xff]
    %v972 = vld [vmem:[#allocation8 + $0x578] sm:$0xff]
    %v973 = vld [vmem:[#allocation8 + $0x580] sm:$0xff]
    %v974 = vld [vmem:[#allocation8 + $0x588] sm:$0xff]
    %v975 = vld [vmem:[#allocation8 + $0x590] sm:$0xff]
    %v976 = vld [vmem:[#allocation8 + $0x598] sm:$0xff]
    %v977 = vld [vmem:[#allocation8 + $0x5a0] sm:$0xff]
    %v978 = vld [vmem:[#allocation8 + $0x5a8] sm:$0xff]
    %v979 = vld [vmem:[#allocation8 + $0x5b0] sm:$0xff]
    %v980 = vld [vmem:[#allocation8 + $0x5b8] sm:$0xff]
    %v981 = vld [vmem:[#allocation8 + $0x5c0] sm:$0xff]
    %v982 = vld [vmem:[#allocation8 + $0x5c8] sm:$0xff]
    %v983 = vld [vmem:[#allocation8 + $0x5d0] sm:$0xff]
    %v984 = vld [vmem:[#allocation8 + $0x5d8] sm:$0xff]
    %v985 = vld [vmem:[#allocation8 + $0x5e0] sm:$0xff]
    %v986 = vld [vmem:[#allocation8 + $0x5e8] sm:$0xff]
    %v987 = vld [vmem:[#allocation8 + $0x5f0] sm:$0xff]
    %v988 = vld [vmem:[#allocation8 + $0x5f8] sm:$0xff]
    %v989 = vld [vmem:[#allocation8 + $0x600] sm:$0xff]
    %v990 = vld [vmem:[#allocation8 + $0x608] sm:$0xff]
    %v991 = vld [vmem:[#allocation8 + $0x610] sm:$0xff]
    %v992 = vld [vmem:[#allocation8 + $0x618] sm:$0xff]
    %v993 = vld [vmem:[#allocation8 + $0x620] sm:$0xff]
    %v994 = vld [vmem:[#allocation8 + $0x628] sm:$0xff]
    %v995 = vld [vmem:[#allocation8 + $0x630] sm:$0xff]
    %v996 = vld [vmem:[#allocation8 + $0x638] sm:$0xff]
    %v997 = vld [vmem:[#allocation8 + $0x640] sm:$0xff]
    %v998 = vld [vmem:[#allocation8 + $0x648] sm:$0xff]
    %v999 = vld [vmem:[#allocation8 + $0x650] sm:$0xff]
    %v1000 = vld [vmem:[#allocation8 + $0x658] sm:$0xff]
    %v1001 = vld [vmem:[#allocation8 + $0x660] sm:$0xff]
    %v1002 = vld [vmem:[#allocation8 + $0x668] sm:$0xff]
    %v1003 = vld [vmem:[#allocation8 + $0x670] sm:$0xff]
    %v1004 = vld [vmem:[#allocation8 + $0x678] sm:$0xff]
    %v1005 = vld [vmem:[#allocation8 + $0x680] sm:$0xff]
    %v1006 = vld [vmem:[#allocation8 + $0x688] sm:$0xff]
    %v1007 = vld [vmem:[#allocation8 + $0x690] sm:$0xff]
    %v1008 = vld [vmem:[#allocation8 + $0x698] sm:$0xff]
    %v1009 = vld [vmem:[#allocation8 + $0x6a0] sm:$0xff]
    %v1010 = vld [vmem:[#allocation8 + $0x6a8] sm:$0xff]
    %v1011 = vld [vmem:[#allocation8 + $0x6b0] sm:$0xff]
    %v1012 = vld [vmem:[#allocation8 + $0x6b8] sm:$0xff]
    %v1013 = vld [vmem:[#allocation8 + $0x6c0] sm:$0xff]
    %v1014 = vld [vmem:[#allocation8 + $0x6c8] sm:$0xff]
    %v1015 = vld [vmem:[#allocation8 + $0x6d0] sm:$0xff]
    %v1016 = vld [vmem:[#allocation8 + $0x6d8] sm:$0xff]
    %v1017 = vld [vmem:[#allocation8 + $0x6e0] sm:$0xff]
    %v1018 = vld [vmem:[#allocation8 + $0x6e8] sm:$0xff]
    %v1019 = vld [vmem:[#allocation8 + $0x6f0] sm:$0xff]
    %v1020 = vld [vmem:[#allocation8 + $0x6f8] sm:$0xff]
    %v1021 = vld [vmem:[#allocation8 + $0x700] sm:$0xff]
    %v1022 = vld [vmem:[#allocation8 + $0x708] sm:$0xff]
    %v1023 = vld [vmem:[#allocation8 + $0x710] sm:$0xff]
    %v1024 = vld [vmem:[#allocation8 + $0x718] sm:$0xff]
    %v1025 = vld [vmem:[#allocation8 + $0x720] sm:$0xff]
    %v1026 = vld [vmem:[#allocation8 + $0x728] sm:$0xff]
    %v1027 = vld [vmem:[#allocation8 + $0x730] sm:$0xff]
    %v1028 = vld [vmem:[#allocation8 + $0x738] sm:$0xff]
    %v1029 = vld [vmem:[#allocation8 + $0x740] sm:$0xff]
    %v1030 = vld [vmem:[#allocation8 + $0x748] sm:$0xff]
    %v1031 = vld [vmem:[#allocation8 + $0x750] sm:$0xff]
    %v1032 = vld [vmem:[#allocation8 + $0x758] sm:$0xff]
    %v1033 = vld [vmem:[#allocation8 + $0x760] sm:$0xff]
    %v1034 = vld [vmem:[#allocation8 + $0x768] sm:$0xff]
    %v1035 = vld [vmem:[#allocation8 + $0x770] sm:$0xff]
    %v1036 = vld [vmem:[#allocation8 + $0x778] sm:$0xff]
    %v1037 = vld [vmem:[#allocation8 + $0x780] sm:$0xff]
    %v1038 = vld [vmem:[#allocation8 + $0x788] sm:$0xff]
    %v1039 = vld [vmem:[#allocation8 + $0x790] sm:$0xff]
    %v1040 = vld [vmem:[#allocation8 + $0x798] sm:$0xff]
    %v1041 = vld [vmem:[#allocation8 + $0x7a0] sm:$0xff]
    %v1042 = vld [vmem:[#allocation8 + $0x7a8] sm:$0xff]
    %v1043 = vld [vmem:[#allocation8 + $0x7b0] sm:$0xff]
    %v1044 = vld [vmem:[#allocation8 + $0x7b8] sm:$0xff]
    %v1045 = vld [vmem:[#allocation8 + $0x7c0] sm:$0xff]
    %v1046 = vld [vmem:[#allocation8 + $0x7c8] sm:$0xff]
    %v1047 = vld [vmem:[#allocation8 + $0x7d0] sm:$0xff]
    %v1048 = vld [vmem:[#allocation8 + $0x7d8] sm:$0xff]
    %v1049 = vld [vmem:[#allocation8 + $0x7e0] sm:$0xff]
    %v1050 = vld [vmem:[#allocation8 + $0x7e8] sm:$0xff]
    %v1051 = vld [vmem:[#allocation8 + $0x7f0] sm:$0xff]
    %v1052 = vld [vmem:[#allocation8 + $0x7f8] sm:$0xff]
    %v1053 = vld [vmem:[%s4] sm:$0xf]
    %v1055 = vlaneseq
    %v1056 = vshrl.u32 %v1055, 7
    %v1057 = vsub.s32 0, %v1056
    %v1058 = vrot.slane %v1053, %v1057
    %v1059 = vlaneseq
    %v1060 = vshrl.u32 %v1059, 7
    %v1061 = vsub.s32 1, %v1060
    %v1062 = vrot.slane %v1053, %v1061
    %v1063 = vlaneseq
    %v1064 = vshrl.u32 %v1063, 7
    %v1065 = vsub.s32 2, %v1064
    %v1066 = vrot.slane %v1053, %v1065
    %v1067 = vlaneseq
    %v1068 = vshrl.u32 %v1067, 7
    %v1069 = vsub.s32 3, %v1068
    %v1070 = vrot.slane %v1053, %v1069
    %v1331 = vunpack.c.l.b16 %v797
    %v1332 = vunpack.c.h.b16 %v797
    %v1333 = vunpack.c.l.b16 %v798
    %v1334 = vunpack.c.h.b16 %v798
    %v1335 = vunpack.c.l.b16 %v799
    %v1336 = vunpack.c.h.b16 %v799
    %v1337 = vunpack.c.l.b16 %v800
    %v1338 = vunpack.c.h.b16 %v800
    %v1339 = vunpack.c.l.b16 %v801
    %v1340 = vunpack.c.h.b16 %v801
    %v1341 = vunpack.c.l.b16 %v802
    %v1342 = vunpack.c.h.b16 %v802
    %v1343 = vunpack.c.l.b16 %v803
    %v1344 = vunpack.c.h.b16 %v803
    %v1345 = vunpack.c.l.b16 %v804
    %v1346 = vunpack.c.h.b16 %v804
    %v1347 = vunpack.c.l.b16 %v805
    %v1348 = vunpack.c.h.b16 %v805
    %v1349 = vunpack.c.l.b16 %v806
    %v1350 = vunpack.c.h.b16 %v806
    %v1351 = vunpack.c.l.b16 %v807
    %v1352 = vunpack.c.h.b16 %v807
    %v1353 = vunpack.c.l.b16 %v808
    %v1354 = vunpack.c.h.b16 %v808
    %v1355 = vunpack.c.l.b16 %v809
    %v1356 = vunpack.c.h.b16 %v809
    %v1357 = vunpack.c.l.b16 %v810
    %v1358 = vunpack.c.h.b16 %v810
    %v1359 = vunpack.c.l.b16 %v811
    %v1360 = vunpack.c.h.b16 %v811
    %v1361 = vunpack.c.l.b16 %v812
    %v1362 = vunpack.c.h.b16 %v812
    %v1363 = vunpack.c.l.b16 %v813
    %v1364 = vunpack.c.h.b16 %v813
    %v1365 = vunpack.c.l.b16 %v814
    %v1366 = vunpack.c.h.b16 %v814
    %v1367 = vunpack.c.l.b16 %v815
    %v1368 = vunpack.c.h.b16 %v815
    %v1369 = vunpack.c.l.b16 %v816
    %v1370 = vunpack.c.h.b16 %v816
    %v1371 = vunpack.c.l.b16 %v817
    %v1372 = vunpack.c.h.b16 %v817
    %v1373 = vunpack.c.l.b16 %v818
    %v1374 = vunpack.c.h.b16 %v818
    %v1375 = vunpack.c.l.b16 %v819
    %v1376 = vunpack.c.h.b16 %v819
    %v1377 = vunpack.c.l.b16 %v820
    %v1378 = vunpack.c.h.b16 %v820
    %v1379 = vunpack.c.l.b16 %v821
    %v1380 = vunpack.c.h.b16 %v821
    %v1381 = vunpack.c.l.b16 %v822
    %v1382 = vunpack.c.h.b16 %v822
    %v1383 = vunpack.c.l.b16 %v823
    %v1384 = vunpack.c.h.b16 %v823
    %v1385 = vunpack.c.l.b16 %v824
    %v1386 = vunpack.c.h.b16 %v824
    %v1387 = vunpack.c.l.b16 %v825
    %v1388 = vunpack.c.h.b16 %v825
    %v1389 = vunpack.c.l.b16 %v826
    %v1390 = vunpack.c.h.b16 %v826
    %v1391 = vunpack.c.l.b16 %v827
    %v1392 = vunpack.c.h.b16 %v827
    %v1393 = vunpack.c.l.b16 %v828
    %v1394 = vunpack.c.h.b16 %v828
    %v1395 = vunpack.c.l.b16 %v829
    %v1396 = vunpack.c.h.b16 %v829
    %v1397 = vunpack.c.l.b16 %v830
    %v1398 = vunpack.c.h.b16 %v830
    %v1399 = vunpack.c.l.b16 %v831
    %v1400 = vunpack.c.h.b16 %v831
    %v1401 = vunpack.c.l.b16 %v832
    %v1402 = vunpack.c.h.b16 %v832
    %v1403 = vunpack.c.l.b16 %v833
    %v1404 = vunpack.c.h.b16 %v833
    %v1405 = vunpack.c.l.b16 %v834
    %v1406 = vunpack.c.h.b16 %v834
    %v1407 = vunpack.c.l.b16 %v835
    %v1408 = vunpack.c.h.b16 %v835
    %v1409 = vunpack.c.l.b16 %v836
    %v1410 = vunpack.c.h.b16 %v836
    %v1411 = vunpack.c.l.b16 %v837
    %v1412 = vunpack.c.h.b16 %v837
    %v1413 = vunpack.c.l.b16 %v838
    %v1414 = vunpack.c.h.b16 %v838
    %v1415 = vunpack.c.l.b16 %v839
    %v1416 = vunpack.c.h.b16 %v839
    %v1417 = vunpack.c.l.b16 %v840
    %v1418 = vunpack.c.h.b16 %v840
    %v1419 = vunpack.c.l.b16 %v841
    %v1420 = vunpack.c.h.b16 %v841
    %v1421 = vunpack.c.l.b16 %v842
    %v1422 = vunpack.c.h.b16 %v842
    %v1423 = vunpack.c.l.b16 %v843
    %v1424 = vunpack.c.h.b16 %v843
    %v1425 = vunpack.c.l.b16 %v844
    %v1426 = vunpack.c.h.b16 %v844
    %v1427 = vunpack.c.l.b16 %v845
    %v1428 = vunpack.c.h.b16 %v845
    %v1429 = vunpack.c.l.b16 %v846
    %v1430 = vunpack.c.h.b16 %v846
    %v1431 = vunpack.c.l.b16 %v847
    %v1432 = vunpack.c.h.b16 %v847
    %v1433 = vunpack.c.l.b16 %v848
    %v1434 = vunpack.c.h.b16 %v848
    %v1435 = vunpack.c.l.b16 %v849
    %v1436 = vunpack.c.h.b16 %v849
    %v1437 = vunpack.c.l.b16 %v850
    %v1438 = vunpack.c.h.b16 %v850
    %v1439 = vunpack.c.l.b16 %v851
    %v1440 = vunpack.c.h.b16 %v851
    %v1441 = vunpack.c.l.b16 %v852
    %v1442 = vunpack.c.h.b16 %v852
    %v1443 = vunpack.c.l.b16 %v853
    %v1444 = vunpack.c.h.b16 %v853
    %v1445 = vunpack.c.l.b16 %v854
    %v1446 = vunpack.c.h.b16 %v854
    %v1447 = vunpack.c.l.b16 %v855
    %v1448 = vunpack.c.h.b16 %v855
    %v1449 = vunpack.c.l.b16 %v856
    %v1450 = vunpack.c.h.b16 %v856
    %v1451 = vunpack.c.l.b16 %v857
    %v1452 = vunpack.c.h.b16 %v857
    %v1453 = vunpack.c.l.b16 %v858
    %v1454 = vunpack.c.h.b16 %v858
    %v1455 = vunpack.c.l.b16 %v859
    %v1456 = vunpack.c.h.b16 %v859
    %v1457 = vunpack.c.l.b16 %v860
    %v1458 = vunpack.c.h.b16 %v860
    %v1459 = vunpack.c.l.b16 %v861
    %v1460 = vunpack.c.h.b16 %v861
    %v1461 = vunpack.c.l.b16 %v862
    %v1462 = vunpack.c.h.b16 %v862
    %v1463 = vunpack.c.l.b16 %v863
    %v1464 = vunpack.c.h.b16 %v863
    %v1465 = vunpack.c.l.b16 %v864
    %v1466 = vunpack.c.h.b16 %v864
    %v1467 = vunpack.c.l.b16 %v865
    %v1468 = vunpack.c.h.b16 %v865
    %v1469 = vunpack.c.l.b16 %v866
    %v1470 = vunpack.c.h.b16 %v866
    %v1471 = vunpack.c.l.b16 %v867
    %v1472 = vunpack.c.h.b16 %v867
    %v1473 = vunpack.c.l.b16 %v868
    %v1474 = vunpack.c.h.b16 %v868
    %v1475 = vunpack.c.l.b16 %v869
    %v1476 = vunpack.c.h.b16 %v869
    %v1477 = vunpack.c.l.b16 %v870
    %v1478 = vunpack.c.h.b16 %v870
    %v1479 = vunpack.c.l.b16 %v871
    %v1480 = vunpack.c.h.b16 %v871
    %v1481 = vunpack.c.l.b16 %v872
    %v1482 = vunpack.c.h.b16 %v872
    %v1483 = vunpack.c.l.b16 %v873
    %v1484 = vunpack.c.h.b16 %v873
    %v1485 = vunpack.c.l.b16 %v874
    %v1486 = vunpack.c.h.b16 %v874
    %v1487 = vunpack.c.l.b16 %v875
    %v1488 = vunpack.c.h.b16 %v875
    %v1489 = vunpack.c.l.b16 %v876
    %v1490 = vunpack.c.h.b16 %v876
    %v1491 = vunpack.c.l.b16 %v877
    %v1492 = vunpack.c.h.b16 %v877
    %v1493 = vunpack.c.l.b16 %v878
    %v1494 = vunpack.c.h.b16 %v878
    %v1495 = vunpack.c.l.b16 %v879
    %v1496 = vunpack.c.h.b16 %v879
    %v1497 = vunpack.c.l.b16 %v880
    %v1498 = vunpack.c.h.b16 %v880
    %v1499 = vunpack.c.l.b16 %v881
    %v1500 = vunpack.c.h.b16 %v881
    %v1501 = vunpack.c.l.b16 %v882
    %v1502 = vunpack.c.h.b16 %v882
    %v1503 = vunpack.c.l.b16 %v883
    %v1504 = vunpack.c.h.b16 %v883
    %v1505 = vunpack.c.l.b16 %v884
    %v1506 = vunpack.c.h.b16 %v884
    %v1507 = vunpack.c.l.b16 %v885
    %v1508 = vunpack.c.h.b16 %v885
    %v1509 = vunpack.c.l.b16 %v886
    %v1510 = vunpack.c.h.b16 %v886
    %v1511 = vunpack.c.l.b16 %v887
    %v1512 = vunpack.c.h.b16 %v887
    %v1513 = vunpack.c.l.b16 %v888
    %v1514 = vunpack.c.h.b16 %v888
    %v1515 = vunpack.c.l.b16 %v889
    %v1516 = vunpack.c.h.b16 %v889
    %v1517 = vunpack.c.l.b16 %v890
    %v1518 = vunpack.c.h.b16 %v890
    %v1519 = vunpack.c.l.b16 %v891
    %v1520 = vunpack.c.h.b16 %v891
    %v1521 = vunpack.c.l.b16 %v892
    %v1522 = vunpack.c.h.b16 %v892
    %v1523 = vunpack.c.l.b16 %v893
    %v1524 = vunpack.c.h.b16 %v893
    %v1525 = vunpack.c.l.b16 %v894
    %v1526 = vunpack.c.h.b16 %v894
    %v1527 = vunpack.c.l.b16 %v895
    %v1528 = vunpack.c.h.b16 %v895
    %v1529 = vunpack.c.l.b16 %v896
    %v1530 = vunpack.c.h.b16 %v896
    %v1531 = vunpack.c.l.b16 %v897
    %v1532 = vunpack.c.h.b16 %v897
    %v1533 = vunpack.c.l.b16 %v898
    %v1534 = vunpack.c.h.b16 %v898
    %v1535 = vunpack.c.l.b16 %v899
    %v1536 = vunpack.c.h.b16 %v899
    %v1537 = vunpack.c.l.b16 %v900
    %v1538 = vunpack.c.h.b16 %v900
    %v1539 = vunpack.c.l.b16 %v901
    %v1540 = vunpack.c.h.b16 %v901
    %v1541 = vunpack.c.l.b16 %v902
    %v1542 = vunpack.c.h.b16 %v902
    %v1543 = vunpack.c.l.b16 %v903
    %v1544 = vunpack.c.h.b16 %v903
    %v1545 = vunpack.c.l.b16 %v904
    %v1546 = vunpack.c.h.b16 %v904
    %v1547 = vunpack.c.l.b16 %v905
    %v1548 = vunpack.c.h.b16 %v905
    %v1549 = vunpack.c.l.b16 %v906
    %v1550 = vunpack.c.h.b16 %v906
    %v1551 = vunpack.c.l.b16 %v907
    %v1552 = vunpack.c.h.b16 %v907
    %v1553 = vunpack.c.l.b16 %v908
    %v1554 = vunpack.c.h.b16 %v908
    %v1555 = vunpack.c.l.b16 %v909
    %v1556 = vunpack.c.h.b16 %v909
    %v1557 = vunpack.c.l.b16 %v910
    %v1558 = vunpack.c.h.b16 %v910
    %v1559 = vunpack.c.l.b16 %v911
    %v1560 = vunpack.c.h.b16 %v911
    %v1561 = vunpack.c.l.b16 %v912
    %v1562 = vunpack.c.h.b16 %v912
    %v1563 = vunpack.c.l.b16 %v913
    %v1564 = vunpack.c.h.b16 %v913
    %v1565 = vunpack.c.l.b16 %v914
    %v1566 = vunpack.c.h.b16 %v914
    %v1567 = vunpack.c.l.b16 %v915
    %v1568 = vunpack.c.h.b16 %v915
    %v1569 = vunpack.c.l.b16 %v916
    %v1570 = vunpack.c.h.b16 %v916
    %v1571 = vunpack.c.l.b16 %v917
    %v1572 = vunpack.c.h.b16 %v917
    %v1573 = vunpack.c.l.b16 %v918
    %v1574 = vunpack.c.h.b16 %v918
    %v1575 = vunpack.c.l.b16 %v919
    %v1576 = vunpack.c.h.b16 %v919
    %v1577 = vunpack.c.l.b16 %v920
    %v1578 = vunpack.c.h.b16 %v920
    %v1579 = vunpack.c.l.b16 %v921
    %v1580 = vunpack.c.h.b16 %v921
    %v1581 = vunpack.c.l.b16 %v922
    %v1582 = vunpack.c.h.b16 %v922
    %v1583 = vunpack.c.l.b16 %v923
    %v1584 = vunpack.c.h.b16 %v923
    %v1585 = vunpack.c.l.b16 %v924
    %v1586 = vunpack.c.h.b16 %v924
    %v1587 = vunpack.c.l.b16 %v925
    %v1588 = vunpack.c.h.b16 %v925
    %v1589 = vunpack.c.l.b16 %v926
    %v1590 = vunpack.c.h.b16 %v926
    %v1591 = vunpack.c.l.b16 %v927
    %v1592 = vunpack.c.h.b16 %v927
    %v1593 = vunpack.c.l.b16 %v928
    %v1594 = vunpack.c.h.b16 %v928
    %v1595 = vunpack.c.l.b16 %v929
    %v1596 = vunpack.c.h.b16 %v929
    %v1597 = vunpack.c.l.b16 %v930
    %v1598 = vunpack.c.h.b16 %v930
    %v1599 = vunpack.c.l.b16 %v931
    %v1600 = vunpack.c.h.b16 %v931
    %v1601 = vunpack.c.l.b16 %v932
    %v1602 = vunpack.c.h.b16 %v932
    %v1603 = vunpack.c.l.b16 %v933
    %v1604 = vunpack.c.h.b16 %v933
    %v1605 = vunpack.c.l.b16 %v934
    %v1606 = vunpack.c.h.b16 %v934
    %v1607 = vunpack.c.l.b16 %v935
    %v1608 = vunpack.c.h.b16 %v935
    %v1609 = vunpack.c.l.b16 %v936
    %v1610 = vunpack.c.h.b16 %v936
    %v1611 = vunpack.c.l.b16 %v937
    %v1612 = vunpack.c.h.b16 %v937
    %v1613 = vunpack.c.l.b16 %v938
    %v1614 = vunpack.c.h.b16 %v938
    %v1615 = vunpack.c.l.b16 %v939
    %v1616 = vunpack.c.h.b16 %v939
    %v1617 = vunpack.c.l.b16 %v940
    %v1618 = vunpack.c.h.b16 %v940
    %v1619 = vunpack.c.l.b16 %v941
    %v1620 = vunpack.c.h.b16 %v941
    %v1621 = vunpack.c.l.b16 %v942
    %v1622 = vunpack.c.h.b16 %v942
    %v1623 = vunpack.c.l.b16 %v943
    %v1624 = vunpack.c.h.b16 %v943
    %v1625 = vunpack.c.l.b16 %v944
    %v1626 = vunpack.c.h.b16 %v944
    %v1627 = vunpack.c.l.b16 %v945
    %v1628 = vunpack.c.h.b16 %v945
    %v1629 = vunpack.c.l.b16 %v946
    %v1630 = vunpack.c.h.b16 %v946
    %v1631 = vunpack.c.l.b16 %v947
    %v1632 = vunpack.c.h.b16 %v947
    %v1633 = vunpack.c.l.b16 %v948
    %v1634 = vunpack.c.h.b16 %v948
    %v1635 = vunpack.c.l.b16 %v949
    %v1636 = vunpack.c.h.b16 %v949
    %v1637 = vunpack.c.l.b16 %v950
    %v1638 = vunpack.c.h.b16 %v950
    %v1639 = vunpack.c.l.b16 %v951
    %v1640 = vunpack.c.h.b16 %v951
    %v1641 = vunpack.c.l.b16 %v952
    %v1642 = vunpack.c.h.b16 %v952
    %v1643 = vunpack.c.l.b16 %v953
    %v1644 = vunpack.c.h.b16 %v953
    %v1645 = vunpack.c.l.b16 %v954
    %v1646 = vunpack.c.h.b16 %v954
    %v1647 = vunpack.c.l.b16 %v955
    %v1648 = vunpack.c.h.b16 %v955
    %v1649 = vunpack.c.l.b16 %v956
    %v1650 = vunpack.c.h.b16 %v956
    %v1651 = vunpack.c.l.b16 %v957
    %v1652 = vunpack.c.h.b16 %v957
    %v1653 = vunpack.c.l.b16 %v958
    %v1654 = vunpack.c.h.b16 %v958
    %v1655 = vunpack.c.l.b16 %v959
    %v1656 = vunpack.c.h.b16 %v959
    %v1657 = vunpack.c.l.b16 %v960
    %v1658 = vunpack.c.h.b16 %v960
    %v1659 = vunpack.c.l.b16 %v961
    %v1660 = vunpack.c.h.b16 %v961
    %v1661 = vunpack.c.l.b16 %v962
    %v1662 = vunpack.c.h.b16 %v962
    %v1663 = vunpack.c.l.b16 %v963
    %v1664 = vunpack.c.h.b16 %v963
    %v1665 = vunpack.c.l.b16 %v964
    %v1666 = vunpack.c.h.b16 %v964
    %v1667 = vunpack.c.l.b16 %v965
    %v1668 = vunpack.c.h.b16 %v965
    %v1669 = vunpack.c.l.b16 %v966
    %v1670 = vunpack.c.h.b16 %v966
    %v1671 = vunpack.c.l.b16 %v967
    %v1672 = vunpack.c.h.b16 %v967
    %v1673 = vunpack.c.l.b16 %v968
    %v1674 = vunpack.c.h.b16 %v968
    %v1675 = vunpack.c.l.b16 %v969
    %v1676 = vunpack.c.h.b16 %v969
    %v1677 = vunpack.c.l.b16 %v970
    %v1678 = vunpack.c.h.b16 %v970
    %v1679 = vunpack.c.l.b16 %v971
    %v1680 = vunpack.c.h.b16 %v971
    %v1681 = vunpack.c.l.b16 %v972
    %v1682 = vunpack.c.h.b16 %v972
    %v1683 = vunpack.c.l.b16 %v973
    %v1684 = vunpack.c.h.b16 %v973
    %v1685 = vunpack.c.l.b16 %v974
    %v1686 = vunpack.c.h.b16 %v974
    %v1687 = vunpack.c.l.b16 %v975
    %v1688 = vunpack.c.h.b16 %v975
    %v1689 = vunpack.c.l.b16 %v976
    %v1690 = vunpack.c.h.b16 %v976
    %v1691 = vunpack.c.l.b16 %v977
    %v1692 = vunpack.c.h.b16 %v977
    %v1693 = vunpack.c.l.b16 %v978
    %v1694 = vunpack.c.h.b16 %v978
    %v1695 = vunpack.c.l.b16 %v979
    %v1696 = vunpack.c.h.b16 %v979
    %v1697 = vunpack.c.l.b16 %v980
    %v1698 = vunpack.c.h.b16 %v980
    %v1699 = vunpack.c.l.b16 %v981
    %v1700 = vunpack.c.h.b16 %v981
    %v1701 = vunpack.c.l.b16 %v982
    %v1702 = vunpack.c.h.b16 %v982
    %v1703 = vunpack.c.l.b16 %v983
    %v1704 = vunpack.c.h.b16 %v983
    %v1705 = vunpack.c.l.b16 %v984
    %v1706 = vunpack.c.h.b16 %v984
    %v1707 = vunpack.c.l.b16 %v985
    %v1708 = vunpack.c.h.b16 %v985
    %v1709 = vunpack.c.l.b16 %v986
    %v1710 = vunpack.c.h.b16 %v986
    %v1711 = vunpack.c.l.b16 %v987
    %v1712 = vunpack.c.h.b16 %v987
    %v1713 = vunpack.c.l.b16 %v988
    %v1714 = vunpack.c.h.b16 %v988
    %v1715 = vunpack.c.l.b16 %v989
    %v1716 = vunpack.c.h.b16 %v989
    %v1717 = vunpack.c.l.b16 %v990
    %v1718 = vunpack.c.h.b16 %v990
    %v1719 = vunpack.c.l.b16 %v991
    %v1720 = vunpack.c.h.b16 %v991
    %v1721 = vunpack.c.l.b16 %v992
    %v1722 = vunpack.c.h.b16 %v992
    %v1723 = vunpack.c.l.b16 %v993
    %v1724 = vunpack.c.h.b16 %v993
    %v1725 = vunpack.c.l.b16 %v994
    %v1726 = vunpack.c.h.b16 %v994
    %v1727 = vunpack.c.l.b16 %v995
    %v1728 = vunpack.c.h.b16 %v995
    %v1729 = vunpack.c.l.b16 %v996
    %v1730 = vunpack.c.h.b16 %v996
    %v1731 = vunpack.c.l.b16 %v997
    %v1732 = vunpack.c.h.b16 %v997
    %v1733 = vunpack.c.l.b16 %v998
    %v1734 = vunpack.c.h.b16 %v998
    %v1735 = vunpack.c.l.b16 %v999
    %v1736 = vunpack.c.h.b16 %v999
    %v1737 = vunpack.c.l.b16 %v1000
    %v1738 = vunpack.c.h.b16 %v1000
    %v1739 = vunpack.c.l.b16 %v1001
    %v1740 = vunpack.c.h.b16 %v1001
    %v1741 = vunpack.c.l.b16 %v1002
    %v1742 = vunpack.c.h.b16 %v1002
    %v1743 = vunpack.c.l.b16 %v1003
    %v1744 = vunpack.c.h.b16 %v1003
    %v1745 = vunpack.c.l.b16 %v1004
    %v1746 = vunpack.c.h.b16 %v1004
    %v1747 = vunpack.c.l.b16 %v1005
    %v1748 = vunpack.c.h.b16 %v1005
    %v1749 = vunpack.c.l.b16 %v1006
    %v1750 = vunpack.c.h.b16 %v1006
    %v1751 = vunpack.c.l.b16 %v1007
    %v1752 = vunpack.c.h.b16 %v1007
    %v1753 = vunpack.c.l.b16 %v1008
    %v1754 = vunpack.c.h.b16 %v1008
    %v1755 = vunpack.c.l.b16 %v1009
    %v1756 = vunpack.c.h.b16 %v1009
    %v1757 = vunpack.c.l.b16 %v1010
    %v1758 = vunpack.c.h.b16 %v1010
    %v1759 = vunpack.c.l.b16 %v1011
    %v1760 = vunpack.c.h.b16 %v1011
    %v1761 = vunpack.c.l.b16 %v1012
    %v1762 = vunpack.c.h.b16 %v1012
    %v1763 = vunpack.c.l.b16 %v1013
    %v1764 = vunpack.c.h.b16 %v1013
    %v1765 = vunpack.c.l.b16 %v1014
    %v1766 = vunpack.c.h.b16 %v1014
    %v1767 = vunpack.c.l.b16 %v1015
    %v1768 = vunpack.c.h.b16 %v1015
    %v1769 = vunpack.c.l.b16 %v1016
    %v1770 = vunpack.c.h.b16 %v1016
    %v1771 = vunpack.c.l.b16 %v1017
    %v1772 = vunpack.c.h.b16 %v1017
    %v1773 = vunpack.c.l.b16 %v1018
    %v1774 = vunpack.c.h.b16 %v1018
    %v1775 = vunpack.c.l.b16 %v1019
    %v1776 = vunpack.c.h.b16 %v1019
    %v1777 = vunpack.c.l.b16 %v1020
    %v1778 = vunpack.c.h.b16 %v1020
    %v1779 = vunpack.c.l.b16 %v1021
    %v1780 = vunpack.c.h.b16 %v1021
    %v1781 = vunpack.c.l.b16 %v1022
    %v1782 = vunpack.c.h.b16 %v1022
    %v1783 = vunpack.c.l.b16 %v1023
    %v1784 = vunpack.c.h.b16 %v1023
    %v1785 = vunpack.c.l.b16 %v1024
    %v1786 = vunpack.c.h.b16 %v1024
    %v1787 = vunpack.c.l.b16 %v1025
    %v1788 = vunpack.c.h.b16 %v1025
    %v1789 = vunpack.c.l.b16 %v1026
    %v1790 = vunpack.c.h.b16 %v1026
    %v1791 = vunpack.c.l.b16 %v1027
    %v1792 = vunpack.c.h.b16 %v1027
    %v1793 = vunpack.c.l.b16 %v1028
    %v1794 = vunpack.c.h.b16 %v1028
    %v1795 = vunpack.c.l.b16 %v1029
    %v1796 = vunpack.c.h.b16 %v1029
    %v1797 = vunpack.c.l.b16 %v1030
    %v1798 = vunpack.c.h.b16 %v1030
    %v1799 = vunpack.c.l.b16 %v1031
    %v1800 = vunpack.c.h.b16 %v1031
    %v1801 = vunpack.c.l.b16 %v1032
    %v1802 = vunpack.c.h.b16 %v1032
    %v1803 = vunpack.c.l.b16 %v1033
    %v1804 = vunpack.c.h.b16 %v1033
    %v1805 = vunpack.c.l.b16 %v1034
    %v1806 = vunpack.c.h.b16 %v1034
    %v1807 = vunpack.c.l.b16 %v1035
    %v1808 = vunpack.c.h.b16 %v1035
    %v1809 = vunpack.c.l.b16 %v1036
    %v1810 = vunpack.c.h.b16 %v1036
    %v1811 = vunpack.c.l.b16 %v1037
    %v1812 = vunpack.c.h.b16 %v1037
    %v1813 = vunpack.c.l.b16 %v1038
    %v1814 = vunpack.c.h.b16 %v1038
    %v1815 = vunpack.c.l.b16 %v1039
    %v1816 = vunpack.c.h.b16 %v1039
    %v1817 = vunpack.c.l.b16 %v1040
    %v1818 = vunpack.c.h.b16 %v1040
    %v1819 = vunpack.c.l.b16 %v1041
    %v1820 = vunpack.c.h.b16 %v1041
    %v1821 = vunpack.c.l.b16 %v1042
    %v1822 = vunpack.c.h.b16 %v1042
    %v1823 = vunpack.c.l.b16 %v1043
    %v1824 = vunpack.c.h.b16 %v1043
    %v1825 = vunpack.c.l.b16 %v1044
    %v1826 = vunpack.c.h.b16 %v1044
    %v1827 = vunpack.c.l.b16 %v1045
    %v1828 = vunpack.c.h.b16 %v1045
    %v1829 = vunpack.c.l.b16 %v1046
    %v1830 = vunpack.c.h.b16 %v1046
    %v1831 = vunpack.c.l.b16 %v1047
    %v1832 = vunpack.c.h.b16 %v1047
    %v1833 = vunpack.c.l.b16 %v1048
    %v1834 = vunpack.c.h.b16 %v1048
    %v1835 = vunpack.c.l.b16 %v1049
    %v1836 = vunpack.c.h.b16 %v1049
    %v1837 = vunpack.c.l.b16 %v1050
    %v1838 = vunpack.c.h.b16 %v1050
    %v1839 = vunpack.c.l.b16 %v1051
    %v1840 = vunpack.c.h.b16 %v1051
    %v1841 = vunpack.c.l.b16 %v1052
    %v1842 = vunpack.c.h.b16 %v1052
    %v1843 = vpack.c.b16 %v1335, %v1331
    %v1844 = vpack.c.b16 %v1336, %v1332
    %v1845 = vpack.c.b16 %v1337, %v1333
    %v1846 = vpack.c.b16 %v1338, %v1334
    %v1847 = vpack.c.b16 %v1343, %v1339
    %v1848 = vpack.c.b16 %v1344, %v1340
    %v1849 = vpack.c.b16 %v1345, %v1341
    %v1850 = vpack.c.b16 %v1346, %v1342
    %v1851 = vpack.c.b16 %v1351, %v1347
    %v1852 = vpack.c.b16 %v1352, %v1348
    %v1853 = vpack.c.b16 %v1353, %v1349
    %v1854 = vpack.c.b16 %v1354, %v1350
    %v1855 = vpack.c.b16 %v1359, %v1355
    %v1856 = vpack.c.b16 %v1360, %v1356
    %v1857 = vpack.c.b16 %v1361, %v1357
    %v1858 = vpack.c.b16 %v1362, %v1358
    %v1859 = vpack.c.b16 %v1367, %v1363
    %v1860 = vpack.c.b16 %v1368, %v1364
    %v1861 = vpack.c.b16 %v1369, %v1365
    %v1862 = vpack.c.b16 %v1370, %v1366
    %v1863 = vpack.c.b16 %v1375, %v1371
    %v1864 = vpack.c.b16 %v1376, %v1372
    %v1865 = vpack.c.b16 %v1377, %v1373
    %v1866 = vpack.c.b16 %v1378, %v1374
    %v1867 = vpack.c.b16 %v1383, %v1379
    %v1868 = vpack.c.b16 %v1384, %v1380
    %v1869 = vpack.c.b16 %v1385, %v1381
    %v1870 = vpack.c.b16 %v1386, %v1382
    %v1871 = vpack.c.b16 %v1391, %v1387
    %v1872 = vpack.c.b16 %v1392, %v1388
    %v1873 = vpack.c.b16 %v1393, %v1389
    %v1874 = vpack.c.b16 %v1394, %v1390
    %v1875 = vpack.c.b16 %v1399, %v1395
    %v1876 = vpack.c.b16 %v1400, %v1396
    %v1877 = vpack.c.b16 %v1401, %v1397
    %v1878 = vpack.c.b16 %v1402, %v1398
    %v1879 = vpack.c.b16 %v1407, %v1403
    %v1880 = vpack.c.b16 %v1408, %v1404
    %v1881 = vpack.c.b16 %v1409, %v1405
    %v1882 = vpack.c.b16 %v1410, %v1406
    %v1883 = vpack.c.b16 %v1415, %v1411
    %v1884 = vpack.c.b16 %v1416, %v1412
    %v1885 = vpack.c.b16 %v1417, %v1413
    %v1886 = vpack.c.b16 %v1418, %v1414
    %v1887 = vpack.c.b16 %v1423, %v1419
    %v1888 = vpack.c.b16 %v1424, %v1420
    %v1889 = vpack.c.b16 %v1425, %v1421
    %v1890 = vpack.c.b16 %v1426, %v1422
    %v1891 = vpack.c.b16 %v1431, %v1427
    %v1892 = vpack.c.b16 %v1432, %v1428
    %v1893 = vpack.c.b16 %v1433, %v1429
    %v1894 = vpack.c.b16 %v1434, %v1430
    %v1895 = vpack.c.b16 %v1439, %v1435
    %v1896 = vpack.c.b16 %v1440, %v1436
    %v1897 = vpack.c.b16 %v1441, %v1437
    %v1898 = vpack.c.b16 %v1442, %v1438
    %v1899 = vpack.c.b16 %v1447, %v1443
    %v1900 = vpack.c.b16 %v1448, %v1444
    %v1901 = vpack.c.b16 %v1449, %v1445
    %v1902 = vpack.c.b16 %v1450, %v1446
    %v1903 = vpack.c.b16 %v1455, %v1451
    %v1904 = vpack.c.b16 %v1456, %v1452
    %v1905 = vpack.c.b16 %v1457, %v1453
    %v1906 = vpack.c.b16 %v1458, %v1454
    %v1907 = vpack.c.b16 %v1463, %v1459
    %v1908 = vpack.c.b16 %v1464, %v1460
    %v1909 = vpack.c.b16 %v1465, %v1461
    %v1910 = vpack.c.b16 %v1466, %v1462
    %v1911 = vpack.c.b16 %v1471, %v1467
    %v1912 = vpack.c.b16 %v1472, %v1468
    %v1913 = vpack.c.b16 %v1473, %v1469
    %v1914 = vpack.c.b16 %v1474, %v1470
    %v1915 = vpack.c.b16 %v1479, %v1475
    %v1916 = vpack.c.b16 %v1480, %v1476
    %v1917 = vpack.c.b16 %v1481, %v1477
    %v1918 = vpack.c.b16 %v1482, %v1478
    %v1919 = vpack.c.b16 %v1487, %v1483
    %v1920 = vpack.c.b16 %v1488, %v1484
    %v1921 = vpack.c.b16 %v1489, %v1485
    %v1922 = vpack.c.b16 %v1490, %v1486
    %v1923 = vpack.c.b16 %v1495, %v1491
    %v1924 = vpack.c.b16 %v1496, %v1492
    %v1925 = vpack.c.b16 %v1497, %v1493
    %v1926 = vpack.c.b16 %v1498, %v1494
    %v1927 = vpack.c.b16 %v1503, %v1499
    %v1928 = vpack.c.b16 %v1504, %v1500
    %v1929 = vpack.c.b16 %v1505, %v1501
    %v1930 = vpack.c.b16 %v1506, %v1502
    %v1931 = vpack.c.b16 %v1511, %v1507
    %v1932 = vpack.c.b16 %v1512, %v1508
    %v1933 = vpack.c.b16 %v1513, %v1509
    %v1934 = vpack.c.b16 %v1514, %v1510
    %v1935 = vpack.c.b16 %v1519, %v1515
    %v1936 = vpack.c.b16 %v1520, %v1516
    %v1937 = vpack.c.b16 %v1521, %v1517
    %v1938 = vpack.c.b16 %v1522, %v1518
    %v1939 = vpack.c.b16 %v1527, %v1523
    %v1940 = vpack.c.b16 %v1528, %v1524
    %v1941 = vpack.c.b16 %v1529, %v1525
    %v1942 = vpack.c.b16 %v1530, %v1526
    %v1943 = vpack.c.b16 %v1535, %v1531
    %v1944 = vpack.c.b16 %v1536, %v1532
    %v1945 = vpack.c.b16 %v1537, %v1533
    %v1946 = vpack.c.b16 %v1538, %v1534
    %v1947 = vpack.c.b16 %v1543, %v1539
    %v1948 = vpack.c.b16 %v1544, %v1540
    %v1949 = vpack.c.b16 %v1545, %v1541
    %v1950 = vpack.c.b16 %v1546, %v1542
    %v1951 = vpack.c.b16 %v1551, %v1547
    %v1952 = vpack.c.b16 %v1552, %v1548
    %v1953 = vpack.c.b16 %v1553, %v1549
    %v1954 = vpack.c.b16 %v1554, %v1550
    %v1955 = vpack.c.b16 %v1559, %v1555
    %v1956 = vpack.c.b16 %v1560, %v1556
    %v1957 = vpack.c.b16 %v1561, %v1557
    %v1958 = vpack.c.b16 %v1562, %v1558
    %v1959 = vpack.c.b16 %v1567, %v1563
    %v1960 = vpack.c.b16 %v1568, %v1564
    %v1961 = vpack.c.b16 %v1569, %v1565
    %v1962 = vpack.c.b16 %v1570, %v1566
    %v1963 = vpack.c.b16 %v1575, %v1571
    %v1964 = vpack.c.b16 %v1576, %v1572
    %v1965 = vpack.c.b16 %v1577, %v1573
    %v1966 = vpack.c.b16 %v1578, %v1574
    %v1967 = vpack.c.b16 %v1583, %v1579
    %v1968 = vpack.c.b16 %v1584, %v1580
    %v1969 = vpack.c.b16 %v1585, %v1581
    %v1970 = vpack.c.b16 %v1586, %v1582
    %v1971 = vpack.c.b16 %v1591, %v1587
    %v1972 = vpack.c.b16 %v1592, %v1588
    %v1973 = vpack.c.b16 %v1593, %v1589
    %v1974 = vpack.c.b16 %v1594, %v1590
    %v1975 = vpack.c.b16 %v1599, %v1595
    %v1976 = vpack.c.b16 %v1600, %v1596
    %v1977 = vpack.c.b16 %v1601, %v1597
    %v1978 = vpack.c.b16 %v1602, %v1598
    %v1979 = vpack.c.b16 %v1607, %v1603
    %v1980 = vpack.c.b16 %v1608, %v1604
    %v1981 = vpack.c.b16 %v1609, %v1605
    %v1982 = vpack.c.b16 %v1610, %v1606
    %v1983 = vpack.c.b16 %v1615, %v1611
    %v1984 = vpack.c.b16 %v1616, %v1612
    %v1985 = vpack.c.b16 %v1617, %v1613
    %v1986 = vpack.c.b16 %v1618, %v1614
    %v1987 = vpack.c.b16 %v1623, %v1619
    %v1988 = vpack.c.b16 %v1624, %v1620
    %v1989 = vpack.c.b16 %v1625, %v1621
    %v1990 = vpack.c.b16 %v1626, %v1622
    %v1991 = vpack.c.b16 %v1631, %v1627
    %v1992 = vpack.c.b16 %v1632, %v1628
    %v1993 = vpack.c.b16 %v1633, %v1629
    %v1994 = vpack.c.b16 %v1634, %v1630
    %v1995 = vpack.c.b16 %v1639, %v1635
    %v1996 = vpack.c.b16 %v1640, %v1636
    %v1997 = vpack.c.b16 %v1641, %v1637
    %v1998 = vpack.c.b16 %v1642, %v1638
    %v1999 = vpack.c.b16 %v1647, %v1643
    %v2000 = vpack.c.b16 %v1648, %v1644
    %v2001 = vpack.c.b16 %v1649, %v1645
    %v2002 = vpack.c.b16 %v1650, %v1646
    %v2003 = vpack.c.b16 %v1655, %v1651
    %v2004 = vpack.c.b16 %v1656, %v1652
    %v2005 = vpack.c.b16 %v1657, %v1653
    %v2006 = vpack.c.b16 %v1658, %v1654
    %v2007 = vpack.c.b16 %v1663, %v1659
    %v2008 = vpack.c.b16 %v1664, %v1660
    %v2009 = vpack.c.b16 %v1665, %v1661
    %v2010 = vpack.c.b16 %v1666, %v1662
    %v2011 = vpack.c.b16 %v1671, %v1667
    %v2012 = vpack.c.b16 %v1672, %v1668
    %v2013 = vpack.c.b16 %v1673, %v1669
    %v2014 = vpack.c.b16 %v1674, %v1670
    %v2015 = vpack.c.b16 %v1679, %v1675
    %v2016 = vpack.c.b16 %v1680, %v1676
    %v2017 = vpack.c.b16 %v1681, %v1677
    %v2018 = vpack.c.b16 %v1682, %v1678
    %v2019 = vpack.c.b16 %v1687, %v1683
    %v2020 = vpack.c.b16 %v1688, %v1684
    %v2021 = vpack.c.b16 %v1689, %v1685
    %v2022 = vpack.c.b16 %v1690, %v1686
    %v2023 = vpack.c.b16 %v1695, %v1691
    %v2024 = vpack.c.b16 %v1696, %v1692
    %v2025 = vpack.c.b16 %v1697, %v1693
    %v2026 = vpack.c.b16 %v1698, %v1694
    %v2027 = vpack.c.b16 %v1703, %v1699
    %v2028 = vpack.c.b16 %v1704, %v1700
    %v2029 = vpack.c.b16 %v1705, %v1701
    %v2030 = vpack.c.b16 %v1706, %v1702
    %v2031 = vpack.c.b16 %v1711, %v1707
    %v2032 = vpack.c.b16 %v1712, %v1708
    %v2033 = vpack.c.b16 %v1713, %v1709
    %v2034 = vpack.c.b16 %v1714, %v1710
    %v2035 = vpack.c.b16 %v1719, %v1715
    %v2036 = vpack.c.b16 %v1720, %v1716
    %v2037 = vpack.c.b16 %v1721, %v1717
    %v2038 = vpack.c.b16 %v1722, %v1718
    %v2039 = vpack.c.b16 %v1727, %v1723
    %v2040 = vpack.c.b16 %v1728, %v1724
    %v2041 = vpack.c.b16 %v1729, %v1725
    %v2042 = vpack.c.b16 %v1730, %v1726
    %v2043 = vpack.c.b16 %v1735, %v1731
    %v2044 = vpack.c.b16 %v1736, %v1732
    %v2045 = vpack.c.b16 %v1737, %v1733
    %v2046 = vpack.c.b16 %v1738, %v1734
    %v2047 = vpack.c.b16 %v1743, %v1739
    %v2048 = vpack.c.b16 %v1744, %v1740
    %v2049 = vpack.c.b16 %v1745, %v1741
    %v2050 = vpack.c.b16 %v1746, %v1742
    %v2051 = vpack.c.b16 %v1751, %v1747
    %v2052 = vpack.c.b16 %v1752, %v1748
    %v2053 = vpack.c.b16 %v1753, %v1749
    %v2054 = vpack.c.b16 %v1754, %v1750
    %v2055 = vpack.c.b16 %v1759, %v1755
    %v2056 = vpack.c.b16 %v1760, %v1756
    %v2057 = vpack.c.b16 %v1761, %v1757
    %v2058 = vpack.c.b16 %v1762, %v1758
    %v2059 = vpack.c.b16 %v1767, %v1763
    %v2060 = vpack.c.b16 %v1768, %v1764
    %v2061 = vpack.c.b16 %v1769, %v1765
    %v2062 = vpack.c.b16 %v1770, %v1766
    %v2063 = vpack.c.b16 %v1775, %v1771
    %v2064 = vpack.c.b16 %v1776, %v1772
    %v2065 = vpack.c.b16 %v1777, %v1773
    %v2066 = vpack.c.b16 %v1778, %v1774
    %v2067 = vpack.c.b16 %v1783, %v1779
    %v2068 = vpack.c.b16 %v1784, %v1780
    %v2069 = vpack.c.b16 %v1785, %v1781
    %v2070 = vpack.c.b16 %v1786, %v1782
    %v2071 = vpack.c.b16 %v1791, %v1787
    %v2072 = vpack.c.b16 %v1792, %v1788
    %v2073 = vpack.c.b16 %v1793, %v1789
    %v2074 = vpack.c.b16 %v1794, %v1790
    %v2075 = vpack.c.b16 %v1799, %v1795
    %v2076 = vpack.c.b16 %v1800, %v1796
    %v2077 = vpack.c.b16 %v1801, %v1797
    %v2078 = vpack.c.b16 %v1802, %v1798
    %v2079 = vpack.c.b16 %v1807, %v1803
    %v2080 = vpack.c.b16 %v1808, %v1804
    %v2081 = vpack.c.b16 %v1809, %v1805
    %v2082 = vpack.c.b16 %v1810, %v1806
    %v2083 = vpack.c.b16 %v1815, %v1811
    %v2084 = vpack.c.b16 %v1816, %v1812
    %v2085 = vpack.c.b16 %v1817, %v1813
    %v2086 = vpack.c.b16 %v1818, %v1814
    %v2087 = vpack.c.b16 %v1823, %v1819
    %v2088 = vpack.c.b16 %v1824, %v1820
    %v2089 = vpack.c.b16 %v1825, %v1821
    %v2090 = vpack.c.b16 %v1826, %v1822
    %v2091 = vpack.c.b16 %v1831, %v1827
    %v2092 = vpack.c.b16 %v1832, %v1828
    %v2093 = vpack.c.b16 %v1833, %v1829
    %v2094 = vpack.c.b16 %v1834, %v1830
    %v2095 = vpack.c.b16 %v1839, %v1835
    %v2096 = vpack.c.b16 %v1840, %v1836
    %v2097 = vpack.c.b16 %v1841, %v1837
    %v2098 = vpack.c.b16 %v1842, %v1838
    %2355 = vmatprep.subr.bf16.mxu0 %v1844
    %2356 = vmatpush1.bf16.msra.mxu0 %v1843
    %2357 = vmatprep.subr.bf16.mxu0 %v1848
    %2358 = vmatpush1.bf16.msra.mxu0 %v1847
    %2359 = vmatprep.subr.bf16.mxu0 %v1852
    %2360 = vmatpush1.bf16.msra.mxu0 %v1851
    %2361 = vmatprep.subr.bf16.mxu0 %v1856
    %2362 = vmatpush1.bf16.msra.mxu0 %v1855
    %2363 = vmatprep.subr.bf16.mxu0 %v1860
    %2364 = vmatpush1.bf16.msra.mxu0 %v1859
    %2365 = vmatprep.subr.bf16.mxu0 %v1864
    %2366 = vmatpush1.bf16.msra.mxu0 %v1863
    %2367 = vmatprep.subr.bf16.mxu0 %v1868
    %2368 = vmatpush1.bf16.msra.mxu0 %v1867
    %2369 = vmatprep.subr.bf16.mxu0 %v1872
    %2370 = vmatpush1.bf16.msra.mxu0 %v1871
    %2371 = vmatprep.subr.bf16.mxu0 %v1876
    %2372 = vmatpush1.bf16.msra.mxu0 %v1875
    %2373 = vmatprep.subr.bf16.mxu0 %v1880
    %2374 = vmatpush1.bf16.msra.mxu0 %v1879
    %2375 = vmatprep.subr.bf16.mxu0 %v1884
    %2376 = vmatpush1.bf16.msra.mxu0 %v1883
    %2377 = vmatprep.subr.bf16.mxu0 %v1888
    %2378 = vmatpush1.bf16.msra.mxu0 %v1887
    %2379 = vmatprep.subr.bf16.mxu0 %v1892
    %2380 = vmatpush1.bf16.msra.mxu0 %v1891
    %2381 = vmatprep.subr.bf16.mxu0 %v1896
    %2382 = vmatpush1.bf16.msra.mxu0 %v1895
    %2383 = vmatprep.subr.bf16.mxu0 %v1900
    %2384 = vmatpush1.bf16.msra.mxu0 %v1899
    %2385 = vmatprep.subr.bf16.mxu0 %v1904
    %2386 = vmatpush1.bf16.msra.mxu0 %v1903
    %2387 = vmatprep.mubr.bf16.mxu0 %v790
    %2388 = vmatmul.mubr.bf16.gmra.mrb[0].mxu0 %v789
    %v2389 = vpop.f32.mrb[0].mxu0
    %v2390 = vadd.f32 %v1058, %v2389
    %v2391 = vpop.f32.mrb[0].mxu0
    %v2392 = vadd.f32 %v1062, %v2391
    %v2393 = vpop.f32.mrb[0].mxu0
    %v2394 = vpop.f32.mrb[0].mxu0
    %2395 = vdwg.mxu0
    %2396 = vmatprep.subr.bf16.mxu0 %v1908
    %2397 = vmatpush1.bf16.msra.mxu0 %v1907
    %2398 = vmatprep.subr.bf16.mxu0 %v1912
    %2399 = vmatpush1.bf16.msra.mxu0 %v1911
    %2400 = vmatprep.subr.bf16.mxu0 %v1916
    %2401 = vmatpush1.bf16.msra.mxu0 %v1915
    %2402 = vmatprep.subr.bf16.mxu0 %v1920
    %2403 = vmatpush1.bf16.msra.mxu0 %v1919
    %2404 = vmatprep.subr.bf16.mxu0 %v1924
    %2405 = vmatpush1.bf16.msra.mxu0 %v1923
    %2406 = vmatprep.subr.bf16.mxu0 %v1928
    %2407 = vmatpush1.bf16.msra.mxu0 %v1927
    %2408 = vmatprep.subr.bf16.mxu0 %v1932
    %2409 = vmatpush1.bf16.msra.mxu0 %v1931
    %2410 = vmatprep.subr.bf16.mxu0 %v1936
    %2411 = vmatpush1.bf16.msra.mxu0 %v1935
    %2412 = vmatprep.subr.bf16.mxu0 %v1940
    %2413 = vmatpush1.bf16.msra.mxu0 %v1939
    %2414 = vmatprep.subr.bf16.mxu0 %v1944
    %2415 = vmatpush1.bf16.msra.mxu0 %v1943
    %2416 = vmatprep.subr.bf16.mxu0 %v1948
    %2417 = vmatpush1.bf16.msra.mxu0 %v1947
    %2418 = vmatprep.subr.bf16.mxu0 %v1952
    %2419 = vmatpush1.bf16.msra.mxu0 %v1951
    %2420 = vmatprep.subr.bf16.mxu0 %v1956
    %2421 = vmatpush1.bf16.msra.mxu0 %v1955
    %2422 = vmatprep.subr.bf16.mxu0 %v1960
    %2423 = vmatpush1.bf16.msra.mxu0 %v1959
    %2424 = vmatprep.subr.bf16.mxu0 %v1964
    %2425 = vmatpush1.bf16.msra.mxu0 %v1963
    %2426 = vmatprep.subr.bf16.mxu0 %v1968
    %2427 = vmatpush1.bf16.msra.mxu0 %v1967
    %2428 = vmatprep.mubr.bf16.mxu0 %v792
    %2429 = vmatmul.mubr.bf16.gmra.mrb[0].mxu0 %v791
    %v2430 = vpop.f32.mrb[0].mxu0
    %v2431 = vadd.f32 %v2390, %v2430
    %v2432 = vpop.f32.mrb[0].mxu0
    %v2433 = vadd.f32 %v2392, %v2432
    %v2434 = vpop.f32.mrb[0].mxu0
    %v2435 = vpop.f32.mrb[0].mxu0
    %2436 = vdwg.mxu0
    %2437 = vmatprep.subr.bf16.mxu0 %v1972
    %2438 = vmatpush1.bf16.msra.mxu0 %v1971
    %2439 = vmatprep.subr.bf16.mxu0 %v1976
    %2440 = vmatpush1.bf16.msra.mxu0 %v1975
    %2441 = vmatprep.subr.bf16.mxu0 %v1980
    %2442 = vmatpush1.bf16.msra.mxu0 %v1979
    %2443 = vmatprep.subr.bf16.mxu0 %v1984
    %2444 = vmatpush1.bf16.msra.mxu0 %v1983
    %2445 = vmatprep.subr.bf16.mxu0 %v1988
    %2446 = vmatpush1.bf16.msra.mxu0 %v1987
    %2447 = vmatprep.subr.bf16.mxu0 %v1992
    %2448 = vmatpush1.bf16.msra.mxu0 %v1991
    %2449 = vmatprep.subr.bf16.mxu0 %v1996
    %2450 = vmatpush1.bf16.msra.mxu0 %v1995
    %2451 = vmatprep.subr.bf16.mxu0 %v2000
    %2452 = vmatpush1.bf16.msra.mxu0 %v1999
    %2453 = vmatprep.subr.bf16.mxu0 %v2004
    %2454 = vmatpush1.bf16.msra.mxu0 %v2003
    %2455 = vmatprep.subr.bf16.mxu0 %v2008
    %2456 = vmatpush1.bf16.msra.mxu0 %v2007
    %2457 = vmatprep.subr.bf16.mxu0 %v2012
    %2458 = vmatpush1.bf16.msra.mxu0 %v2011
    %2459 = vmatprep.subr.bf16.mxu0 %v2016
    %2460 = vmatpush1.bf16.msra.mxu0 %v2015
    %2461 = vmatprep.subr.bf16.mxu0 %v2020
    %2462 = vmatpush1.bf16.msra.mxu0 %v2019
    %2463 = vmatprep.subr.bf16.mxu0 %v2024
    %2464 = vmatpush1.bf16.msra.mxu0 %v2023
    %2465 = vmatprep.subr.bf16.mxu0 %v2028
    %2466 = vmatpush1.bf16.msra.mxu0 %v2027
    %2467 = vmatprep.subr.bf16.mxu0 %v2032
    %2468 = vmatpush1.bf16.msra.mxu0 %v2031
    %2469 = vmatprep.mubr.bf16.mxu0 %v794
    %2470 = vmatmul.mubr.bf16.gmra.mrb[0].mxu0 %v793
    %v2471 = vpop.f32.mrb[0].mxu0
    %v2472 = vadd.f32 %v2431, %v2471
    %v2473 = vpop.f32.mrb[0].mxu0
    %v2474 = vadd.f32 %v2433, %v2473
    %v2475 = vpop.f32.mrb[0].mxu0
    %v2476 = vpop.f32.mrb[0].mxu0
    %2477 = vdwg.mxu0
    %2478 = vmatprep.subr.bf16.mxu0 %v2036
    %2479 = vmatpush1.bf16.msra.mxu0 %v2035
    %2480 = vmatprep.subr.bf16.mxu0 %v2040
    %2481 = vmatpush1.bf16.msra.mxu0 %v2039
    %2482 = vmatprep.subr.bf16.mxu0 %v2044
    %2483 = vmatpush1.bf16.msra.mxu0 %v2043
    %2484 = vmatprep.subr.bf16.mxu0 %v2048
    %2485 = vmatpush1.bf16.msra.mxu0 %v2047
    %2486 = vmatprep.subr.bf16.mxu0 %v2052
    %2487 = vmatpush1.bf16.msra.mxu0 %v2051
    %2488 = vmatprep.subr.bf16.mxu0 %v2056
    %2489 = vmatpush1.bf16.msra.mxu0 %v2055
    %2490 = vmatprep.subr.bf16.mxu0 %v2060
    %2491 = vmatpush1.bf16.msra.mxu0 %v2059
    %2492 = vmatprep.subr.bf16.mxu0 %v2064
    %2493 = vmatpush1.bf16.msra.mxu0 %v2063
    %2494 = vmatprep.subr.bf16.mxu0 %v2068
    %2495 = vmatpush1.bf16.msra.mxu0 %v2067
    %2496 = vmatprep.subr.bf16.mxu0 %v2072
    %2497 = vmatpush1.bf16.msra.mxu0 %v2071
    %2498 = vmatprep.subr.bf16.mxu0 %v2076
    %2499 = vmatpush1.bf16.msra.mxu0 %v2075
    %2500 = vmatprep.subr.bf16.mxu0 %v2080
    %2501 = vmatpush1.bf16.msra.mxu0 %v2079
    %2502 = vmatprep.subr.bf16.mxu0 %v2084
    %2503 = vmatpush1.bf16.msra.mxu0 %v2083
    %2504 = vmatprep.subr.bf16.mxu0 %v2088
    %2505 = vmatpush1.bf16.msra.mxu0 %v2087
    %2506 = vmatprep.subr.bf16.mxu0 %v2092
    %2507 = vmatpush1.bf16.msra.mxu0 %v2091
    %2508 = vmatprep.subr.bf16.mxu0 %v2096
    %2509 = vmatpush1.bf16.msra.mxu0 %v2095
    %2510 = vmatprep.mubr.bf16.mxu0 %v796
    %2511 = vmatmul.mubr.bf16.gmra.mrb[0].mxu0 %v795
    %v2512 = vpop.f32.mrb[0].mxu0
    %v2513 = vadd.f32 %v2472, %v2512
    %v2514 = vpop.f32.mrb[0].mxu0
    %v2515 = vadd.f32 %v2474, %v2514
    %v2516 = vpop.f32.mrb[0].mxu0
    %v2517 = vpop.f32.mrb[0].mxu0
    %2518 = vdwg.mxu0
    %2519 = vmatprep.subr.bf16.mxu0 %v1846
    %2520 = vmatpush1.bf16.msra.mxu0 %v1845
    %2521 = vmatprep.subr.bf16.mxu0 %v1850
    %2522 = vmatpush1.bf16.msra.mxu0 %v1849
    %2523 = vmatprep.subr.bf16.mxu0 %v1854
    %2524 = vmatpush1.bf16.msra.mxu0 %v1853
    %2525 = vmatprep.subr.bf16.mxu0 %v1858
    %2526 = vmatpush1.bf16.msra.mxu0 %v1857
    %2527 = vmatprep.subr.bf16.mxu0 %v1862
    %2528 = vmatpush1.bf16.msra.mxu0 %v1861
    %2529 = vmatprep.subr.bf16.mxu0 %v1866
    %2530 = vmatpush1.bf16.msra.mxu0 %v1865
    %2531 = vmatprep.subr.bf16.mxu0 %v1870
    %2532 = vmatpush1.bf16.msra.mxu0 %v1869
    %2533 = vmatprep.subr.bf16.mxu0 %v1874
    %2534 = vmatpush1.bf16.msra.mxu0 %v1873
    %2535 = vmatprep.subr.bf16.mxu0 %v1878
    %2536 = vmatpush1.bf16.msra.mxu0 %v1877
    %2537 = vmatprep.subr.bf16.mxu0 %v1882
    %2538 = vmatpush1.bf16.msra.mxu0 %v1881
    %2539 = vmatprep.subr.bf16.mxu0 %v1886
    %2540 = vmatpush1.bf16.msra.mxu0 %v1885
    %2541 = vmatprep.subr.bf16.mxu0 %v1890
    %2542 = vmatpush1.bf16.msra.mxu0 %v1889
    %2543 = vmatprep.subr.bf16.mxu0 %v1894
    %2544 = vmatpush1.bf16.msra.mxu0 %v1893
    %2545 = vmatprep.subr.bf16.mxu0 %v1898
    %2546 = vmatpush1.bf16.msra.mxu0 %v1897
    %2547 = vmatprep.subr.bf16.mxu0 %v1902
    %2548 = vmatpush1.bf16.msra.mxu0 %v1901
    %2549 = vmatprep.subr.bf16.mxu0 %v1906
    %2550 = vmatpush1.bf16.msra.mxu0 %v1905
    %2551 = vmatprep.mubr.bf16.mxu0 %v790
    %2552 = vmatmul.mubr.bf16.gmra.mrb[0].mxu0 %v789
    %v2553 = vpop.f32.mrb[0].mxu0
    %v2554 = vadd.f32 %v1066, %v2553
    %v2555 = vpop.f32.mrb[0].mxu0
    %v2556 = vadd.f32 %v1070, %v2555
    %v2557 = vpop.f32.mrb[0].mxu0
    %v2558 = vpop.f32.mrb[0].mxu0
    %2559 = vdwg.mxu0
    %2560 = vmatprep.subr.bf16.mxu0 %v1910
    %2561 = vmatpush1.bf16.msra.mxu0 %v1909
    %2562 = vmatprep.subr.bf16.mxu0 %v1914
    %2563 = vmatpush1.bf16.msra.mxu0 %v1913
    %2564 = vmatprep.subr.bf16.mxu0 %v1918
    %2565 = vmatpush1.bf16.msra.mxu0 %v1917
    %2566 = vmatprep.subr.bf16.mxu0 %v1922
    %2567 = vmatpush1.bf16.msra.mxu0 %v1921
    %2568 = vmatprep.subr.bf16.mxu0 %v1926
    %2569 = vmatpush1.bf16.msra.mxu0 %v1925
    %2570 = vmatprep.subr.bf16.mxu0 %v1930
    %2571 = vmatpush1.bf16.msra.mxu0 %v1929
    %2572 = vmatprep.subr.bf16.mxu0 %v1934
    %2573 = vmatpush1.bf16.msra.mxu0 %v1933
    %2574 = vmatprep.subr.bf16.mxu0 %v1938
    %2575 = vmatpush1.bf16.msra.mxu0 %v1937
    %2576 = vmatprep.subr.bf16.mxu0 %v1942
    %2577 = vmatpush1.bf16.msra.mxu0 %v1941
    %2578 = vmatprep.subr.bf16.mxu0 %v1946
    %2579 = vmatpush1.bf16.msra.mxu0 %v1945
    %2580 = vmatprep.subr.bf16.mxu0 %v1950
    %2581 = vmatpush1.bf16.msra.mxu0 %v1949
    %2582 = vmatprep.subr.bf16.mxu0 %v1954
    %2583 = vmatpush1.bf16.msra.mxu0 %v1953
    %2584 = vmatprep.subr.bf16.mxu0 %v1958
    %2585 = vmatpush1.bf16.msra.mxu0 %v1957
    %2586 = vmatprep.subr.bf16.mxu0 %v1962
    %2587 = vmatpush1.bf16.msra.mxu0 %v1961
    %2588 = vmatprep.subr.bf16.mxu0 %v1966
    %2589 = vmatpush1.bf16.msra.mxu0 %v1965
    %2590 = vmatprep.subr.bf16.mxu0 %v1970
    %2591 = vmatpush1.bf16.msra.mxu0 %v1969
    %2592 = vmatprep.mubr.bf16.mxu0 %v792
    %2593 = vmatmul.mubr.bf16.gmra.mrb[0].mxu0 %v791
    %v2594 = vpop.f32.mrb[0].mxu0
    %v2595 = vadd.f32 %v2554, %v2594
    %v2596 = vpop.f32.mrb[0].mxu0
    %v2597 = vadd.f32 %v2556, %v2596
    %v2598 = vpop.f32.mrb[0].mxu0
    %v2599 = vpop.f32.mrb[0].mxu0
    %2600 = vdwg.mxu0
    %2601 = vmatprep.subr.bf16.mxu0 %v1974
    %2602 = vmatpush1.bf16.msra.mxu0 %v1973
    %2603 = vmatprep.subr.bf16.mxu0 %v1978
    %2604 = vmatpush1.bf16.msra.mxu0 %v1977
    %2605 = vmatprep.subr.bf16.mxu0 %v1982
    %2606 = vmatpush1.bf16.msra.mxu0 %v1981
    %2607 = vmatprep.subr.bf16.mxu0 %v1986
    %2608 = vmatpush1.bf16.msra.mxu0 %v1985
    %2609 = vmatprep.subr.bf16.mxu0 %v1990
    %2610 = vmatpush1.bf16.msra.mxu0 %v1989
    %2611 = vmatprep.subr.bf16.mxu0 %v1994
    %2612 = vmatpush1.bf16.msra.mxu0 %v1993
    %2613 = vmatprep.subr.bf16.mxu0 %v1998
    %2614 = vmatpush1.bf16.msra.mxu0 %v1997
    %2615 = vmatprep.subr.bf16.mxu0 %v2002
    %2616 = vmatpush1.bf16.msra.mxu0 %v2001
    %2617 = vmatprep.subr.bf16.mxu0 %v2006
    %2618 = vmatpush1.bf16.msra.mxu0 %v2005
    %2619 = vmatprep.subr.bf16.mxu0 %v2010
    %2620 = vmatpush1.bf16.msra.mxu0 %v2009
    %2621 = vmatprep.subr.bf16.mxu0 %v2014
    %2622 = vmatpush1.bf16.msra.mxu0 %v2013
    %2623 = vmatprep.subr.bf16.mxu0 %v2018
    %2624 = vmatpush1.bf16.msra.mxu0 %v2017
    %2625 = vmatprep.subr.bf16.mxu0 %v2022
    %2626 = vmatpush1.bf16.msra.mxu0 %v2021
    %2627 = vmatprep.subr.bf16.mxu0 %v2026
    %2628 = vmatpush1.bf16.msra.mxu0 %v2025
    %2629 = vmatprep.subr.bf16.mxu0 %v2030
    %2630 = vmatpush1.bf16.msra.mxu0 %v2029
    %2631 = vmatprep.subr.bf16.mxu0 %v2034
    %2632 = vmatpush1.bf16.msra.mxu0 %v2033
    %2633 = vmatprep.mubr.bf16.mxu0 %v794
    %2634 = vmatmul.mubr.bf16.gmra.mrb[0].mxu0 %v793
    %v2635 = vpop.f32.mrb[0].mxu0
    %v2636 = vadd.f32 %v2595, %v2635
    %v2637 = vpop.f32.mrb[0].mxu0
    %v2638 = vadd.f32 %v2597, %v2637
    %v2639 = vpop.f32.mrb[0].mxu0
    %v2640 = vpop.f32.mrb[0].mxu0
    %2641 = vdwg.mxu0
    %2642 = vmatprep.subr.bf16.mxu0 %v2038
    %2643 = vmatpush1.bf16.msra.mxu0 %v2037
    %2644 = vmatprep.subr.bf16.mxu0 %v2042
    %2645 = vmatpush1.bf16.msra.mxu0 %v2041
    %2646 = vmatprep.subr.bf16.mxu0 %v2046
    %2647 = vmatpush1.bf16.msra.mxu0 %v2045
    %2648 = vmatprep.subr.bf16.mxu0 %v2050
    %2649 = vmatpush1.bf16.msra.mxu0 %v2049
    %2650 = vmatprep.subr.bf16.mxu0 %v2054
    %2651 = vmatpush1.bf16.msra.mxu0 %v2053
    %2652 = vmatprep.subr.bf16.mxu0 %v2058
    %2653 = vmatpush1.bf16.msra.mxu0 %v2057
    %2654 = vmatprep.subr.bf16.mxu0 %v2062
    %2655 = vmatpush1.bf16.msra.mxu0 %v2061
    %2656 = vmatprep.subr.bf16.mxu0 %v2066
    %2657 = vmatpush1.bf16.msra.mxu0 %v2065
    %2658 = vmatprep.subr.bf16.mxu0 %v2070
    %2659 = vmatpush1.bf16.msra.mxu0 %v2069
    %2660 = vmatprep.subr.bf16.mxu0 %v2074
    %2661 = vmatpush1.bf16.msra.mxu0 %v2073
    %2662 = vmatprep.subr.bf16.mxu0 %v2078
    %2663 = vmatpush1.bf16.msra.mxu0 %v2077
    %2664 = vmatprep.subr.bf16.mxu0 %v2082
    %2665 = vmatpush1.bf16.msra.mxu0 %v2081
    %2666 = vmatprep.subr.bf16.mxu0 %v2086
    %2667 = vmatpush1.bf16.msra.mxu0 %v2085
    %2668 = vmatprep.subr.bf16.mxu0 %v2090
    %2669 = vmatpush1.bf16.msra.mxu0 %v2089
    %2670 = vmatprep.subr.bf16.mxu0 %v2094
    %2671 = vmatpush1.bf16.msra.mxu0 %v2093
    %2672 = vmatprep.subr.bf16.mxu0 %v2098
    %2673 = vmatpush1.bf16.msra.mxu0 %v2097
    %2674 = vmatprep.mubr.bf16.mxu0 %v796
    %2675 = vmatmul.mubr.bf16.gmra.mrb[0].mxu0 %v795
    %v2676 = vpop.f32.mrb[0].mxu0
    %v2677 = vadd.f32 %v2636, %v2676
    %v2678 = vpop.f32.mrb[0].mxu0
    %v2679 = vadd.f32 %v2638, %v2678
    %v2680 = vpop.f32.mrb[0].mxu0
    %v2681 = vpop.f32.mrb[0].mxu0
    %2682 = vdwg.mxu0
    %v2683 = vmax.f32 %v2513, 0.0
    %v2684 = vmax.f32 %v2515, 0.0
    %v2685 = vmax.f32 %v2677, 0.0
    %v2686 = vmax.f32 %v2679, 0.0
    %v2687 = vpack.c.bf16 %v2683, %v2683
    %v2688 = vpack.c.bf16 %v2684, %v2684
    %v2689 = vpack.c.bf16 %v2685, %v2685
    %v2690 = vpack.c.bf16 %v2686, %v2686
    %v2691 = vld [vmem:[#allocation10] sm:$0xff]
    %v2692 = vld [vmem:[#allocation10 + $0x8] sm:$0xff]
    %v2693 = vld [vmem:[#allocation10 + $0x10] sm:$0xff]
    %v2694 = vld [vmem:[#allocation10 + $0x18] sm:$0xff]
    %v2695 = vld [vmem:[#allocation10 + $0x20] sm:$0xff]
    %v2696 = vld [vmem:[#allocation10 + $0x28] sm:$0xff]
    %v2697 = vld [vmem:[#allocation10 + $0x30] sm:$0xff]
    %v2698 = vld [vmem:[#allocation10 + $0x38] sm:$0xff]
    %v2699 = vld [vmem:[#allocation10 + $0x40] sm:$0xff]
    %v2700 = vld [vmem:[#allocation10 + $0x48] sm:$0xff]
    %v2701 = vld [vmem:[#allocation10 + $0x50] sm:$0xff]
    %v2702 = vld [vmem:[#allocation10 + $0x58] sm:$0xff]
    %v2703 = vld [vmem:[#allocation10 + $0x60] sm:$0xff]
    %v2704 = vld [vmem:[#allocation10 + $0x68] sm:$0xff]
    %v2705 = vld [vmem:[#allocation10 + $0x70] sm:$0xff]
    %v2706 = vld [vmem:[#allocation10 + $0x78] sm:$0xff]
    %v2707 = vld [vmem:[#allocation10 + $0x80] sm:$0xff]
    %v2708 = vld [vmem:[#allocation10 + $0x88] sm:$0xff]
    %v2709 = vld [vmem:[#allocation10 + $0x90] sm:$0xff]
    %v2710 = vld [vmem:[#allocation10 + $0x98] sm:$0xff]
    %v2711 = vld [vmem:[#allocation10 + $0xa0] sm:$0xff]
    %v2712 = vld [vmem:[#allocation10 + $0xa8] sm:$0xff]
    %v2713 = vld [vmem:[#allocation10 + $0xb0] sm:$0xff]
    %v2714 = vld [vmem:[#allocation10 + $0xb8] sm:$0xff]
    %v2715 = vld [vmem:[#allocation10 + $0xc0] sm:$0xff]
    %v2716 = vld [vmem:[#allocation10 + $0xc8] sm:$0xff]
    %v2717 = vld [vmem:[#allocation10 + $0xd0] sm:$0xff]
    %v2718 = vld [vmem:[#allocation10 + $0xd8] sm:$0xff]
    %v2719 = vld [vmem:[#allocation10 + $0xe0] sm:$0xff]
    %v2720 = vld [vmem:[#allocation10 + $0xe8] sm:$0xff]
    %v2721 = vld [vmem:[#allocation10 + $0xf0] sm:$0xff]
    %v2722 = vld [vmem:[#allocation10 + $0xf8] sm:$0xff]
    %v2723 = vld [vmem:[#allocation10 + $0x100] sm:$0xff]
    %v2724 = vld [vmem:[#allocation10 + $0x108] sm:$0xff]
    %v2725 = vld [vmem:[#allocation10 + $0x110] sm:$0xff]
    %v2726 = vld [vmem:[#allocation10 + $0x118] sm:$0xff]
    %v2727 = vld [vmem:[#allocation10 + $0x120] sm:$0xff]
    %v2728 = vld [vmem:[#allocation10 + $0x128] sm:$0xff]
    %v2729 = vld [vmem:[#allocation10 + $0x130] sm:$0xff]
    %v2730 = vld [vmem:[#allocation10 + $0x138] sm:$0xff]
    %v2731 = vld [vmem:[#allocation10 + $0x140] sm:$0xff]
    %v2732 = vld [vmem:[#allocation10 + $0x148] sm:$0xff]
    %v2733 = vld [vmem:[#allocation10 + $0x150] sm:$0xff]
    %v2734 = vld [vmem:[#allocation10 + $0x158] sm:$0xff]
    %v2735 = vld [vmem:[#allocation10 + $0x160] sm:$0xff]
    %v2736 = vld [vmem:[#allocation10 + $0x168] sm:$0xff]
    %v2737 = vld [vmem:[#allocation10 + $0x170] sm:$0xff]
    %v2738 = vld [vmem:[#allocation10 + $0x178] sm:$0xff]
    %v2739 = vld [vmem:[#allocation10 + $0x180] sm:$0xff]
    %v2740 = vld [vmem:[#allocation10 + $0x188] sm:$0xff]
    %v2741 = vld [vmem:[#allocation10 + $0x190] sm:$0xff]
    %v2742 = vld [vmem:[#allocation10 + $0x198] sm:$0xff]
    %v2743 = vld [vmem:[#allocation10 + $0x1a0] sm:$0xff]
    %v2744 = vld [vmem:[#allocation10 + $0x1a8] sm:$0xff]
    %v2745 = vld [vmem:[#allocation10 + $0x1b0] sm:$0xff]
    %v2746 = vld [vmem:[#allocation10 + $0x1b8] sm:$0xff]
    %v2747 = vld [vmem:[#allocation10 + $0x1c0] sm:$0xff]
    %v2748 = vld [vmem:[#allocation10 + $0x1c8] sm:$0xff]
    %v2749 = vld [vmem:[#allocation10 + $0x1d0] sm:$0xff]
    %v2750 = vld [vmem:[#allocation10 + $0x1d8] sm:$0xff]
    %v2751 = vld [vmem:[#allocation10 + $0x1e0] sm:$0xff]
    %v2752 = vld [vmem:[#allocation10 + $0x1e8] sm:$0xff]
    %v2753 = vld [vmem:[#allocation10 + $0x1f0] sm:$0xff]
    %v2754 = vld [vmem:[#allocation10 + $0x1f8] sm:$0xff]
    %v2755 = vld [vmem:[%s6] sm:$0x3]
    %v2757 = vlaneseq
    %v2758 = vshrl.u32 %v2757, 7
    %v2759 = vsub.s32 0, %v2758
    %v2760 = vrot.slane %v2755, %v2759
    %v2761 = vlaneseq
    %v2762 = vshrl.u32 %v2761, 7
    %v2763 = vsub.s32 1, %v2762
    %v2764 = vrot.slane %v2755, %v2763
    %v2831 = vunpack.c.l.b16 %v2691
    %v2832 = vunpack.c.h.b16 %v2691
    %v2833 = vunpack.c.l.b16 %v2692
    %v2834 = vunpack.c.h.b16 %v2692
    %v2835 = vunpack.c.l.b16 %v2693
    %v2836 = vunpack.c.h.b16 %v2693
    %v2837 = vunpack.c.l.b16 %v2694
    %v2838 = vunpack.c.h.b16 %v2694
    %v2839 = vunpack.c.l.b16 %v2695
    %v2840 = vunpack.c.h.b16 %v2695
    %v2841 = vunpack.c.l.b16 %v2696
    %v2842 = vunpack.c.h.b16 %v2696
    %v2843 = vunpack.c.l.b16 %v2697
    %v2844 = vunpack.c.h.b16 %v2697
    %v2845 = vunpack.c.l.b16 %v2698
    %v2846 = vunpack.c.h.b16 %v2698
    %v2847 = vunpack.c.l.b16 %v2699
    %v2848 = vunpack.c.h.b16 %v2699
    %v2849 = vunpack.c.l.b16 %v2700
    %v2850 = vunpack.c.h.b16 %v2700
    %v2851 = vunpack.c.l.b16 %v2701
    %v2852 = vunpack.c.h.b16 %v2701
    %v2853 = vunpack.c.l.b16 %v2702
    %v2854 = vunpack.c.h.b16 %v2702
    %v2855 = vunpack.c.l.b16 %v2703
    %v2856 = vunpack.c.h.b16 %v2703
    %v2857 = vunpack.c.l.b16 %v2704
    %v2858 = vunpack.c.h.b16 %v2704
    %v2859 = vunpack.c.l.b16 %v2705
    %v2860 = vunpack.c.h.b16 %v2705
    %v2861 = vunpack.c.l.b16 %v2706
    %v2862 = vunpack.c.h.b16 %v2706
    %v2863 = vunpack.c.l.b16 %v2707
    %v2864 = vunpack.c.h.b16 %v2707
    %v2865 = vunpack.c.l.b16 %v2708
    %v2866 = vunpack.c.h.b16 %v2708
    %v2867 = vunpack.c.l.b16 %v2709
    %v2868 = vunpack.c.h.b16 %v2709
    %v2869 = vunpack.c.l.b16 %v2710
    %v2870 = vunpack.c.h.b16 %v2710
    %v2871 = vunpack.c.l.b16 %v2711
    %v2872 = vunpack.c.h.b16 %v2711
    %v2873 = vunpack.c.l.b16 %v2712
    %v2874 = vunpack.c.h.b16 %v2712
    %v2875 = vunpack.c.l.b16 %v2713
    %v2876 = vunpack.c.h.b16 %v2713
    %v2877 = vunpack.c.l.b16 %v2714
    %v2878 = vunpack.c.h.b16 %v2714
    %v2879 = vunpack.c.l.b16 %v2715
    %v2880 = vunpack.c.h.b16 %v2715
    %v2881 = vunpack.c.l.b16 %v2716
    %v2882 = vunpack.c.h.b16 %v2716
    %v2883 = vunpack.c.l.b16 %v2717
    %v2884 = vunpack.c.h.b16 %v2717
    %v2885 = vunpack.c.l.b16 %v2718
    %v2886 = vunpack.c.h.b16 %v2718
    %v2887 = vunpack.c.l.b16 %v2719
    %v2888 = vunpack.c.h.b16 %v2719
    %v2889 = vunpack.c.l.b16 %v2720
    %v2890 = vunpack.c.h.b16 %v2720
    %v2891 = vunpack.c.l.b16 %v2721
    %v2892 = vunpack.c.h.b16 %v2721
    %v2893 = vunpack.c.l.b16 %v2722
    %v2894 = vunpack.c.h.b16 %v2722
    %v2895 = vunpack.c.l.b16 %v2723
    %v2896 = vunpack.c.h.b16 %v2723
    %v2897 = vunpack.c.l.b16 %v2724
    %v2898 = vunpack.c.h.b16 %v2724
    %v2899 = vunpack.c.l.b16 %v2725
    %v2900 = vunpack.c.h.b16 %v2725
    %v2901 = vunpack.c.l.b16 %v2726
    %v2902 = vunpack.c.h.b16 %v2726
    %v2903 = vunpack.c.l.b16 %v2727
    %v2904 = vunpack.c.h.b16 %v2727
    %v2905 = vunpack.c.l.b16 %v2728
    %v2906 = vunpack.c.h.b16 %v2728
    %v2907 = vunpack.c.l.b16 %v2729
    %v2908 = vunpack.c.h.b16 %v2729
    %v2909 = vunpack.c.l.b16 %v2730
    %v2910 = vunpack.c.h.b16 %v2730
    %v2911 = vunpack.c.l.b16 %v2731
    %v2912 = vunpack.c.h.b16 %v2731
    %v2913 = vunpack.c.l.b16 %v2732
    %v2914 = vunpack.c.h.b16 %v2732
    %v2915 = vunpack.c.l.b16 %v2733
    %v2916 = vunpack.c.h.b16 %v2733
    %v2917 = vunpack.c.l.b16 %v2734
    %v2918 = vunpack.c.h.b16 %v2734
    %v2919 = vunpack.c.l.b16 %v2735
    %v2920 = vunpack.c.h.b16 %v2735
    %v2921 = vunpack.c.l.b16 %v2736
    %v2922 = vunpack.c.h.b16 %v2736
    %v2923 = vunpack.c.l.b16 %v2737
    %v2924 = vunpack.c.h.b16 %v2737
    %v2925 = vunpack.c.l.b16 %v2738
    %v2926 = vunpack.c.h.b16 %v2738
    %v2927 = vunpack.c.l.b16 %v2739
    %v2928 = vunpack.c.h.b16 %v2739
    %v2929 = vunpack.c.l.b16 %v2740
    %v2930 = vunpack.c.h.b16 %v2740
    %v2931 = vunpack.c.l.b16 %v2741
    %v2932 = vunpack.c.h.b16 %v2741
    %v2933 = vunpack.c.l.b16 %v2742
    %v2934 = vunpack.c.h.b16 %v2742
    %v2935 = vunpack.c.l.b16 %v2743
    %v2936 = vunpack.c.h.b16 %v2743
    %v2937 = vunpack.c.l.b16 %v2744
    %v2938 = vunpack.c.h.b16 %v2744
    %v2939 = vunpack.c.l.b16 %v2745
    %v2940 = vunpack.c.h.b16 %v2745
    %v2941 = vunpack.c.l.b16 %v2746
    %v2942 = vunpack.c.h.b16 %v2746
    %v2943 = vunpack.c.l.b16 %v2747
    %v2944 = vunpack.c.h.b16 %v2747
    %v2945 = vunpack.c.l.b16 %v2748
    %v2946 = vunpack.c.h.b16 %v2748
    %v2947 = vunpack.c.l.b16 %v2749
    %v2948 = vunpack.c.h.b16 %v2749
    %v2949 = vunpack.c.l.b16 %v2750
    %v2950 = vunpack.c.h.b16 %v2750
    %v2951 = vunpack.c.l.b16 %v2751
    %v2952 = vunpack.c.h.b16 %v2751
    %v2953 = vunpack.c.l.b16 %v2752
    %v2954 = vunpack.c.h.b16 %v2752
    %v2955 = vunpack.c.l.b16 %v2753
    %v2956 = vunpack.c.h.b16 %v2753
    %v2957 = vunpack.c.l.b16 %v2754
    %v2958 = vunpack.c.h.b16 %v2754
    %v2959 = vpack.c.b16 %v2833, %v2831
    %v2960 = vpack.c.b16 %v2834, %v2832
    %v2961 = vpack.c.b16 %v2837, %v2835
    %v2962 = vpack.c.b16 %v2838, %v2836
    %v2963 = vpack.c.b16 %v2841, %v2839
    %v2964 = vpack.c.b16 %v2842, %v2840
    %v2965 = vpack.c.b16 %v2845, %v2843
    %v2966 = vpack.c.b16 %v2846, %v2844
    %v2967 = vpack.c.b16 %v2849, %v2847
    %v2968 = vpack.c.b16 %v2850, %v2848
    %v2969 = vpack.c.b16 %v2853, %v2851
    %v2970 = vpack.c.b16 %v2854, %v2852
    %v2971 = vpack.c.b16 %v2857, %v2855
    %v2972 = vpack.c.b16 %v2858, %v2856
    %v2973 = vpack.c.b16 %v2861, %v2859
    %v2974 = vpack.c.b16 %v2862, %v2860
    %v2975 = vpack.c.b16 %v2865, %v2863
    %v2976 = vpack.c.b16 %v2866, %v2864
    %v2977 = vpack.c.b16 %v2869, %v2867
    %v2978 = vpack.c.b16 %v2870, %v2868
    %v2979 = vpack.c.b16 %v2873, %v2871
    %v2980 = vpack.c.b16 %v2874, %v2872
    %v2981 = vpack.c.b16 %v2877, %v2875
    %v2982 = vpack.c.b16 %v2878, %v2876
    %v2983 = vpack.c.b16 %v2881, %v2879
    %v2984 = vpack.c.b16 %v2882, %v2880
    %v2985 = vpack.c.b16 %v2885, %v2883
    %v2986 = vpack.c.b16 %v2886, %v2884
    %v2987 = vpack.c.b16 %v2889, %v2887
    %v2988 = vpack.c.b16 %v2890, %v2888
    %v2989 = vpack.c.b16 %v2893, %v2891
    %v2990 = vpack.c.b16 %v2894, %v2892
    %v2991 = vpack.c.b16 %v2897, %v2895
    %v2992 = vpack.c.b16 %v2898, %v2896
    %v2993 = vpack.c.b16 %v2901, %v2899
    %v2994 = vpack.c.b16 %v2902, %v2900
    %v2995 = vpack.c.b16 %v2905, %v2903
    %v2996 = vpack.c.b16 %v2906, %v2904
    %v2997 = vpack.c.b16 %v2909, %v2907
    %v2998 = vpack.c.b16 %v2910, %v2908
    %v2999 = vpack.c.b16 %v2913, %v2911
    %v3000 = vpack.c.b16 %v2914, %v2912
    %v3001 = vpack.c.b16 %v2917, %v2915
    %v3002 = vpack.c.b16 %v2918, %v2916
    %v3003 = vpack.c.b16 %v2921, %v2919
    %v3004 = vpack.c.b16 %v2922, %v2920
    %v3005 = vpack.c.b16 %v2925, %v2923
    %v3006 = vpack.c.b16 %v2926, %v2924
    %v3007 = vpack.c.b16 %v2929, %v2927
    %v3008 = vpack.c.b16 %v2930, %v2928
    %v3009 = vpack.c.b16 %v2933, %v2931
    %v3010 = vpack.c.b16 %v2934, %v2932
    %v3011 = vpack.c.b16 %v2937, %v2935
    %v3012 = vpack.c.b16 %v2938, %v2936
    %v3013 = vpack.c.b16 %v2941, %v2939
    %v3014 = vpack.c.b16 %v2942, %v2940
    %v3015 = vpack.c.b16 %v2945, %v2943
    %v3016 = vpack.c.b16 %v2946, %v2944
    %v3017 = vpack.c.b16 %v2949, %v2947
    %v3018 = vpack.c.b16 %v2950, %v2948
    %v3019 = vpack.c.b16 %v2953, %v2951
    %v3020 = vpack.c.b16 %v2954, %v2952
    %v3021 = vpack.c.b16 %v2957, %v2955
    %v3022 = vpack.c.b16 %v2958, %v2956
    %3087 = vmatprep.subr.bf16.mxu0 %v2960
    %3088 = vmatpush1.bf16.msra.mxu0 %v2959
    %3089 = vmatprep.subr.bf16.mxu0 %v2962
    %3090 = vmatpush1.bf16.msra.mxu0 %v2961
    %3091 = vmatprep.subr.bf16.mxu0 %v2964
    %3092 = vmatpush1.bf16.msra.mxu0 %v2963
    %3093 = vmatprep.subr.bf16.mxu0 %v2966
    %3094 = vmatpush1.bf16.msra.mxu0 %v2965
    %3095 = vmatprep.subr.bf16.mxu0 %v2968
    %3096 = vmatpush1.bf16.msra.mxu0 %v2967
    %3097 = vmatprep.subr.bf16.mxu0 %v2970
    %3098 = vmatpush1.bf16.msra.mxu0 %v2969
    %3099 = vmatprep.subr.bf16.mxu0 %v2972
    %3100 = vmatpush1.bf16.msra.mxu0 %v2971
    %3101 = vmatprep.subr.bf16.mxu0 %v2974
    %3102 = vmatpush1.bf16.msra.mxu0 %v2973
    %3103 = vmatprep.subr.bf16.mxu0 %v2976
    %3104 = vmatpush1.bf16.msra.mxu0 %v2975
    %3105 = vmatprep.subr.bf16.mxu0 %v2978
    %3106 = vmatpush1.bf16.msra.mxu0 %v2977
    %3107 = vmatprep.subr.bf16.mxu0 %v2980
    %3108 = vmatpush1.bf16.msra.mxu0 %v2979
    %3109 = vmatprep.subr.bf16.mxu0 %v2982
    %3110 = vmatpush1.bf16.msra.mxu0 %v2981
    %3111 = vmatprep.subr.bf16.mxu0 %v2984
    %3112 = vmatpush1.bf16.msra.mxu0 %v2983
    %3113 = vmatprep.subr.bf16.mxu0 %v2986
    %3114 = vmatpush1.bf16.msra.mxu0 %v2985
    %3115 = vmatprep.subr.bf16.mxu0 %v2988
    %3116 = vmatpush1.bf16.msra.mxu0 %v2987
    %3117 = vmatprep.subr.bf16.mxu0 %v2990
    %3118 = vmatpush1.bf16.msra.mxu0 %v2989
    %3119 = vmatprep.mubr.bf16.mxu0 %v2688
    %3120 = vmatmul.mubr.bf16.gmra.mrb[0].mxu0 %v2687
    %v3121 = vpop.f32.mrb[0].mxu0
    %v3122 = vadd.f32 %v2760, %v3121
    %v3123 = vpop.f32.mrb[0].mxu0
    %v3124 = vadd.f32 %v2764, %v3123
    %v3125 = vpop.f32.mrb[0].mxu0
    %v3126 = vpop.f32.mrb[0].mxu0
    %3127 = vdwg.mxu0
    %3128 = vmatprep.subr.bf16.mxu0 %v2992
    %3129 = vmatpush1.bf16.msra.mxu0 %v2991
    %3130 = vmatprep.subr.bf16.mxu0 %v2994
    %3131 = vmatpush1.bf16.msra.mxu0 %v2993
    %3132 = vmatprep.subr.bf16.mxu0 %v2996
    %3133 = vmatpush1.bf16.msra.mxu0 %v2995
    %3134 = vmatprep.subr.bf16.mxu0 %v2998
    %3135 = vmatpush1.bf16.msra.mxu0 %v2997
    %3136 = vmatprep.subr.bf16.mxu0 %v3000
    %3137 = vmatpush1.bf16.msra.mxu0 %v2999
    %3138 = vmatprep.subr.bf16.mxu0 %v3002
    %3139 = vmatpush1.bf16.msra.mxu0 %v3001
    %3140 = vmatprep.subr.bf16.mxu0 %v3004
    %3141 = vmatpush1.bf16.msra.mxu0 %v3003
    %3142 = vmatprep.subr.bf16.mxu0 %v3006
    %3143 = vmatpush1.bf16.msra.mxu0 %v3005
    %3144 = vmatprep.subr.bf16.mxu0 %v3008
    %3145 = vmatpush1.bf16.msra.mxu0 %v3007
    %3146 = vmatprep.subr.bf16.mxu0 %v3010
    %3147 = vmatpush1.bf16.msra.mxu0 %v3009
    %3148 = vmatprep.subr.bf16.mxu0 %v3012
    %3149 = vmatpush1.bf16.msra.mxu0 %v3011
    %3150 = vmatprep.subr.bf16.mxu0 %v3014
    %3151 = vmatpush1.bf16.msra.mxu0 %v3013
    %3152 = vmatprep.subr.bf16.mxu0 %v3016
    %3153 = vmatpush1.bf16.msra.mxu0 %v3015
    %3154 = vmatprep.subr.bf16.mxu0 %v3018
    %3155 = vmatpush1.bf16.msra.mxu0 %v3017
    %3156 = vmatprep.subr.bf16.mxu0 %v3020
    %3157 = vmatpush1.bf16.msra.mxu0 %v3019
    %3158 = vmatprep.subr.bf16.mxu0 %v3022
    %3159 = vmatpush1.bf16.msra.mxu0 %v3021
    %3160 = vmatprep.mubr.bf16.mxu0 %v2690
    %3161 = vmatmul.mubr.bf16.gmra.mrb[0].mxu0 %v2689
    %v3162 = vpop.f32.mrb[0].mxu0
    %v3163 = vadd.f32 %v3122, %v3162
    %v3164 = vpop.f32.mrb[0].mxu0
    %v3165 = vadd.f32 %v3124, %v3164
    %v3166 = vpop.f32.mrb[0].mxu0
    %v3167 = vpop.f32.mrb[0].mxu0
    %3168 = vdwg.mxu0
    %v3169 = vmax.f32 %v3163, 0.0
    %v3170 = vmax.f32 %v3165, 0.0
    %v3171 = vpack.c.bf16 %v3169, %v3169
    %v3172 = vpack.c.bf16 %v3170, %v3170
    %v3173 = vld [vmem:[#allocation11] sm:$0xf]
    %v3174 = vld [vmem:[#allocation11 + $0x4] sm:$0xf]
    %v3175 = vld [vmem:[#allocation11 + $0x8] sm:$0xf]
    %v3176 = vld [vmem:[#allocation11 + $0xc] sm:$0xf]
    %v3177 = vld [vmem:[#allocation11 + $0x10] sm:$0xf]
    %v3178 = vld [vmem:[#allocation11 + $0x14] sm:$0xf]
    %v3179 = vld [vmem:[#allocation11 + $0x18] sm:$0xf]
    %v3180 = vld [vmem:[#allocation11 + $0x1c] sm:$0xf]
    %v3181 = vld [vmem:[#allocation11 + $0x20] sm:$0xf]
    %v3182 = vld [vmem:[#allocation11 + $0x24] sm:$0xf]
    %v3183 = vld [vmem:[#allocation11 + $0x28] sm:$0xf]
    %v3184 = vld [vmem:[#allocation11 + $0x2c] sm:$0xf]
    %v3185 = vld [vmem:[#allocation11 + $0x30] sm:$0xf]
    %v3186 = vld [vmem:[#allocation11 + $0x34] sm:$0xf]
    %v3187 = vld [vmem:[#allocation11 + $0x38] sm:$0xf]
    %v3188 = vld [vmem:[#allocation11 + $0x3c] sm:$0xf]
    %v3189 = vld [vmem:[#allocation11 + $0x40] sm:$0xf]
    %v3190 = vld [vmem:[#allocation11 + $0x44] sm:$0xf]
    %v3191 = vld [vmem:[#allocation11 + $0x48] sm:$0xf]
    %v3192 = vld [vmem:[#allocation11 + $0x4c] sm:$0xf]
    %v3193 = vld [vmem:[#allocation11 + $0x50] sm:$0xf]
    %v3194 = vld [vmem:[#allocation11 + $0x54] sm:$0xf]
    %v3195 = vld [vmem:[#allocation11 + $0x58] sm:$0xf]
    %v3196 = vld [vmem:[#allocation11 + $0x5c] sm:$0xf]
    %v3197 = vld [vmem:[#allocation11 + $0x60] sm:$0xf]
    %v3198 = vld [vmem:[#allocation11 + $0x64] sm:$0xf]
    %v3199 = vld [vmem:[#allocation11 + $0x68] sm:$0xf]
    %v3200 = vld [vmem:[#allocation11 + $0x6c] sm:$0xf]
    %v3201 = vld [vmem:[#allocation11 + $0x70] sm:$0xf]
    %v3202 = vld [vmem:[#allocation11 + $0x74] sm:$0xf]
    %v3203 = vld [vmem:[#allocation11 + $0x78] sm:$0xf]
    %v3204 = vld [vmem:[#allocation11 + $0x7c] sm:$0xf]
    %v3205 = vld [vmem:[%s8] sm:$0x1]
    %v3207 = vlaneseq
    %v3208 = vshrl.u32 %v3207, 7
    %v3209 = vsub.s32 0, %v3208
    %v3210 = vrot.slane %v3205, %v3209
    %v3244 = vunpack.c.l.b16 %v3173
    %v3245 = vunpack.c.l.b16 %v3174
    %v3246 = vunpack.c.l.b16 %v3175
    %v3247 = vunpack.c.l.b16 %v3176
    %v3248 = vunpack.c.l.b16 %v3177
    %v3249 = vunpack.c.l.b16 %v3178
    %v3250 = vunpack.c.l.b16 %v3179
    %v3251 = vunpack.c.l.b16 %v3180
    %v3252 = vunpack.c.l.b16 %v3181
    %v3253 = vunpack.c.l.b16 %v3182
    %v3254 = vunpack.c.l.b16 %v3183
    %v3255 = vunpack.c.l.b16 %v3184
    %v3256 = vunpack.c.l.b16 %v3185
    %v3257 = vunpack.c.l.b16 %v3186
    %v3258 = vunpack.c.l.b16 %v3187
    %v3259 = vunpack.c.l.b16 %v3188
    %v3260 = vunpack.c.l.b16 %v3189
    %v3261 = vunpack.c.l.b16 %v3190
    %v3262 = vunpack.c.l.b16 %v3191
    %v3263 = vunpack.c.l.b16 %v3192
    %v3264 = vunpack.c.l.b16 %v3193
    %v3265 = vunpack.c.l.b16 %v3194
    %v3266 = vunpack.c.l.b16 %v3195
    %v3267 = vunpack.c.l.b16 %v3196
    %v3268 = vunpack.c.l.b16 %v3197
    %v3269 = vunpack.c.l.b16 %v3198
    %v3270 = vunpack.c.l.b16 %v3199
    %v3271 = vunpack.c.l.b16 %v3200
    %v3272 = vunpack.c.l.b16 %v3201
    %v3273 = vunpack.c.l.b16 %v3202
    %v3274 = vunpack.c.l.b16 %v3203
    %v3275 = vunpack.c.l.b16 %v3204
    %v3276 = vpack.c.b16 %v3245, %v3244
    %v3277 = vpack.c.b16 %v3247, %v3246
    %v3278 = vpack.c.b16 %v3249, %v3248
    %v3279 = vpack.c.b16 %v3251, %v3250
    %v3280 = vpack.c.b16 %v3253, %v3252
    %v3281 = vpack.c.b16 %v3255, %v3254
    %v3282 = vpack.c.b16 %v3257, %v3256
    %v3283 = vpack.c.b16 %v3259, %v3258
    %v3284 = vpack.c.b16 %v3261, %v3260
    %v3285 = vpack.c.b16 %v3263, %v3262
    %v3286 = vpack.c.b16 %v3265, %v3264
    %v3287 = vpack.c.b16 %v3267, %v3266
    %v3288 = vpack.c.b16 %v3269, %v3268
    %v3289 = vpack.c.b16 %v3271, %v3270
    %v3290 = vpack.c.b16 %v3273, %v3272
    %v3291 = vpack.c.b16 %v3275, %v3274
    %3308 = vmatprep.subr.bf16.mxu0 0
    %3309 = vmatpush1.bf16.msra.mxu0 %v3276
    %3310 = vmatprep.subr.bf16.mxu0 0
    %3311 = vmatpush1.bf16.msra.mxu0 %v3277
    %3312 = vmatprep.subr.bf16.mxu0 0
    %3313 = vmatpush1.bf16.msra.mxu0 %v3278
    %3314 = vmatprep.subr.bf16.mxu0 0
    %3315 = vmatpush1.bf16.msra.mxu0 %v3279
    %3316 = vmatprep.subr.bf16.mxu0 0
    %3317 = vmatpush1.bf16.msra.mxu0 %v3280
    %3318 = vmatprep.subr.bf16.mxu0 0
    %3319 = vmatpush1.bf16.msra.mxu0 %v3281
    %3320 = vmatprep.subr.bf16.mxu0 0
    %3321 = vmatpush1.bf16.msra.mxu0 %v3282
    %3322 = vmatprep.subr.bf16.mxu0 0
    %3323 = vmatpush1.bf16.msra.mxu0 %v3283
    %3324 = vmatprep.subr.bf16.mxu0 0
    %3325 = vmatpush1.bf16.msra.mxu0 %v3284
    %3326 = vmatprep.subr.bf16.mxu0 0
    %3327 = vmatpush1.bf16.msra.mxu0 %v3285
    %3328 = vmatprep.subr.bf16.mxu0 0
    %3329 = vmatpush1.bf16.msra.mxu0 %v3286
    %3330 = vmatprep.subr.bf16.mxu0 0
    %3331 = vmatpush1.bf16.msra.mxu0 %v3287
    %3332 = vmatprep.subr.bf16.mxu0 0
    %3333 = vmatpush1.bf16.msra.mxu0 %v3288
    %3334 = vmatprep.subr.bf16.mxu0 0
    %3335 = vmatpush1.bf16.msra.mxu0 %v3289
    %3336 = vmatprep.subr.bf16.mxu0 0
    %3337 = vmatpush1.bf16.msra.mxu0 %v3290
    %3338 = vmatprep.subr.bf16.mxu0 0
    %3339 = vmatpush1.bf16.msra.mxu0 %v3291
    %3340 = vmatprep.mubr.bf16.mxu0 %v3172
    %3341 = vmatmul.mubr.bf16.gmra.mrb[0].mxu0 %v3171
    %v3342 = vpop.f32.mrb[0].mxu0
    %v3343 = vadd.f32 %v3210, %v3342
    %v3344 = vpop.f32.mrb[0].mxu0
    %v3345 = vpop.f32.mrb[0].mxu0
    %v3346 = vpop.f32.mrb[0].mxu0
    %3347 = vdwg.mxu0
    %v3348 = vpack.c.bf16 %v3343, %v3343
    %v3349 = vld [vmem:[#allocation13] sm:$0xff]
    %v3350 = vld [vmem:[#allocation13 + $0x8] sm:$0xff]
    %v3351 = vld [vmem:[#allocation13 + $0x10] sm:$0xff]
    %v3352 = vld [vmem:[#allocation13 + $0x18] sm:$0xff]
    %v3353 = vld [vmem:[#allocation13 + $0x20] sm:$0xff]
    %v3354 = vld [vmem:[#allocation13 + $0x28] sm:$0xff]
    %v3355 = vld [vmem:[#allocation13 + $0x30] sm:$0xff]
    %v3356 = vld [vmem:[#allocation13 + $0x38] sm:$0xff]
    %v3357 = vld [vmem:[#allocation13 + $0x40] sm:$0xff]
    %v3358 = vld [vmem:[#allocation13 + $0x48] sm:$0xff]
    %v3359 = vld [vmem:[#allocation13 + $0x50] sm:$0xff]
    %v3360 = vld [vmem:[#allocation13 + $0x58] sm:$0xff]
    %v3361 = vld [vmem:[#allocation13 + $0x60] sm:$0xff]
    %v3362 = vld [vmem:[#allocation13 + $0x68] sm:$0xff]
    %v3363 = vld [vmem:[#allocation13 + $0x70] sm:$0xff]
    %v3364 = vld [vmem:[#allocation13 + $0x78] sm:$0xff]
    %v3365 = vld [vmem:[%s10] sm:$0x3]
    %v3367 = vlaneseq
    %v3368 = vshrl.u32 %v3367, 7
    %v3369 = vsub.s32 0, %v3368
    %v3370 = vrot.slane %v3365, %v3369
    %v3371 = vlaneseq
    %v3372 = vshrl.u32 %v3371, 7
    %v3373 = vsub.s32 1, %v3372
    %v3374 = vrot.slane %v3365, %v3373
    %v3393 = vunpack.c.l.b16 %v3349
    %v3394 = vunpack.c.h.b16 %v3349
    %v3395 = vunpack.c.l.b16 %v3350
    %v3396 = vunpack.c.h.b16 %v3350
    %v3397 = vunpack.c.l.b16 %v3351
    %v3398 = vunpack.c.h.b16 %v3351
    %v3399 = vunpack.c.l.b16 %v3352
    %v3400 = vunpack.c.h.b16 %v3352
    %v3401 = vunpack.c.l.b16 %v3353
    %v3402 = vunpack.c.h.b16 %v3353
    %v3403 = vunpack.c.l.b16 %v3354
    %v3404 = vunpack.c.h.b16 %v3354
    %v3405 = vunpack.c.l.b16 %v3355
    %v3406 = vunpack.c.h.b16 %v3355
    %v3407 = vunpack.c.l.b16 %v3356
    %v3408 = vunpack.c.h.b16 %v3356
    %v3409 = vunpack.c.l.b16 %v3357
    %v3410 = vunpack.c.h.b16 %v3357
    %v3411 = vunpack.c.l.b16 %v3358
    %v3412 = vunpack.c.h.b16 %v3358
    %v3413 = vunpack.c.l.b16 %v3359
    %v3414 = vunpack.c.h.b16 %v3359
    %v3415 = vunpack.c.l.b16 %v3360
    %v3416 = vunpack.c.h.b16 %v3360
    %v3417 = vunpack.c.l.b16 %v3361
    %v3418 = vunpack.c.h.b16 %v3361
    %v3419 = vunpack.c.l.b16 %v3362
    %v3420 = vunpack.c.h.b16 %v3362
    %v3421 = vunpack.c.l.b16 %v3363
    %v3422 = vunpack.c.h.b16 %v3363
    %v3423 = vunpack.c.l.b16 %v3364
    %v3424 = vunpack.c.h.b16 %v3364
    %v3425 = vpack.c.b16 %v3395, %v3393
    %v3426 = vpack.c.b16 %v3396, %v3394
    %v3427 = vpack.c.b16 %v3399, %v3397
    %v3428 = vpack.c.b16 %v3400, %v3398
    %v3429 = vpack.c.b16 %v3403, %v3401
    %v3430 = vpack.c.b16 %v3404, %v3402
    %v3431 = vpack.c.b16 %v3407, %v3405
    %v3432 = vpack.c.b16 %v3408, %v3406
    %v3433 = vpack.c.b16 %v3411, %v3409
    %v3434 = vpack.c.b16 %v3412, %v3410
    %v3435 = vpack.c.b16 %v3415, %v3413
    %v3436 = vpack.c.b16 %v3416, %v3414
    %v3437 = vpack.c.b16 %v3419, %v3417
    %v3438 = vpack.c.b16 %v3420, %v3418
    %v3439 = vpack.c.b16 %v3423, %v3421
    %v3440 = vpack.c.b16 %v3424, %v3422
    %3457 = vmatprep.subr.bf16.mxu0 %v3426
    %3458 = vmatpush1.bf16.msra.mxu0 %v3425
    %3459 = vmatprep.subr.bf16.mxu0 %v3428
    %3460 = vmatpush1.bf16.msra.mxu0 %v3427
    %3461 = vmatprep.subr.bf16.mxu0 %v3430
    %3462 = vmatpush1.bf16.msra.mxu0 %v3429
    %3463 = vmatprep.subr.bf16.mxu0 %v3432
    %3464 = vmatpush1.bf16.msra.mxu0 %v3431
    %3465 = vmatprep.subr.bf16.mxu0 %v3434
    %3466 = vmatpush1.bf16.msra.mxu0 %v3433
    %3467 = vmatprep.subr.bf16.mxu0 %v3436
    %3468 = vmatpush1.bf16.msra.mxu0 %v3435
    %3469 = vmatprep.subr.bf16.mxu0 %v3438
    %3470 = vmatpush1.bf16.msra.mxu0 %v3437
    %3471 = vmatprep.subr.bf16.mxu0 %v3440
    %3472 = vmatpush1.bf16.msra.mxu0 %v3439
    %3473 = vmatprep.subr.bf16.mxu0 0
    %3474 = vmatpush1.bf16.msra.mxu0 0
    %3475 = vmatprep.subr.bf16.mxu0 0
    %3476 = vmatpush1.bf16.msra.mxu0 0
    %3477 = vmatprep.subr.bf16.mxu0 0
    %3478 = vmatpush1.bf16.msra.mxu0 0
    %3479 = vmatprep.subr.bf16.mxu0 0
    %3480 = vmatpush1.bf16.msra.mxu0 0
    %3481 = vmatprep.subr.bf16.mxu0 0
    %3482 = vmatpush1.bf16.msra.mxu0 0
    %3483 = vmatprep.subr.bf16.mxu0 0
    %3484 = vmatpush1.bf16.msra.mxu0 0
    %3485 = vmatprep.subr.bf16.mxu0 0
    %3486 = vmatpush1.bf16.msra.mxu0 0
    %3487 = vmatprep.subr.bf16.mxu0 0
    %3488 = vmatpush1.bf16.msra.mxu0 0
    %3489 = vmatprep.mubr.bf16.mxu0 0
    %3490 = vmatmul.mubr.bf16.gmra.mrb[0].mxu0 %v3348
    %v3491 = vpop.f32.mrb[0].mxu0
    %v3492 = vadd.f32 %v3370, %v3491
    %v3493 = vpop.f32.mrb[0].mxu0
    %v3494 = vadd.f32 %v3374, %v3493
    %v3495 = vpop.f32.mrb[0].mxu0
    %v3496 = vpop.f32.mrb[0].mxu0
    %3497 = vdwg.mxu0
    %v3498 = vmax.f32 %v3492, 0.0
    %v3499 = vmax.f32 %v3494, 0.0
    %v3500 = vpack.c.bf16 %v3498, %v3498
    %v3501 = vpack.c.bf16 %v3499, %v3499
    %v3502 = vld [vmem:[#allocation14] sm:$0xff]
    %v3503 = vld [vmem:[#allocation14 + $0x8] sm:$0xff]
    %v3504 = vld [vmem:[#allocation14 + $0x10] sm:$0xff]
    %v3505 = vld [vmem:[#allocation14 + $0x18] sm:$0xff]
    %v3506 = vld [vmem:[#allocation14 + $0x20] sm:$0xff]
    %v3507 = vld [vmem:[#allocation14 + $0x28] sm:$0xff]
    %v3508 = vld [vmem:[#allocation14 + $0x30] sm:$0xff]
    %v3509 = vld [vmem:[#allocation14 + $0x38] sm:$0xff]
    %v3510 = vld [vmem:[#allocation14 + $0x40] sm:$0xff]
    %v3511 = vld [vmem:[#allocation14 + $0x48] sm:$0xff]
    %v3512 = vld [vmem:[#allocation14 + $0x50] sm:$0xff]
    %v3513 = vld [vmem:[#allocation14 + $0x58] sm:$0xff]
    %v3514 = vld [vmem:[#allocation14 + $0x60] sm:$0xff]
    %v3515 = vld [vmem:[#allocation14 + $0x68] sm:$0xff]
    %v3516 = vld [vmem:[#allocation14 + $0x70] sm:$0xff]
    %v3517 = vld [vmem:[#allocation14 + $0x78] sm:$0xff]
    %v3518 = vld [vmem:[#allocation14 + $0x80] sm:$0xff]
    %v3519 = vld [vmem:[#allocation14 + $0x88] sm:$0xff]
    %v3520 = vld [vmem:[#allocation14 + $0x90] sm:$0xff]
    %v3521 = vld [vmem:[#allocation14 + $0x98] sm:$0xff]
    %v3522 = vld [vmem:[#allocation14 + $0xa0] sm:$0xff]
    %v3523 = vld [vmem:[#allocation14 + $0xa8] sm:$0xff]
    %v3524 = vld [vmem:[#allocation14 + $0xb0] sm:$0xff]
    %v3525 = vld [vmem:[#allocation14 + $0xb8] sm:$0xff]
    %v3526 = vld [vmem:[#allocation14 + $0xc0] sm:$0xff]
    %v3527 = vld [vmem:[#allocation14 + $0xc8] sm:$0xff]
    %v3528 = vld [vmem:[#allocation14 + $0xd0] sm:$0xff]
    %v3529 = vld [vmem:[#allocation14 + $0xd8] sm:$0xff]
    %v3530 = vld [vmem:[#allocation14 + $0xe0] sm:$0xff]
    %v3531 = vld [vmem:[#allocation14 + $0xe8] sm:$0xff]
    %v3532 = vld [vmem:[#allocation14 + $0xf0] sm:$0xff]
    %v3533 = vld [vmem:[#allocation14 + $0xf8] sm:$0xff]
    %v3534 = vld [vmem:[#allocation14 + $0x100] sm:$0xff]
    %v3535 = vld [vmem:[#allocation14 + $0x108] sm:$0xff]
    %v3536 = vld [vmem:[#allocation14 + $0x110] sm:$0xff]
    %v3537 = vld [vmem:[#allocation14 + $0x118] sm:$0xff]
    %v3538 = vld [vmem:[#allocation14 + $0x120] sm:$0xff]
    %v3539 = vld [vmem:[#allocation14 + $0x128] sm:$0xff]
    %v3540 = vld [vmem:[#allocation14 + $0x130] sm:$0xff]
    %v3541 = vld [vmem:[#allocation14 + $0x138] sm:$0xff]
    %v3542 = vld [vmem:[#allocation14 + $0x140] sm:$0xff]
    %v3543 = vld [vmem:[#allocation14 + $0x148] sm:$0xff]
    %v3544 = vld [vmem:[#allocation14 + $0x150] sm:$0xff]
    %v3545 = vld [vmem:[#allocation14 + $0x158] sm:$0xff]
    %v3546 = vld [vmem:[#allocation14 + $0x160] sm:$0xff]
    %v3547 = vld [vmem:[#allocation14 + $0x168] sm:$0xff]
    %v3548 = vld [vmem:[#allocation14 + $0x170] sm:$0xff]
    %v3549 = vld [vmem:[#allocation14 + $0x178] sm:$0xff]
    %v3550 = vld [vmem:[#allocation14 + $0x180] sm:$0xff]
    %v3551 = vld [vmem:[#allocation14 + $0x188] sm:$0xff]
    %v3552 = vld [vmem:[#allocation14 + $0x190] sm:$0xff]
    %v3553 = vld [vmem:[#allocation14 + $0x198] sm:$0xff]
    %v3554 = vld [vmem:[#allocation14 + $0x1a0] sm:$0xff]
    %v3555 = vld [vmem:[#allocation14 + $0x1a8] sm:$0xff]
    %v3556 = vld [vmem:[#allocation14 + $0x1b0] sm:$0xff]
    %v3557 = vld [vmem:[#allocation14 + $0x1b8] sm:$0xff]
    %v3558 = vld [vmem:[#allocation14 + $0x1c0] sm:$0xff]
    %v3559 = vld [vmem:[#allocation14 + $0x1c8] sm:$0xff]
    %v3560 = vld [vmem:[#allocation14 + $0x1d0] sm:$0xff]
    %v3561 = vld [vmem:[#allocation14 + $0x1d8] sm:$0xff]
    %v3562 = vld [vmem:[#allocation14 + $0x1e0] sm:$0xff]
    %v3563 = vld [vmem:[#allocation14 + $0x1e8] sm:$0xff]
    %v3564 = vld [vmem:[#allocation14 + $0x1f0] sm:$0xff]
    %v3565 = vld [vmem:[#allocation14 + $0x1f8] sm:$0xff]
    %v3566 = vld [vmem:[%s12] sm:$0xf]
    %v3568 = vlaneseq
    %v3569 = vshrl.u32 %v3568, 7
    %v3570 = vsub.s32 0, %v3569
    %v3571 = vrot.slane %v3566, %v3570
    %v3572 = vlaneseq
    %v3573 = vshrl.u32 %v3572, 7
    %v3574 = vsub.s32 1, %v3573
    %v3575 = vrot.slane %v3566, %v3574
    %v3576 = vlaneseq
    %v3577 = vshrl.u32 %v3576, 7
    %v3578 = vsub.s32 2, %v3577
    %v3579 = vrot.slane %v3566, %v3578
    %v3580 = vlaneseq
    %v3581 = vshrl.u32 %v3580, 7
    %v3582 = vsub.s32 3, %v3581
    %v3583 = vrot.slane %v3566, %v3582
    %v3652 = vunpack.c.l.b16 %v3502
    %v3653 = vunpack.c.h.b16 %v3502
    %v3654 = vunpack.c.l.b16 %v3503
    %v3655 = vunpack.c.h.b16 %v3503
    %v3656 = vunpack.c.l.b16 %v3504
    %v3657 = vunpack.c.h.b16 %v3504
    %v3658 = vunpack.c.l.b16 %v3505
    %v3659 = vunpack.c.h.b16 %v3505
    %v3660 = vunpack.c.l.b16 %v3506
    %v3661 = vunpack.c.h.b16 %v3506
    %v3662 = vunpack.c.l.b16 %v3507
    %v3663 = vunpack.c.h.b16 %v3507
    %v3664 = vunpack.c.l.b16 %v3508
    %v3665 = vunpack.c.h.b16 %v3508
    %v3666 = vunpack.c.l.b16 %v3509
    %v3667 = vunpack.c.h.b16 %v3509
    %v3668 = vunpack.c.l.b16 %v3510
    %v3669 = vunpack.c.h.b16 %v3510
    %v3670 = vunpack.c.l.b16 %v3511
    %v3671 = vunpack.c.h.b16 %v3511
    %v3672 = vunpack.c.l.b16 %v3512
    %v3673 = vunpack.c.h.b16 %v3512
    %v3674 = vunpack.c.l.b16 %v3513
    %v3675 = vunpack.c.h.b16 %v3513
    %v3676 = vunpack.c.l.b16 %v3514
    %v3677 = vunpack.c.h.b16 %v3514
    %v3678 = vunpack.c.l.b16 %v3515
    %v3679 = vunpack.c.h.b16 %v3515
    %v3680 = vunpack.c.l.b16 %v3516
    %v3681 = vunpack.c.h.b16 %v3516
    %v3682 = vunpack.c.l.b16 %v3517
    %v3683 = vunpack.c.h.b16 %v3517
    %v3684 = vunpack.c.l.b16 %v3518
    %v3685 = vunpack.c.h.b16 %v3518
    %v3686 = vunpack.c.l.b16 %v3519
    %v3687 = vunpack.c.h.b16 %v3519
    %v3688 = vunpack.c.l.b16 %v3520
    %v3689 = vunpack.c.h.b16 %v3520
    %v3690 = vunpack.c.l.b16 %v3521
    %v3691 = vunpack.c.h.b16 %v3521
    %v3692 = vunpack.c.l.b16 %v3522
    %v3693 = vunpack.c.h.b16 %v3522
    %v3694 = vunpack.c.l.b16 %v3523
    %v3695 = vunpack.c.h.b16 %v3523
    %v3696 = vunpack.c.l.b16 %v3524
    %v3697 = vunpack.c.h.b16 %v3524
    %v3698 = vunpack.c.l.b16 %v3525
    %v3699 = vunpack.c.h.b16 %v3525
    %v3700 = vunpack.c.l.b16 %v3526
    %v3701 = vunpack.c.h.b16 %v3526
    %v3702 = vunpack.c.l.b16 %v3527
    %v3703 = vunpack.c.h.b16 %v3527
    %v3704 = vunpack.c.l.b16 %v3528
    %v3705 = vunpack.c.h.b16 %v3528
    %v3706 = vunpack.c.l.b16 %v3529
    %v3707 = vunpack.c.h.b16 %v3529
    %v3708 = vunpack.c.l.b16 %v3530
    %v3709 = vunpack.c.h.b16 %v3530
    %v3710 = vunpack.c.l.b16 %v3531
    %v3711 = vunpack.c.h.b16 %v3531
    %v3712 = vunpack.c.l.b16 %v3532
    %v3713 = vunpack.c.h.b16 %v3532
    %v3714 = vunpack.c.l.b16 %v3533
    %v3715 = vunpack.c.h.b16 %v3533
    %v3716 = vunpack.c.l.b16 %v3534
    %v3717 = vunpack.c.h.b16 %v3534
    %v3718 = vunpack.c.l.b16 %v3535
    %v3719 = vunpack.c.h.b16 %v3535
    %v3720 = vunpack.c.l.b16 %v3536
    %v3721 = vunpack.c.h.b16 %v3536
    %v3722 = vunpack.c.l.b16 %v3537
    %v3723 = vunpack.c.h.b16 %v3537
    %v3724 = vunpack.c.l.b16 %v3538
    %v3725 = vunpack.c.h.b16 %v3538
    %v3726 = vunpack.c.l.b16 %v3539
    %v3727 = vunpack.c.h.b16 %v3539
    %v3728 = vunpack.c.l.b16 %v3540
    %v3729 = vunpack.c.h.b16 %v3540
    %v3730 = vunpack.c.l.b16 %v3541
    %v3731 = vunpack.c.h.b16 %v3541
    %v3732 = vunpack.c.l.b16 %v3542
    %v3733 = vunpack.c.h.b16 %v3542
    %v3734 = vunpack.c.l.b16 %v3543
    %v3735 = vunpack.c.h.b16 %v3543
    %v3736 = vunpack.c.l.b16 %v3544
    %v3737 = vunpack.c.h.b16 %v3544
    %v3738 = vunpack.c.l.b16 %v3545
    %v3739 = vunpack.c.h.b16 %v3545
    %v3740 = vunpack.c.l.b16 %v3546
    %v3741 = vunpack.c.h.b16 %v3546
    %v3742 = vunpack.c.l.b16 %v3547
    %v3743 = vunpack.c.h.b16 %v3547
    %v3744 = vunpack.c.l.b16 %v3548
    %v3745 = vunpack.c.h.b16 %v3548
    %v3746 = vunpack.c.l.b16 %v3549
    %v3747 = vunpack.c.h.b16 %v3549
    %v3748 = vunpack.c.l.b16 %v3550
    %v3749 = vunpack.c.h.b16 %v3550
    %v3750 = vunpack.c.l.b16 %v3551
    %v3751 = vunpack.c.h.b16 %v3551
    %v3752 = vunpack.c.l.b16 %v3552
    %v3753 = vunpack.c.h.b16 %v3552
    %v3754 = vunpack.c.l.b16 %v3553
    %v3755 = vunpack.c.h.b16 %v3553
    %v3756 = vunpack.c.l.b16 %v3554
    %v3757 = vunpack.c.h.b16 %v3554
    %v3758 = vunpack.c.l.b16 %v3555
    %v3759 = vunpack.c.h.b16 %v3555
    %v3760 = vunpack.c.l.b16 %v3556
    %v3761 = vunpack.c.h.b16 %v3556
    %v3762 = vunpack.c.l.b16 %v3557
    %v3763 = vunpack.c.h.b16 %v3557
    %v3764 = vunpack.c.l.b16 %v3558
    %v3765 = vunpack.c.h.b16 %v3558
    %v3766 = vunpack.c.l.b16 %v3559
    %v3767 = vunpack.c.h.b16 %v3559
    %v3768 = vunpack.c.l.b16 %v3560
    %v3769 = vunpack.c.h.b16 %v3560
    %v3770 = vunpack.c.l.b16 %v3561
    %v3771 = vunpack.c.h.b16 %v3561
    %v3772 = vunpack.c.l.b16 %v3562
    %v3773 = vunpack.c.h.b16 %v3562
    %v3774 = vunpack.c.l.b16 %v3563
    %v3775 = vunpack.c.h.b16 %v3563
    %v3776 = vunpack.c.l.b16 %v3564
    %v3777 = vunpack.c.h.b16 %v3564
    %v3778 = vunpack.c.l.b16 %v3565
    %v3779 = vunpack.c.h.b16 %v3565
    %v3780 = vpack.c.b16 %v3656, %v3652
    %v3781 = vpack.c.b16 %v3657, %v3653
    %v3782 = vpack.c.b16 %v3658, %v3654
    %v3783 = vpack.c.b16 %v3659, %v3655
    %v3784 = vpack.c.b16 %v3664, %v3660
    %v3785 = vpack.c.b16 %v3665, %v3661
    %v3786 = vpack.c.b16 %v3666, %v3662
    %v3787 = vpack.c.b16 %v3667, %v3663
    %v3788 = vpack.c.b16 %v3672, %v3668
    %v3789 = vpack.c.b16 %v3673, %v3669
    %v3790 = vpack.c.b16 %v3674, %v3670
    %v3791 = vpack.c.b16 %v3675, %v3671
    %v3792 = vpack.c.b16 %v3680, %v3676
    %v3793 = vpack.c.b16 %v3681, %v3677
    %v3794 = vpack.c.b16 %v3682, %v3678
    %v3795 = vpack.c.b16 %v3683, %v3679
    %v3796 = vpack.c.b16 %v3688, %v3684
    %v3797 = vpack.c.b16 %v3689, %v3685
    %v3798 = vpack.c.b16 %v3690, %v3686
    %v3799 = vpack.c.b16 %v3691, %v3687
    %v3800 = vpack.c.b16 %v3696, %v3692
    %v3801 = vpack.c.b16 %v3697, %v3693
    %v3802 = vpack.c.b16 %v3698, %v3694
    %v3803 = vpack.c.b16 %v3699, %v3695
    %v3804 = vpack.c.b16 %v3704, %v3700
    %v3805 = vpack.c.b16 %v3705, %v3701
    %v3806 = vpack.c.b16 %v3706, %v3702
    %v3807 = vpack.c.b16 %v3707, %v3703
    %v3808 = vpack.c.b16 %v3712, %v3708
    %v3809 = vpack.c.b16 %v3713, %v3709
    %v3810 = vpack.c.b16 %v3714, %v3710
    %v3811 = vpack.c.b16 %v3715, %v3711
    %v3812 = vpack.c.b16 %v3720, %v3716
    %v3813 = vpack.c.b16 %v3721, %v3717
    %v3814 = vpack.c.b16 %v3722, %v3718
    %v3815 = vpack.c.b16 %v3723, %v3719
    %v3816 = vpack.c.b16 %v3728, %v3724
    %v3817 = vpack.c.b16 %v3729, %v3725
    %v3818 = vpack.c.b16 %v3730, %v3726
    %v3819 = vpack.c.b16 %v3731, %v3727
    %v3820 = vpack.c.b16 %v3736, %v3732
    %v3821 = vpack.c.b16 %v3737, %v3733
    %v3822 = vpack.c.b16 %v3738, %v3734
    %v3823 = vpack.c.b16 %v3739, %v3735
    %v3824 = vpack.c.b16 %v3744, %v3740
    %v3825 = vpack.c.b16 %v3745, %v3741
    %v3826 = vpack.c.b16 %v3746, %v3742
    %v3827 = vpack.c.b16 %v3747, %v3743
    %v3828 = vpack.c.b16 %v3752, %v3748
    %v3829 = vpack.c.b16 %v3753, %v3749
    %v3830 = vpack.c.b16 %v3754, %v3750
    %v3831 = vpack.c.b16 %v3755, %v3751
    %v3832 = vpack.c.b16 %v3760, %v3756
    %v3833 = vpack.c.b16 %v3761, %v3757
    %v3834 = vpack.c.b16 %v3762, %v3758
    %v3835 = vpack.c.b16 %v3763, %v3759
    %v3836 = vpack.c.b16 %v3768, %v3764
    %v3837 = vpack.c.b16 %v3769, %v3765
    %v3838 = vpack.c.b16 %v3770, %v3766
    %v3839 = vpack.c.b16 %v3771, %v3767
    %v3840 = vpack.c.b16 %v3776, %v3772
    %v3841 = vpack.c.b16 %v3777, %v3773
    %v3842 = vpack.c.b16 %v3778, %v3774
    %v3843 = vpack.c.b16 %v3779, %v3775
    %3908 = vmatprep.subr.bf16.mxu0 %v3781
    %3909 = vmatpush1.bf16.msra.mxu0 %v3780
    %3910 = vmatprep.subr.bf16.mxu0 %v3785
    %3911 = vmatpush1.bf16.msra.mxu0 %v3784
    %3912 = vmatprep.subr.bf16.mxu0 %v3789
    %3913 = vmatpush1.bf16.msra.mxu0 %v3788
    %3914 = vmatprep.subr.bf16.mxu0 %v3793
    %3915 = vmatpush1.bf16.msra.mxu0 %v3792
    %3916 = vmatprep.subr.bf16.mxu0 %v3797
    %3917 = vmatpush1.bf16.msra.mxu0 %v3796
    %3918 = vmatprep.subr.bf16.mxu0 %v3801
    %3919 = vmatpush1.bf16.msra.mxu0 %v3800
    %3920 = vmatprep.subr.bf16.mxu0 %v3805
    %3921 = vmatpush1.bf16.msra.mxu0 %v3804
    %3922 = vmatprep.subr.bf16.mxu0 %v3809
    %3923 = vmatpush1.bf16.msra.mxu0 %v3808
    %3924 = vmatprep.subr.bf16.mxu0 %v3813
    %3925 = vmatpush1.bf16.msra.mxu0 %v3812
    %3926 = vmatprep.subr.bf16.mxu0 %v3817
    %3927 = vmatpush1.bf16.msra.mxu0 %v3816
    %3928 = vmatprep.subr.bf16.mxu0 %v3821
    %3929 = vmatpush1.bf16.msra.mxu0 %v3820
    %3930 = vmatprep.subr.bf16.mxu0 %v3825
    %3931 = vmatpush1.bf16.msra.mxu0 %v3824
    %3932 = vmatprep.subr.bf16.mxu0 %v3829
    %3933 = vmatpush1.bf16.msra.mxu0 %v3828
    %3934 = vmatprep.subr.bf16.mxu0 %v3833
    %3935 = vmatpush1.bf16.msra.mxu0 %v3832
    %3936 = vmatprep.subr.bf16.mxu0 %v3837
    %3937 = vmatpush1.bf16.msra.mxu0 %v3836
    %3938 = vmatprep.subr.bf16.mxu0 %v3841
    %3939 = vmatpush1.bf16.msra.mxu0 %v3840
    %3940 = vmatprep.mubr.bf16.mxu0 %v3501
    %3941 = vmatmul.mubr.bf16.gmra.mrb[0].mxu0 %v3500
    %v3942 = vpop.f32.mrb[0].mxu0
    %v3943 = vadd.f32 %v3571, %v3942
    %v3944 = vpop.f32.mrb[0].mxu0
    %v3945 = vadd.f32 %v3575, %v3944
    %v3946 = vpop.f32.mrb[0].mxu0
    %v3947 = vpop.f32.mrb[0].mxu0
    %3948 = vdwg.mxu0
    %3949 = vmatprep.subr.bf16.mxu0 %v3783
    %3950 = vmatpush1.bf16.msra.mxu0 %v3782
    %3951 = vmatprep.subr.bf16.mxu0 %v3787
    %3952 = vmatpush1.bf16.msra.mxu0 %v3786
    %3953 = vmatprep.subr.bf16.mxu0 %v3791
    %3954 = vmatpush1.bf16.msra.mxu0 %v3790
    %3955 = vmatprep.subr.bf16.mxu0 %v3795
    %3956 = vmatpush1.bf16.msra.mxu0 %v3794
    %3957 = vmatprep.subr.bf16.mxu0 %v3799
    %3958 = vmatpush1.bf16.msra.mxu0 %v3798
    %3959 = vmatprep.subr.bf16.mxu0 %v3803
    %3960 = vmatpush1.bf16.msra.mxu0 %v3802
    %3961 = vmatprep.subr.bf16.mxu0 %v3807
    %3962 = vmatpush1.bf16.msra.mxu0 %v3806
    %3963 = vmatprep.subr.bf16.mxu0 %v3811
    %3964 = vmatpush1.bf16.msra.mxu0 %v3810
    %3965 = vmatprep.subr.bf16.mxu0 %v3815
    %3966 = vmatpush1.bf16.msra.mxu0 %v3814
    %3967 = vmatprep.subr.bf16.mxu0 %v3819
    %3968 = vmatpush1.bf16.msra.mxu0 %v3818
    %3969 = vmatprep.subr.bf16.mxu0 %v3823
    %3970 = vmatpush1.bf16.msra.mxu0 %v3822
    %3971 = vmatprep.subr.bf16.mxu0 %v3827
    %3972 = vmatpush1.bf16.msra.mxu0 %v3826
    %3973 = vmatprep.subr.bf16.mxu0 %v3831
    %3974 = vmatpush1.bf16.msra.mxu0 %v3830
    %3975 = vmatprep.subr.bf16.mxu0 %v3835
    %3976 = vmatpush1.bf16.msra.mxu0 %v3834
    %3977 = vmatprep.subr.bf16.mxu0 %v3839
    %3978 = vmatpush1.bf16.msra.mxu0 %v3838
    %3979 = vmatprep.subr.bf16.mxu0 %v3843
    %3980 = vmatpush1.bf16.msra.mxu0 %v3842
    %3981 = vmatprep.mubr.bf16.mxu0 %v3501
    %3982 = vmatmul.mubr.bf16.gmra.mrb[0].mxu0 %v3500
    %v3983 = vpop.f32.mrb[0].mxu0
    %v3984 = vadd.f32 %v3579, %v3983
    %v3985 = vpop.f32.mrb[0].mxu0
    %v3986 = vadd.f32 %v3583, %v3985
    %v3987 = vpop.f32.mrb[0].mxu0
    %v3988 = vpop.f32.mrb[0].mxu0
    %3989 = vdwg.mxu0
    %v3990 = vmax.f32 %v3943, 0.0
    %v3991 = vmax.f32 %v3945, 0.0
    %v3992 = vmax.f32 %v3984, 0.0
    %v3993 = vmax.f32 %v3986, 0.0
    %v3994 = vpack.c.bf16 %v3990, %v3990
    %v3995 = vpack.c.bf16 %v3991, %v3991
    %v3996 = vpack.c.bf16 %v3992, %v3992
    %v3997 = vpack.c.bf16 %v3993, %v3993
    %v3998 = vld [vmem:[#allocation16] sm:$0xff]
    %v3999 = vld [vmem:[#allocation16 + $0x8] sm:$0xff]
    %v4000 = vld [vmem:[#allocation16 + $0x10] sm:$0xff]
    %v4001 = vld [vmem:[#allocation16 + $0x18] sm:$0xff]
    %v4002 = vld [vmem:[#allocation16 + $0x20] sm:$0xff]
    %v4003 = vld [vmem:[#allocation16 + $0x28] sm:$0xff]
    %v4004 = vld [vmem:[#allocation16 + $0x30] sm:$0xff]
    %v4005 = vld [vmem:[#allocation16 + $0x38] sm:$0xff]
    %v4006 = vld [vmem:[#allocation16 + $0x40] sm:$0xff]
    %v4007 = vld [vmem:[#allocation16 + $0x48] sm:$0xff]
    %v4008 = vld [vmem:[#allocation16 + $0x50] sm:$0xff]
    %v4009 = vld [vmem:[#allocation16 + $0x58] sm:$0xff]
    %v4010 = vld [vmem:[#allocation16 + $0x60] sm:$0xff]
    %v4011 = vld [vmem:[#allocation16 + $0x68] sm:$0xff]
    %v4012 = vld [vmem:[#allocation16 + $0x70] sm:$0xff]
    %v4013 = vld [vmem:[#allocation16 + $0x78] sm:$0xff]
    %v4014 = vld [vmem:[#allocation16 + $0x80] sm:$0xff]
    %v4015 = vld [vmem:[#allocation16 + $0x88] sm:$0xff]
    %v4016 = vld [vmem:[#allocation16 + $0x90] sm:$0xff]
    %v4017 = vld [vmem:[#allocation16 + $0x98] sm:$0xff]
    %v4018 = vld [vmem:[#allocation16 + $0xa0] sm:$0xff]
    %v4019 = vld [vmem:[#allocation16 + $0xa8] sm:$0xff]
    %v4020 = vld [vmem:[#allocation16 + $0xb0] sm:$0xff]
    %v4021 = vld [vmem:[#allocation16 + $0xb8] sm:$0xff]
    %v4022 = vld [vmem:[#allocation16 + $0xc0] sm:$0xff]
    %v4023 = vld [vmem:[#allocation16 + $0xc8] sm:$0xff]
    %v4024 = vld [vmem:[#allocation16 + $0xd0] sm:$0xff]
    %v4025 = vld [vmem:[#allocation16 + $0xd8] sm:$0xff]
    %v4026 = vld [vmem:[#allocation16 + $0xe0] sm:$0xff]
    %v4027 = vld [vmem:[#allocation16 + $0xe8] sm:$0xff]
    %v4028 = vld [vmem:[#allocation16 + $0xf0] sm:$0xff]
    %v4029 = vld [vmem:[#allocation16 + $0xf8] sm:$0xff]
    %v4030 = vld [vmem:[#allocation16 + $0x100] sm:$0xff]
    %v4031 = vld [vmem:[#allocation16 + $0x108] sm:$0xff]
    %v4032 = vld [vmem:[#allocation16 + $0x110] sm:$0xff]
    %v4033 = vld [vmem:[#allocation16 + $0x118] sm:$0xff]
    %v4034 = vld [vmem:[#allocation16 + $0x120] sm:$0xff]
    %v4035 = vld [vmem:[#allocation16 + $0x128] sm:$0xff]
    %v4036 = vld [vmem:[#allocation16 + $0x130] sm:$0xff]
    %v4037 = vld [vmem:[#allocation16 + $0x138] sm:$0xff]
    %v4038 = vld [vmem:[#allocation16 + $0x140] sm:$0xff]
    %v4039 = vld [vmem:[#allocation16 + $0x148] sm:$0xff]
    %v4040 = vld [vmem:[#allocation16 + $0x150] sm:$0xff]
    %v4041 = vld [vmem:[#allocation16 + $0x158] sm:$0xff]
    %v4042 = vld [vmem:[#allocation16 + $0x160] sm:$0xff]
    %v4043 = vld [vmem:[#allocation16 + $0x168] sm:$0xff]
    %v4044 = vld [vmem:[#allocation16 + $0x170] sm:$0xff]
    %v4045 = vld [vmem:[#allocation16 + $0x178] sm:$0xff]
    %v4046 = vld [vmem:[#allocation16 + $0x180] sm:$0xff]
    %v4047 = vld [vmem:[#allocation16 + $0x188] sm:$0xff]
    %v4048 = vld [vmem:[#allocation16 + $0x190] sm:$0xff]
    %v4049 = vld [vmem:[#allocation16 + $0x198] sm:$0xff]
    %v4050 = vld [vmem:[#allocation16 + $0x1a0] sm:$0xff]
    %v4051 = vld [vmem:[#allocation16 + $0x1a8] sm:$0xff]
    %v4052 = vld [vmem:[#allocation16 + $0x1b0] sm:$0xff]
    %v4053 = vld [vmem:[#allocation16 + $0x1b8] sm:$0xff]
    %v4054 = vld [vmem:[#allocation16 + $0x1c0] sm:$0xff]
    %v4055 = vld [vmem:[#allocation16 + $0x1c8] sm:$0xff]
    %v4056 = vld [vmem:[#allocation16 + $0x1d0] sm:$0xff]
    %v4057 = vld [vmem:[#allocation16 + $0x1d8] sm:$0xff]
    %v4058 = vld [vmem:[#allocation16 + $0x1e0] sm:$0xff]
    %v4059 = vld [vmem:[#allocation16 + $0x1e8] sm:$0xff]
    %v4060 = vld [vmem:[#allocation16 + $0x1f0] sm:$0xff]
    %v4061 = vld [vmem:[#allocation16 + $0x1f8] sm:$0xff]
    %v4062 = vld [vmem:[#allocation16 + $0x200] sm:$0xff]
    %v4063 = vld [vmem:[#allocation16 + $0x208] sm:$0xff]
    %v4064 = vld [vmem:[#allocation16 + $0x210] sm:$0xff]
    %v4065 = vld [vmem:[#allocation16 + $0x218] sm:$0xff]
    %v4066 = vld [vmem:[#allocation16 + $0x220] sm:$0xff]
    %v4067 = vld [vmem:[#allocation16 + $0x228] sm:$0xff]
    %v4068 = vld [vmem:[#allocation16 + $0x230] sm:$0xff]
    %v4069 = vld [vmem:[#allocation16 + $0x238] sm:$0xff]
    %v4070 = vld [vmem:[#allocation16 + $0x240] sm:$0xff]
    %v4071 = vld [vmem:[#allocation16 + $0x248] sm:$0xff]
    %v4072 = vld [vmem:[#allocation16 + $0x250] sm:$0xff]
    %v4073 = vld [vmem:[#allocation16 + $0x258] sm:$0xff]
    %v4074 = vld [vmem:[#allocation16 + $0x260] sm:$0xff]
    %v4075 = vld [vmem:[#allocation16 + $0x268] sm:$0xff]
    %v4076 = vld [vmem:[#allocation16 + $0x270] sm:$0xff]
    %v4077 = vld [vmem:[#allocation16 + $0x278] sm:$0xff]
    %v4078 = vld [vmem:[#allocation16 + $0x280] sm:$0xff]
    %v4079 = vld [vmem:[#allocation16 + $0x288] sm:$0xff]
    %v4080 = vld [vmem:[#allocation16 + $0x290] sm:$0xff]
    %v4081 = vld [vmem:[#allocation16 + $0x298] sm:$0xff]
    %v4082 = vld [vmem:[#allocation16 + $0x2a0] sm:$0xff]
    %v4083 = vld [vmem:[#allocation16 + $0x2a8] sm:$0xff]
    %v4084 = vld [vmem:[#allocation16 + $0x2b0] sm:$0xff]
    %v4085 = vld [vmem:[#allocation16 + $0x2b8] sm:$0xff]
    %v4086 = vld [vmem:[#allocation16 + $0x2c0] sm:$0xff]
    %v4087 = vld [vmem:[#allocation16 + $0x2c8] sm:$0xff]
    %v4088 = vld [vmem:[#allocation16 + $0x2d0] sm:$0xff]
    %v4089 = vld [vmem:[#allocation16 + $0x2d8] sm:$0xff]
    %v4090 = vld [vmem:[#allocation16 + $0x2e0] sm:$0xff]
    %v4091 = vld [vmem:[#allocation16 + $0x2e8] sm:$0xff]
    %v4092 = vld [vmem:[#allocation16 + $0x2f0] sm:$0xff]
    %v4093 = vld [vmem:[#allocation16 + $0x2f8] sm:$0xff]
    %v4094 = vld [vmem:[#allocation16 + $0x300] sm:$0xff]
    %v4095 = vld [vmem:[#allocation16 + $0x308] sm:$0xff]
    %v4096 = vld [vmem:[#allocation16 + $0x310] sm:$0xff]
    %v4097 = vld [vmem:[#allocation16 + $0x318] sm:$0xff]
    %v4098 = vld [vmem:[#allocation16 + $0x320] sm:$0xff]
    %v4099 = vld [vmem:[#allocation16 + $0x328] sm:$0xff]
    %v4100 = vld [vmem:[#allocation16 + $0x330] sm:$0xff]
    %v4101 = vld [vmem:[#allocation16 + $0x338] sm:$0xff]
    %v4102 = vld [vmem:[#allocation16 + $0x340] sm:$0xff]
    %v4103 = vld [vmem:[#allocation16 + $0x348] sm:$0xff]
    %v4104 = vld [vmem:[#allocation16 + $0x350] sm:$0xff]
    %v4105 = vld [vmem:[#allocation16 + $0x358] sm:$0xff]
    %v4106 = vld [vmem:[#allocation16 + $0x360] sm:$0xff]
    %v4107 = vld [vmem:[#allocation16 + $0x368] sm:$0xff]
    %v4108 = vld [vmem:[#allocation16 + $0x370] sm:$0xff]
    %v4109 = vld [vmem:[#allocation16 + $0x378] sm:$0xff]
    %v4110 = vld [vmem:[#allocation16 + $0x380] sm:$0xff]
    %v4111 = vld [vmem:[#allocation16 + $0x388] sm:$0xff]
    %v4112 = vld [vmem:[#allocation16 + $0x390] sm:$0xff]
    %v4113 = vld [vmem:[#allocation16 + $0x398] sm:$0xff]
    %v4114 = vld [vmem:[#allocation16 + $0x3a0] sm:$0xff]
    %v4115 = vld [vmem:[#allocation16 + $0x3a8] sm:$0xff]
    %v4116 = vld [vmem:[#allocation16 + $0x3b0] sm:$0xff]
    %v4117 = vld [vmem:[#allocation16 + $0x3b8] sm:$0xff]
    %v4118 = vld [vmem:[#allocation16 + $0x3c0] sm:$0xff]
    %v4119 = vld [vmem:[#allocation16 + $0x3c8] sm:$0xff]
    %v4120 = vld [vmem:[#allocation16 + $0x3d0] sm:$0xff]
    %v4121 = vld [vmem:[#allocation16 + $0x3d8] sm:$0xff]
    %v4122 = vld [vmem:[#allocation16 + $0x3e0] sm:$0xff]
    %v4123 = vld [vmem:[#allocation16 + $0x3e8] sm:$0xff]
    %v4124 = vld [vmem:[#allocation16 + $0x3f0] sm:$0xff]
    %v4125 = vld [vmem:[#allocation16 + $0x3f8] sm:$0xff]
    %v4126 = vld [vmem:[#allocation16 + $0x400] sm:$0xff]
    %v4127 = vld [vmem:[#allocation16 + $0x408] sm:$0xff]
    %v4128 = vld [vmem:[#allocation16 + $0x410] sm:$0xff]
    %v4129 = vld [vmem:[#allocation16 + $0x418] sm:$0xff]
    %v4130 = vld [vmem:[#allocation16 + $0x420] sm:$0xff]
    %v4131 = vld [vmem:[#allocation16 + $0x428] sm:$0xff]
    %v4132 = vld [vmem:[#allocation16 + $0x430] sm:$0xff]
    %v4133 = vld [vmem:[#allocation16 + $0x438] sm:$0xff]
    %v4134 = vld [vmem:[#allocation16 + $0x440] sm:$0xff]
    %v4135 = vld [vmem:[#allocation16 + $0x448] sm:$0xff]
    %v4136 = vld [vmem:[#allocation16 + $0x450] sm:$0xff]
    %v4137 = vld [vmem:[#allocation16 + $0x458] sm:$0xff]
    %v4138 = vld [vmem:[#allocation16 + $0x460] sm:$0xff]
    %v4139 = vld [vmem:[#allocation16 + $0x468] sm:$0xff]
    %v4140 = vld [vmem:[#allocation16 + $0x470] sm:$0xff]
    %v4141 = vld [vmem:[#allocation16 + $0x478] sm:$0xff]
    %v4142 = vld [vmem:[#allocation16 + $0x480] sm:$0xff]
    %v4143 = vld [vmem:[#allocation16 + $0x488] sm:$0xff]
    %v4144 = vld [vmem:[#allocation16 + $0x490] sm:$0xff]
    %v4145 = vld [vmem:[#allocation16 + $0x498] sm:$0xff]
    %v4146 = vld [vmem:[#allocation16 + $0x4a0] sm:$0xff]
    %v4147 = vld [vmem:[#allocation16 + $0x4a8] sm:$0xff]
    %v4148 = vld [vmem:[#allocation16 + $0x4b0] sm:$0xff]
    %v4149 = vld [vmem:[#allocation16 + $0x4b8] sm:$0xff]
    %v4150 = vld [vmem:[#allocation16 + $0x4c0] sm:$0xff]
    %v4151 = vld [vmem:[#allocation16 + $0x4c8] sm:$0xff]
    %v4152 = vld [vmem:[#allocation16 + $0x4d0] sm:$0xff]
    %v4153 = vld [vmem:[#allocation16 + $0x4d8] sm:$0xff]
    %v4154 = vld [vmem:[#allocation16 + $0x4e0] sm:$0xff]
    %v4155 = vld [vmem:[#allocation16 + $0x4e8] sm:$0xff]
    %v4156 = vld [vmem:[#allocation16 + $0x4f0] sm:$0xff]
    %v4157 = vld [vmem:[#allocation16 + $0x4f8] sm:$0xff]
    %v4158 = vld [vmem:[#allocation16 + $0x500] sm:$0xff]
    %v4159 = vld [vmem:[#allocation16 + $0x508] sm:$0xff]
    %v4160 = vld [vmem:[#allocation16 + $0x510] sm:$0xff]
    %v4161 = vld [vmem:[#allocation16 + $0x518] sm:$0xff]
    %v4162 = vld [vmem:[#allocation16 + $0x520] sm:$0xff]
    %v4163 = vld [vmem:[#allocation16 + $0x528] sm:$0xff]
    %v4164 = vld [vmem:[#allocation16 + $0x530] sm:$0xff]
    %v4165 = vld [vmem:[#allocation16 + $0x538] sm:$0xff]
    %v4166 = vld [vmem:[#allocation16 + $0x540] sm:$0xff]
    %v4167 = vld [vmem:[#allocation16 + $0x548] sm:$0xff]
    %v4168 = vld [vmem:[#allocation16 + $0x550] sm:$0xff]
    %v4169 = vld [vmem:[#allocation16 + $0x558] sm:$0xff]
    %v4170 = vld [vmem:[#allocation16 + $0x560] sm:$0xff]
    %v4171 = vld [vmem:[#allocation16 + $0x568] sm:$0xff]
    %v4172 = vld [vmem:[#allocation16 + $0x570] sm:$0xff]
    %v4173 = vld [vmem:[#allocation16 + $0x578] sm:$0xff]
    %v4174 = vld [vmem:[#allocation16 + $0x580] sm:$0xff]
    %v4175 = vld [vmem:[#allocation16 + $0x588] sm:$0xff]
    %v4176 = vld [vmem:[#allocation16 + $0x590] sm:$0xff]
    %v4177 = vld [vmem:[#allocation16 + $0x598] sm:$0xff]
    %v4178 = vld [vmem:[#allocation16 + $0x5a0] sm:$0xff]
    %v4179 = vld [vmem:[#allocation16 + $0x5a8] sm:$0xff]
    %v4180 = vld [vmem:[#allocation16 + $0x5b0] sm:$0xff]
    %v4181 = vld [vmem:[#allocation16 + $0x5b8] sm:$0xff]
    %v4182 = vld [vmem:[#allocation16 + $0x5c0] sm:$0xff]
    %v4183 = vld [vmem:[#allocation16 + $0x5c8] sm:$0xff]
    %v4184 = vld [vmem:[#allocation16 + $0x5d0] sm:$0xff]
    %v4185 = vld [vmem:[#allocation16 + $0x5d8] sm:$0xff]
    %v4186 = vld [vmem:[#allocation16 + $0x5e0] sm:$0xff]
    %v4187 = vld [vmem:[#allocation16 + $0x5e8] sm:$0xff]
    %v4188 = vld [vmem:[#allocation16 + $0x5f0] sm:$0xff]
    %v4189 = vld [vmem:[#allocation16 + $0x5f8] sm:$0xff]
    %v4190 = vld [vmem:[#allocation16 + $0x600] sm:$0xff]
    %v4191 = vld [vmem:[#allocation16 + $0x608] sm:$0xff]
    %v4192 = vld [vmem:[#allocation16 + $0x610] sm:$0xff]
    %v4193 = vld [vmem:[#allocation16 + $0x618] sm:$0xff]
    %v4194 = vld [vmem:[#allocation16 + $0x620] sm:$0xff]
    %v4195 = vld [vmem:[#allocation16 + $0x628] sm:$0xff]
    %v4196 = vld [vmem:[#allocation16 + $0x630] sm:$0xff]
    %v4197 = vld [vmem:[#allocation16 + $0x638] sm:$0xff]
    %v4198 = vld [vmem:[#allocation16 + $0x640] sm:$0xff]
    %v4199 = vld [vmem:[#allocation16 + $0x648] sm:$0xff]
    %v4200 = vld [vmem:[#allocation16 + $0x650] sm:$0xff]
    %v4201 = vld [vmem:[#allocation16 + $0x658] sm:$0xff]
    %v4202 = vld [vmem:[#allocation16 + $0x660] sm:$0xff]
    %v4203 = vld [vmem:[#allocation16 + $0x668] sm:$0xff]
    %v4204 = vld [vmem:[#allocation16 + $0x670] sm:$0xff]
    %v4205 = vld [vmem:[#allocation16 + $0x678] sm:$0xff]
    %v4206 = vld [vmem:[#allocation16 + $0x680] sm:$0xff]
    %v4207 = vld [vmem:[#allocation16 + $0x688] sm:$0xff]
    %v4208 = vld [vmem:[#allocation16 + $0x690] sm:$0xff]
    %v4209 = vld [vmem:[#allocation16 + $0x698] sm:$0xff]
    %v4210 = vld [vmem:[#allocation16 + $0x6a0] sm:$0xff]
    %v4211 = vld [vmem:[#allocation16 + $0x6a8] sm:$0xff]
    %v4212 = vld [vmem:[#allocation16 + $0x6b0] sm:$0xff]
    %v4213 = vld [vmem:[#allocation16 + $0x6b8] sm:$0xff]
    %v4214 = vld [vmem:[#allocation16 + $0x6c0] sm:$0xff]
    %v4215 = vld [vmem:[#allocation16 + $0x6c8] sm:$0xff]
    %v4216 = vld [vmem:[#allocation16 + $0x6d0] sm:$0xff]
    %v4217 = vld [vmem:[#allocation16 + $0x6d8] sm:$0xff]
    %v4218 = vld [vmem:[#allocation16 + $0x6e0] sm:$0xff]
    %v4219 = vld [vmem:[#allocation16 + $0x6e8] sm:$0xff]
    %v4220 = vld [vmem:[#allocation16 + $0x6f0] sm:$0xff]
    %v4221 = vld [vmem:[#allocation16 + $0x6f8] sm:$0xff]
    %v4222 = vld [vmem:[#allocation16 + $0x700] sm:$0xff]
    %v4223 = vld [vmem:[#allocation16 + $0x708] sm:$0xff]
    %v4224 = vld [vmem:[#allocation16 + $0x710] sm:$0xff]
    %v4225 = vld [vmem:[#allocation16 + $0x718] sm:$0xff]
    %v4226 = vld [vmem:[#allocation16 + $0x720] sm:$0xff]
    %v4227 = vld [vmem:[#allocation16 + $0x728] sm:$0xff]
    %v4228 = vld [vmem:[#allocation16 + $0x730] sm:$0xff]
    %v4229 = vld [vmem:[#allocation16 + $0x738] sm:$0xff]
    %v4230 = vld [vmem:[#allocation16 + $0x740] sm:$0xff]
    %v4231 = vld [vmem:[#allocation16 + $0x748] sm:$0xff]
    %v4232 = vld [vmem:[#allocation16 + $0x750] sm:$0xff]
    %v4233 = vld [vmem:[#allocation16 + $0x758] sm:$0xff]
    %v4234 = vld [vmem:[#allocation16 + $0x760] sm:$0xff]
    %v4235 = vld [vmem:[#allocation16 + $0x768] sm:$0xff]
    %v4236 = vld [vmem:[#allocation16 + $0x770] sm:$0xff]
    %v4237 = vld [vmem:[#allocation16 + $0x778] sm:$0xff]
    %v4238 = vld [vmem:[#allocation16 + $0x780] sm:$0xff]
    %v4239 = vld [vmem:[#allocation16 + $0x788] sm:$0xff]
    %v4240 = vld [vmem:[#allocation16 + $0x790] sm:$0xff]
    %v4241 = vld [vmem:[#allocation16 + $0x798] sm:$0xff]
    %v4242 = vld [vmem:[#allocation16 + $0x7a0] sm:$0xff]
    %v4243 = vld [vmem:[#allocation16 + $0x7a8] sm:$0xff]
    %v4244 = vld [vmem:[#allocation16 + $0x7b0] sm:$0xff]
    %v4245 = vld [vmem:[#allocation16 + $0x7b8] sm:$0xff]
    %v4246 = vld [vmem:[#allocation16 + $0x7c0] sm:$0xff]
    %v4247 = vld [vmem:[#allocation16 + $0x7c8] sm:$0xff]
    %v4248 = vld [vmem:[#allocation16 + $0x7d0] sm:$0xff]
    %v4249 = vld [vmem:[#allocation16 + $0x7d8] sm:$0xff]
    %v4250 = vld [vmem:[#allocation16 + $0x7e0] sm:$0xff]
    %v4251 = vld [vmem:[#allocation16 + $0x7e8] sm:$0xff]
    %v4252 = vld [vmem:[#allocation16 + $0x7f0] sm:$0xff]
    %v4253 = vld [vmem:[#allocation16 + $0x7f8] sm:$0xff]
    %v4254 = vld [vmem:[%s14] sm:$0xff]
    %v4256 = vlaneseq
    %v4257 = vshrl.u32 %v4256, 7
    %v4258 = vsub.s32 0, %v4257
    %v4259 = vrot.slane %v4254, %v4258
    %v4260 = vlaneseq
    %v4261 = vshrl.u32 %v4260, 7
    %v4262 = vsub.s32 1, %v4261
    %v4263 = vrot.slane %v4254, %v4262
    %v4264 = vlaneseq
    %v4265 = vshrl.u32 %v4264, 7
    %v4266 = vsub.s32 2, %v4265
    %v4267 = vrot.slane %v4254, %v4266
    %v4268 = vlaneseq
    %v4269 = vshrl.u32 %v4268, 7
    %v4270 = vsub.s32 3, %v4269
    %v4271 = vrot.slane %v4254, %v4270
    %v4272 = vlaneseq
    %v4273 = vshrl.u32 %v4272, 7
    %v4274 = vsub.s32 4, %v4273
    %v4275 = vrot.slane %v4254, %v4274
    %v4276 = vlaneseq
    %v4277 = vshrl.u32 %v4276, 7
    %v4278 = vsub.s32 5, %v4277
    %v4279 = vrot.slane %v4254, %v4278
    %v4280 = vlaneseq
    %v4281 = vshrl.u32 %v4280, 7
    %v4282 = vsub.s32 6, %v4281
    %v4283 = vrot.slane %v4254, %v4282
    %v4284 = vlaneseq
    %v4285 = vshrl.u32 %v4284, 7
    %v4286 = vsub.s32 7, %v4285
    %v4287 = vrot.slane %v4254, %v4286
    %v4552 = vunpack.c.l.b16 %v3998
    %v4553 = vunpack.c.h.b16 %v3998
    %v4554 = vunpack.c.l.b16 %v3999
    %v4555 = vunpack.c.h.b16 %v3999
    %v4556 = vunpack.c.l.b16 %v4000
    %v4557 = vunpack.c.h.b16 %v4000
    %v4558 = vunpack.c.l.b16 %v4001
    %v4559 = vunpack.c.h.b16 %v4001
    %v4560 = vunpack.c.l.b16 %v4002
    %v4561 = vunpack.c.h.b16 %v4002
    %v4562 = vunpack.c.l.b16 %v4003
    %v4563 = vunpack.c.h.b16 %v4003
    %v4564 = vunpack.c.l.b16 %v4004
    %v4565 = vunpack.c.h.b16 %v4004
    %v4566 = vunpack.c.l.b16 %v4005
    %v4567 = vunpack.c.h.b16 %v4005
    %v4568 = vunpack.c.l.b16 %v4006
    %v4569 = vunpack.c.h.b16 %v4006
    %v4570 = vunpack.c.l.b16 %v4007
    %v4571 = vunpack.c.h.b16 %v4007
    %v4572 = vunpack.c.l.b16 %v4008
    %v4573 = vunpack.c.h.b16 %v4008
    %v4574 = vunpack.c.l.b16 %v4009
    %v4575 = vunpack.c.h.b16 %v4009
    %v4576 = vunpack.c.l.b16 %v4010
    %v4577 = vunpack.c.h.b16 %v4010
    %v4578 = vunpack.c.l.b16 %v4011
    %v4579 = vunpack.c.h.b16 %v4011
    %v4580 = vunpack.c.l.b16 %v4012
    %v4581 = vunpack.c.h.b16 %v4012
    %v4582 = vunpack.c.l.b16 %v4013
    %v4583 = vunpack.c.h.b16 %v4013
    %v4584 = vunpack.c.l.b16 %v4014
    %v4585 = vunpack.c.h.b16 %v4014
    %v4586 = vunpack.c.l.b16 %v4015
    %v4587 = vunpack.c.h.b16 %v4015
    %v4588 = vunpack.c.l.b16 %v4016
    %v4589 = vunpack.c.h.b16 %v4016
    %v4590 = vunpack.c.l.b16 %v4017
    %v4591 = vunpack.c.h.b16 %v4017
    %v4592 = vunpack.c.l.b16 %v4018
    %v4593 = vunpack.c.h.b16 %v4018
    %v4594 = vunpack.c.l.b16 %v4019
    %v4595 = vunpack.c.h.b16 %v4019
    %v4596 = vunpack.c.l.b16 %v4020
    %v4597 = vunpack.c.h.b16 %v4020
    %v4598 = vunpack.c.l.b16 %v4021
    %v4599 = vunpack.c.h.b16 %v4021
    %v4600 = vunpack.c.l.b16 %v4022
    %v4601 = vunpack.c.h.b16 %v4022
    %v4602 = vunpack.c.l.b16 %v4023
    %v4603 = vunpack.c.h.b16 %v4023
    %v4604 = vunpack.c.l.b16 %v4024
    %v4605 = vunpack.c.h.b16 %v4024
    %v4606 = vunpack.c.l.b16 %v4025
    %v4607 = vunpack.c.h.b16 %v4025
    %v4608 = vunpack.c.l.b16 %v4026
    %v4609 = vunpack.c.h.b16 %v4026
    %v4610 = vunpack.c.l.b16 %v4027
    %v4611 = vunpack.c.h.b16 %v4027
    %v4612 = vunpack.c.l.b16 %v4028
    %v4613 = vunpack.c.h.b16 %v4028
    %v4614 = vunpack.c.l.b16 %v4029
    %v4615 = vunpack.c.h.b16 %v4029
    %v4616 = vunpack.c.l.b16 %v4030
    %v4617 = vunpack.c.h.b16 %v4030
    %v4618 = vunpack.c.l.b16 %v4031
    %v4619 = vunpack.c.h.b16 %v4031
    %v4620 = vunpack.c.l.b16 %v4032
    %v4621 = vunpack.c.h.b16 %v4032
    %v4622 = vunpack.c.l.b16 %v4033
    %v4623 = vunpack.c.h.b16 %v4033
    %v4624 = vunpack.c.l.b16 %v4034
    %v4625 = vunpack.c.h.b16 %v4034
    %v4626 = vunpack.c.l.b16 %v4035
    %v4627 = vunpack.c.h.b16 %v4035
    %v4628 = vunpack.c.l.b16 %v4036
    %v4629 = vunpack.c.h.b16 %v4036
    %v4630 = vunpack.c.l.b16 %v4037
    %v4631 = vunpack.c.h.b16 %v4037
    %v4632 = vunpack.c.l.b16 %v4038
    %v4633 = vunpack.c.h.b16 %v4038
    %v4634 = vunpack.c.l.b16 %v4039
    %v4635 = vunpack.c.h.b16 %v4039
    %v4636 = vunpack.c.l.b16 %v4040
    %v4637 = vunpack.c.h.b16 %v4040
    %v4638 = vunpack.c.l.b16 %v4041
    %v4639 = vunpack.c.h.b16 %v4041
    %v4640 = vunpack.c.l.b16 %v4042
    %v4641 = vunpack.c.h.b16 %v4042
    %v4642 = vunpack.c.l.b16 %v4043
    %v4643 = vunpack.c.h.b16 %v4043
    %v4644 = vunpack.c.l.b16 %v4044
    %v4645 = vunpack.c.h.b16 %v4044
    %v4646 = vunpack.c.l.b16 %v4045
    %v4647 = vunpack.c.h.b16 %v4045
    %v4648 = vunpack.c.l.b16 %v4046
    %v4649 = vunpack.c.h.b16 %v4046
    %v4650 = vunpack.c.l.b16 %v4047
    %v4651 = vunpack.c.h.b16 %v4047
    %v4652 = vunpack.c.l.b16 %v4048
    %v4653 = vunpack.c.h.b16 %v4048
    %v4654 = vunpack.c.l.b16 %v4049
    %v4655 = vunpack.c.h.b16 %v4049
    %v4656 = vunpack.c.l.b16 %v4050
    %v4657 = vunpack.c.h.b16 %v4050
    %v4658 = vunpack.c.l.b16 %v4051
    %v4659 = vunpack.c.h.b16 %v4051
    %v4660 = vunpack.c.l.b16 %v4052
    %v4661 = vunpack.c.h.b16 %v4052
    %v4662 = vunpack.c.l.b16 %v4053
    %v4663 = vunpack.c.h.b16 %v4053
    %v4664 = vunpack.c.l.b16 %v4054
    %v4665 = vunpack.c.h.b16 %v4054
    %v4666 = vunpack.c.l.b16 %v4055
    %v4667 = vunpack.c.h.b16 %v4055
    %v4668 = vunpack.c.l.b16 %v4056
    %v4669 = vunpack.c.h.b16 %v4056
    %v4670 = vunpack.c.l.b16 %v4057
    %v4671 = vunpack.c.h.b16 %v4057
    %v4672 = vunpack.c.l.b16 %v4058
    %v4673 = vunpack.c.h.b16 %v4058
    %v4674 = vunpack.c.l.b16 %v4059
    %v4675 = vunpack.c.h.b16 %v4059
    %v4676 = vunpack.c.l.b16 %v4060
    %v4677 = vunpack.c.h.b16 %v4060
    %v4678 = vunpack.c.l.b16 %v4061
    %v4679 = vunpack.c.h.b16 %v4061
    %v4680 = vunpack.c.l.b16 %v4062
    %v4681 = vunpack.c.h.b16 %v4062
    %v4682 = vunpack.c.l.b16 %v4063
    %v4683 = vunpack.c.h.b16 %v4063
    %v4684 = vunpack.c.l.b16 %v4064
    %v4685 = vunpack.c.h.b16 %v4064
    %v4686 = vunpack.c.l.b16 %v4065
    %v4687 = vunpack.c.h.b16 %v4065
    %v4688 = vunpack.c.l.b16 %v4066
    %v4689 = vunpack.c.h.b16 %v4066
    %v4690 = vunpack.c.l.b16 %v4067
    %v4691 = vunpack.c.h.b16 %v4067
    %v4692 = vunpack.c.l.b16 %v4068
    %v4693 = vunpack.c.h.b16 %v4068
    %v4694 = vunpack.c.l.b16 %v4069
    %v4695 = vunpack.c.h.b16 %v4069
    %v4696 = vunpack.c.l.b16 %v4070
    %v4697 = vunpack.c.h.b16 %v4070
    %v4698 = vunpack.c.l.b16 %v4071
    %v4699 = vunpack.c.h.b16 %v4071
    %v4700 = vunpack.c.l.b16 %v4072
    %v4701 = vunpack.c.h.b16 %v4072
    %v4702 = vunpack.c.l.b16 %v4073
    %v4703 = vunpack.c.h.b16 %v4073
    %v4704 = vunpack.c.l.b16 %v4074
    %v4705 = vunpack.c.h.b16 %v4074
    %v4706 = vunpack.c.l.b16 %v4075
    %v4707 = vunpack.c.h.b16 %v4075
    %v4708 = vunpack.c.l.b16 %v4076
    %v4709 = vunpack.c.h.b16 %v4076
    %v4710 = vunpack.c.l.b16 %v4077
    %v4711 = vunpack.c.h.b16 %v4077
    %v4712 = vunpack.c.l.b16 %v4078
    %v4713 = vunpack.c.h.b16 %v4078
    %v4714 = vunpack.c.l.b16 %v4079
    %v4715 = vunpack.c.h.b16 %v4079
    %v4716 = vunpack.c.l.b16 %v4080
    %v4717 = vunpack.c.h.b16 %v4080
    %v4718 = vunpack.c.l.b16 %v4081
    %v4719 = vunpack.c.h.b16 %v4081
    %v4720 = vunpack.c.l.b16 %v4082
    %v4721 = vunpack.c.h.b16 %v4082
    %v4722 = vunpack.c.l.b16 %v4083
    %v4723 = vunpack.c.h.b16 %v4083
    %v4724 = vunpack.c.l.b16 %v4084
    %v4725 = vunpack.c.h.b16 %v4084
    %v4726 = vunpack.c.l.b16 %v4085
    %v4727 = vunpack.c.h.b16 %v4085
    %v4728 = vunpack.c.l.b16 %v4086
    %v4729 = vunpack.c.h.b16 %v4086
    %v4730 = vunpack.c.l.b16 %v4087
    %v4731 = vunpack.c.h.b16 %v4087
    %v4732 = vunpack.c.l.b16 %v4088
    %v4733 = vunpack.c.h.b16 %v4088
    %v4734 = vunpack.c.l.b16 %v4089
    %v4735 = vunpack.c.h.b16 %v4089
    %v4736 = vunpack.c.l.b16 %v4090
    %v4737 = vunpack.c.h.b16 %v4090
    %v4738 = vunpack.c.l.b16 %v4091
    %v4739 = vunpack.c.h.b16 %v4091
    %v4740 = vunpack.c.l.b16 %v4092
    %v4741 = vunpack.c.h.b16 %v4092
    %v4742 = vunpack.c.l.b16 %v4093
    %v4743 = vunpack.c.h.b16 %v4093
    %v4744 = vunpack.c.l.b16 %v4094
    %v4745 = vunpack.c.h.b16 %v4094
    %v4746 = vunpack.c.l.b16 %v4095
    %v4747 = vunpack.c.h.b16 %v4095
    %v4748 = vunpack.c.l.b16 %v4096
    %v4749 = vunpack.c.h.b16 %v4096
    %v4750 = vunpack.c.l.b16 %v4097
    %v4751 = vunpack.c.h.b16 %v4097
    %v4752 = vunpack.c.l.b16 %v4098
    %v4753 = vunpack.c.h.b16 %v4098
    %v4754 = vunpack.c.l.b16 %v4099
    %v4755 = vunpack.c.h.b16 %v4099
    %v4756 = vunpack.c.l.b16 %v4100
    %v4757 = vunpack.c.h.b16 %v4100
    %v4758 = vunpack.c.l.b16 %v4101
    %v4759 = vunpack.c.h.b16 %v4101
    %v4760 = vunpack.c.l.b16 %v4102
    %v4761 = vunpack.c.h.b16 %v4102
    %v4762 = vunpack.c.l.b16 %v4103
    %v4763 = vunpack.c.h.b16 %v4103
    %v4764 = vunpack.c.l.b16 %v4104
    %v4765 = vunpack.c.h.b16 %v4104
    %v4766 = vunpack.c.l.b16 %v4105
    %v4767 = vunpack.c.h.b16 %v4105
    %v4768 = vunpack.c.l.b16 %v4106
    %v4769 = vunpack.c.h.b16 %v4106
    %v4770 = vunpack.c.l.b16 %v4107
    %v4771 = vunpack.c.h.b16 %v4107
    %v4772 = vunpack.c.l.b16 %v4108
    %v4773 = vunpack.c.h.b16 %v4108
    %v4774 = vunpack.c.l.b16 %v4109
    %v4775 = vunpack.c.h.b16 %v4109
    %v4776 = vunpack.c.l.b16 %v4110
    %v4777 = vunpack.c.h.b16 %v4110
    %v4778 = vunpack.c.l.b16 %v4111
    %v4779 = vunpack.c.h.b16 %v4111
    %v4780 = vunpack.c.l.b16 %v4112
    %v4781 = vunpack.c.h.b16 %v4112
    %v4782 = vunpack.c.l.b16 %v4113
    %v4783 = vunpack.c.h.b16 %v4113
    %v4784 = vunpack.c.l.b16 %v4114
    %v4785 = vunpack.c.h.b16 %v4114
    %v4786 = vunpack.c.l.b16 %v4115
    %v4787 = vunpack.c.h.b16 %v4115
    %v4788 = vunpack.c.l.b16 %v4116
    %v4789 = vunpack.c.h.b16 %v4116
    %v4790 = vunpack.c.l.b16 %v4117
    %v4791 = vunpack.c.h.b16 %v4117
    %v4792 = vunpack.c.l.b16 %v4118
    %v4793 = vunpack.c.h.b16 %v4118
    %v4794 = vunpack.c.l.b16 %v4119
    %v4795 = vunpack.c.h.b16 %v4119
    %v4796 = vunpack.c.l.b16 %v4120
    %v4797 = vunpack.c.h.b16 %v4120
    %v4798 = vunpack.c.l.b16 %v4121
    %v4799 = vunpack.c.h.b16 %v4121
    %v4800 = vunpack.c.l.b16 %v4122
    %v4801 = vunpack.c.h.b16 %v4122
    %v4802 = vunpack.c.l.b16 %v4123
    %v4803 = vunpack.c.h.b16 %v4123
    %v4804 = vunpack.c.l.b16 %v4124
    %v4805 = vunpack.c.h.b16 %v4124
    %v4806 = vunpack.c.l.b16 %v4125
    %v4807 = vunpack.c.h.b16 %v4125
    %v4808 = vunpack.c.l.b16 %v4126
    %v4809 = vunpack.c.h.b16 %v4126
    %v4810 = vunpack.c.l.b16 %v4127
    %v4811 = vunpack.c.h.b16 %v4127
    %v4812 = vunpack.c.l.b16 %v4128
    %v4813 = vunpack.c.h.b16 %v4128
    %v4814 = vunpack.c.l.b16 %v4129
    %v4815 = vunpack.c.h.b16 %v4129
    %v4816 = vunpack.c.l.b16 %v4130
    %v4817 = vunpack.c.h.b16 %v4130
    %v4818 = vunpack.c.l.b16 %v4131
    %v4819 = vunpack.c.h.b16 %v4131
    %v4820 = vunpack.c.l.b16 %v4132
    %v4821 = vunpack.c.h.b16 %v4132
    %v4822 = vunpack.c.l.b16 %v4133
    %v4823 = vunpack.c.h.b16 %v4133
    %v4824 = vunpack.c.l.b16 %v4134
    %v4825 = vunpack.c.h.b16 %v4134
    %v4826 = vunpack.c.l.b16 %v4135
    %v4827 = vunpack.c.h.b16 %v4135
    %v4828 = vunpack.c.l.b16 %v4136
    %v4829 = vunpack.c.h.b16 %v4136
    %v4830 = vunpack.c.l.b16 %v4137
    %v4831 = vunpack.c.h.b16 %v4137
    %v4832 = vunpack.c.l.b16 %v4138
    %v4833 = vunpack.c.h.b16 %v4138
    %v4834 = vunpack.c.l.b16 %v4139
    %v4835 = vunpack.c.h.b16 %v4139
    %v4836 = vunpack.c.l.b16 %v4140
    %v4837 = vunpack.c.h.b16 %v4140
    %v4838 = vunpack.c.l.b16 %v4141
    %v4839 = vunpack.c.h.b16 %v4141
    %v4840 = vunpack.c.l.b16 %v4142
    %v4841 = vunpack.c.h.b16 %v4142
    %v4842 = vunpack.c.l.b16 %v4143
    %v4843 = vunpack.c.h.b16 %v4143
    %v4844 = vunpack.c.l.b16 %v4144
    %v4845 = vunpack.c.h.b16 %v4144
    %v4846 = vunpack.c.l.b16 %v4145
    %v4847 = vunpack.c.h.b16 %v4145
    %v4848 = vunpack.c.l.b16 %v4146
    %v4849 = vunpack.c.h.b16 %v4146
    %v4850 = vunpack.c.l.b16 %v4147
    %v4851 = vunpack.c.h.b16 %v4147
    %v4852 = vunpack.c.l.b16 %v4148
    %v4853 = vunpack.c.h.b16 %v4148
    %v4854 = vunpack.c.l.b16 %v4149
    %v4855 = vunpack.c.h.b16 %v4149
    %v4856 = vunpack.c.l.b16 %v4150
    %v4857 = vunpack.c.h.b16 %v4150
    %v4858 = vunpack.c.l.b16 %v4151
    %v4859 = vunpack.c.h.b16 %v4151
    %v4860 = vunpack.c.l.b16 %v4152
    %v4861 = vunpack.c.h.b16 %v4152
    %v4862 = vunpack.c.l.b16 %v4153
    %v4863 = vunpack.c.h.b16 %v4153
    %v4864 = vunpack.c.l.b16 %v4154
    %v4865 = vunpack.c.h.b16 %v4154
    %v4866 = vunpack.c.l.b16 %v4155
    %v4867 = vunpack.c.h.b16 %v4155
    %v4868 = vunpack.c.l.b16 %v4156
    %v4869 = vunpack.c.h.b16 %v4156
    %v4870 = vunpack.c.l.b16 %v4157
    %v4871 = vunpack.c.h.b16 %v4157
    %v4872 = vunpack.c.l.b16 %v4158
    %v4873 = vunpack.c.h.b16 %v4158
    %v4874 = vunpack.c.l.b16 %v4159
    %v4875 = vunpack.c.h.b16 %v4159
    %v4876 = vunpack.c.l.b16 %v4160
    %v4877 = vunpack.c.h.b16 %v4160
    %v4878 = vunpack.c.l.b16 %v4161
    %v4879 = vunpack.c.h.b16 %v4161
    %v4880 = vunpack.c.l.b16 %v4162
    %v4881 = vunpack.c.h.b16 %v4162
    %v4882 = vunpack.c.l.b16 %v4163
    %v4883 = vunpack.c.h.b16 %v4163
    %v4884 = vunpack.c.l.b16 %v4164
    %v4885 = vunpack.c.h.b16 %v4164
    %v4886 = vunpack.c.l.b16 %v4165
    %v4887 = vunpack.c.h.b16 %v4165
    %v4888 = vunpack.c.l.b16 %v4166
    %v4889 = vunpack.c.h.b16 %v4166
    %v4890 = vunpack.c.l.b16 %v4167
    %v4891 = vunpack.c.h.b16 %v4167
    %v4892 = vunpack.c.l.b16 %v4168
    %v4893 = vunpack.c.h.b16 %v4168
    %v4894 = vunpack.c.l.b16 %v4169
    %v4895 = vunpack.c.h.b16 %v4169
    %v4896 = vunpack.c.l.b16 %v4170
    %v4897 = vunpack.c.h.b16 %v4170
    %v4898 = vunpack.c.l.b16 %v4171
    %v4899 = vunpack.c.h.b16 %v4171
    %v4900 = vunpack.c.l.b16 %v4172
    %v4901 = vunpack.c.h.b16 %v4172
    %v4902 = vunpack.c.l.b16 %v4173
    %v4903 = vunpack.c.h.b16 %v4173
    %v4904 = vunpack.c.l.b16 %v4174
    %v4905 = vunpack.c.h.b16 %v4174
    %v4906 = vunpack.c.l.b16 %v4175
    %v4907 = vunpack.c.h.b16 %v4175
    %v4908 = vunpack.c.l.b16 %v4176
    %v4909 = vunpack.c.h.b16 %v4176
    %v4910 = vunpack.c.l.b16 %v4177
    %v4911 = vunpack.c.h.b16 %v4177
    %v4912 = vunpack.c.l.b16 %v4178
    %v4913 = vunpack.c.h.b16 %v4178
    %v4914 = vunpack.c.l.b16 %v4179
    %v4915 = vunpack.c.h.b16 %v4179
    %v4916 = vunpack.c.l.b16 %v4180
    %v4917 = vunpack.c.h.b16 %v4180
    %v4918 = vunpack.c.l.b16 %v4181
    %v4919 = vunpack.c.h.b16 %v4181
    %v4920 = vunpack.c.l.b16 %v4182
    %v4921 = vunpack.c.h.b16 %v4182
    %v4922 = vunpack.c.l.b16 %v4183
    %v4923 = vunpack.c.h.b16 %v4183
    %v4924 = vunpack.c.l.b16 %v4184
    %v4925 = vunpack.c.h.b16 %v4184
    %v4926 = vunpack.c.l.b16 %v4185
    %v4927 = vunpack.c.h.b16 %v4185
    %v4928 = vunpack.c.l.b16 %v4186
    %v4929 = vunpack.c.h.b16 %v4186
    %v4930 = vunpack.c.l.b16 %v4187
    %v4931 = vunpack.c.h.b16 %v4187
    %v4932 = vunpack.c.l.b16 %v4188
    %v4933 = vunpack.c.h.b16 %v4188
    %v4934 = vunpack.c.l.b16 %v4189
    %v4935 = vunpack.c.h.b16 %v4189
    %v4936 = vunpack.c.l.b16 %v4190
    %v4937 = vunpack.c.h.b16 %v4190
    %v4938 = vunpack.c.l.b16 %v4191
    %v4939 = vunpack.c.h.b16 %v4191
    %v4940 = vunpack.c.l.b16 %v4192
    %v4941 = vunpack.c.h.b16 %v4192
    %v4942 = vunpack.c.l.b16 %v4193
    %v4943 = vunpack.c.h.b16 %v4193
    %v4944 = vunpack.c.l.b16 %v4194
    %v4945 = vunpack.c.h.b16 %v4194
    %v4946 = vunpack.c.l.b16 %v4195
    %v4947 = vunpack.c.h.b16 %v4195
    %v4948 = vunpack.c.l.b16 %v4196
    %v4949 = vunpack.c.h.b16 %v4196
    %v4950 = vunpack.c.l.b16 %v4197
    %v4951 = vunpack.c.h.b16 %v4197
    %v4952 = vunpack.c.l.b16 %v4198
    %v4953 = vunpack.c.h.b16 %v4198
    %v4954 = vunpack.c.l.b16 %v4199
    %v4955 = vunpack.c.h.b16 %v4199
    %v4956 = vunpack.c.l.b16 %v4200
    %v4957 = vunpack.c.h.b16 %v4200
    %v4958 = vunpack.c.l.b16 %v4201
    %v4959 = vunpack.c.h.b16 %v4201
    %v4960 = vunpack.c.l.b16 %v4202
    %v4961 = vunpack.c.h.b16 %v4202
    %v4962 = vunpack.c.l.b16 %v4203
    %v4963 = vunpack.c.h.b16 %v4203
    %v4964 = vunpack.c.l.b16 %v4204
    %v4965 = vunpack.c.h.b16 %v4204
    %v4966 = vunpack.c.l.b16 %v4205
    %v4967 = vunpack.c.h.b16 %v4205
    %v4968 = vunpack.c.l.b16 %v4206
    %v4969 = vunpack.c.h.b16 %v4206
    %v4970 = vunpack.c.l.b16 %v4207
    %v4971 = vunpack.c.h.b16 %v4207
    %v4972 = vunpack.c.l.b16 %v4208
    %v4973 = vunpack.c.h.b16 %v4208
    %v4974 = vunpack.c.l.b16 %v4209
    %v4975 = vunpack.c.h.b16 %v4209
    %v4976 = vunpack.c.l.b16 %v4210
    %v4977 = vunpack.c.h.b16 %v4210
    %v4978 = vunpack.c.l.b16 %v4211
    %v4979 = vunpack.c.h.b16 %v4211
    %v4980 = vunpack.c.l.b16 %v4212
    %v4981 = vunpack.c.h.b16 %v4212
    %v4982 = vunpack.c.l.b16 %v4213
    %v4983 = vunpack.c.h.b16 %v4213
    %v4984 = vunpack.c.l.b16 %v4214
    %v4985 = vunpack.c.h.b16 %v4214
    %v4986 = vunpack.c.l.b16 %v4215
    %v4987 = vunpack.c.h.b16 %v4215
    %v4988 = vunpack.c.l.b16 %v4216
    %v4989 = vunpack.c.h.b16 %v4216
    %v4990 = vunpack.c.l.b16 %v4217
    %v4991 = vunpack.c.h.b16 %v4217
    %v4992 = vunpack.c.l.b16 %v4218
    %v4993 = vunpack.c.h.b16 %v4218
    %v4994 = vunpack.c.l.b16 %v4219
    %v4995 = vunpack.c.h.b16 %v4219
    %v4996 = vunpack.c.l.b16 %v4220
    %v4997 = vunpack.c.h.b16 %v4220
    %v4998 = vunpack.c.l.b16 %v4221
    %v4999 = vunpack.c.h.b16 %v4221
    %v5000 = vunpack.c.l.b16 %v4222
    %v5001 = vunpack.c.h.b16 %v4222
    %v5002 = vunpack.c.l.b16 %v4223
    %v5003 = vunpack.c.h.b16 %v4223
    %v5004 = vunpack.c.l.b16 %v4224
    %v5005 = vunpack.c.h.b16 %v4224
    %v5006 = vunpack.c.l.b16 %v4225
    %v5007 = vunpack.c.h.b16 %v4225
    %v5008 = vunpack.c.l.b16 %v4226
    %v5009 = vunpack.c.h.b16 %v4226
    %v5010 = vunpack.c.l.b16 %v4227
    %v5011 = vunpack.c.h.b16 %v4227
    %v5012 = vunpack.c.l.b16 %v4228
    %v5013 = vunpack.c.h.b16 %v4228
    %v5014 = vunpack.c.l.b16 %v4229
    %v5015 = vunpack.c.h.b16 %v4229
    %v5016 = vunpack.c.l.b16 %v4230
    %v5017 = vunpack.c.h.b16 %v4230
    %v5018 = vunpack.c.l.b16 %v4231
    %v5019 = vunpack.c.h.b16 %v4231
    %v5020 = vunpack.c.l.b16 %v4232
    %v5021 = vunpack.c.h.b16 %v4232
    %v5022 = vunpack.c.l.b16 %v4233
    %v5023 = vunpack.c.h.b16 %v4233
    %v5024 = vunpack.c.l.b16 %v4234
    %v5025 = vunpack.c.h.b16 %v4234
    %v5026 = vunpack.c.l.b16 %v4235
    %v5027 = vunpack.c.h.b16 %v4235
    %v5028 = vunpack.c.l.b16 %v4236
    %v5029 = vunpack.c.h.b16 %v4236
    %v5030 = vunpack.c.l.b16 %v4237
    %v5031 = vunpack.c.h.b16 %v4237
    %v5032 = vunpack.c.l.b16 %v4238
    %v5033 = vunpack.c.h.b16 %v4238
    %v5034 = vunpack.c.l.b16 %v4239
    %v5035 = vunpack.c.h.b16 %v4239
    %v5036 = vunpack.c.l.b16 %v4240
    %v5037 = vunpack.c.h.b16 %v4240
    %v5038 = vunpack.c.l.b16 %v4241
    %v5039 = vunpack.c.h.b16 %v4241
    %v5040 = vunpack.c.l.b16 %v4242
    %v5041 = vunpack.c.h.b16 %v4242
    %v5042 = vunpack.c.l.b16 %v4243
    %v5043 = vunpack.c.h.b16 %v4243
    %v5044 = vunpack.c.l.b16 %v4244
    %v5045 = vunpack.c.h.b16 %v4244
    %v5046 = vunpack.c.l.b16 %v4245
    %v5047 = vunpack.c.h.b16 %v4245
    %v5048 = vunpack.c.l.b16 %v4246
    %v5049 = vunpack.c.h.b16 %v4246
    %v5050 = vunpack.c.l.b16 %v4247
    %v5051 = vunpack.c.h.b16 %v4247
    %v5052 = vunpack.c.l.b16 %v4248
    %v5053 = vunpack.c.h.b16 %v4248
    %v5054 = vunpack.c.l.b16 %v4249
    %v5055 = vunpack.c.h.b16 %v4249
    %v5056 = vunpack.c.l.b16 %v4250
    %v5057 = vunpack.c.h.b16 %v4250
    %v5058 = vunpack.c.l.b16 %v4251
    %v5059 = vunpack.c.h.b16 %v4251
    %v5060 = vunpack.c.l.b16 %v4252
    %v5061 = vunpack.c.h.b16 %v4252
    %v5062 = vunpack.c.l.b16 %v4253
    %v5063 = vunpack.c.h.b16 %v4253
    %v5064 = vpack.c.b16 %v4560, %v4552
    %v5065 = vpack.c.b16 %v4561, %v4553
    %v5066 = vpack.c.b16 %v4562, %v4554
    %v5067 = vpack.c.b16 %v4563, %v4555
    %v5068 = vpack.c.b16 %v4564, %v4556
    %v5069 = vpack.c.b16 %v4565, %v4557
    %v5070 = vpack.c.b16 %v4566, %v4558
    %v5071 = vpack.c.b16 %v4567, %v4559
    %v5072 = vpack.c.b16 %v4576, %v4568
    %v5073 = vpack.c.b16 %v4577, %v4569
    %v5074 = vpack.c.b16 %v4578, %v4570
    %v5075 = vpack.c.b16 %v4579, %v4571
    %v5076 = vpack.c.b16 %v4580, %v4572
    %v5077 = vpack.c.b16 %v4581, %v4573
    %v5078 = vpack.c.b16 %v4582, %v4574
    %v5079 = vpack.c.b16 %v4583, %v4575
    %v5080 = vpack.c.b16 %v4592, %v4584
    %v5081 = vpack.c.b16 %v4593, %v4585
    %v5082 = vpack.c.b16 %v4594, %v4586
    %v5083 = vpack.c.b16 %v4595, %v4587
    %v5084 = vpack.c.b16 %v4596, %v4588
    %v5085 = vpack.c.b16 %v4597, %v4589
    %v5086 = vpack.c.b16 %v4598, %v4590
    %v5087 = vpack.c.b16 %v4599, %v4591
    %v5088 = vpack.c.b16 %v4608, %v4600
    %v5089 = vpack.c.b16 %v4609, %v4601
    %v5090 = vpack.c.b16 %v4610, %v4602
    %v5091 = vpack.c.b16 %v4611, %v4603
    %v5092 = vpack.c.b16 %v4612, %v4604
    %v5093 = vpack.c.b16 %v4613, %v4605
    %v5094 = vpack.c.b16 %v4614, %v4606
    %v5095 = vpack.c.b16 %v4615, %v4607
    %v5096 = vpack.c.b16 %v4624, %v4616
    %v5097 = vpack.c.b16 %v4625, %v4617
    %v5098 = vpack.c.b16 %v4626, %v4618
    %v5099 = vpack.c.b16 %v4627, %v4619
    %v5100 = vpack.c.b16 %v4628, %v4620
    %v5101 = vpack.c.b16 %v4629, %v4621
    %v5102 = vpack.c.b16 %v4630, %v4622
    %v5103 = vpack.c.b16 %v4631, %v4623
    %v5104 = vpack.c.b16 %v4640, %v4632
    %v5105 = vpack.c.b16 %v4641, %v4633
    %v5106 = vpack.c.b16 %v4642, %v4634
    %v5107 = vpack.c.b16 %v4643, %v4635
    %v5108 = vpack.c.b16 %v4644, %v4636
    %v5109 = vpack.c.b16 %v4645, %v4637
    %v5110 = vpack.c.b16 %v4646, %v4638
    %v5111 = vpack.c.b16 %v4647, %v4639
    %v5112 = vpack.c.b16 %v4656, %v4648
    %v5113 = vpack.c.b16 %v4657, %v4649
    %v5114 = vpack.c.b16 %v4658, %v4650
    %v5115 = vpack.c.b16 %v4659, %v4651
    %v5116 = vpack.c.b16 %v4660, %v4652
    %v5117 = vpack.c.b16 %v4661, %v4653
    %v5118 = vpack.c.b16 %v4662, %v4654
    %v5119 = vpack.c.b16 %v4663, %v4655
    %v5120 = vpack.c.b16 %v4672, %v4664
    %v5121 = vpack.c.b16 %v4673, %v4665
    %v5122 = vpack.c.b16 %v4674, %v4666
    %v5123 = vpack.c.b16 %v4675, %v4667
    %v5124 = vpack.c.b16 %v4676, %v4668
    %v5125 = vpack.c.b16 %v4677, %v4669
    %v5126 = vpack.c.b16 %v4678, %v4670
    %v5127 = vpack.c.b16 %v4679, %v4671
    %v5128 = vpack.c.b16 %v4688, %v4680
    %v5129 = vpack.c.b16 %v4689, %v4681
    %v5130 = vpack.c.b16 %v4690, %v4682
    %v5131 = vpack.c.b16 %v4691, %v4683
    %v5132 = vpack.c.b16 %v4692, %v4684
    %v5133 = vpack.c.b16 %v4693, %v4685
    %v5134 = vpack.c.b16 %v4694, %v4686
    %v5135 = vpack.c.b16 %v4695, %v4687
    %v5136 = vpack.c.b16 %v4704, %v4696
    %v5137 = vpack.c.b16 %v4705, %v4697
    %v5138 = vpack.c.b16 %v4706, %v4698
    %v5139 = vpack.c.b16 %v4707, %v4699
    %v5140 = vpack.c.b16 %v4708, %v4700
    %v5141 = vpack.c.b16 %v4709, %v4701
    %v5142 = vpack.c.b16 %v4710, %v4702
    %v5143 = vpack.c.b16 %v4711, %v4703
    %v5144 = vpack.c.b16 %v4720, %v4712
    %v5145 = vpack.c.b16 %v4721, %v4713
    %v5146 = vpack.c.b16 %v4722, %v4714
    %v5147 = vpack.c.b16 %v4723, %v4715
    %v5148 = vpack.c.b16 %v4724, %v4716
    %v5149 = vpack.c.b16 %v4725, %v4717
    %v5150 = vpack.c.b16 %v4726, %v4718
    %v5151 = vpack.c.b16 %v4727, %v4719
    %v5152 = vpack.c.b16 %v4736, %v4728
    %v5153 = vpack.c.b16 %v4737, %v4729
    %v5154 = vpack.c.b16 %v4738, %v4730
    %v5155 = vpack.c.b16 %v4739, %v4731
    %v5156 = vpack.c.b16 %v4740, %v4732
    %v5157 = vpack.c.b16 %v4741, %v4733
    %v5158 = vpack.c.b16 %v4742, %v4734
    %v5159 = vpack.c.b16 %v4743, %v4735
    %v5160 = vpack.c.b16 %v4752, %v4744
    %v5161 = vpack.c.b16 %v4753, %v4745
    %v5162 = vpack.c.b16 %v4754, %v4746
    %v5163 = vpack.c.b16 %v4755, %v4747
    %v5164 = vpack.c.b16 %v4756, %v4748
    %v5165 = vpack.c.b16 %v4757, %v4749
    %v5166 = vpack.c.b16 %v4758, %v4750
    %v5167 = vpack.c.b16 %v4759, %v4751
    %v5168 = vpack.c.b16 %v4768, %v4760
    %v5169 = vpack.c.b16 %v4769, %v4761
    %v5170 = vpack.c.b16 %v4770, %v4762
    %v5171 = vpack.c.b16 %v4771, %v4763
    %v5172 = vpack.c.b16 %v4772, %v4764
    %v5173 = vpack.c.b16 %v4773, %v4765
    %v5174 = vpack.c.b16 %v4774, %v4766
    %v5175 = vpack.c.b16 %v4775, %v4767
    %v5176 = vpack.c.b16 %v4784, %v4776
    %v5177 = vpack.c.b16 %v4785, %v4777
    %v5178 = vpack.c.b16 %v4786, %v4778
    %v5179 = vpack.c.b16 %v4787, %v4779
    %v5180 = vpack.c.b16 %v4788, %v4780
    %v5181 = vpack.c.b16 %v4789, %v4781
    %v5182 = vpack.c.b16 %v4790, %v4782
    %v5183 = vpack.c.b16 %v4791, %v4783
    %v5184 = vpack.c.b16 %v4800, %v4792
    %v5185 = vpack.c.b16 %v4801, %v4793
    %v5186 = vpack.c.b16 %v4802, %v4794
    %v5187 = vpack.c.b16 %v4803, %v4795
    %v5188 = vpack.c.b16 %v4804, %v4796
    %v5189 = vpack.c.b16 %v4805, %v4797
    %v5190 = vpack.c.b16 %v4806, %v4798
    %v5191 = vpack.c.b16 %v4807, %v4799
    %v5192 = vpack.c.b16 %v4816, %v4808
    %v5193 = vpack.c.b16 %v4817, %v4809
    %v5194 = vpack.c.b16 %v4818, %v4810
    %v5195 = vpack.c.b16 %v4819, %v4811
    %v5196 = vpack.c.b16 %v4820, %v4812
    %v5197 = vpack.c.b16 %v4821, %v4813
    %v5198 = vpack.c.b16 %v4822, %v4814
    %v5199 = vpack.c.b16 %v4823, %v4815
    %v5200 = vpack.c.b16 %v4832, %v4824
    %v5201 = vpack.c.b16 %v4833, %v4825
    %v5202 = vpack.c.b16 %v4834, %v4826
    %v5203 = vpack.c.b16 %v4835, %v4827
    %v5204 = vpack.c.b16 %v4836, %v4828
    %v5205 = vpack.c.b16 %v4837, %v4829
    %v5206 = vpack.c.b16 %v4838, %v4830
    %v5207 = vpack.c.b16 %v4839, %v4831
    %v5208 = vpack.c.b16 %v4848, %v4840
    %v5209 = vpack.c.b16 %v4849, %v4841
    %v5210 = vpack.c.b16 %v4850, %v4842
    %v5211 = vpack.c.b16 %v4851, %v4843
    %v5212 = vpack.c.b16 %v4852, %v4844
    %v5213 = vpack.c.b16 %v4853, %v4845
    %v5214 = vpack.c.b16 %v4854, %v4846
    %v5215 = vpack.c.b16 %v4855, %v4847
    %v5216 = vpack.c.b16 %v4864, %v4856
    %v5217 = vpack.c.b16 %v4865, %v4857
    %v5218 = vpack.c.b16 %v4866, %v4858
    %v5219 = vpack.c.b16 %v4867, %v4859
    %v5220 = vpack.c.b16 %v4868, %v4860
    %v5221 = vpack.c.b16 %v4869, %v4861
    %v5222 = vpack.c.b16 %v4870, %v4862
    %v5223 = vpack.c.b16 %v4871, %v4863
    %v5224 = vpack.c.b16 %v4880, %v4872
    %v5225 = vpack.c.b16 %v4881, %v4873
    %v5226 = vpack.c.b16 %v4882, %v4874
    %v5227 = vpack.c.b16 %v4883, %v4875
    %v5228 = vpack.c.b16 %v4884, %v4876
    %v5229 = vpack.c.b16 %v4885, %v4877
    %v5230 = vpack.c.b16 %v4886, %v4878
    %v5231 = vpack.c.b16 %v4887, %v4879
    %v5232 = vpack.c.b16 %v4896, %v4888
    %v5233 = vpack.c.b16 %v4897, %v4889
    %v5234 = vpack.c.b16 %v4898, %v4890
    %v5235 = vpack.c.b16 %v4899, %v4891
    %v5236 = vpack.c.b16 %v4900, %v4892
    %v5237 = vpack.c.b16 %v4901, %v4893
    %v5238 = vpack.c.b16 %v4902, %v4894
    %v5239 = vpack.c.b16 %v4903, %v4895
    %v5240 = vpack.c.b16 %v4912, %v4904
    %v5241 = vpack.c.b16 %v4913, %v4905
    %v5242 = vpack.c.b16 %v4914, %v4906
    %v5243 = vpack.c.b16 %v4915, %v4907
    %v5244 = vpack.c.b16 %v4916, %v4908
    %v5245 = vpack.c.b16 %v4917, %v4909
    %v5246 = vpack.c.b16 %v4918, %v4910
    %v5247 = vpack.c.b16 %v4919, %v4911
    %v5248 = vpack.c.b16 %v4928, %v4920
    %v5249 = vpack.c.b16 %v4929, %v4921
    %v5250 = vpack.c.b16 %v4930, %v4922
    %v5251 = vpack.c.b16 %v4931, %v4923
    %v5252 = vpack.c.b16 %v4932, %v4924
    %v5253 = vpack.c.b16 %v4933, %v4925
    %v5254 = vpack.c.b16 %v4934, %v4926
    %v5255 = vpack.c.b16 %v4935, %v4927
    %v5256 = vpack.c.b16 %v4944, %v4936
    %v5257 = vpack.c.b16 %v4945, %v4937
    %v5258 = vpack.c.b16 %v4946, %v4938
    %v5259 = vpack.c.b16 %v4947, %v4939
    %v5260 = vpack.c.b16 %v4948, %v4940
    %v5261 = vpack.c.b16 %v4949, %v4941
    %v5262 = vpack.c.b16 %v4950, %v4942
    %v5263 = vpack.c.b16 %v4951, %v4943
    %v5264 = vpack.c.b16 %v4960, %v4952
    %v5265 = vpack.c.b16 %v4961, %v4953
    %v5266 = vpack.c.b16 %v4962, %v4954
    %v5267 = vpack.c.b16 %v4963, %v4955
    %v5268 = vpack.c.b16 %v4964, %v4956
    %v5269 = vpack.c.b16 %v4965, %v4957
    %v5270 = vpack.c.b16 %v4966, %v4958
    %v5271 = vpack.c.b16 %v4967, %v4959
    %v5272 = vpack.c.b16 %v4976, %v4968
    %v5273 = vpack.c.b16 %v4977, %v4969
    %v5274 = vpack.c.b16 %v4978, %v4970
    %v5275 = vpack.c.b16 %v4979, %v4971
    %v5276 = vpack.c.b16 %v4980, %v4972
    %v5277 = vpack.c.b16 %v4981, %v4973
    %v5278 = vpack.c.b16 %v4982, %v4974
    %v5279 = vpack.c.b16 %v4983, %v4975
    %v5280 = vpack.c.b16 %v4992, %v4984
    %v5281 = vpack.c.b16 %v4993, %v4985
    %v5282 = vpack.c.b16 %v4994, %v4986
    %v5283 = vpack.c.b16 %v4995, %v4987
    %v5284 = vpack.c.b16 %v4996, %v4988
    %v5285 = vpack.c.b16 %v4997, %v4989
    %v5286 = vpack.c.b16 %v4998, %v4990
    %v5287 = vpack.c.b16 %v4999, %v4991
    %v5288 = vpack.c.b16 %v5008, %v5000
    %v5289 = vpack.c.b16 %v5009, %v5001
    %v5290 = vpack.c.b16 %v5010, %v5002
    %v5291 = vpack.c.b16 %v5011, %v5003
    %v5292 = vpack.c.b16 %v5012, %v5004
    %v5293 = vpack.c.b16 %v5013, %v5005
    %v5294 = vpack.c.b16 %v5014, %v5006
    %v5295 = vpack.c.b16 %v5015, %v5007
    %v5296 = vpack.c.b16 %v5024, %v5016
    %v5297 = vpack.c.b16 %v5025, %v5017
    %v5298 = vpack.c.b16 %v5026, %v5018
    %v5299 = vpack.c.b16 %v5027, %v5019
    %v5300 = vpack.c.b16 %v5028, %v5020
    %v5301 = vpack.c.b16 %v5029, %v5021
    %v5302 = vpack.c.b16 %v5030, %v5022
    %v5303 = vpack.c.b16 %v5031, %v5023
    %v5304 = vpack.c.b16 %v5040, %v5032
    %v5305 = vpack.c.b16 %v5041, %v5033
    %v5306 = vpack.c.b16 %v5042, %v5034
    %v5307 = vpack.c.b16 %v5043, %v5035
    %v5308 = vpack.c.b16 %v5044, %v5036
    %v5309 = vpack.c.b16 %v5045, %v5037
    %v5310 = vpack.c.b16 %v5046, %v5038
    %v5311 = vpack.c.b16 %v5047, %v5039
    %v5312 = vpack.c.b16 %v5056, %v5048
    %v5313 = vpack.c.b16 %v5057, %v5049
    %v5314 = vpack.c.b16 %v5058, %v5050
    %v5315 = vpack.c.b16 %v5059, %v5051
    %v5316 = vpack.c.b16 %v5060, %v5052
    %v5317 = vpack.c.b16 %v5061, %v5053
    %v5318 = vpack.c.b16 %v5062, %v5054
    %v5319 = vpack.c.b16 %v5063, %v5055
    %5576 = vmatprep.subr.bf16.mxu0 %v5065
    %5577 = vmatpush1.bf16.msra.mxu0 %v5064
    %5578 = vmatprep.subr.bf16.mxu0 %v5073
    %5579 = vmatpush1.bf16.msra.mxu0 %v5072
    %5580 = vmatprep.subr.bf16.mxu0 %v5081
    %5581 = vmatpush1.bf16.msra.mxu0 %v5080
    %5582 = vmatprep.subr.bf16.mxu0 %v5089
    %5583 = vmatpush1.bf16.msra.mxu0 %v5088
    %5584 = vmatprep.subr.bf16.mxu0 %v5097
    %5585 = vmatpush1.bf16.msra.mxu0 %v5096
    %5586 = vmatprep.subr.bf16.mxu0 %v5105
    %5587 = vmatpush1.bf16.msra.mxu0 %v5104
    %5588 = vmatprep.subr.bf16.mxu0 %v5113
    %5589 = vmatpush1.bf16.msra.mxu0 %v5112
    %5590 = vmatprep.subr.bf16.mxu0 %v5121
    %5591 = vmatpush1.bf16.msra.mxu0 %v5120
    %5592 = vmatprep.subr.bf16.mxu0 %v5129
    %5593 = vmatpush1.bf16.msra.mxu0 %v5128
    %5594 = vmatprep.subr.bf16.mxu0 %v5137
    %5595 = vmatpush1.bf16.msra.mxu0 %v5136
    %5596 = vmatprep.subr.bf16.mxu0 %v5145
    %5597 = vmatpush1.bf16.msra.mxu0 %v5144
    %5598 = vmatprep.subr.bf16.mxu0 %v5153
    %5599 = vmatpush1.bf16.msra.mxu0 %v5152
    %5600 = vmatprep.subr.bf16.mxu0 %v5161
    %5601 = vmatpush1.bf16.msra.mxu0 %v5160
    %5602 = vmatprep.subr.bf16.mxu0 %v5169
    %5603 = vmatpush1.bf16.msra.mxu0 %v5168
    %5604 = vmatprep.subr.bf16.mxu0 %v5177
    %5605 = vmatpush1.bf16.msra.mxu0 %v5176
    %5606 = vmatprep.subr.bf16.mxu0 %v5185
    %5607 = vmatpush1.bf16.msra.mxu0 %v5184
    %5608 = vmatprep.mubr.bf16.mxu0 %v3995
    %5609 = vmatmul.mubr.bf16.gmra.mrb[0].mxu0 %v3994
    %v5610 = vpop.f32.mrb[0].mxu0
    %v5611 = vadd.f32 %v4259, %v5610
    %v5612 = vpop.f32.mrb[0].mxu0
    %v5613 = vadd.f32 %v4263, %v5612
    %v5614 = vpop.f32.mrb[0].mxu0
    %v5615 = vpop.f32.mrb[0].mxu0
    %5616 = vdwg.mxu0
    %5617 = vmatprep.subr.bf16.mxu0 %v5193
    %5618 = vmatpush1.bf16.msra.mxu0 %v5192
    %5619 = vmatprep.subr.bf16.mxu0 %v5201
    %5620 = vmatpush1.bf16.msra.mxu0 %v5200
    %5621 = vmatprep.subr.bf16.mxu0 %v5209
    %5622 = vmatpush1.bf16.msra.mxu0 %v5208
    %5623 = vmatprep.subr.bf16.mxu0 %v5217
    %5624 = vmatpush1.bf16.msra.mxu0 %v5216
    %5625 = vmatprep.subr.bf16.mxu0 %v5225
    %5626 = vmatpush1.bf16.msra.mxu0 %v5224
    %5627 = vmatprep.subr.bf16.mxu0 %v5233
    %5628 = vmatpush1.bf16.msra.mxu0 %v5232
    %5629 = vmatprep.subr.bf16.mxu0 %v5241
    %5630 = vmatpush1.bf16.msra.mxu0 %v5240
    %5631 = vmatprep.subr.bf16.mxu0 %v5249
    %5632 = vmatpush1.bf16.msra.mxu0 %v5248
    %5633 = vmatprep.subr.bf16.mxu0 %v5257
    %5634 = vmatpush1.bf16.msra.mxu0 %v5256
    %5635 = vmatprep.subr.bf16.mxu0 %v5265
    %5636 = vmatpush1.bf16.msra.mxu0 %v5264
    %5637 = vmatprep.subr.bf16.mxu0 %v5273
    %5638 = vmatpush1.bf16.msra.mxu0 %v5272
    %5639 = vmatprep.subr.bf16.mxu0 %v5281
    %5640 = vmatpush1.bf16.msra.mxu0 %v5280
    %5641 = vmatprep.subr.bf16.mxu0 %v5289
    %5642 = vmatpush1.bf16.msra.mxu0 %v5288
    %5643 = vmatprep.subr.bf16.mxu0 %v5297
    %5644 = vmatpush1.bf16.msra.mxu0 %v5296
    %5645 = vmatprep.subr.bf16.mxu0 %v5305
    %5646 = vmatpush1.bf16.msra.mxu0 %v5304
    %5647 = vmatprep.subr.bf16.mxu0 %v5313
    %5648 = vmatpush1.bf16.msra.mxu0 %v5312
    %5649 = vmatprep.mubr.bf16.mxu0 %v3997
    %5650 = vmatmul.mubr.bf16.gmra.mrb[0].mxu0 %v3996
    %v5651 = vpop.f32.mrb[0].mxu0
    %v5652 = vadd.f32 %v5611, %v5651
    %v5653 = vpop.f32.mrb[0].mxu0
    %v5654 = vadd.f32 %v5613, %v5653
    %v5655 = vpop.f32.mrb[0].mxu0
    %v5656 = vpop.f32.mrb[0].mxu0
    %5657 = vdwg.mxu0
    %5658 = vmatprep.subr.bf16.mxu0 %v5067
    %5659 = vmatpush1.bf16.msra.mxu0 %v5066
    %5660 = vmatprep.subr.bf16.mxu0 %v5075
    %5661 = vmatpush1.bf16.msra.mxu0 %v5074
    %5662 = vmatprep.subr.bf16.mxu0 %v5083
    %5663 = vmatpush1.bf16.msra.mxu0 %v5082
    %5664 = vmatprep.subr.bf16.mxu0 %v5091
    %5665 = vmatpush1.bf16.msra.mxu0 %v5090
    %5666 = vmatprep.subr.bf16.mxu0 %v5099
    %5667 = vmatpush1.bf16.msra.mxu0 %v5098
    %5668 = vmatprep.subr.bf16.mxu0 %v5107
    %5669 = vmatpush1.bf16.msra.mxu0 %v5106
    %5670 = vmatprep.subr.bf16.mxu0 %v5115
    %5671 = vmatpush1.bf16.msra.mxu0 %v5114
    %5672 = vmatprep.subr.bf16.mxu0 %v5123
    %5673 = vmatpush1.bf16.msra.mxu0 %v5122
    %5674 = vmatprep.subr.bf16.mxu0 %v5131
    %5675 = vmatpush1.bf16.msra.mxu0 %v5130
    %5676 = vmatprep.subr.bf16.mxu0 %v5139
    %5677 = vmatpush1.bf16.msra.mxu0 %v5138
    %5678 = vmatprep.subr.bf16.mxu0 %v5147
    %5679 = vmatpush1.bf16.msra.mxu0 %v5146
    %5680 = vmatprep.subr.bf16.mxu0 %v5155
    %5681 = vmatpush1.bf16.msra.mxu0 %v5154
    %5682 = vmatprep.subr.bf16.mxu0 %v5163
    %5683 = vmatpush1.bf16.msra.mxu0 %v5162
    %5684 = vmatprep.subr.bf16.mxu0 %v5171
    %5685 = vmatpush1.bf16.msra.mxu0 %v5170
    %5686 = vmatprep.subr.bf16.mxu0 %v5179
    %5687 = vmatpush1.bf16.msra.mxu0 %v5178
    %5688 = vmatprep.subr.bf16.mxu0 %v5187
    %5689 = vmatpush1.bf16.msra.mxu0 %v5186
    %5690 = vmatprep.mubr.bf16.mxu0 %v3995
    %5691 = vmatmul.mubr.bf16.gmra.mrb[0].mxu0 %v3994
    %v5692 = vpop.f32.mrb[0].mxu0
    %v5693 = vadd.f32 %v4267, %v5692
    %v5694 = vpop.f32.mrb[0].mxu0
    %v5695 = vadd.f32 %v4271, %v5694
    %v5696 = vpop.f32.mrb[0].mxu0
    %v5697 = vpop.f32.mrb[0].mxu0
    %5698 = vdwg.mxu0
    %5699 = vmatprep.subr.bf16.mxu0 %v5195
    %5700 = vmatpush1.bf16.msra.mxu0 %v5194
    %5701 = vmatprep.subr.bf16.mxu0 %v5203
    %5702 = vmatpush1.bf16.msra.mxu0 %v5202
    %5703 = vmatprep.subr.bf16.mxu0 %v5211
    %5704 = vmatpush1.bf16.msra.mxu0 %v5210
    %5705 = vmatprep.subr.bf16.mxu0 %v5219
    %5706 = vmatpush1.bf16.msra.mxu0 %v5218
    %5707 = vmatprep.subr.bf16.mxu0 %v5227
    %5708 = vmatpush1.bf16.msra.mxu0 %v5226
    %5709 = vmatprep.subr.bf16.mxu0 %v5235
    %5710 = vmatpush1.bf16.msra.mxu0 %v5234
    %5711 = vmatprep.subr.bf16.mxu0 %v5243
    %5712 = vmatpush1.bf16.msra.mxu0 %v5242
    %5713 = vmatprep.subr.bf16.mxu0 %v5251
    %5714 = vmatpush1.bf16.msra.mxu0 %v5250
    %5715 = vmatprep.subr.bf16.mxu0 %v5259
    %5716 = vmatpush1.bf16.msra.mxu0 %v5258
    %5717 = vmatprep.subr.bf16.mxu0 %v5267
    %5718 = vmatpush1.bf16.msra.mxu0 %v5266
    %5719 = vmatprep.subr.bf16.mxu0 %v5275
    %5720 = vmatpush1.bf16.msra.mxu0 %v5274
    %5721 = vmatprep.subr.bf16.mxu0 %v5283
    %5722 = vmatpush1.bf16.msra.mxu0 %v5282
    %5723 = vmatprep.subr.bf16.mxu0 %v5291
    %5724 = vmatpush1.bf16.msra.mxu0 %v5290
    %5725 = vmatprep.subr.bf16.mxu0 %v5299
    %5726 = vmatpush1.bf16.msra.mxu0 %v5298
    %5727 = vmatprep.subr.bf16.mxu0 %v5307
    %5728 = vmatpush1.bf16.msra.mxu0 %v5306
    %5729 = vmatprep.subr.bf16.mxu0 %v5315
    %5730 = vmatpush1.bf16.msra.mxu0 %v5314
    %5731 = vmatprep.mubr.bf16.mxu0 %v3997
    %5732 = vmatmul.mubr.bf16.gmra.mrb[0].mxu0 %v3996
    %v5733 = vpop.f32.mrb[0].mxu0
    %v5734 = vadd.f32 %v5693, %v5733
    %v5735 = vpop.f32.mrb[0].mxu0
    %v5736 = vadd.f32 %v5695, %v5735
    %v5737 = vpop.f32.mrb[0].mxu0
    %v5738 = vpop.f32.mrb[0].mxu0
    %5739 = vdwg.mxu0
    %5740 = vmatprep.subr.bf16.mxu0 %v5069
    %5741 = vmatpush1.bf16.msra.mxu0 %v5068
    %5742 = vmatprep.subr.bf16.mxu0 %v5077
    %5743 = vmatpush1.bf16.msra.mxu0 %v5076
    %5744 = vmatprep.subr.bf16.mxu0 %v5085
    %5745 = vmatpush1.bf16.msra.mxu0 %v5084
    %5746 = vmatprep.subr.bf16.mxu0 %v5093
    %5747 = vmatpush1.bf16.msra.mxu0 %v5092
    %5748 = vmatprep.subr.bf16.mxu0 %v5101
    %5749 = vmatpush1.bf16.msra.mxu0 %v5100
    %5750 = vmatprep.subr.bf16.mxu0 %v5109
    %5751 = vmatpush1.bf16.msra.mxu0 %v5108
    %5752 = vmatprep.subr.bf16.mxu0 %v5117
    %5753 = vmatpush1.bf16.msra.mxu0 %v5116
    %5754 = vmatprep.subr.bf16.mxu0 %v5125
    %5755 = vmatpush1.bf16.msra.mxu0 %v5124
    %5756 = vmatprep.subr.bf16.mxu0 %v5133
    %5757 = vmatpush1.bf16.msra.mxu0 %v5132
    %5758 = vmatprep.subr.bf16.mxu0 %v5141
    %5759 = vmatpush1.bf16.msra.mxu0 %v5140
    %5760 = vmatprep.subr.bf16.mxu0 %v5149
    %5761 = vmatpush1.bf16.msra.mxu0 %v5148
    %5762 = vmatprep.subr.bf16.mxu0 %v5157
    %5763 = vmatpush1.bf16.msra.mxu0 %v5156
    %5764 = vmatprep.subr.bf16.mxu0 %v5165
    %5765 = vmatpush1.bf16.msra.mxu0 %v5164
    %5766 = vmatprep.subr.bf16.mxu0 %v5173
    %5767 = vmatpush1.bf16.msra.mxu0 %v5172
    %5768 = vmatprep.subr.bf16.mxu0 %v5181
    %5769 = vmatpush1.bf16.msra.mxu0 %v5180
    %5770 = vmatprep.subr.bf16.mxu0 %v5189
    %5771 = vmatpush1.bf16.msra.mxu0 %v5188
    %5772 = vmatprep.mubr.bf16.mxu0 %v3995
    %5773 = vmatmul.mubr.bf16.gmra.mrb[0].mxu0 %v3994
    %v5774 = vpop.f32.mrb[0].mxu0
    %v5775 = vadd.f32 %v4275, %v5774
    %v5776 = vpop.f32.mrb[0].mxu0
    %v5777 = vadd.f32 %v4279, %v5776
    %v5778 = vpop.f32.mrb[0].mxu0
    %v5779 = vpop.f32.mrb[0].mxu0
    %5780 = vdwg.mxu0
    %5781 = vmatprep.subr.bf16.mxu0 %v5197
    %5782 = vmatpush1.bf16.msra.mxu0 %v5196
    %5783 = vmatprep.subr.bf16.mxu0 %v5205
    %5784 = vmatpush1.bf16.msra.mxu0 %v5204
    %5785 = vmatprep.subr.bf16.mxu0 %v5213
    %5786 = vmatpush1.bf16.msra.mxu0 %v5212
    %5787 = vmatprep.subr.bf16.mxu0 %v5221
    %5788 = vmatpush1.bf16.msra.mxu0 %v5220
    %5789 = vmatprep.subr.bf16.mxu0 %v5229
    %5790 = vmatpush1.bf16.msra.mxu0 %v5228
    %5791 = vmatprep.subr.bf16.mxu0 %v5237
    %5792 = vmatpush1.bf16.msra.mxu0 %v5236
    %5793 = vmatprep.subr.bf16.mxu0 %v5245
    %5794 = vmatpush1.bf16.msra.mxu0 %v5244
    %5795 = vmatprep.subr.bf16.mxu0 %v5253
    %5796 = vmatpush1.bf16.msra.mxu0 %v5252
    %5797 = vmatprep.subr.bf16.mxu0 %v5261
    %5798 = vmatpush1.bf16.msra.mxu0 %v5260
    %5799 = vmatprep.subr.bf16.mxu0 %v5269
    %5800 = vmatpush1.bf16.msra.mxu0 %v5268
    %5801 = vmatprep.subr.bf16.mxu0 %v5277
    %5802 = vmatpush1.bf16.msra.mxu0 %v5276
    %5803 = vmatprep.subr.bf16.mxu0 %v5285
    %5804 = vmatpush1.bf16.msra.mxu0 %v5284
    %5805 = vmatprep.subr.bf16.mxu0 %v5293
    %5806 = vmatpush1.bf16.msra.mxu0 %v5292
    %5807 = vmatprep.subr.bf16.mxu0 %v5301
    %5808 = vmatpush1.bf16.msra.mxu0 %v5300
    %5809 = vmatprep.subr.bf16.mxu0 %v5309
    %5810 = vmatpush1.bf16.msra.mxu0 %v5308
    %5811 = vmatprep.subr.bf16.mxu0 %v5317
    %5812 = vmatpush1.bf16.msra.mxu0 %v5316
    %5813 = vmatprep.mubr.bf16.mxu0 %v3997
    %5814 = vmatmul.mubr.bf16.gmra.mrb[0].mxu0 %v3996
    %v5815 = vpop.f32.mrb[0].mxu0
    %v5816 = vadd.f32 %v5775, %v5815
    %v5817 = vpop.f32.mrb[0].mxu0
    %v5818 = vadd.f32 %v5777, %v5817
    %v5819 = vpop.f32.mrb[0].mxu0
    %v5820 = vpop.f32.mrb[0].mxu0
    %5821 = vdwg.mxu0
    %5822 = vmatprep.subr.bf16.mxu0 %v5071
    %5823 = vmatpush1.bf16.msra.mxu0 %v5070
    %5824 = vmatprep.subr.bf16.mxu0 %v5079
    %5825 = vmatpush1.bf16.msra.mxu0 %v5078
    %5826 = vmatprep.subr.bf16.mxu0 %v5087
    %5827 = vmatpush1.bf16.msra.mxu0 %v5086
    %5828 = vmatprep.subr.bf16.mxu0 %v5095
    %5829 = vmatpush1.bf16.msra.mxu0 %v5094
    %5830 = vmatprep.subr.bf16.mxu0 %v5103
    %5831 = vmatpush1.bf16.msra.mxu0 %v5102
    %5832 = vmatprep.subr.bf16.mxu0 %v5111
    %5833 = vmatpush1.bf16.msra.mxu0 %v5110
    %5834 = vmatprep.subr.bf16.mxu0 %v5119
    %5835 = vmatpush1.bf16.msra.mxu0 %v5118
    %5836 = vmatprep.subr.bf16.mxu0 %v5127
    %5837 = vmatpush1.bf16.msra.mxu0 %v5126
    %5838 = vmatprep.subr.bf16.mxu0 %v5135
    %5839 = vmatpush1.bf16.msra.mxu0 %v5134
    %5840 = vmatprep.subr.bf16.mxu0 %v5143
    %5841 = vmatpush1.bf16.msra.mxu0 %v5142
    %5842 = vmatprep.subr.bf16.mxu0 %v5151
    %5843 = vmatpush1.bf16.msra.mxu0 %v5150
    %5844 = vmatprep.subr.bf16.mxu0 %v5159
    %5845 = vmatpush1.bf16.msra.mxu0 %v5158
    %5846 = vmatprep.subr.bf16.mxu0 %v5167
    %5847 = vmatpush1.bf16.msra.mxu0 %v5166
    %5848 = vmatprep.subr.bf16.mxu0 %v5175
    %5849 = vmatpush1.bf16.msra.mxu0 %v5174
    %5850 = vmatprep.subr.bf16.mxu0 %v5183
    %5851 = vmatpush1.bf16.msra.mxu0 %v5182
    %5852 = vmatprep.subr.bf16.mxu0 %v5191
    %5853 = vmatpush1.bf16.msra.mxu0 %v5190
    %5854 = vmatprep.mubr.bf16.mxu0 %v3995
    %5855 = vmatmul.mubr.bf16.gmra.mrb[0].mxu0 %v3994
    %v5856 = vpop.f32.mrb[0].mxu0
    %v5857 = vadd.f32 %v4283, %v5856
    %v5858 = vpop.f32.mrb[0].mxu0
    %v5859 = vadd.f32 %v4287, %v5858
    %v5860 = vpop.f32.mrb[0].mxu0
    %v5861 = vpop.f32.mrb[0].mxu0
    %5862 = vdwg.mxu0
    %5863 = vmatprep.subr.bf16.mxu0 %v5199
    %5864 = vmatpush1.bf16.msra.mxu0 %v5198
    %5865 = vmatprep.subr.bf16.mxu0 %v5207
    %5866 = vmatpush1.bf16.msra.mxu0 %v5206
    %5867 = vmatprep.subr.bf16.mxu0 %v5215
    %5868 = vmatpush1.bf16.msra.mxu0 %v5214
    %5869 = vmatprep.subr.bf16.mxu0 %v5223
    %5870 = vmatpush1.bf16.msra.mxu0 %v5222
    %5871 = vmatprep.subr.bf16.mxu0 %v5231
    %5872 = vmatpush1.bf16.msra.mxu0 %v5230
    %5873 = vmatprep.subr.bf16.mxu0 %v5239
    %5874 = vmatpush1.bf16.msra.mxu0 %v5238
    %5875 = vmatprep.subr.bf16.mxu0 %v5247
    %5876 = vmatpush1.bf16.msra.mxu0 %v5246
    %5877 = vmatprep.subr.bf16.mxu0 %v5255
    %5878 = vmatpush1.bf16.msra.mxu0 %v5254
    %5879 = vmatprep.subr.bf16.mxu0 %v5263
    %5880 = vmatpush1.bf16.msra.mxu0 %v5262
    %5881 = vmatprep.subr.bf16.mxu0 %v5271
    %5882 = vmatpush1.bf16.msra.mxu0 %v5270
    %5883 = vmatprep.subr.bf16.mxu0 %v5279
    %5884 = vmatpush1.bf16.msra.mxu0 %v5278
    %5885 = vmatprep.subr.bf16.mxu0 %v5287
    %5886 = vmatpush1.bf16.msra.mxu0 %v5286
    %5887 = vmatprep.subr.bf16.mxu0 %v5295
    %5888 = vmatpush1.bf16.msra.mxu0 %v5294
    %5889 = vmatprep.subr.bf16.mxu0 %v5303
    %5890 = vmatpush1.bf16.msra.mxu0 %v5302
    %5891 = vmatprep.subr.bf16.mxu0 %v5311
    %5892 = vmatpush1.bf16.msra.mxu0 %v5310
    %5893 = vmatprep.subr.bf16.mxu0 %v5319
    %5894 = vmatpush1.bf16.msra.mxu0 %v5318
    %5895 = vmatprep.mubr.bf16.mxu0 %v3997
    %5896 = vmatmul.mubr.bf16.gmra.mrb[0].mxu0 %v3996
    %v5897 = vpop.f32.mrb[0].mxu0
    %v5898 = vadd.f32 %v5857, %v5897
    %v5899 = vpop.f32.mrb[0].mxu0
    %v5900 = vadd.f32 %v5859, %v5899
    %v5901 = vpop.f32.mrb[0].mxu0
    %v5902 = vpop.f32.mrb[0].mxu0
    %5903 = vdwg.mxu0
    %v5904 = vmax.f32 %v5652, 0.0
    %v5905 = vmax.f32 %v5654, 0.0
    %v5906 = vmax.f32 %v5734, 0.0
    %v5907 = vmax.f32 %v5736, 0.0
    %v5908 = vmax.f32 %v5816, 0.0
    %v5909 = vmax.f32 %v5818, 0.0
    %v5910 = vmax.f32 %v5898, 0.0
    %v5911 = vmax.f32 %v5900, 0.0
    %v5912 = vpack.c.bf16 %v5904, %v5904
    %v5913 = vpack.c.bf16 %v5905, %v5905
    %v5914 = vpack.c.bf16 %v5906, %v5906
    %v5915 = vpack.c.bf16 %v5907, %v5907
    %v5916 = vpack.c.bf16 %v5908, %v5908
    %v5917 = vpack.c.bf16 %v5909, %v5909
    %v5918 = vpack.c.bf16 %v5910, %v5910
    %v5919 = vpack.c.bf16 %v5911, %v5911
    %v5920 = vld [vmem:[#allocation17] sm:$0xf]
    %v5921 = vld [vmem:[#allocation17 + $0x4] sm:$0xf]
    %v5922 = vld [vmem:[#allocation17 + $0x8] sm:$0xf]
    %v5923 = vld [vmem:[#allocation17 + $0xc] sm:$0xf]
    %v5924 = vld [vmem:[#allocation17 + $0x10] sm:$0xf]
    %v5925 = vld [vmem:[#allocation17 + $0x14] sm:$0xf]
    %v5926 = vld [vmem:[#allocation17 + $0x18] sm:$0xf]
    %v5927 = vld [vmem:[#allocation17 + $0x1c] sm:$0xf]
    %v5928 = vld [vmem:[#allocation17 + $0x20] sm:$0xf]
    %v5929 = vld [vmem:[#allocation17 + $0x24] sm:$0xf]
    %v5930 = vld [vmem:[#allocation17 + $0x28] sm:$0xf]
    %v5931 = vld [vmem:[#allocation17 + $0x2c] sm:$0xf]
    %v5932 = vld [vmem:[#allocation17 + $0x30] sm:$0xf]
    %v5933 = vld [vmem:[#allocation17 + $0x34] sm:$0xf]
    %v5934 = vld [vmem:[#allocation17 + $0x38] sm:$0xf]
    %v5935 = vld [vmem:[#allocation17 + $0x3c] sm:$0xf]
    %v5936 = vld [vmem:[#allocation17 + $0x40] sm:$0xf]
    %v5937 = vld [vmem:[#allocation17 + $0x44] sm:$0xf]
    %v5938 = vld [vmem:[#allocation17 + $0x48] sm:$0xf]
    %v5939 = vld [vmem:[#allocation17 + $0x4c] sm:$0xf]
    %v5940 = vld [vmem:[#allocation17 + $0x50] sm:$0xf]
    %v5941 = vld [vmem:[#allocation17 + $0x54] sm:$0xf]
    %v5942 = vld [vmem:[#allocation17 + $0x58] sm:$0xf]
    %v5943 = vld [vmem:[#allocation17 + $0x5c] sm:$0xf]
    %v5944 = vld [vmem:[#allocation17 + $0x60] sm:$0xf]
    %v5945 = vld [vmem:[#allocation17 + $0x64] sm:$0xf]
    %v5946 = vld [vmem:[#allocation17 + $0x68] sm:$0xf]
    %v5947 = vld [vmem:[#allocation17 + $0x6c] sm:$0xf]
    %v5948 = vld [vmem:[#allocation17 + $0x70] sm:$0xf]
    %v5949 = vld [vmem:[#allocation17 + $0x74] sm:$0xf]
    %v5950 = vld [vmem:[#allocation17 + $0x78] sm:$0xf]
    %v5951 = vld [vmem:[#allocation17 + $0x7c] sm:$0xf]
    %v5952 = vld [vmem:[#allocation17 + $0x80] sm:$0xf]
    %v5953 = vld [vmem:[#allocation17 + $0x84] sm:$0xf]
    %v5954 = vld [vmem:[#allocation17 + $0x88] sm:$0xf]
    %v5955 = vld [vmem:[#allocation17 + $0x8c] sm:$0xf]
    %v5956 = vld [vmem:[#allocation17 + $0x90] sm:$0xf]
    %v5957 = vld [vmem:[#allocation17 + $0x94] sm:$0xf]
    %v5958 = vld [vmem:[#allocation17 + $0x98] sm:$0xf]
    %v5959 = vld [vmem:[#allocation17 + $0x9c] sm:$0xf]
    %v5960 = vld [vmem:[#allocation17 + $0xa0] sm:$0xf]
    %v5961 = vld [vmem:[#allocation17 + $0xa4] sm:$0xf]
    %v5962 = vld [vmem:[#allocation17 + $0xa8] sm:$0xf]
    %v5963 = vld [vmem:[#allocation17 + $0xac] sm:$0xf]
    %v5964 = vld [vmem:[#allocation17 + $0xb0] sm:$0xf]
    %v5965 = vld [vmem:[#allocation17 + $0xb4] sm:$0xf]
    %v5966 = vld [vmem:[#allocation17 + $0xb8] sm:$0xf]
    %v5967 = vld [vmem:[#allocation17 + $0xbc] sm:$0xf]
    %v5968 = vld [vmem:[#allocation17 + $0xc0] sm:$0xf]
    %v5969 = vld [vmem:[#allocation17 + $0xc4] sm:$0xf]
    %v5970 = vld [vmem:[#allocation17 + $0xc8] sm:$0xf]
    %v5971 = vld [vmem:[#allocation17 + $0xcc] sm:$0xf]
    %v5972 = vld [vmem:[#allocation17 + $0xd0] sm:$0xf]
    %v5973 = vld [vmem:[#allocation17 + $0xd4] sm:$0xf]
    %v5974 = vld [vmem:[#allocation17 + $0xd8] sm:$0xf]
    %v5975 = vld [vmem:[#allocation17 + $0xdc] sm:$0xf]
    %v5976 = vld [vmem:[#allocation17 + $0xe0] sm:$0xf]
    %v5977 = vld [vmem:[#allocation17 + $0xe4] sm:$0xf]
    %v5978 = vld [vmem:[#allocation17 + $0xe8] sm:$0xf]
    %v5979 = vld [vmem:[#allocation17 + $0xec] sm:$0xf]
    %v5980 = vld [vmem:[#allocation17 + $0xf0] sm:$0xf]
    %v5981 = vld [vmem:[#allocation17 + $0xf4] sm:$0xf]
    %v5982 = vld [vmem:[#allocation17 + $0xf8] sm:$0xf]
    %v5983 = vld [vmem:[#allocation17 + $0xfc] sm:$0xf]
    %v5984 = vld [vmem:[#allocation17 + $0x100] sm:$0xf]
    %v5985 = vld [vmem:[#allocation17 + $0x104] sm:$0xf]
    %v5986 = vld [vmem:[#allocation17 + $0x108] sm:$0xf]
    %v5987 = vld [vmem:[#allocation17 + $0x10c] sm:$0xf]
    %v5988 = vld [vmem:[#allocation17 + $0x110] sm:$0xf]
    %v5989 = vld [vmem:[#allocation17 + $0x114] sm:$0xf]
    %v5990 = vld [vmem:[#allocation17 + $0x118] sm:$0xf]
    %v5991 = vld [vmem:[#allocation17 + $0x11c] sm:$0xf]
    %v5992 = vld [vmem:[#allocation17 + $0x120] sm:$0xf]
    %v5993 = vld [vmem:[#allocation17 + $0x124] sm:$0xf]
    %v5994 = vld [vmem:[#allocation17 + $0x128] sm:$0xf]
    %v5995 = vld [vmem:[#allocation17 + $0x12c] sm:$0xf]
    %v5996 = vld [vmem:[#allocation17 + $0x130] sm:$0xf]
    %v5997 = vld [vmem:[#allocation17 + $0x134] sm:$0xf]
    %v5998 = vld [vmem:[#allocation17 + $0x138] sm:$0xf]
    %v5999 = vld [vmem:[#allocation17 + $0x13c] sm:$0xf]
    %v6000 = vld [vmem:[#allocation17 + $0x140] sm:$0xf]
    %v6001 = vld [vmem:[#allocation17 + $0x144] sm:$0xf]
    %v6002 = vld [vmem:[#allocation17 + $0x148] sm:$0xf]
    %v6003 = vld [vmem:[#allocation17 + $0x14c] sm:$0xf]
    %v6004 = vld [vmem:[#allocation17 + $0x150] sm:$0xf]
    %v6005 = vld [vmem:[#allocation17 + $0x154] sm:$0xf]
    %v6006 = vld [vmem:[#allocation17 + $0x158] sm:$0xf]
    %v6007 = vld [vmem:[#allocation17 + $0x15c] sm:$0xf]
    %v6008 = vld [vmem:[#allocation17 + $0x160] sm:$0xf]
    %v6009 = vld [vmem:[#allocation17 + $0x164] sm:$0xf]
    %v6010 = vld [vmem:[#allocation17 + $0x168] sm:$0xf]
    %v6011 = vld [vmem:[#allocation17 + $0x16c] sm:$0xf]
    %v6012 = vld [vmem:[#allocation17 + $0x170] sm:$0xf]
    %v6013 = vld [vmem:[#allocation17 + $0x174] sm:$0xf]
    %v6014 = vld [vmem:[#allocation17 + $0x178] sm:$0xf]
    %v6015 = vld [vmem:[#allocation17 + $0x17c] sm:$0xf]
    %v6016 = vld [vmem:[#allocation17 + $0x180] sm:$0xf]
    %v6017 = vld [vmem:[#allocation17 + $0x184] sm:$0xf]
    %v6018 = vld [vmem:[#allocation17 + $0x188] sm:$0xf]
    %v6019 = vld [vmem:[#allocation17 + $0x18c] sm:$0xf]
    %v6020 = vld [vmem:[#allocation17 + $0x190] sm:$0xf]
    %v6021 = vld [vmem:[#allocation17 + $0x194] sm:$0xf]
    %v6022 = vld [vmem:[#allocation17 + $0x198] sm:$0xf]
    %v6023 = vld [vmem:[#allocation17 + $0x19c] sm:$0xf]
    %v6024 = vld [vmem:[#allocation17 + $0x1a0] sm:$0xf]
    %v6025 = vld [vmem:[#allocation17 + $0x1a4] sm:$0xf]
    %v6026 = vld [vmem:[#allocation17 + $0x1a8] sm:$0xf]
    %v6027 = vld [vmem:[#allocation17 + $0x1ac] sm:$0xf]
    %v6028 = vld [vmem:[#allocation17 + $0x1b0] sm:$0xf]
    %v6029 = vld [vmem:[#allocation17 + $0x1b4] sm:$0xf]
    %v6030 = vld [vmem:[#allocation17 + $0x1b8] sm:$0xf]
    %v6031 = vld [vmem:[#allocation17 + $0x1bc] sm:$0xf]
    %v6032 = vld [vmem:[#allocation17 + $0x1c0] sm:$0xf]
    %v6033 = vld [vmem:[#allocation17 + $0x1c4] sm:$0xf]
    %v6034 = vld [vmem:[#allocation17 + $0x1c8] sm:$0xf]
    %v6035 = vld [vmem:[#allocation17 + $0x1cc] sm:$0xf]
    %v6036 = vld [vmem:[#allocation17 + $0x1d0] sm:$0xf]
    %v6037 = vld [vmem:[#allocation17 + $0x1d4] sm:$0xf]
    %v6038 = vld [vmem:[#allocation17 + $0x1d8] sm:$0xf]
    %v6039 = vld [vmem:[#allocation17 + $0x1dc] sm:$0xf]
    %v6040 = vld [vmem:[#allocation17 + $0x1e0] sm:$0xf]
    %v6041 = vld [vmem:[#allocation17 + $0x1e4] sm:$0xf]
    %v6042 = vld [vmem:[#allocation17 + $0x1e8] sm:$0xf]
    %v6043 = vld [vmem:[#allocation17 + $0x1ec] sm:$0xf]
    %v6044 = vld [vmem:[#allocation17 + $0x1f0] sm:$0xf]
    %v6045 = vld [vmem:[#allocation17 + $0x1f4] sm:$0xf]
    %v6046 = vld [vmem:[#allocation17 + $0x1f8] sm:$0xf]
    %v6047 = vld [vmem:[#allocation17 + $0x1fc] sm:$0xf]
    %v6048 = vld [vmem:[%s16] sm:$0x1]
    %v6050 = vlaneseq
    %v6051 = vshrl.u32 %v6050, 7
    %v6052 = vsub.s32 0, %v6051
    %v6053 = vrot.slane %v6048, %v6052
    %v6183 = vunpack.c.l.b16 %v5920
    %v6184 = vunpack.c.l.b16 %v5921
    %v6185 = vunpack.c.l.b16 %v5922
    %v6186 = vunpack.c.l.b16 %v5923
    %v6187 = vunpack.c.l.b16 %v5924
    %v6188 = vunpack.c.l.b16 %v5925
    %v6189 = vunpack.c.l.b16 %v5926
    %v6190 = vunpack.c.l.b16 %v5927
    %v6191 = vunpack.c.l.b16 %v5928
    %v6192 = vunpack.c.l.b16 %v5929
    %v6193 = vunpack.c.l.b16 %v5930
    %v6194 = vunpack.c.l.b16 %v5931
    %v6195 = vunpack.c.l.b16 %v5932
    %v6196 = vunpack.c.l.b16 %v5933
    %v6197 = vunpack.c.l.b16 %v5934
    %v6198 = vunpack.c.l.b16 %v5935
    %v6199 = vunpack.c.l.b16 %v5936
    %v6200 = vunpack.c.l.b16 %v5937
    %v6201 = vunpack.c.l.b16 %v5938
    %v6202 = vunpack.c.l.b16 %v5939
    %v6203 = vunpack.c.l.b16 %v5940
    %v6204 = vunpack.c.l.b16 %v5941
    %v6205 = vunpack.c.l.b16 %v5942
    %v6206 = vunpack.c.l.b16 %v5943
    %v6207 = vunpack.c.l.b16 %v5944
    %v6208 = vunpack.c.l.b16 %v5945
    %v6209 = vunpack.c.l.b16 %v5946
    %v6210 = vunpack.c.l.b16 %v5947
    %v6211 = vunpack.c.l.b16 %v5948
    %v6212 = vunpack.c.l.b16 %v5949
    %v6213 = vunpack.c.l.b16 %v5950
    %v6214 = vunpack.c.l.b16 %v5951
    %v6215 = vunpack.c.l.b16 %v5952
    %v6216 = vunpack.c.l.b16 %v5953
    %v6217 = vunpack.c.l.b16 %v5954
    %v6218 = vunpack.c.l.b16 %v5955
    %v6219 = vunpack.c.l.b16 %v5956
    %v6220 = vunpack.c.l.b16 %v5957
    %v6221 = vunpack.c.l.b16 %v5958
    %v6222 = vunpack.c.l.b16 %v5959
    %v6223 = vunpack.c.l.b16 %v5960
    %v6224 = vunpack.c.l.b16 %v5961
    %v6225 = vunpack.c.l.b16 %v5962
    %v6226 = vunpack.c.l.b16 %v5963
    %v6227 = vunpack.c.l.b16 %v5964
    %v6228 = vunpack.c.l.b16 %v5965
    %v6229 = vunpack.c.l.b16 %v5966
    %v6230 = vunpack.c.l.b16 %v5967
    %v6231 = vunpack.c.l.b16 %v5968
    %v6232 = vunpack.c.l.b16 %v5969
    %v6233 = vunpack.c.l.b16 %v5970
    %v6234 = vunpack.c.l.b16 %v5971
    %v6235 = vunpack.c.l.b16 %v5972
    %v6236 = vunpack.c.l.b16 %v5973
    %v6237 = vunpack.c.l.b16 %v5974
    %v6238 = vunpack.c.l.b16 %v5975
    %v6239 = vunpack.c.l.b16 %v5976
    %v6240 = vunpack.c.l.b16 %v5977
    %v6241 = vunpack.c.l.b16 %v5978
    %v6242 = vunpack.c.l.b16 %v5979
    %v6243 = vunpack.c.l.b16 %v5980
    %v6244 = vunpack.c.l.b16 %v5981
    %v6245 = vunpack.c.l.b16 %v5982
    %v6246 = vunpack.c.l.b16 %v5983
    %v6247 = vunpack.c.l.b16 %v5984
    %v6248 = vunpack.c.l.b16 %v5985
    %v6249 = vunpack.c.l.b16 %v5986
    %v6250 = vunpack.c.l.b16 %v5987
    %v6251 = vunpack.c.l.b16 %v5988
    %v6252 = vunpack.c.l.b16 %v5989
    %v6253 = vunpack.c.l.b16 %v5990
    %v6254 = vunpack.c.l.b16 %v5991
    %v6255 = vunpack.c.l.b16 %v5992
    %v6256 = vunpack.c.l.b16 %v5993
    %v6257 = vunpack.c.l.b16 %v5994
    %v6258 = vunpack.c.l.b16 %v5995
    %v6259 = vunpack.c.l.b16 %v5996
    %v6260 = vunpack.c.l.b16 %v5997
    %v6261 = vunpack.c.l.b16 %v5998
    %v6262 = vunpack.c.l.b16 %v5999
    %v6263 = vunpack.c.l.b16 %v6000
    %v6264 = vunpack.c.l.b16 %v6001
    %v6265 = vunpack.c.l.b16 %v6002
    %v6266 = vunpack.c.l.b16 %v6003
    %v6267 = vunpack.c.l.b16 %v6004
    %v6268 = vunpack.c.l.b16 %v6005
    %v6269 = vunpack.c.l.b16 %v6006
    %v6270 = vunpack.c.l.b16 %v6007
    %v6271 = vunpack.c.l.b16 %v6008
    %v6272 = vunpack.c.l.b16 %v6009
    %v6273 = vunpack.c.l.b16 %v6010
    %v6274 = vunpack.c.l.b16 %v6011
    %v6275 = vunpack.c.l.b16 %v6012
    %v6276 = vunpack.c.l.b16 %v6013
    %v6277 = vunpack.c.l.b16 %v6014
    %v6278 = vunpack.c.l.b16 %v6015
    %v6279 = vunpack.c.l.b16 %v6016
    %v6280 = vunpack.c.l.b16 %v6017
    %v6281 = vunpack.c.l.b16 %v6018
    %v6282 = vunpack.c.l.b16 %v6019
    %v6283 = vunpack.c.l.b16 %v6020
    %v6284 = vunpack.c.l.b16 %v6021
    %v6285 = vunpack.c.l.b16 %v6022
    %v6286 = vunpack.c.l.b16 %v6023
    %v6287 = vunpack.c.l.b16 %v6024
    %v6288 = vunpack.c.l.b16 %v6025
    %v6289 = vunpack.c.l.b16 %v6026
    %v6290 = vunpack.c.l.b16 %v6027
    %v6291 = vunpack.c.l.b16 %v6028
    %v6292 = vunpack.c.l.b16 %v6029
    %v6293 = vunpack.c.l.b16 %v6030
    %v6294 = vunpack.c.l.b16 %v6031
    %v6295 = vunpack.c.l.b16 %v6032
    %v6296 = vunpack.c.l.b16 %v6033
    %v6297 = vunpack.c.l.b16 %v6034
    %v6298 = vunpack.c.l.b16 %v6035
    %v6299 = vunpack.c.l.b16 %v6036
    %v6300 = vunpack.c.l.b16 %v6037
    %v6301 = vunpack.c.l.b16 %v6038
    %v6302 = vunpack.c.l.b16 %v6039
    %v6303 = vunpack.c.l.b16 %v6040
    %v6304 = vunpack.c.l.b16 %v6041
    %v6305 = vunpack.c.l.b16 %v6042
    %v6306 = vunpack.c.l.b16 %v6043
    %v6307 = vunpack.c.l.b16 %v6044
    %v6308 = vunpack.c.l.b16 %v6045
    %v6309 = vunpack.c.l.b16 %v6046
    %v6310 = vunpack.c.l.b16 %v6047
    %v6311 = vpack.c.b16 %v6184, %v6183
    %v6312 = vpack.c.b16 %v6186, %v6185
    %v6313 = vpack.c.b16 %v6188, %v6187
    %v6314 = vpack.c.b16 %v6190, %v6189
    %v6315 = vpack.c.b16 %v6192, %v6191
    %v6316 = vpack.c.b16 %v6194, %v6193
    %v6317 = vpack.c.b16 %v6196, %v6195
    %v6318 = vpack.c.b16 %v6198, %v6197
    %v6319 = vpack.c.b16 %v6200, %v6199
    %v6320 = vpack.c.b16 %v6202, %v6201
    %v6321 = vpack.c.b16 %v6204, %v6203
    %v6322 = vpack.c.b16 %v6206, %v6205
    %v6323 = vpack.c.b16 %v6208, %v6207
    %v6324 = vpack.c.b16 %v6210, %v6209
    %v6325 = vpack.c.b16 %v6212, %v6211
    %v6326 = vpack.c.b16 %v6214, %v6213
    %v6327 = vpack.c.b16 %v6216, %v6215
    %v6328 = vpack.c.b16 %v6218, %v6217
    %v6329 = vpack.c.b16 %v6220, %v6219
    %v6330 = vpack.c.b16 %v6222, %v6221
    %v6331 = vpack.c.b16 %v6224, %v6223
    %v6332 = vpack.c.b16 %v6226, %v6225
    %v6333 = vpack.c.b16 %v6228, %v6227
    %v6334 = vpack.c.b16 %v6230, %v6229
    %v6335 = vpack.c.b16 %v6232, %v6231
    %v6336 = vpack.c.b16 %v6234, %v6233
    %v6337 = vpack.c.b16 %v6236, %v6235
    %v6338 = vpack.c.b16 %v6238, %v6237
    %v6339 = vpack.c.b16 %v6240, %v6239
    %v6340 = vpack.c.b16 %v6242, %v6241
    %v6341 = vpack.c.b16 %v6244, %v6243
    %v6342 = vpack.c.b16 %v6246, %v6245
    %v6343 = vpack.c.b16 %v6248, %v6247
    %v6344 = vpack.c.b16 %v6250, %v6249
    %v6345 = vpack.c.b16 %v6252, %v6251
    %v6346 = vpack.c.b16 %v6254, %v6253
    %v6347 = vpack.c.b16 %v6256, %v6255
    %v6348 = vpack.c.b16 %v6258, %v6257
    %v6349 = vpack.c.b16 %v6260, %v6259
    %v6350 = vpack.c.b16 %v6262, %v6261
    %v6351 = vpack.c.b16 %v6264, %v6263
    %v6352 = vpack.c.b16 %v6266, %v6265
    %v6353 = vpack.c.b16 %v6268, %v6267
    %v6354 = vpack.c.b16 %v6270, %v6269
    %v6355 = vpack.c.b16 %v6272, %v6271
    %v6356 = vpack.c.b16 %v6274, %v6273
    %v6357 = vpack.c.b16 %v6276, %v6275
    %v6358 = vpack.c.b16 %v6278, %v6277
    %v6359 = vpack.c.b16 %v6280, %v6279
    %v6360 = vpack.c.b16 %v6282, %v6281
    %v6361 = vpack.c.b16 %v6284, %v6283
    %v6362 = vpack.c.b16 %v6286, %v6285
    %v6363 = vpack.c.b16 %v6288, %v6287
    %v6364 = vpack.c.b16 %v6290, %v6289
    %v6365 = vpack.c.b16 %v6292, %v6291
    %v6366 = vpack.c.b16 %v6294, %v6293
    %v6367 = vpack.c.b16 %v6296, %v6295
    %v6368 = vpack.c.b16 %v6298, %v6297
    %v6369 = vpack.c.b16 %v6300, %v6299
    %v6370 = vpack.c.b16 %v6302, %v6301
    %v6371 = vpack.c.b16 %v6304, %v6303
    %v6372 = vpack.c.b16 %v6306, %v6305
    %v6373 = vpack.c.b16 %v6308, %v6307
    %v6374 = vpack.c.b16 %v6310, %v6309
    %6439 = vmatprep.subr.bf16.mxu0 0
    %6440 = vmatpush1.bf16.msra.mxu0 %v6311
    %6441 = vmatprep.subr.bf16.mxu0 0
    %6442 = vmatpush1.bf16.msra.mxu0 %v6312
    %6443 = vmatprep.subr.bf16.mxu0 0
    %6444 = vmatpush1.bf16.msra.mxu0 %v6313
    %6445 = vmatprep.subr.bf16.mxu0 0
    %6446 = vmatpush1.bf16.msra.mxu0 %v6314
    %6447 = vmatprep.subr.bf16.mxu0 0
    %6448 = vmatpush1.bf16.msra.mxu0 %v6315
    %6449 = vmatprep.subr.bf16.mxu0 0
    %6450 = vmatpush1.bf16.msra.mxu0 %v6316
    %6451 = vmatprep.subr.bf16.mxu0 0
    %6452 = vmatpush1.bf16.msra.mxu0 %v6317
    %6453 = vmatprep.subr.bf16.mxu0 0
    %6454 = vmatpush1.bf16.msra.mxu0 %v6318
    %6455 = vmatprep.subr.bf16.mxu0 0
    %6456 = vmatpush1.bf16.msra.mxu0 %v6319
    %6457 = vmatprep.subr.bf16.mxu0 0
    %6458 = vmatpush1.bf16.msra.mxu0 %v6320
    %6459 = vmatprep.subr.bf16.mxu0 0
    %6460 = vmatpush1.bf16.msra.mxu0 %v6321
    %6461 = vmatprep.subr.bf16.mxu0 0
    %6462 = vmatpush1.bf16.msra.mxu0 %v6322
    %6463 = vmatprep.subr.bf16.mxu0 0
    %6464 = vmatpush1.bf16.msra.mxu0 %v6323
    %6465 = vmatprep.subr.bf16.mxu0 0
    %6466 = vmatpush1.bf16.msra.mxu0 %v6324
    %6467 = vmatprep.subr.bf16.mxu0 0
    %6468 = vmatpush1.bf16.msra.mxu0 %v6325
    %6469 = vmatprep.subr.bf16.mxu0 0
    %6470 = vmatpush1.bf16.msra.mxu0 %v6326
    %6471 = vmatprep.mubr.bf16.mxu0 %v5913
    %6472 = vmatmul.mubr.bf16.gmra.mrb[0].mxu0 %v5912
    %v6473 = vpop.f32.mrb[0].mxu0
    %v6474 = vadd.f32 %v6053, %v6473
    %v6475 = vpop.f32.mrb[0].mxu0
    %v6476 = vpop.f32.mrb[0].mxu0
    %v6477 = vpop.f32.mrb[0].mxu0
    %6478 = vdwg.mxu0
    %6479 = vmatprep.subr.bf16.mxu0 0
    %6480 = vmatpush1.bf16.msra.mxu0 %v6327
    %6481 = vmatprep.subr.bf16.mxu0 0
    %6482 = vmatpush1.bf16.msra.mxu0 %v6328
    %6483 = vmatprep.subr.bf16.mxu0 0
    %6484 = vmatpush1.bf16.msra.mxu0 %v6329
    %6485 = vmatprep.subr.bf16.mxu0 0
    %6486 = vmatpush1.bf16.msra.mxu0 %v6330
    %6487 = vmatprep.subr.bf16.mxu0 0
    %6488 = vmatpush1.bf16.msra.mxu0 %v6331
    %6489 = vmatprep.subr.bf16.mxu0 0
    %6490 = vmatpush1.bf16.msra.mxu0 %v6332
    %6491 = vmatprep.subr.bf16.mxu0 0
    %6492 = vmatpush1.bf16.msra.mxu0 %v6333
    %6493 = vmatprep.subr.bf16.mxu0 0
    %6494 = vmatpush1.bf16.msra.mxu0 %v6334
    %6495 = vmatprep.subr.bf16.mxu0 0
    %6496 = vmatpush1.bf16.msra.mxu0 %v6335
    %6497 = vmatprep.subr.bf16.mxu0 0
    %6498 = vmatpush1.bf16.msra.mxu0 %v6336
    %6499 = vmatprep.subr.bf16.mxu0 0
    %6500 = vmatpush1.bf16.msra.mxu0 %v6337
    %6501 = vmatprep.subr.bf16.mxu0 0
    %6502 = vmatpush1.bf16.msra.mxu0 %v6338
    %6503 = vmatprep.subr.bf16.mxu0 0
    %6504 = vmatpush1.bf16.msra.mxu0 %v6339
    %6505 = vmatprep.subr.bf16.mxu0 0
    %6506 = vmatpush1.bf16.msra.mxu0 %v6340
    %6507 = vmatprep.subr.bf16.mxu0 0
    %6508 = vmatpush1.bf16.msra.mxu0 %v6341
    %6509 = vmatprep.subr.bf16.mxu0 0
    %6510 = vmatpush1.bf16.msra.mxu0 %v6342
    %6511 = vmatprep.mubr.bf16.mxu0 %v5915
    %6512 = vmatmul.mubr.bf16.gmra.mrb[0].mxu0 %v5914
    %v6513 = vpop.f32.mrb[0].mxu0
    %v6514 = vadd.f32 %v6474, %v6513
    %v6515 = vpop.f32.mrb[0].mxu0
    %v6516 = vpop.f32.mrb[0].mxu0
    %v6517 = vpop.f32.mrb[0].mxu0
    %6518 = vdwg.mxu0
    %6519 = vmatprep.subr.bf16.mxu0 0
    %6520 = vmatpush1.bf16.msra.mxu0 %v6343
    %6521 = vmatprep.subr.bf16.mxu0 0
    %6522 = vmatpush1.bf16.msra.mxu0 %v6344
    %6523 = vmatprep.subr.bf16.mxu0 0
    %6524 = vmatpush1.bf16.msra.mxu0 %v6345
    %6525 = vmatprep.subr.bf16.mxu0 0
    %6526 = vmatpush1.bf16.msra.mxu0 %v6346
    %6527 = vmatprep.subr.bf16.mxu0 0
    %6528 = vmatpush1.bf16.msra.mxu0 %v6347
    %6529 = vmatprep.subr.bf16.mxu0 0
    %6530 = vmatpush1.bf16.msra.mxu0 %v6348
    %6531 = vmatprep.subr.bf16.mxu0 0
    %6532 = vmatpush1.bf16.msra.mxu0 %v6349
    %6533 = vmatprep.subr.bf16.mxu0 0
    %6534 = vmatpush1.bf16.msra.mxu0 %v6350
    %6535 = vmatprep.subr.bf16.mxu0 0
    %6536 = vmatpush1.bf16.msra.mxu0 %v6351
    %6537 = vmatprep.subr.bf16.mxu0 0
    %6538 = vmatpush1.bf16.msra.mxu0 %v6352
    %6539 = vmatprep.subr.bf16.mxu0 0
    %6540 = vmatpush1.bf16.msra.mxu0 %v6353
    %6541 = vmatprep.subr.bf16.mxu0 0
    %6542 = vmatpush1.bf16.msra.mxu0 %v6354
    %6543 = vmatprep.subr.bf16.mxu0 0
    %6544 = vmatpush1.bf16.msra.mxu0 %v6355
    %6545 = vmatprep.subr.bf16.mxu0 0
    %6546 = vmatpush1.bf16.msra.mxu0 %v6356
    %6547 = vmatprep.subr.bf16.mxu0 0
    %6548 = vmatpush1.bf16.msra.mxu0 %v6357
    %6549 = vmatprep.subr.bf16.mxu0 0
    %6550 = vmatpush1.bf16.msra.mxu0 %v6358
    %6551 = vmatprep.mubr.bf16.mxu0 %v5917
    %6552 = vmatmul.mubr.bf16.gmra.mrb[0].mxu0 %v5916
    %v6553 = vpop.f32.mrb[0].mxu0
    %v6554 = vadd.f32 %v6514, %v6553
    %v6555 = vpop.f32.mrb[0].mxu0
    %v6556 = vpop.f32.mrb[0].mxu0
    %v6557 = vpop.f32.mrb[0].mxu0
    %6558 = vdwg.mxu0
    %6559 = vmatprep.subr.bf16.mxu0 0
    %6560 = vmatpush1.bf16.msra.mxu0 %v6359
    %6561 = vmatprep.subr.bf16.mxu0 0
    %6562 = vmatpush1.bf16.msra.mxu0 %v6360
    %6563 = vmatprep.subr.bf16.mxu0 0
    %6564 = vmatpush1.bf16.msra.mxu0 %v6361
    %6565 = vmatprep.subr.bf16.mxu0 0
    %6566 = vmatpush1.bf16.msra.mxu0 %v6362
    %6567 = vmatprep.subr.bf16.mxu0 0
    %6568 = vmatpush1.bf16.msra.mxu0 %v6363
    %6569 = vmatprep.subr.bf16.mxu0 0
    %6570 = vmatpush1.bf16.msra.mxu0 %v6364
    %6571 = vmatprep.subr.bf16.mxu0 0
    %6572 = vmatpush1.bf16.msra.mxu0 %v6365
    %6573 = vmatprep.subr.bf16.mxu0 0
    %6574 = vmatpush1.bf16.msra.mxu0 %v6366
    %6575 = vmatprep.subr.bf16.mxu0 0
    %6576 = vmatpush1.bf16.msra.mxu0 %v6367
    %6577 = vmatprep.subr.bf16.mxu0 0
    %6578 = vmatpush1.bf16.msra.mxu0 %v6368
    %6579 = vmatprep.subr.bf16.mxu0 0
    %6580 = vmatpush1.bf16.msra.mxu0 %v6369
    %6581 = vmatprep.subr.bf16.mxu0 0
    %6582 = vmatpush1.bf16.msra.mxu0 %v6370
    %6583 = vmatprep.subr.bf16.mxu0 0
    %6584 = vmatpush1.bf16.msra.mxu0 %v6371
    %6585 = vmatprep.subr.bf16.mxu0 0
    %6586 = vmatpush1.bf16.msra.mxu0 %v6372
    %6587 = vmatprep.subr.bf16.mxu0 0
    %6588 = vmatpush1.bf16.msra.mxu0 %v6373
    %6589 = vmatprep.subr.bf16.mxu0 0
    %6590 = vmatpush1.bf16.msra.mxu0 %v6374
    %6591 = vmatprep.mubr.bf16.mxu0 %v5919
    %6592 = vmatmul.mubr.bf16.gmra.mrb[0].mxu0 %v5918
    %v6593 = vpop.f32.mrb[0].mxu0
    %v6594 = vadd.f32 %v6554, %v6593
    %v6595 = vpop.f32.mrb[0].mxu0
    %v6596 = vpop.f32.mrb[0].mxu0
    %v6597 = vpop.f32.mrb[0].mxu0
    %6598 = vdwg.mxu0
    %v6599 = vpack.c.bf16 %v6594, %v6594
    %6600 = vst [vmem:[#allocation19] sm:$0xf] %v6599
    // Predicated region
    $region110: #{tpu_custom_call.1} parent=1 // pred_check
      _
    $region111: #{tpu_custom_call.1} parent=1 // pred_check_branch
      %6602 = sbr.rel (0) target = $region113
    $region112: #{tpu_custom_call.1} parent=1 // pred_region
      %s6604 = ssub.s32 64, 64
      %6605 = vsyncadd [#allocation4], %s6604
      %s6607 = sshll.u32 [#allocation19], 4
      %s6608 = int_to_ptr.vmem [resolvable:$true] %s6607
      %6610 = dma.vmem_to_hbm [thread:$0]  %s6608, 64, %s17, [#allocation4]
    $region113: #{tpu_custom_call.1} parent=1 // pred_fallthru
      _
    // Predicated region
    $region114: #{tpu_custom_call.1} parent=1 // pred_check
      _
    $region115: #{tpu_custom_call.1} parent=1 // pred_check_branch
      %6612 = sbr.rel (0) target = $region117
    $region116: #{tpu_custom_call.1} parent=1 // pred_region
      %6613 = dma.done [#allocation4], 64
    $region117: #{tpu_custom_call.1} parent=1 // pred_fallthru
      _
    %6614 = vsyncpa [#allocation3], 1
    %6615 = vsyncpa [#allocation6], 1
    %6616 = vsyncpa [#allocation9], 1
    %6617 = vsyncpa [#allocation12], 1
    %6618 = vsyncpa [#allocation15], 1
    %6619 = vsyncpa [#allocation18], 1
    %6620 = vsyncpa [#allocation4], 1

</llo_original>
